<compile_context>
chip_gen: v5e
topology: v5e:2x2
jax: 0.10.0
libtpu: 0.0.40
codegen_flags: <defaults>
</compile_context>

<pallas_src>
import functools

import numpy as np
import jax
import jax.numpy as jnp
from jax.experimental import pallas as pl
from jax.experimental.pallas import tpu as pltpu


# ------------------------------------------------------------------ fused kernel

def _swin_subblock_kernel(
    x_ref, wqkv_ref, bqkv_ref, wp_ref, bp_ref, scale_ref, bias_ref,
    g_ref, beta_ref, w1_ref, b1_ref, w2_ref, b2_ref, o_ref, *, heads,
):
    """One fused SWIN-V2 sub-block for a single batch element.

    On window-ordered tokens:
        x1 = x  + LN( proj( window-cosine-MSA(x) ) )
        y  = x1 + LN( Linear(GELU(Linear(x1))) )
    """
    L, C = x_ref.shape[1], x_ref.shape[2]
    hd = C // heads
    Tw = bias_ref.shape[2]
    nW = L // Tw

    x = x_ref[0].astype(jnp.float32)                  # (L, C), lane-dense on C
    xb = x.astype(jnp.bfloat16)
    gamma = g_ref[...]                                # (1, C)
    beta = beta_ref[...]                              # (1, C)

    def layernorm(y):
        mu = jnp.mean(y, axis=-1, keepdims=True)
        var = jnp.mean(jnp.square(y - mu), axis=-1, keepdims=True)
        return (y - mu) * jax.lax.rsqrt(var + 1e-5) * gamma + beta

    # ---- window cosine multi-head self-attention -------------------------------
    # Fused QKV: one wide MXU matmul, bf16 operands, f32 accumulation.
    qkv = jnp.dot(xb, wqkv_ref[...], preferred_element_type=jnp.float32) + bqkv_ref[...]

    head_outs = []
    for h in range(heads):                            # static unroll over heads
        # static lane slices out of the fused QKV result (native [q|k|v] x head layout)
        q = qkv[:, h * hd:(h + 1) * hd].reshape(nW, Tw, hd)
        k = qkv[:, C + h * hd:C + (h + 1) * hd].reshape(nW, Tw, hd)
        v = qkv[:, 2 * C + h * hd:2 * C + (h + 1) * hd].reshape(nW, Tw, hd)
        # cosine attention: normalize q/k along head_dim; fold learnable per-head
        # logit scale into q (cheaper than scaling the (Tw,Tw) scores).
        qn = q * jax.lax.rsqrt(jnp.sum(q * q, axis=-1, keepdims=True) + 1e-12)
        kn = k * jax.lax.rsqrt(jnp.sum(k * k, axis=-1, keepdims=True) + 1e-12)
        qn = qn * scale_ref[h]
        s = jnp.einsum("wqd,wkd->wqk", qn, kn, preferred_element_type=jnp.float32)
        s = s + bias_ref[h]                           # (1|nW, Tw, Tw) broadcast over windows
        s = s - jnp.max(s, axis=-1, keepdims=True)
        p = jnp.exp(s)
        inv_den = pl.reciprocal(jnp.sum(p, axis=-1, keepdims=True), approx=True)
        oh = jnp.einsum("wqk,wkd->wqd", p.astype(jnp.bfloat16), v.astype(jnp.bfloat16),
                        preferred_element_type=jnp.float32)
        oh = oh * inv_den                             # normalize after PV (hd < Tw)
        head_outs.append(oh.reshape(L, hd))

    attn = jnp.concatenate(head_outs, axis=-1)        # (L, C) lane-dense
    attn = jnp.dot(attn.astype(jnp.bfloat16), wp_ref[...],
                   preferred_element_type=jnp.float32) + bp_ref[...]
    x1 = x + layernorm(attn)

    # ---- MLP: Linear -> GELU -> Linear, post-LN, residual -----------------------
    hmid = jnp.dot(x1.astype(jnp.bfloat16), w1_ref[...],
                   preferred_element_type=jnp.float32) + b1_ref[...]
    # TODO(synk): torch nn.GELU defaults to the exact erf form; tanh approximation
    # used here for guaranteed Mosaic lowering (~1e-3 relative difference).
    hmid = jax.nn.gelu(hmid, approximate=True)
    y = jnp.dot(hmid.astype(jnp.bfloat16), w2_ref[...],
                preferred_element_type=jnp.float32) + b2_ref[...]
    o_ref[0] = (x1 + layernorm(y)).astype(o_ref.dtype)


# ------------------------------------------------------------------ static helpers

def _relative_position_index(wh, ww):
    coords = np.stack(np.meshgrid(np.arange(wh), np.arange(ww), indexing="ij"))
    flat = coords.reshape(2, -1)                      # (2, Tw)
    rel = flat[:, :, None] - flat[:, None, :]         # (2, Tw, Tw)
    rel = rel.transpose(1, 2, 0).astype(np.int64)
    rel[:, :, 0] += wh - 1
    rel[:, :, 1] += ww - 1
    rel[:, :, 0] *= 2 * ww - 1
    return rel.sum(-1)                                # (Tw, Tw)


def _shifted_window_mask(H, W, wh, ww, sh, sw):
    img = np.zeros((H, W), np.int32)
    cnt = 0
    for hs in (slice(0, -wh), slice(-wh, -sh), slice(-sh, None)):
        for ws in (slice(0, -ww), slice(-ww, -sw), slice(-sw, None)):
            img[hs, ws] = cnt
            cnt += 1
    mw = img.reshape(H // wh, wh, W // ww, ww).transpose(0, 2, 1, 3).reshape(-1, wh * ww)
    m = mw[:, None, :] - mw[:, :, None]
    return np.where(m != 0, -100.0, 0.0).astype(np.float32)   # (nW, Tw, Tw)


def _window_perm(H, W, wh, ww, shift):
    """Static token permutation implementing cyclic shift + window partition."""
    idx = np.arange(H * W, dtype=np.int32).reshape(H, W)
    if shift is not None:
        idx = np.roll(idx, (-shift[0], -shift[1]), axis=(0, 1))
    perm = idx.reshape(H // wh, wh, W // ww, ww).transpose(0, 2, 1, 3).reshape(-1)
    return perm, np.argsort(perm).astype(np.int32)


# ------------------------------------------------------------------ fused block wrapper

def _fused_swin_block(x_win, blk, *, heads):
    """Apply one fused sub-block (attn+LN+res, MLP+LN+res) on window-ordered tokens."""
    B, L, C = x_win.shape
    Tw = blk["bias"].shape[2]
    nW = L // Tw

    def _full(a):
        nd = a.ndim
        return pl.BlockSpec(a.shape, lambda b, _nd=nd: (0,) * _nd)

    # Advisory cost estimate (qkv + scores + PV + proj + MLP) for XLA scheduling.
    flops = int(2 * B * L * C * (3 * C + C + 8 * C) + 4 * B * L * Tw * C)
    transc = int(B * (heads * nW * Tw * Tw + 4 * L * C + 2 * heads * L))
    bytes_acc = int(2 * B * L * C * 4                           # x in + y out (f32)
                    + 2 * (3 * C * C + C * C + 8 * C * C)       # bf16 weights
                    + 4 * int(blk["bias"].size)                 # bias (+mask) f32
                    + 4 * (3 * C + 6 * C + 4 * C + heads))      # biases / ln / scale
    ce = pl.CostEstimate(flops=flops, transcendentals=transc, bytes_accessed=bytes_acc)

    kernel = functools.partial(_swin_subblock_kernel, heads=heads)
    return pl.pallas_call(
        kernel,
        out_shape=jax.ShapeDtypeStruct((B, L, C), x_win.dtype),
        grid=(B,),
        in_specs=[
            pl.BlockSpec((1, L, C), lambda b: (b, 0, 0)),        # x (one batch element)
            _full(blk["wqkv"]), _full(blk["bqkv"]),
            _full(blk["wproj"]), _full(blk["bproj"]),
            pl.BlockSpec(memory_space=pltpu.MemorySpace.SMEM),   # per-head logit scale
            _full(blk["bias"]),
            _full(blk["ln_g"]), _full(blk["ln_b"]),
            _full(blk["w1"]), _full(blk["b1"]),
            _full(blk["w2"]), _full(blk["b2"]),
        ],
        out_specs=pl.BlockSpec((1, L, C), lambda b: (b, 0, 0)),
        compiler_params=pltpu.CompilerParams(
            dimension_semantics=("parallel",),                   # batch steps shard across TCs
            vmem_limit_bytes=32 * 1024 * 1024),                  # explicit scoped-VMEM budget
        cost_estimate=ce,
    )(x_win, blk["wqkv"], blk["bqkv"], blk["wproj"], blk["bproj"], blk["scale"],
      blk["bias"], blk["ln_g"], blk["ln_b"], blk["w1"], blk["b1"], blk["w2"], blk["b2"])


# ------------------------------------------------------------------ module forward

def swin_connect_encoder_forward(x, prep, *, grid_hw, win, heads):
    """SwinConnectEncoder.forward: returns (y, y)."""
    H, W = grid_hw
    wh, ww = win

    # Static token permutations; middle one composes inv(block0) with perm(block1)
    # so only 3 full-activation gathers are paid (instead of 4).
    perm0, inv0 = _window_perm(H, W, wh, ww, None)
    perm1, inv1 = _window_perm(H, W, wh, ww, (wh // 2, ww // 2))
    mid = inv0[perm1]

    # x = x + LN(WMSA(x));  x = x + LN(MLP(x))          (un-shifted windows)
    x_w0 = x[:, perm0, :]
    y_w0 = _fused_swin_block(x_w0, prep["wmsa"], heads=heads)
    # x = x + LN(SWMSA(x)); x = x + LN(MLP(x))          (shifted windows)
    x_w1 = y_w0[:, mid, :]
    y_w1 = _fused_swin_block(x_w1, prep["swmsa"], heads=heads)
    y = y_w1[:, inv1, :]
    return y, y


# ------------------------------------------------------------------ parameters

def init_params(key, C, heads, win):
    """Raw (torch-like) parameters."""
    wh, ww = win
    ks = jax.random.split(key, 8)

    def dense(k, fan_in, shape):
        return (jax.random.normal(k, shape, jnp.float32) / np.sqrt(fan_in)).astype(jnp.float32)

    def msa(kk):
        k1, k2, k3 = jax.random.split(kk, 3)
        return dict(
            wqkv=dense(k1, C, (C, 3 * C)),            # native layout: columns = (qkv, head, hd)
            bqkv=jnp.zeros((3 * C,), jnp.float32),
            wproj=dense(k2, C, (C, C)),
            bproj=jnp.zeros((C,), jnp.float32),
            logit_scale=jnp.full((heads, 1, 1), np.log(10.0), jnp.float32),
            rpb=0.02 * jax.random.normal(k3, ((2 * wh - 1) * (2 * ww - 1), heads), jnp.float32),
        )

    return dict(
        ln_g=jnp.ones((C,), jnp.float32),
        ln_b=jnp.zeros((C,), jnp.float32),
        wmsa=msa(ks[0]),
        swmsa=msa(ks[1]),
        mlp=dict(
            w1=dense(ks[2], C, (C, 4 * C)),
            b1=jnp.zeros((4 * C,), jnp.float32),
            w2=dense(ks[3], 4 * C, (4 * C, C)),
            b2=jnp.zeros((C,), jnp.float32),
        ),
    )


def prepare_params(params, *, C, heads, grid_hw, win):
    """One-time, out-of-jit re-layout: rpb gather, mask fold, bf16 casts, bias reshapes."""
    H, W = grid_hw
    wh, ww = win
    rpi = _relative_position_index(wh, ww)

    ln_g = params["ln_g"].reshape(1, C)
    ln_b = params["ln_b"].reshape(1, C)
    mlp = dict(
        w1=params["mlp"]["w1"].astype(jnp.bfloat16),
        b1=params["mlp"]["b1"].reshape(1, -1),
        w2=params["mlp"]["w2"].astype(jnp.bfloat16),
        b2=params["mlp"]["b2"].reshape(1, C),
    )

    def _prep_msa(msa, shifted):
        rpb = jnp.transpose(msa["rpb"][rpi], (2, 0, 1))             # (heads, Tw, Tw)
        if shifted:
            mask = jnp.asarray(_shifted_window_mask(H, W, wh, ww, wh // 2, ww // 2))
            bias = rpb[:, None, :, :] + mask[None, :, :, :]         # (heads, nW, Tw, Tw)
        else:
            bias = rpb[:, None, :, :]                               # (heads, 1, Tw, Tw) — no nW broadcast
        return dict(
            wqkv=msa["wqkv"].astype(jnp.bfloat16),
            bqkv=msa["bqkv"].reshape(1, 3 * C),
            wproj=msa["wproj"].astype(jnp.bfloat16),
            bproj=msa["bproj"].reshape(1, C),
            scale=jnp.exp(jnp.minimum(msa["logit_scale"], jnp.log(100.0))).reshape(heads),
            bias=bias,
            ln_g=ln_g, ln_b=ln_b, **mlp,
        )

    return dict(
        wmsa=_prep_msa(params["wmsa"], shifted=False),
        swmsa=_prep_msa(params["swmsa"], shifted=True),
    )


# ------------------------------------------------------------------ main

if __name__ == "__main__":
    # small shapes consistent with the module: emb=32, heads=4, patch grid 8x8, window 4x4
    C, heads = 32, 4
    grid_hw = (8, 8)
    win = (4, 4)
    B = 2
    L = grid_hw[0] * grid_hw[1]

    key = jax.random.PRNGKey(0)
    kx, kp = jax.random.split(key)
    x = jax.random.normal(kx, (B, L, C), jnp.float32)
    params = init_params(kp, C, heads, win)
    prep = prepare_params(params, C=C, heads=heads, grid_hw=grid_hw, win=win)

    fwd = jax.jit(functools.partial(
        swin_connect_encoder_forward, grid_hw=grid_hw, win=win, heads=heads))
    y1, y2 = fwd(x, prep)
    jax.block_until_ready((y1, y2))

    assert y1.shape == (B, L, C) and y2.shape == (B, L, C)
    assert bool(jnp.all(y1 == y2))
    assert bool(jnp.all(jnp.isfinite(y1)))
    print("KERNEL_OK")
</pallas_src>

<mosaic_0001>
module attributes {stable_mosaic.version = 11 : i64} {
  func.func @_swin_subblock_kernel(%arg0: i32, %arg1: memref<1x64x32xf32, #tpu.memory_space<vmem>>, %arg2: memref<32x96xbf16, #tpu.memory_space<vmem>>, %arg3: memref<1x96xf32, #tpu.memory_space<vmem>>, %arg4: memref<32x32xbf16, #tpu.memory_space<vmem>>, %arg5: memref<1x32xf32, #tpu.memory_space<vmem>>, %arg6: memref<4xf32, #tpu.memory_space<smem>>, %arg7: memref<4x1x16x16xf32, #tpu.memory_space<vmem>>, %arg8: memref<1x32xf32, #tpu.memory_space<vmem>>, %arg9: memref<1x32xf32, #tpu.memory_space<vmem>>, %arg10: memref<32x128xbf16, #tpu.memory_space<vmem>>, %arg11: memref<1x128xf32, #tpu.memory_space<vmem>>, %arg12: memref<128x32xbf16, #tpu.memory_space<vmem>>, %arg13: memref<1x32xf32, #tpu.memory_space<vmem>>, %arg14: memref<1x64x32xf32, #tpu.memory_space<vmem>>) attributes {dimension_semantics = [#tpu.dimension_semantics<parallel>], iteration_bounds = array<i64: 2>, scalar_prefetch = 0 : i64, scratch_operands = 0 : i64, tpu.core_type = #tpu.core_type<tc>, window_params = [{transform_indices = @transform_0, window_bounds = array<i64: 1, 64, 32>}, {pipeline_mode = #tpu.pipeline_mode<synchronous>, transform_indices = @transform_1, window_bounds = array<i64: 32, 96>}, {pipeline_mode = #tpu.pipeline_mode<synchronous>, transform_indices = @transform_2, window_bounds = array<i64: 1, 96>}, {pipeline_mode = #tpu.pipeline_mode<synchronous>, transform_indices = @transform_3, window_bounds = array<i64: 32, 32>}, {pipeline_mode = #tpu.pipeline_mode<synchronous>, transform_indices = @transform_4, window_bounds = array<i64: 1, 32>}, {transform_indices = @transform_5, window_bounds = array<i64: 4>}, {pipeline_mode = #tpu.pipeline_mode<synchronous>, transform_indices = @transform_6, window_bounds = array<i64: 4, 1, 16, 16>}, {pipeline_mode = #tpu.pipeline_mode<synchronous>, transform_indices = @transform_7, window_bounds = array<i64: 1, 32>}, {pipeline_mode = #tpu.pipeline_mode<synchronous>, transform_indices = @transform_8, window_bounds = array<i64: 1, 32>}, {pipeline_mode = #tpu.pipeline_mode<synchronous>, transform_indices = @transform_9, window_bounds = array<i64: 32, 128>}, {pipeline_mode = #tpu.pipeline_mode<synchronous>, transform_indices = @transform_10, window_bounds = array<i64: 1, 128>}, {pipeline_mode = #tpu.pipeline_mode<synchronous>, transform_indices = @transform_11, window_bounds = array<i64: 128, 32>}, {pipeline_mode = #tpu.pipeline_mode<synchronous>, transform_indices = @transform_12, window_bounds = array<i64: 1, 32>}, {transform_indices = @transform_13, window_bounds = array<i64: 1, 64, 32>}]} {
    %c0 = arith.constant 0 : index
    %c0_0 = arith.constant 0 : index
    %c0_1 = arith.constant 0 : index
    %0 = vector.load %arg1[%c0, %c0_0, %c0_1] : memref<1x64x32xf32, #tpu.memory_space<vmem>>, vector<1x64x32xf32>
    %1 = vector.shape_cast %0 : vector<1x64x32xf32> to vector<64x32xf32>
    %2 = arith.truncf %1 : vector<64x32xf32> to vector<64x32xbf16>
    %c0_2 = arith.constant 0 : index
    %c0_3 = arith.constant 0 : index
    %3 = vector.load %arg8[%c0_2, %c0_3] : memref<1x32xf32, #tpu.memory_space<vmem>>, vector<1x32xf32>
    %c0_4 = arith.constant 0 : index
    %c0_5 = arith.constant 0 : index
    %4 = vector.load %arg9[%c0_4, %c0_5] : memref<1x32xf32, #tpu.memory_space<vmem>>, vector<1x32xf32>
    %c0_6 = arith.constant 0 : index
    %c0_7 = arith.constant 0 : index
    %5 = vector.load %arg2[%c0_6, %c0_7] : memref<32x96xbf16, #tpu.memory_space<vmem>>, vector<32x96xbf16>
    %cst = arith.constant dense<0.000000e+00> : vector<64x96xf32>
    %6 = tpu.matmul %2, %5, %cst {dimension_numbers = #tpu.dot_dimension_numbers<[1], [0], [0], [1], [0, 0, 1, 1], [], []>} : vector<64x32xbf16>, vector<32x96xbf16>, vector<64x96xf32> -> vector<64x96xf32>
    %c0_8 = arith.constant 0 : index
    %c0_9 = arith.constant 0 : index
    %7 = vector.load %arg3[%c0_8, %c0_9] : memref<1x96xf32, #tpu.memory_space<vmem>>, vector<1x96xf32>
    %8 = vector.broadcast %7 : vector<1x96xf32> to vector<64x96xf32>
    %9 = arith.addf %6, %8 : vector<64x96xf32>
    %10 = vector.extract_strided_slice %9 {offsets = [0, 0], sizes = [64, 8], strides = [1, 1]} : vector<64x96xf32> to vector<64x8xf32>
    %11 = vector.shape_cast %10 : vector<64x8xf32> to vector<4x16x8xf32>
    %12 = vector.extract_strided_slice %9 {offsets = [0, 32], sizes = [64, 8], strides = [1, 1]} : vector<64x96xf32> to vector<64x8xf32>
    %13 = vector.shape_cast %12 : vector<64x8xf32> to vector<4x16x8xf32>
    %14 = vector.extract_strided_slice %9 {offsets = [0, 64], sizes = [64, 8], strides = [1, 1]} : vector<64x96xf32> to vector<64x8xf32>
    %15 = vector.shape_cast %14 : vector<64x8xf32> to vector<4x16x8xf32>
    %16 = arith.mulf %11, %11 : vector<4x16x8xf32>
    %cst_10 = arith.constant dense<0.000000e+00> : vector<4x16xf32>
    %17 = vector.multi_reduction <add>, %16, %cst_10 [2] : vector<4x16x8xf32> to vector<4x16xf32>
    %18 = vector.shape_cast %17 : vector<4x16xf32> to vector<4x16x1xf32>
    %cst_11 = arith.constant 9.99999996E-13 : f32
    %19 = vector.broadcast %cst_11 : f32 to vector<4x16x1xf32>
    %20 = arith.addf %18, %19 : vector<4x16x1xf32>
    %21 = math.rsqrt %20 : vector<4x16x1xf32>
    %22 = vector.broadcast %21 : vector<4x16x1xf32> to vector<4x16x8xf32>
    %23 = arith.mulf %11, %22 : vector<4x16x8xf32>
    %24 = arith.mulf %13, %13 : vector<4x16x8xf32>
    %cst_12 = arith.constant dense<0.000000e+00> : vector<4x16xf32>
    %25 = vector.multi_reduction <add>, %24, %cst_12 [2] : vector<4x16x8xf32> to vector<4x16xf32>
    %26 = vector.shape_cast %25 : vector<4x16xf32> to vector<4x16x1xf32>
    %cst_13 = arith.constant 9.99999996E-13 : f32
    %27 = vector.broadcast %cst_13 : f32 to vector<4x16x1xf32>
    %28 = arith.addf %26, %27 : vector<4x16x1xf32>
    %29 = math.rsqrt %28 : vector<4x16x1xf32>
    %30 = vector.broadcast %29 : vector<4x16x1xf32> to vector<4x16x8xf32>
    %31 = arith.mulf %13, %30 : vector<4x16x8xf32>
    %c0_14 = arith.constant 0 : index
    %32 = memref.load %arg6[%c0_14] : memref<4xf32, #tpu.memory_space<smem>>
    %33 = vector.broadcast %32 : f32 to vector<4x16x8xf32>
    %34 = arith.mulf %23, %33 : vector<4x16x8xf32>
    "tpu.trace_start"() <{level = 10 : i32, message = "wqd,wkd->wqk"}> : () -> ()
    %cst_15 = arith.constant dense<0.000000e+00> : vector<4x16x16xf32>
    %35 = tpu.matmul %34, %31, %cst_15 {dimension_numbers = #tpu.dot_dimension_numbers<[2], [2], [1], [1], [0, 0, 0, 1, 1, 1], [0], [0]>} : vector<4x16x8xf32>, vector<4x16x8xf32>, vector<4x16x16xf32> -> vector<4x16x16xf32>
    "tpu.trace_stop"() : () -> ()
    %c0_16 = arith.constant 0 : index
    %c0_17 = arith.constant 0 : index
    %c0_18 = arith.constant 0 : index
    %c0_19 = arith.constant 0 : index
    %36 = vector.load %arg7[%c0_16, %c0_17, %c0_18, %c0_19] : memref<4x1x16x16xf32, #tpu.memory_space<vmem>>, vector<1x1x16x16xf32>
    %37 = vector.shape_cast %36 : vector<1x1x16x16xf32> to vector<1x16x16xf32>
    %38 = vector.broadcast %37 : vector<1x16x16xf32> to vector<4x16x16xf32>
    %39 = arith.addf %35, %38 : vector<4x16x16xf32>
    %cst_20 = arith.constant dense<0xFF800000> : vector<4x16xf32>
    %40 = vector.multi_reduction <maximumf>, %39, %cst_20 [2] : vector<4x16x16xf32> to vector<4x16xf32>
    %41 = vector.shape_cast %40 : vector<4x16xf32> to vector<4x16x1xf32>
    %42 = vector.broadcast %41 : vector<4x16x1xf32> to vector<4x16x16xf32>
    %43 = arith.subf %39, %42 : vector<4x16x16xf32>
    %44 = math.exp %43 : vector<4x16x16xf32>
    %cst_21 = arith.constant dense<0.000000e+00> : vector<4x16xf32>
    %45 = vector.multi_reduction <add>, %44, %cst_21 [2] : vector<4x16x16xf32> to vector<4x16xf32>
    %46 = vector.shape_cast %45 : vector<4x16xf32> to vector<4x16x1xf32>
    %47 = tpu.reciprocal %46 {approx = true} : vector<4x16x1xf32> -> vector<4x16x1xf32>
    %48 = arith.truncf %44 : vector<4x16x16xf32> to vector<4x16x16xbf16>
    %49 = arith.truncf %15 : vector<4x16x8xf32> to vector<4x16x8xbf16>
    "tpu.trace_start"() <{level = 10 : i32, message = "wqk,wkd->wqd"}> : () -> ()
    %cst_22 = arith.constant dense<0.000000e+00> : vector<4x16x8xf32>
    %50 = tpu.matmul %48, %49, %cst_22 {dimension_numbers = #tpu.dot_dimension_numbers<[2], [1], [1], [2], [0, 0, 0, 1, 1, 2], [0], [0]>} : vector<4x16x16xbf16>, vector<4x16x8xbf16>, vector<4x16x8xf32> -> vector<4x16x8xf32>
    "tpu.trace_stop"() : () -> ()
    %51 = vector.broadcast %47 : vector<4x16x1xf32> to vector<4x16x8xf32>
    %52 = arith.mulf %50, %51 : vector<4x16x8xf32>
    %53 = vector.shape_cast %52 : vector<4x16x8xf32> to vector<64x8xf32>
    %54 = vector.extract_strided_slice %9 {offsets = [0, 8], sizes = [64, 8], strides = [1, 1]} : vector<64x96xf32> to vector<64x8xf32>
    %55 = vector.shape_cast %54 : vector<64x8xf32> to vector<4x16x8xf32>
    %56 = vector.extract_strided_slice %9 {offsets = [0, 40], sizes = [64, 8], strides = [1, 1]} : vector<64x96xf32> to vector<64x8xf32>
    %57 = vector.shape_cast %56 : vector<64x8xf32> to vector<4x16x8xf32>
    %58 = vector.extract_strided_slice %9 {offsets = [0, 72], sizes = [64, 8], strides = [1, 1]} : vector<64x96xf32> to vector<64x8xf32>
    %59 = vector.shape_cast %58 : vector<64x8xf32> to vector<4x16x8xf32>
    %60 = arith.mulf %55, %55 : vector<4x16x8xf32>
    %cst_23 = arith.constant dense<0.000000e+00> : vector<4x16xf32>
    %61 = vector.multi_reduction <add>, %60, %cst_23 [2] : vector<4x16x8xf32> to vector<4x16xf32>
    %62 = vector.shape_cast %61 : vector<4x16xf32> to vector<4x16x1xf32>
    %cst_24 = arith.constant 9.99999996E-13 : f32
    %63 = vector.broadcast %cst_24 : f32 to vector<4x16x1xf32>
    %64 = arith.addf %62, %63 : vector<4x16x1xf32>
    %65 = math.rsqrt %64 : vector<4x16x1xf32>
    %66 = vector.broadcast %65 : vector<4x16x1xf32> to vector<4x16x8xf32>
    %67 = arith.mulf %55, %66 : vector<4x16x8xf32>
    %68 = arith.mulf %57, %57 : vector<4x16x8xf32>
    %cst_25 = arith.constant dense<0.000000e+00> : vector<4x16xf32>
    %69 = vector.multi_reduction <add>, %68, %cst_25 [2] : vector<4x16x8xf32> to vector<4x16xf32>
    %70 = vector.shape_cast %69 : vector<4x16xf32> to vector<4x16x1xf32>
    %cst_26 = arith.constant 9.99999996E-13 : f32
    %71 = vector.broadcast %cst_26 : f32 to vector<4x16x1xf32>
    %72 = arith.addf %70, %71 : vector<4x16x1xf32>
    %73 = math.rsqrt %72 : vector<4x16x1xf32>
    %74 = vector.broadcast %73 : vector<4x16x1xf32> to vector<4x16x8xf32>
    %75 = arith.mulf %57, %74 : vector<4x16x8xf32>
    %c1 = arith.constant 1 : index
    %76 = memref.load %arg6[%c1] : memref<4xf32, #tpu.memory_space<smem>>
    %77 = vector.broadcast %76 : f32 to vector<4x16x8xf32>
    %78 = arith.mulf %67, %77 : vector<4x16x8xf32>
    "tpu.trace_start"() <{level = 10 : i32, message = "wqd,wkd->wqk"}> : () -> ()
    %cst_27 = arith.constant dense<0.000000e+00> : vector<4x16x16xf32>
    %79 = tpu.matmul %78, %75, %cst_27 {dimension_numbers = #tpu.dot_dimension_numbers<[2], [2], [1], [1], [0, 0, 0, 1, 1, 1], [0], [0]>} : vector<4x16x8xf32>, vector<4x16x8xf32>, vector<4x16x16xf32> -> vector<4x16x16xf32>
    "tpu.trace_stop"() : () -> ()
    %c1_28 = arith.constant 1 : index
    %c0_29 = arith.constant 0 : index
    %c0_30 = arith.constant 0 : index
    %c0_31 = arith.constant 0 : index
    %80 = vector.load %arg7[%c1_28, %c0_29, %c0_30, %c0_31] : memref<4x1x16x16xf32, #tpu.memory_space<vmem>>, vector<1x1x16x16xf32>
    %81 = vector.shape_cast %80 : vector<1x1x16x16xf32> to vector<1x16x16xf32>
    %82 = vector.broadcast %81 : vector<1x16x16xf32> to vector<4x16x16xf32>
    %83 = arith.addf %79, %82 : vector<4x16x16xf32>
    %cst_32 = arith.constant dense<0xFF800000> : vector<4x16xf32>
    %84 = vector.multi_reduction <maximumf>, %83, %cst_32 [2] : vector<4x16x16xf32> to vector<4x16xf32>
    %85 = vector.shape_cast %84 : vector<4x16xf32> to vector<4x16x1xf32>
    %86 = vector.broadcast %85 : vector<4x16x1xf32> to vector<4x16x16xf32>
    %87 = arith.subf %83, %86 : vector<4x16x16xf32>
    %88 = math.exp %87 : vector<4x16x16xf32>
    %cst_33 = arith.constant dense<0.000000e+00> : vector<4x16xf32>
    %89 = vector.multi_reduction <add>, %88, %cst_33 [2] : vector<4x16x16xf32> to vector<4x16xf32>
    %90 = vector.shape_cast %89 : vector<4x16xf32> to vector<4x16x1xf32>
    %91 = tpu.reciprocal %90 {approx = true} : vector<4x16x1xf32> -> vector<4x16x1xf32>
    %92 = arith.truncf %88 : vector<4x16x16xf32> to vector<4x16x16xbf16>
    %93 = arith.truncf %59 : vector<4x16x8xf32> to vector<4x16x8xbf16>
    "tpu.trace_start"() <{level = 10 : i32, message = "wqk,wkd->wqd"}> : () -> ()
    %cst_34 = arith.constant dense<0.000000e+00> : vector<4x16x8xf32>
    %94 = tpu.matmul %92, %93, %cst_34 {dimension_numbers = #tpu.dot_dimension_numbers<[2], [1], [1], [2], [0, 0, 0, 1, 1, 2], [0], [0]>} : vector<4x16x16xbf16>, vector<4x16x8xbf16>, vector<4x16x8xf32> -> vector<4x16x8xf32>
    "tpu.trace_stop"() : () -> ()
    %95 = vector.broadcast %91 : vector<4x16x1xf32> to vector<4x16x8xf32>
    %96 = arith.mulf %94, %95 : vector<4x16x8xf32>
    %97 = vector.shape_cast %96 : vector<4x16x8xf32> to vector<64x8xf32>
    %98 = vector.extract_strided_slice %9 {offsets = [0, 16], sizes = [64, 8], strides = [1, 1]} : vector<64x96xf32> to vector<64x8xf32>
    %99 = vector.shape_cast %98 : vector<64x8xf32> to vector<4x16x8xf32>
    %100 = vector.extract_strided_slice %9 {offsets = [0, 48], sizes = [64, 8], strides = [1, 1]} : vector<64x96xf32> to vector<64x8xf32>
    %101 = vector.shape_cast %100 : vector<64x8xf32> to vector<4x16x8xf32>
    %102 = vector.extract_strided_slice %9 {offsets = [0, 80], sizes = [64, 8], strides = [1, 1]} : vector<64x96xf32> to vector<64x8xf32>
    %103 = vector.shape_cast %102 : vector<64x8xf32> to vector<4x16x8xf32>
    %104 = arith.mulf %99, %99 : vector<4x16x8xf32>
    %cst_35 = arith.constant dense<0.000000e+00> : vector<4x16xf32>
    %105 = vector.multi_reduction <add>, %104, %cst_35 [2] : vector<4x16x8xf32> to vector<4x16xf32>
    %106 = vector.shape_cast %105 : vector<4x16xf32> to vector<4x16x1xf32>
    %cst_36 = arith.constant 9.99999996E-13 : f32
    %107 = vector.broadcast %cst_36 : f32 to vector<4x16x1xf32>
    %108 = arith.addf %106, %107 : vector<4x16x1xf32>
    %109 = math.rsqrt %108 : vector<4x16x1xf32>
    %110 = vector.broadcast %109 : vector<4x16x1xf32> to vector<4x16x8xf32>
    %111 = arith.mulf %99, %110 : vector<4x16x8xf32>
    %112 = arith.mulf %101, %101 : vector<4x16x8xf32>
    %cst_37 = arith.constant dense<0.000000e+00> : vector<4x16xf32>
    %113 = vector.multi_reduction <add>, %112, %cst_37 [2] : vector<4x16x8xf32> to vector<4x16xf32>
    %114 = vector.shape_cast %113 : vector<4x16xf32> to vector<4x16x1xf32>
    %cst_38 = arith.constant 9.99999996E-13 : f32
    %115 = vector.broadcast %cst_38 : f32 to vector<4x16x1xf32>
    %116 = arith.addf %114, %115 : vector<4x16x1xf32>
    %117 = math.rsqrt %116 : vector<4x16x1xf32>
    %118 = vector.broadcast %117 : vector<4x16x1xf32> to vector<4x16x8xf32>
    %119 = arith.mulf %101, %118 : vector<4x16x8xf32>
    %c2 = arith.constant 2 : index
    %120 = memref.load %arg6[%c2] : memref<4xf32, #tpu.memory_space<smem>>
    %121 = vector.broadcast %120 : f32 to vector<4x16x8xf32>
    %122 = arith.mulf %111, %121 : vector<4x16x8xf32>
    "tpu.trace_start"() <{level = 10 : i32, message = "wqd,wkd->wqk"}> : () -> ()
    %cst_39 = arith.constant dense<0.000000e+00> : vector<4x16x16xf32>
    %123 = tpu.matmul %122, %119, %cst_39 {dimension_numbers = #tpu.dot_dimension_numbers<[2], [2], [1], [1], [0, 0, 0, 1, 1, 1], [0], [0]>} : vector<4x16x8xf32>, vector<4x16x8xf32>, vector<4x16x16xf32> -> vector<4x16x16xf32>
    "tpu.trace_stop"() : () -> ()
    %c2_40 = arith.constant 2 : index
    %c0_41 = arith.constant 0 : index
    %c0_42 = arith.constant 0 : index
    %c0_43 = arith.constant 0 : index
    %124 = vector.load %arg7[%c2_40, %c0_41, %c0_42, %c0_43] : memref<4x1x16x16xf32, #tpu.memory_space<vmem>>, vector<1x1x16x16xf32>
    %125 = vector.shape_cast %124 : vector<1x1x16x16xf32> to vector<1x16x16xf32>
    %126 = vector.broadcast %125 : vector<1x16x16xf32> to vector<4x16x16xf32>
    %127 = arith.addf %123, %126 : vector<4x16x16xf32>
    %cst_44 = arith.constant dense<0xFF800000> : vector<4x16xf32>
    %128 = vector.multi_reduction <maximumf>, %127, %cst_44 [2] : vector<4x16x16xf32> to vector<4x16xf32>
    %129 = vector.shape_cast %128 : vector<4x16xf32> to vector<4x16x1xf32>
    %130 = vector.broadcast %129 : vector<4x16x1xf32> to vector<4x16x16xf32>
    %131 = arith.subf %127, %130 : vector<4x16x16xf32>
    %132 = math.exp %131 : vector<4x16x16xf32>
    %cst_45 = arith.constant dense<0.000000e+00> : vector<4x16xf32>
    %133 = vector.multi_reduction <add>, %132, %cst_45 [2] : vector<4x16x16xf32> to vector<4x16xf32>
    %134 = vector.shape_cast %133 : vector<4x16xf32> to vector<4x16x1xf32>
    %135 = tpu.reciprocal %134 {approx = true} : vector<4x16x1xf32> -> vector<4x16x1xf32>
    %136 = arith.truncf %132 : vector<4x16x16xf32> to vector<4x16x16xbf16>
    %137 = arith.truncf %103 : vector<4x16x8xf32> to vector<4x16x8xbf16>
    "tpu.trace_start"() <{level = 10 : i32, message = "wqk,wkd->wqd"}> : () -> ()
    %cst_46 = arith.constant dense<0.000000e+00> : vector<4x16x8xf32>
    %138 = tpu.matmul %136, %137, %cst_46 {dimension_numbers = #tpu.dot_dimension_numbers<[2], [1], [1], [2], [0, 0, 0, 1, 1, 2], [0], [0]>} : vector<4x16x16xbf16>, vector<4x16x8xbf16>, vector<4x16x8xf32> -> vector<4x16x8xf32>
    "tpu.trace_stop"() : () -> ()
    %139 = vector.broadcast %135 : vector<4x16x1xf32> to vector<4x16x8xf32>
    %140 = arith.mulf %138, %139 : vector<4x16x8xf32>
    %141 = vector.shape_cast %140 : vector<4x16x8xf32> to vector<64x8xf32>
    %142 = vector.extract_strided_slice %9 {offsets = [0, 24], sizes = [64, 8], strides = [1, 1]} : vector<64x96xf32> to vector<64x8xf32>
    %143 = vector.shape_cast %142 : vector<64x8xf32> to vector<4x16x8xf32>
    %144 = vector.extract_strided_slice %9 {offsets = [0, 56], sizes = [64, 8], strides = [1, 1]} : vector<64x96xf32> to vector<64x8xf32>
    %145 = vector.shape_cast %144 : vector<64x8xf32> to vector<4x16x8xf32>
    %146 = vector.extract_strided_slice %9 {offsets = [0, 88], sizes = [64, 8], strides = [1, 1]} : vector<64x96xf32> to vector<64x8xf32>
    %147 = vector.shape_cast %146 : vector<64x8xf32> to vector<4x16x8xf32>
    %148 = arith.mulf %143, %143 : vector<4x16x8xf32>
    %cst_47 = arith.constant dense<0.000000e+00> : vector<4x16xf32>
    %149 = vector.multi_reduction <add>, %148, %cst_47 [2] : vector<4x16x8xf32> to vector<4x16xf32>
    %150 = vector.shape_cast %149 : vector<4x16xf32> to vector<4x16x1xf32>
    %cst_48 = arith.constant 9.99999996E-13 : f32
    %151 = vector.broadcast %cst_48 : f32 to vector<4x16x1xf32>
    %152 = arith.addf %150, %151 : vector<4x16x1xf32>
    %153 = math.rsqrt %152 : vector<4x16x1xf32>
    %154 = vector.broadcast %153 : vector<4x16x1xf32> to vector<4x16x8xf32>
    %155 = arith.mulf %143, %154 : vector<4x16x8xf32>
    %156 = arith.mulf %145, %145 : vector<4x16x8xf32>
    %cst_49 = arith.constant dense<0.000000e+00> : vector<4x16xf32>
    %157 = vector.multi_reduction <add>, %156, %cst_49 [2] : vector<4x16x8xf32> to vector<4x16xf32>
    %158 = vector.shape_cast %157 : vector<4x16xf32> to vector<4x16x1xf32>
    %cst_50 = arith.constant 9.99999996E-13 : f32
    %159 = vector.broadcast %cst_50 : f32 to vector<4x16x1xf32>
    %160 = arith.addf %158, %159 : vector<4x16x1xf32>
    %161 = math.rsqrt %160 : vector<4x16x1xf32>
    %162 = vector.broadcast %161 : vector<4x16x1xf32> to vector<4x16x8xf32>
    %163 = arith.mulf %145, %162 : vector<4x16x8xf32>
    %c3 = arith.constant 3 : index
    %164 = memref.load %arg6[%c3] : memref<4xf32, #tpu.memory_space<smem>>
    %165 = vector.broadcast %164 : f32 to vector<4x16x8xf32>
    %166 = arith.mulf %155, %165 : vector<4x16x8xf32>
    "tpu.trace_start"() <{level = 10 : i32, message = "wqd,wkd->wqk"}> : () -> ()
    %cst_51 = arith.constant dense<0.000000e+00> : vector<4x16x16xf32>
    %167 = tpu.matmul %166, %163, %cst_51 {dimension_numbers = #tpu.dot_dimension_numbers<[2], [2], [1], [1], [0, 0, 0, 1, 1, 1], [0], [0]>} : vector<4x16x8xf32>, vector<4x16x8xf32>, vector<4x16x16xf32> -> vector<4x16x16xf32>
    "tpu.trace_stop"() : () -> ()
    %c3_52 = arith.constant 3 : index
    %c0_53 = arith.constant 0 : index
    %c0_54 = arith.constant 0 : index
    %c0_55 = arith.constant 0 : index
    %168 = vector.load %arg7[%c3_52, %c0_53, %c0_54, %c0_55] : memref<4x1x16x16xf32, #tpu.memory_space<vmem>>, vector<1x1x16x16xf32>
    %169 = vector.shape_cast %168 : vector<1x1x16x16xf32> to vector<1x16x16xf32>
    %170 = vector.broadcast %169 : vector<1x16x16xf32> to vector<4x16x16xf32>
    %171 = arith.addf %167, %170 : vector<4x16x16xf32>
    %cst_56 = arith.constant dense<0xFF800000> : vector<4x16xf32>
    %172 = vector.multi_reduction <maximumf>, %171, %cst_56 [2] : vector<4x16x16xf32> to vector<4x16xf32>
    %173 = vector.shape_cast %172 : vector<4x16xf32> to vector<4x16x1xf32>
    %174 = vector.broadcast %173 : vector<4x16x1xf32> to vector<4x16x16xf32>
    %175 = arith.subf %171, %174 : vector<4x16x16xf32>
    %176 = math.exp %175 : vector<4x16x16xf32>
    %cst_57 = arith.constant dense<0.000000e+00> : vector<4x16xf32>
    %177 = vector.multi_reduction <add>, %176, %cst_57 [2] : vector<4x16x16xf32> to vector<4x16xf32>
    %178 = vector.shape_cast %177 : vector<4x16xf32> to vector<4x16x1xf32>
    %179 = tpu.reciprocal %178 {approx = true} : vector<4x16x1xf32> -> vector<4x16x1xf32>
    %180 = arith.truncf %176 : vector<4x16x16xf32> to vector<4x16x16xbf16>
    %181 = arith.truncf %147 : vector<4x16x8xf32> to vector<4x16x8xbf16>
    "tpu.trace_start"() <{level = 10 : i32, message = "wqk,wkd->wqd"}> : () -> ()
    %cst_58 = arith.constant dense<0.000000e+00> : vector<4x16x8xf32>
    %182 = tpu.matmul %180, %181, %cst_58 {dimension_numbers = #tpu.dot_dimension_numbers<[2], [1], [1], [2], [0, 0, 0, 1, 1, 2], [0], [0]>} : vector<4x16x16xbf16>, vector<4x16x8xbf16>, vector<4x16x8xf32> -> vector<4x16x8xf32>
    "tpu.trace_stop"() : () -> ()
    %183 = vector.broadcast %179 : vector<4x16x1xf32> to vector<4x16x8xf32>
    %184 = arith.mulf %182, %183 : vector<4x16x8xf32>
    %185 = vector.shape_cast %184 : vector<4x16x8xf32> to vector<64x8xf32>
    %186 = tpu.concatenate %53, %97, %141, %185 in 1 : vector<64x8xf32>, vector<64x8xf32>, vector<64x8xf32>, vector<64x8xf32> -> vector<64x32xf32>
    %187 = arith.truncf %186 : vector<64x32xf32> to vector<64x32xbf16>
    %c0_59 = arith.constant 0 : index
    %c0_60 = arith.constant 0 : index
    %188 = vector.load %arg4[%c0_59, %c0_60] : memref<32x32xbf16, #tpu.memory_space<vmem>>, vector<32x32xbf16>
    %cst_61 = arith.constant dense<0.000000e+00> : vector<64x32xf32>
    %189 = tpu.matmul %187, %188, %cst_61 {dimension_numbers = #tpu.dot_dimension_numbers<[1], [0], [0], [1], [0, 0, 1, 1], [], []>} : vector<64x32xbf16>, vector<32x32xbf16>, vector<64x32xf32> -> vector<64x32xf32>
    %c0_62 = arith.constant 0 : index
    %c0_63 = arith.constant 0 : index
    %190 = vector.load %arg5[%c0_62, %c0_63] : memref<1x32xf32, #tpu.memory_space<vmem>>, vector<1x32xf32>
    %191 = vector.broadcast %190 : vector<1x32xf32> to vector<64x32xf32>
    %192 = arith.addf %189, %191 : vector<64x32xf32>
    %cst_64 = arith.constant dense<0.000000e+00> : vector<64xf32>
    %193 = vector.multi_reduction <add>, %192, %cst_64 [1] : vector<64x32xf32> to vector<64xf32>
    %194 = vector.shape_cast %193 : vector<64xf32> to vector<64x1xf32>
    %cst_65 = arith.constant 3.200000e+01 : f32
    %195 = vector.broadcast %cst_65 : f32 to vector<64x1xf32>
    %196 = arith.divf %194, %195 : vector<64x1xf32>
    %197 = vector.broadcast %196 : vector<64x1xf32> to vector<64x32xf32>
    %198 = arith.subf %192, %197 : vector<64x32xf32>
    %199 = arith.mulf %198, %198 : vector<64x32xf32>
    %cst_66 = arith.constant dense<0.000000e+00> : vector<64xf32>
    %200 = vector.multi_reduction <add>, %199, %cst_66 [1] : vector<64x32xf32> to vector<64xf32>
    %201 = vector.shape_cast %200 : vector<64xf32> to vector<64x1xf32>
    %cst_67 = arith.constant 3.200000e+01 : f32
    %202 = vector.broadcast %cst_67 : f32 to vector<64x1xf32>
    %203 = arith.divf %201, %202 : vector<64x1xf32>
    %204 = vector.broadcast %196 : vector<64x1xf32> to vector<64x32xf32>
    %205 = arith.subf %192, %204 : vector<64x32xf32>
    %cst_68 = arith.constant 9.99999974E-6 : f32
    %206 = vector.broadcast %cst_68 : f32 to vector<64x1xf32>
    %207 = arith.addf %203, %206 : vector<64x1xf32>
    %208 = math.rsqrt %207 : vector<64x1xf32>
    %209 = vector.broadcast %208 : vector<64x1xf32> to vector<64x32xf32>
    %210 = arith.mulf %205, %209 : vector<64x32xf32>
    %211 = vector.broadcast %3 : vector<1x32xf32> to vector<64x32xf32>
    %212 = arith.mulf %210, %211 : vector<64x32xf32>
    %213 = vector.broadcast %4 : vector<1x32xf32> to vector<64x32xf32>
    %214 = arith.addf %212, %213 : vector<64x32xf32>
    %215 = arith.addf %1, %214 : vector<64x32xf32>
    %216 = arith.truncf %215 : vector<64x32xf32> to vector<64x32xbf16>
    %c0_69 = arith.constant 0 : index
    %c0_70 = arith.constant 0 : index
    %217 = vector.load %arg10[%c0_69, %c0_70] : memref<32x128xbf16, #tpu.memory_space<vmem>>, vector<32x128xbf16>
    %cst_71 = arith.constant dense<0.000000e+00> : vector<64x128xf32>
    %218 = tpu.matmul %216, %217, %cst_71 {dimension_numbers = #tpu.dot_dimension_numbers<[1], [0], [0], [1], [0, 0, 1, 1], [], []>} : vector<64x32xbf16>, vector<32x128xbf16>, vector<64x128xf32> -> vector<64x128xf32>
    %c0_72 = arith.constant 0 : index
    %c0_73 = arith.constant 0 : index
    %219 = vector.load %arg11[%c0_72, %c0_73] : memref<1x128xf32, #tpu.memory_space<vmem>>, vector<1x128xf32>
    %220 = vector.broadcast %219 : vector<1x128xf32> to vector<64x128xf32>
    %221 = arith.addf %218, %220 : vector<64x128xf32>
    %222 = arith.mulf %221, %221 : vector<64x128xf32>
    %223 = arith.mulf %221, %222 : vector<64x128xf32>
    %cst_74 = arith.constant 4.471500e-02 : f32
    %224 = vector.broadcast %cst_74 : f32 to vector<64x128xf32>
    %225 = arith.mulf %224, %223 : vector<64x128xf32>
    %226 = arith.addf %221, %225 : vector<64x128xf32>
    %cst_75 = arith.constant 0.797884583 : f32
    %227 = vector.broadcast %cst_75 : f32 to vector<64x128xf32>
    %228 = arith.mulf %227, %226 : vector<64x128xf32>
    %229 = math.tanh %228 : vector<64x128xf32>
    %cst_76 = arith.constant 1.000000e+00 : f32
    %230 = vector.broadcast %cst_76 : f32 to vector<64x128xf32>
    %231 = arith.addf %230, %229 : vector<64x128xf32>
    %cst_77 = arith.constant 5.000000e-01 : f32
    %232 = vector.broadcast %cst_77 : f32 to vector<64x128xf32>
    %233 = arith.mulf %232, %231 : vector<64x128xf32>
    %234 = arith.mulf %221, %233 : vector<64x128xf32>
    %235 = arith.truncf %234 : vector<64x128xf32> to vector<64x128xbf16>
    %c0_78 = arith.constant 0 : index
    %c0_79 = arith.constant 0 : index
    %236 = vector.load %arg12[%c0_78, %c0_79] : memref<128x32xbf16, #tpu.memory_space<vmem>>, vector<128x32xbf16>
    %cst_80 = arith.constant dense<0.000000e+00> : vector<64x32xf32>
    %237 = tpu.matmul %235, %236, %cst_80 {dimension_numbers = #tpu.dot_dimension_numbers<[1], [0], [0], [1], [0, 0, 1, 1], [], []>} : vector<64x128xbf16>, vector<128x32xbf16>, vector<64x32xf32> -> vector<64x32xf32>
    %c0_81 = arith.constant 0 : index
    %c0_82 = arith.constant 0 : index
    %238 = vector.load %arg13[%c0_81, %c0_82] : memref<1x32xf32, #tpu.memory_space<vmem>>, vector<1x32xf32>
    %239 = vector.broadcast %238 : vector<1x32xf32> to vector<64x32xf32>
    %240 = arith.addf %237, %239 : vector<64x32xf32>
    %cst_83 = arith.constant dense<0.000000e+00> : vector<64xf32>
    %241 = vector.multi_reduction <add>, %240, %cst_83 [1] : vector<64x32xf32> to vector<64xf32>
    %242 = vector.shape_cast %241 : vector<64xf32> to vector<64x1xf32>
    %cst_84 = arith.constant 3.200000e+01 : f32
    %243 = vector.broadcast %cst_84 : f32 to vector<64x1xf32>
    %244 = arith.divf %242, %243 : vector<64x1xf32>
    %245 = vector.broadcast %244 : vector<64x1xf32> to vector<64x32xf32>
    %246 = arith.subf %240, %245 : vector<64x32xf32>
    %247 = arith.mulf %246, %246 : vector<64x32xf32>
    %cst_85 = arith.constant dense<0.000000e+00> : vector<64xf32>
    %248 = vector.multi_reduction <add>, %247, %cst_85 [1] : vector<64x32xf32> to vector<64xf32>
    %249 = vector.shape_cast %248 : vector<64xf32> to vector<64x1xf32>
    %cst_86 = arith.constant 3.200000e+01 : f32
    %250 = vector.broadcast %cst_86 : f32 to vector<64x1xf32>
    %251 = arith.divf %249, %250 : vector<64x1xf32>
    %252 = vector.broadcast %244 : vector<64x1xf32> to vector<64x32xf32>
    %253 = arith.subf %240, %252 : vector<64x32xf32>
    %cst_87 = arith.constant 9.99999974E-6 : f32
    %254 = vector.broadcast %cst_87 : f32 to vector<64x1xf32>
    %255 = arith.addf %251, %254 : vector<64x1xf32>
    %256 = math.rsqrt %255 : vector<64x1xf32>
    %257 = vector.broadcast %256 : vector<64x1xf32> to vector<64x32xf32>
    %258 = arith.mulf %253, %257 : vector<64x32xf32>
    %259 = vector.broadcast %3 : vector<1x32xf32> to vector<64x32xf32>
    %260 = arith.mulf %258, %259 : vector<64x32xf32>
    %261 = vector.broadcast %4 : vector<1x32xf32> to vector<64x32xf32>
    %262 = arith.addf %260, %261 : vector<64x32xf32>
    %263 = arith.addf %215, %262 : vector<64x32xf32>
    %c0_88 = arith.constant 0 : index
    %c0_89 = arith.constant 0 : index
    %c0_90 = arith.constant 0 : index
    %264 = vector.load %arg14[%c0_88, %c0_89, %c0_90] : memref<1x64x32xf32, #tpu.memory_space<vmem>>, vector<1x64x32xf32>
    %265 = vector.shape_cast %264 : vector<1x64x32xf32> to vector<64x32xf32>
    %266 = vector.shape_cast %263 : vector<64x32xf32> to vector<1x64x32xf32>
    tpu.vector_store %arg14[%c0_88, %c0_89, %c0_90], %266 {strides = array<i32>} : memref<1x64x32xf32, #tpu.memory_space<vmem>>, vector<1x64x32xf32>,
    return
  }
  func.func @transform_0(%arg0: i32) -> (i32, i32, i32) {
    %c0_i32 = arith.constant 0 : i32
    %c0_i32_0 = arith.constant 0 : i32
    %c0_i32_1 = arith.constant 0 : i32
    return %arg0, %c0_i32, %c0_i32_0 : i32, i32, i32
  }
  func.func @transform_1(%arg0: i32) -> (i32, i32) {
    %c0_i32 = arith.constant 0 : i32
    %c0_i32_0 = arith.constant 0 : i32
    %c0_i32_1 = arith.constant 0 : i32
    return %c0_i32, %c0_i32_0 : i32, i32
  }
  func.func @transform_2(%arg0: i32) -> (i32, i32) {
    %c0_i32 = arith.constant 0 : i32
    %c0_i32_0 = arith.constant 0 : i32
    %c0_i32_1 = arith.constant 0 : i32
    return %c0_i32, %c0_i32_0 : i32, i32
  }
  func.func @transform_3(%arg0: i32) -> (i32, i32) {
    %c0_i32 = arith.constant 0 : i32
    %c0_i32_0 = arith.constant 0 : i32
    %c0_i32_1 = arith.constant 0 : i32
    return %c0_i32, %c0_i32_0 : i32, i32
  }
  func.func @transform_4(%arg0: i32) -> (i32, i32) {
    %c0_i32 = arith.constant 0 : i32
    %c0_i32_0 = arith.constant 0 : i32
    %c0_i32_1 = arith.constant 0 : i32
    return %c0_i32, %c0_i32_0 : i32, i32
  }
  func.func @transform_5(%arg0: i32) -> i32 {
    %c0_i32 = arith.constant 0 : i32
    %c0_i32_0 = arith.constant 0 : i32
    return %c0_i32 : i32
  }
  func.func @transform_6(%arg0: i32) -> (i32, i32, i32, i32) {
    %c0_i32 = arith.constant 0 : i32
    %c0_i32_0 = arith.constant 0 : i32
    %c0_i32_1 = arith.constant 0 : i32
    %c0_i32_2 = arith.constant 0 : i32
    %c0_i32_3 = arith.constant 0 : i32
    return %c0_i32, %c0_i32_0, %c0_i32_1, %c0_i32_2 : i32, i32, i32, i32
  }
  func.func @transform_7(%arg0: i32) -> (i32, i32) {
    %c0_i32 = arith.constant 0 : i32
    %c0_i32_0 = arith.constant 0 : i32
    %c0_i32_1 = arith.constant 0 : i32
    return %c0_i32, %c0_i32_0 : i32, i32
  }
  func.func @transform_8(%arg0: i32) -> (i32, i32) {
    %c0_i32 = arith.constant 0 : i32
    %c0_i32_0 = arith.constant 0 : i32
    %c0_i32_1 = arith.constant 0 : i32
    return %c0_i32, %c0_i32_0 : i32, i32
  }
  func.func @transform_9(%arg0: i32) -> (i32, i32) {
    %c0_i32 = arith.constant 0 : i32
    %c0_i32_0 = arith.constant 0 : i32
    %c0_i32_1 = arith.constant 0 : i32
    return %c0_i32, %c0_i32_0 : i32, i32
  }
  func.func @transform_10(%arg0: i32) -> (i32, i32) {
    %c0_i32 = arith.constant 0 : i32
    %c0_i32_0 = arith.constant 0 : i32
    %c0_i32_1 = arith.constant 0 : i32
    return %c0_i32, %c0_i32_0 : i32, i32
  }
  func.func @transform_11(%arg0: i32) -> (i32, i32) {
    %c0_i32 = arith.constant 0 : i32
    %c0_i32_0 = arith.constant 0 : i32
    %c0_i32_1 = arith.constant 0 : i32
    return %c0_i32, %c0_i32_0 : i32, i32
  }
  func.func @transform_12(%arg0: i32) -> (i32, i32) {
    %c0_i32 = arith.constant 0 : i32
    %c0_i32_0 = arith.constant 0 : i32
    %c0_i32_1 = arith.constant 0 : i32
    return %c0_i32, %c0_i32_0 : i32, i32
  }
  func.func @transform_13(%arg0: i32) -> (i32, i32, i32) {
    %c0_i32 = arith.constant 0 : i32
    %c0_i32_0 = arith.constant 0 : i32
    %c0_i32_1 = arith.constant 0 : i32
    return %arg0, %c0_i32, %c0_i32_0 : i32, i32, i32
  }
}

module attributes {stable_mosaic.version = 11 : i64} {
  func.func @_swin_subblock_kernel(%arg0: i32, %arg1: memref<1x64x32xf32, #tpu.memory_space<vmem>>, %arg2: memref<32x96xbf16, #tpu.memory_space<vmem>>, %arg3: memref<1x96xf32, #tpu.memory_space<vmem>>, %arg4: memref<32x32xbf16, #tpu.memory_space<vmem>>, %arg5: memref<1x32xf32, #tpu.memory_space<vmem>>, %arg6: memref<4xf32, #tpu.memory_space<smem>>, %arg7: memref<4x4x16x16xf32, #tpu.memory_space<vmem>>, %arg8: memref<1x32xf32, #tpu.memory_space<vmem>>, %arg9: memref<1x32xf32, #tpu.memory_space<vmem>>, %arg10: memref<32x128xbf16, #tpu.memory_space<vmem>>, %arg11: memref<1x128xf32, #tpu.memory_space<vmem>>, %arg12: memref<128x32xbf16, #tpu.memory_space<vmem>>, %arg13: memref<1x32xf32, #tpu.memory_space<vmem>>, %arg14: memref<1x64x32xf32, #tpu.memory_space<vmem>>) attributes {dimension_semantics = [#tpu.dimension_semantics<parallel>], iteration_bounds = array<i64: 2>, scalar_prefetch = 0 : i64, scratch_operands = 0 : i64, tpu.core_type = #tpu.core_type<tc>, window_params = [{transform_indices = @transform_0, window_bounds = array<i64: 1, 64, 32>}, {pipeline_mode = #tpu.pipeline_mode<synchronous>, transform_indices = @transform_1, window_bounds = array<i64: 32, 96>}, {pipeline_mode = #tpu.pipeline_mode<synchronous>, transform_indices = @transform_2, window_bounds = array<i64: 1, 96>}, {pipeline_mode = #tpu.pipeline_mode<synchronous>, transform_indices = @transform_3, window_bounds = array<i64: 32, 32>}, {pipeline_mode = #tpu.pipeline_mode<synchronous>, transform_indices = @transform_4, window_bounds = array<i64: 1, 32>}, {transform_indices = @transform_5, window_bounds = array<i64: 4>}, {pipeline_mode = #tpu.pipeline_mode<synchronous>, transform_indices = @transform_6, window_bounds = array<i64: 4, 4, 16, 16>}, {pipeline_mode = #tpu.pipeline_mode<synchronous>, transform_indices = @transform_7, window_bounds = array<i64: 1, 32>}, {pipeline_mode = #tpu.pipeline_mode<synchronous>, transform_indices = @transform_8, window_bounds = array<i64: 1, 32>}, {pipeline_mode = #tpu.pipeline_mode<synchronous>, transform_indices = @transform_9, window_bounds = array<i64: 32, 128>}, {pipeline_mode = #tpu.pipeline_mode<synchronous>, transform_indices = @transform_10, window_bounds = array<i64: 1, 128>}, {pipeline_mode = #tpu.pipeline_mode<synchronous>, transform_indices = @transform_11, window_bounds = array<i64: 128, 32>}, {pipeline_mode = #tpu.pipeline_mode<synchronous>, transform_indices = @transform_12, window_bounds = array<i64: 1, 32>}, {transform_indices = @transform_13, window_bounds = array<i64: 1, 64, 32>}]} {
    %c0 = arith.constant 0 : index
    %c0_0 = arith.constant 0 : index
    %c0_1 = arith.constant 0 : index
    %0 = vector.load %arg1[%c0, %c0_0, %c0_1] : memref<1x64x32xf32, #tpu.memory_space<vmem>>, vector<1x64x32xf32>
    %1 = vector.shape_cast %0 : vector<1x64x32xf32> to vector<64x32xf32>
    %2 = arith.truncf %1 : vector<64x32xf32> to vector<64x32xbf16>
    %c0_2 = arith.constant 0 : index
    %c0_3 = arith.constant 0 : index
    %3 = vector.load %arg8[%c0_2, %c0_3] : memref<1x32xf32, #tpu.memory_space<vmem>>, vector<1x32xf32>
    %c0_4 = arith.constant 0 : index
    %c0_5 = arith.constant 0 : index
    %4 = vector.load %arg9[%c0_4, %c0_5] : memref<1x32xf32, #tpu.memory_space<vmem>>, vector<1x32xf32>
    %c0_6 = arith.constant 0 : index
    %c0_7 = arith.constant 0 : index
    %5 = vector.load %arg2[%c0_6, %c0_7] : memref<32x96xbf16, #tpu.memory_space<vmem>>, vector<32x96xbf16>
    %cst = arith.constant dense<0.000000e+00> : vector<64x96xf32>
    %6 = tpu.matmul %2, %5, %cst {dimension_numbers = #tpu.dot_dimension_numbers<[1], [0], [0], [1], [0, 0, 1, 1], [], []>} : vector<64x32xbf16>, vector<32x96xbf16>, vector<64x96xf32> -> vector<64x96xf32>
    %c0_8 = arith.constant 0 : index
    %c0_9 = arith.constant 0 : index
    %7 = vector.load %arg3[%c0_8, %c0_9] : memref<1x96xf32, #tpu.memory_space<vmem>>, vector<1x96xf32>
    %8 = vector.broadcast %7 : vector<1x96xf32> to vector<64x96xf32>
    %9 = arith.addf %6, %8 : vector<64x96xf32>
    %10 = vector.extract_strided_slice %9 {offsets = [0, 0], sizes = [64, 8], strides = [1, 1]} : vector<64x96xf32> to vector<64x8xf32>
    %11 = vector.shape_cast %10 : vector<64x8xf32> to vector<4x16x8xf32>
    %12 = vector.extract_strided_slice %9 {offsets = [0, 32], sizes = [64, 8], strides = [1, 1]} : vector<64x96xf32> to vector<64x8xf32>
    %13 = vector.shape_cast %12 : vector<64x8xf32> to vector<4x16x8xf32>
    %14 = vector.extract_strided_slice %9 {offsets = [0, 64], sizes = [64, 8], strides = [1, 1]} : vector<64x96xf32> to vector<64x8xf32>
    %15 = vector.shape_cast %14 : vector<64x8xf32> to vector<4x16x8xf32>
    %16 = arith.mulf %11, %11 : vector<4x16x8xf32>
    %cst_10 = arith.constant dense<0.000000e+00> : vector<4x16xf32>
    %17 = vector.multi_reduction <add>, %16, %cst_10 [2] : vector<4x16x8xf32> to vector<4x16xf32>
    %18 = vector.shape_cast %17 : vector<4x16xf32> to vector<4x16x1xf32>
    %cst_11 = arith.constant 9.99999996E-13 : f32
    %19 = vector.broadcast %cst_11 : f32 to vector<4x16x1xf32>
    %20 = arith.addf %18, %19 : vector<4x16x1xf32>
    %21 = math.rsqrt %20 : vector<4x16x1xf32>
    %22 = vector.broadcast %21 : vector<4x16x1xf32> to vector<4x16x8xf32>
    %23 = arith.mulf %11, %22 : vector<4x16x8xf32>
    %24 = arith.mulf %13, %13 : vector<4x16x8xf32>
    %cst_12 = arith.constant dense<0.000000e+00> : vector<4x16xf32>
    %25 = vector.multi_reduction <add>, %24, %cst_12 [2] : vector<4x16x8xf32> to vector<4x16xf32>
    %26 = vector.shape_cast %25 : vector<4x16xf32> to vector<4x16x1xf32>
    %cst_13 = arith.constant 9.99999996E-13 : f32
    %27 = vector.broadcast %cst_13 : f32 to vector<4x16x1xf32>
    %28 = arith.addf %26, %27 : vector<4x16x1xf32>
    %29 = math.rsqrt %28 : vector<4x16x1xf32>
    %30 = vector.broadcast %29 : vector<4x16x1xf32> to vector<4x16x8xf32>
    %31 = arith.mulf %13, %30 : vector<4x16x8xf32>
    %c0_14 = arith.constant 0 : index
    %32 = memref.load %arg6[%c0_14] : memref<4xf32, #tpu.memory_space<smem>>
    %33 = vector.broadcast %32 : f32 to vector<4x16x8xf32>
    %34 = arith.mulf %23, %33 : vector<4x16x8xf32>
    "tpu.trace_start"() <{level = 10 : i32, message = "wqd,wkd->wqk"}> : () -> ()
    %cst_15 = arith.constant dense<0.000000e+00> : vector<4x16x16xf32>
    %35 = tpu.matmul %34, %31, %cst_15 {dimension_numbers = #tpu.dot_dimension_numbers<[2], [2], [1], [1], [0, 0, 0, 1, 1, 1], [0], [0]>} : vector<4x16x8xf32>, vector<4x16x8xf32>, vector<4x16x16xf32> -> vector<4x16x16xf32>
    "tpu.trace_stop"() : () -> ()
    %c0_16 = arith.constant 0 : index
    %c0_17 = arith.constant 0 : index
    %c0_18 = arith.constant 0 : index
    %c0_19 = arith.constant 0 : index
    %36 = vector.load %arg7[%c0_16, %c0_17, %c0_18, %c0_19] : memref<4x4x16x16xf32, #tpu.memory_space<vmem>>, vector<1x4x16x16xf32>
    %37 = vector.shape_cast %36 : vector<1x4x16x16xf32> to vector<4x16x16xf32>
    %38 = arith.addf %35, %37 : vector<4x16x16xf32>
    %cst_20 = arith.constant dense<0xFF800000> : vector<4x16xf32>
    %39 = vector.multi_reduction <maximumf>, %38, %cst_20 [2] : vector<4x16x16xf32> to vector<4x16xf32>
    %40 = vector.shape_cast %39 : vector<4x16xf32> to vector<4x16x1xf32>
    %41 = vector.broadcast %40 : vector<4x16x1xf32> to vector<4x16x16xf32>
    %42 = arith.subf %38, %41 : vector<4x16x16xf32>
    %43 = math.exp %42 : vector<4x16x16xf32>
    %cst_21 = arith.constant dense<0.000000e+00> : vector<4x16xf32>
    %44 = vector.multi_reduction <add>, %43, %cst_21 [2] : vector<4x16x16xf32> to vector<4x16xf32>
    %45 = vector.shape_cast %44 : vector<4x16xf32> to vector<4x16x1xf32>
    %46 = tpu.reciprocal %45 {approx = true} : vector<4x16x1xf32> -> vector<4x16x1xf32>
    %47 = arith.truncf %43 : vector<4x16x16xf32> to vector<4x16x16xbf16>
    %48 = arith.truncf %15 : vector<4x16x8xf32> to vector<4x16x8xbf16>
    "tpu.trace_start"() <{level = 10 : i32, message = "wqk,wkd->wqd"}> : () -> ()
    %cst_22 = arith.constant dense<0.000000e+00> : vector<4x16x8xf32>
    %49 = tpu.matmul %47, %48, %cst_22 {dimension_numbers = #tpu.dot_dimension_numbers<[2], [1], [1], [2], [0, 0, 0, 1, 1, 2], [0], [0]>} : vector<4x16x16xbf16>, vector<4x16x8xbf16>, vector<4x16x8xf32> -> vector<4x16x8xf32>
    "tpu.trace_stop"() : () -> ()
    %50 = vector.broadcast %46 : vector<4x16x1xf32> to vector<4x16x8xf32>
    %51 = arith.mulf %49, %50 : vector<4x16x8xf32>
    %52 = vector.shape_cast %51 : vector<4x16x8xf32> to vector<64x8xf32>
    %53 = vector.extract_strided_slice %9 {offsets = [0, 8], sizes = [64, 8], strides = [1, 1]} : vector<64x96xf32> to vector<64x8xf32>
    %54 = vector.shape_cast %53 : vector<64x8xf32> to vector<4x16x8xf32>
    %55 = vector.extract_strided_slice %9 {offsets = [0, 40], sizes = [64, 8], strides = [1, 1]} : vector<64x96xf32> to vector<64x8xf32>
    %56 = vector.shape_cast %55 : vector<64x8xf32> to vector<4x16x8xf32>
    %57 = vector.extract_strided_slice %9 {offsets = [0, 72], sizes = [64, 8], strides = [1, 1]} : vector<64x96xf32> to vector<64x8xf32>
    %58 = vector.shape_cast %57 : vector<64x8xf32> to vector<4x16x8xf32>
    %59 = arith.mulf %54, %54 : vector<4x16x8xf32>
    %cst_23 = arith.constant dense<0.000000e+00> : vector<4x16xf32>
    %60 = vector.multi_reduction <add>, %59, %cst_23 [2] : vector<4x16x8xf32> to vector<4x16xf32>
    %61 = vector.shape_cast %60 : vector<4x16xf32> to vector<4x16x1xf32>
    %cst_24 = arith.constant 9.99999996E-13 : f32
    %62 = vector.broadcast %cst_24 : f32 to vector<4x16x1xf32>
    %63 = arith.addf %61, %62 : vector<4x16x1xf32>
    %64 = math.rsqrt %63 : vector<4x16x1xf32>
    %65 = vector.broadcast %64 : vector<4x16x1xf32> to vector<4x16x8xf32>
    %66 = arith.mulf %54, %65 : vector<4x16x8xf32>
    %67 = arith.mulf %56, %56 : vector<4x16x8xf32>
    %cst_25 = arith.constant dense<0.000000e+00> : vector<4x16xf32>
    %68 = vector.multi_reduction <add>, %67, %cst_25 [2] : vector<4x16x8xf32> to vector<4x16xf32>
    %69 = vector.shape_cast %68 : vector<4x16xf32> to vector<4x16x1xf32>
    %cst_26 = arith.constant 9.99999996E-13 : f32
    %70 = vector.broadcast %cst_26 : f32 to vector<4x16x1xf32>
    %71 = arith.addf %69, %70 : vector<4x16x1xf32>
    %72 = math.rsqrt %71 : vector<4x16x1xf32>
    %73 = vector.broadcast %72 : vector<4x16x1xf32> to vector<4x16x8xf32>
    %74 = arith.mulf %56, %73 : vector<4x16x8xf32>
    %c1 = arith.constant 1 : index
    %75 = memref.load %arg6[%c1] : memref<4xf32, #tpu.memory_space<smem>>
    %76 = vector.broadcast %75 : f32 to vector<4x16x8xf32>
    %77 = arith.mulf %66, %76 : vector<4x16x8xf32>
    "tpu.trace_start"() <{level = 10 : i32, message = "wqd,wkd->wqk"}> : () -> ()
    %cst_27 = arith.constant dense<0.000000e+00> : vector<4x16x16xf32>
    %78 = tpu.matmul %77, %74, %cst_27 {dimension_numbers = #tpu.dot_dimension_numbers<[2], [2], [1], [1], [0, 0, 0, 1, 1, 1], [0], [0]>} : vector<4x16x8xf32>, vector<4x16x8xf32>, vector<4x16x16xf32> -> vector<4x16x16xf32>
    "tpu.trace_stop"() : () -> ()
    %c1_28 = arith.constant 1 : index
    %c0_29 = arith.constant 0 : index
    %c0_30 = arith.constant 0 : index
    %c0_31 = arith.constant 0 : index
    %79 = vector.load %arg7[%c1_28, %c0_29, %c0_30, %c0_31] : memref<4x4x16x16xf32, #tpu.memory_space<vmem>>, vector<1x4x16x16xf32>
    %80 = vector.shape_cast %79 : vector<1x4x16x16xf32> to vector<4x16x16xf32>
    %81 = arith.addf %78, %80 : vector<4x16x16xf32>
    %cst_32 = arith.constant dense<0xFF800000> : vector<4x16xf32>
    %82 = vector.multi_reduction <maximumf>, %81, %cst_32 [2] : vector<4x16x16xf32> to vector<4x16xf32>
    %83 = vector.shape_cast %82 : vector<4x16xf32> to vector<4x16x1xf32>
    %84 = vector.broadcast %83 : vector<4x16x1xf32> to vector<4x16x16xf32>
    %85 = arith.subf %81, %84 : vector<4x16x16xf32>
    %86 = math.exp %85 : vector<4x16x16xf32>
    %cst_33 = arith.constant dense<0.000000e+00> : vector<4x16xf32>
    %87 = vector.multi_reduction <add>, %86, %cst_33 [2] : vector<4x16x16xf32> to vector<4x16xf32>
    %88 = vector.shape_cast %87 : vector<4x16xf32> to vector<4x16x1xf32>
    %89 = tpu.reciprocal %88 {approx = true} : vector<4x16x1xf32> -> vector<4x16x1xf32>
    %90 = arith.truncf %86 : vector<4x16x16xf32> to vector<4x16x16xbf16>
    %91 = arith.truncf %58 : vector<4x16x8xf32> to vector<4x16x8xbf16>
    "tpu.trace_start"() <{level = 10 : i32, message = "wqk,wkd->wqd"}> : () -> ()
    %cst_34 = arith.constant dense<0.000000e+00> : vector<4x16x8xf32>
    %92 = tpu.matmul %90, %91, %cst_34 {dimension_numbers = #tpu.dot_dimension_numbers<[2], [1], [1], [2], [0, 0, 0, 1, 1, 2], [0], [0]>} : vector<4x16x16xbf16>, vector<4x16x8xbf16>, vector<4x16x8xf32> -> vector<4x16x8xf32>
    "tpu.trace_stop"() : () -> ()
    %93 = vector.broadcast %89 : vector<4x16x1xf32> to vector<4x16x8xf32>
    %94 = arith.mulf %92, %93 : vector<4x16x8xf32>
    %95 = vector.shape_cast %94 : vector<4x16x8xf32> to vector<64x8xf32>
    %96 = vector.extract_strided_slice %9 {offsets = [0, 16], sizes = [64, 8], strides = [1, 1]} : vector<64x96xf32> to vector<64x8xf32>
    %97 = vector.shape_cast %96 : vector<64x8xf32> to vector<4x16x8xf32>
    %98 = vector.extract_strided_slice %9 {offsets = [0, 48], sizes = [64, 8], strides = [1, 1]} : vector<64x96xf32> to vector<64x8xf32>
    %99 = vector.shape_cast %98 : vector<64x8xf32> to vector<4x16x8xf32>
    %100 = vector.extract_strided_slice %9 {offsets = [0, 80], sizes = [64, 8], strides = [1, 1]} : vector<64x96xf32> to vector<64x8xf32>
    %101 = vector.shape_cast %100 : vector<64x8xf32> to vector<4x16x8xf32>
    %102 = arith.mulf %97, %97 : vector<4x16x8xf32>
    %cst_35 = arith.constant dense<0.000000e+00> : vector<4x16xf32>
    %103 = vector.multi_reduction <add>, %102, %cst_35 [2] : vector<4x16x8xf32> to vector<4x16xf32>
    %104 = vector.shape_cast %103 : vector<4x16xf32> to vector<4x16x1xf32>
    %cst_36 = arith.constant 9.99999996E-13 : f32
    %105 = vector.broadcast %cst_36 : f32 to vector<4x16x1xf32>
    %106 = arith.addf %104, %105 : vector<4x16x1xf32>
    %107 = math.rsqrt %106 : vector<4x16x1xf32>
    %108 = vector.broadcast %107 : vector<4x16x1xf32> to vector<4x16x8xf32>
    %109 = arith.mulf %97, %108 : vector<4x16x8xf32>
    %110 = arith.mulf %99, %99 : vector<4x16x8xf32>
    %cst_37 = arith.constant dense<0.000000e+00> : vector<4x16xf32>
    %111 = vector.multi_reduction <add>, %110, %cst_37 [2] : vector<4x16x8xf32> to vector<4x16xf32>
    %112 = vector.shape_cast %111 : vector<4x16xf32> to vector<4x16x1xf32>
    %cst_38 = arith.constant 9.99999996E-13 : f32
    %113 = vector.broadcast %cst_38 : f32 to vector<4x16x1xf32>
    %114 = arith.addf %112, %113 : vector<4x16x1xf32>
    %115 = math.rsqrt %114 : vector<4x16x1xf32>
    %116 = vector.broadcast %115 : vector<4x16x1xf32> to vector<4x16x8xf32>
    %117 = arith.mulf %99, %116 : vector<4x16x8xf32>
    %c2 = arith.constant 2 : index
    %118 = memref.load %arg6[%c2] : memref<4xf32, #tpu.memory_space<smem>>
    %119 = vector.broadcast %118 : f32 to vector<4x16x8xf32>
    %120 = arith.mulf %109, %119 : vector<4x16x8xf32>
    "tpu.trace_start"() <{level = 10 : i32, message = "wqd,wkd->wqk"}> : () -> ()
    %cst_39 = arith.constant dense<0.000000e+00> : vector<4x16x16xf32>
    %121 = tpu.matmul %120, %117, %cst_39 {dimension_numbers = #tpu.dot_dimension_numbers<[2], [2], [1], [1], [0, 0, 0, 1, 1, 1], [0], [0]>} : vector<4x16x8xf32>, vector<4x16x8xf32>, vector<4x16x16xf32> -> vector<4x16x16xf32>
    "tpu.trace_stop"() : () -> ()
    %c2_40 = arith.constant 2 : index
    %c0_41 = arith.constant 0 : index
    %c0_42 = arith.constant 0 : index
    %c0_43 = arith.constant 0 : index
    %122 = vector.load %arg7[%c2_40, %c0_41, %c0_42, %c0_43] : memref<4x4x16x16xf32, #tpu.memory_space<vmem>>, vector<1x4x16x16xf32>
    %123 = vector.shape_cast %122 : vector<1x4x16x16xf32> to vector<4x16x16xf32>
    %124 = arith.addf %121, %123 : vector<4x16x16xf32>
    %cst_44 = arith.constant dense<0xFF800000> : vector<4x16xf32>
    %125 = vector.multi_reduction <maximumf>, %124, %cst_44 [2] : vector<4x16x16xf32> to vector<4x16xf32>
    %126 = vector.shape_cast %125 : vector<4x16xf32> to vector<4x16x1xf32>
    %127 = vector.broadcast %126 : vector<4x16x1xf32> to vector<4x16x16xf32>
    %128 = arith.subf %124, %127 : vector<4x16x16xf32>
    %129 = math.exp %128 : vector<4x16x16xf32>
    %cst_45 = arith.constant dense<0.000000e+00> : vector<4x16xf32>
    %130 = vector.multi_reduction <add>, %129, %cst_45 [2] : vector<4x16x16xf32> to vector<4x16xf32>
    %131 = vector.shape_cast %130 : vector<4x16xf32> to vector<4x16x1xf32>
    %132 = tpu.reciprocal %131 {approx = true} : vector<4x16x1xf32> -> vector<4x16x1xf32>
    %133 = arith.truncf %129 : vector<4x16x16xf32> to vector<4x16x16xbf16>
    %134 = arith.truncf %101 : vector<4x16x8xf32> to vector<4x16x8xbf16>
    "tpu.trace_start"() <{level = 10 : i32, message = "wqk,wkd->wqd"}> : () -> ()
    %cst_46 = arith.constant dense<0.000000e+00> : vector<4x16x8xf32>
    %135 = tpu.matmul %133, %134, %cst_46 {dimension_numbers = #tpu.dot_dimension_numbers<[2], [1], [1], [2], [0, 0, 0, 1, 1, 2], [0], [0]>} : vector<4x16x16xbf16>, vector<4x16x8xbf16>, vector<4x16x8xf32> -> vector<4x16x8xf32>
    "tpu.trace_stop"() : () -> ()
    %136 = vector.broadcast %132 : vector<4x16x1xf32> to vector<4x16x8xf32>
    %137 = arith.mulf %135, %136 : vector<4x16x8xf32>
    %138 = vector.shape_cast %137 : vector<4x16x8xf32> to vector<64x8xf32>
    %139 = vector.extract_strided_slice %9 {offsets = [0, 24], sizes = [64, 8], strides = [1, 1]} : vector<64x96xf32> to vector<64x8xf32>
    %140 = vector.shape_cast %139 : vector<64x8xf32> to vector<4x16x8xf32>
    %141 = vector.extract_strided_slice %9 {offsets = [0, 56], sizes = [64, 8], strides = [1, 1]} : vector<64x96xf32> to vector<64x8xf32>
    %142 = vector.shape_cast %141 : vector<64x8xf32> to vector<4x16x8xf32>
    %143 = vector.extract_strided_slice %9 {offsets = [0, 88], sizes = [64, 8], strides = [1, 1]} : vector<64x96xf32> to vector<64x8xf32>
    %144 = vector.shape_cast %143 : vector<64x8xf32> to vector<4x16x8xf32>
    %145 = arith.mulf %140, %140 : vector<4x16x8xf32>
    %cst_47 = arith.constant dense<0.000000e+00> : vector<4x16xf32>
    %146 = vector.multi_reduction <add>, %145, %cst_47 [2] : vector<4x16x8xf32> to vector<4x16xf32>
    %147 = vector.shape_cast %146 : vector<4x16xf32> to vector<4x16x1xf32>
    %cst_48 = arith.constant 9.99999996E-13 : f32
    %148 = vector.broadcast %cst_48 : f32 to vector<4x16x1xf32>
    %149 = arith.addf %147, %148 : vector<4x16x1xf32>
    %150 = math.rsqrt %149 : vector<4x16x1xf32>
    %151 = vector.broadcast %150 : vector<4x16x1xf32> to vector<4x16x8xf32>
    %152 = arith.mulf %140, %151 : vector<4x16x8xf32>
    %153 = arith.mulf %142, %142 : vector<4x16x8xf32>
    %cst_49 = arith.constant dense<0.000000e+00> : vector<4x16xf32>
    %154 = vector.multi_reduction <add>, %153, %cst_49 [2] : vector<4x16x8xf32> to vector<4x16xf32>
    %155 = vector.shape_cast %154 : vector<4x16xf32> to vector<4x16x1xf32>
    %cst_50 = arith.constant 9.99999996E-13 : f32
    %156 = vector.broadcast %cst_50 : f32 to vector<4x16x1xf32>
    %157 = arith.addf %155, %156 : vector<4x16x1xf32>
    %158 = math.rsqrt %157 : vector<4x16x1xf32>
    %159 = vector.broadcast %158 : vector<4x16x1xf32> to vector<4x16x8xf32>
    %160 = arith.mulf %142, %159 : vector<4x16x8xf32>
    %c3 = arith.constant 3 : index
    %161 = memref.load %arg6[%c3] : memref<4xf32, #tpu.memory_space<smem>>
    %162 = vector.broadcast %161 : f32 to vector<4x16x8xf32>
    %163 = arith.mulf %152, %162 : vector<4x16x8xf32>
    "tpu.trace_start"() <{level = 10 : i32, message = "wqd,wkd->wqk"}> : () -> ()
    %cst_51 = arith.constant dense<0.000000e+00> : vector<4x16x16xf32>
    %164 = tpu.matmul %163, %160, %cst_51 {dimension_numbers = #tpu.dot_dimension_numbers<[2], [2], [1], [1], [0, 0, 0, 1, 1, 1], [0], [0]>} : vector<4x16x8xf32>, vector<4x16x8xf32>, vector<4x16x16xf32> -> vector<4x16x16xf32>
    "tpu.trace_stop"() : () -> ()
    %c3_52 = arith.constant 3 : index
    %c0_53 = arith.constant 0 : index
    %c0_54 = arith.constant 0 : index
    %c0_55 = arith.constant 0 : index
    %165 = vector.load %arg7[%c3_52, %c0_53, %c0_54, %c0_55] : memref<4x4x16x16xf32, #tpu.memory_space<vmem>>, vector<1x4x16x16xf32>
    %166 = vector.shape_cast %165 : vector<1x4x16x16xf32> to vector<4x16x16xf32>
    %167 = arith.addf %164, %166 : vector<4x16x16xf32>
    %cst_56 = arith.constant dense<0xFF800000> : vector<4x16xf32>
    %168 = vector.multi_reduction <maximumf>, %167, %cst_56 [2] : vector<4x16x16xf32> to vector<4x16xf32>
    %169 = vector.shape_cast %168 : vector<4x16xf32> to vector<4x16x1xf32>
    %170 = vector.broadcast %169 : vector<4x16x1xf32> to vector<4x16x16xf32>
    %171 = arith.subf %167, %170 : vector<4x16x16xf32>
    %172 = math.exp %171 : vector<4x16x16xf32>
    %cst_57 = arith.constant dense<0.000000e+00> : vector<4x16xf32>
    %173 = vector.multi_reduction <add>, %172, %cst_57 [2] : vector<4x16x16xf32> to vector<4x16xf32>
    %174 = vector.shape_cast %173 : vector<4x16xf32> to vector<4x16x1xf32>
    %175 = tpu.reciprocal %174 {approx = true} : vector<4x16x1xf32> -> vector<4x16x1xf32>
    %176 = arith.truncf %172 : vector<4x16x16xf32> to vector<4x16x16xbf16>
    %177 = arith.truncf %144 : vector<4x16x8xf32> to vector<4x16x8xbf16>
    "tpu.trace_start"() <{level = 10 : i32, message = "wqk,wkd->wqd"}> : () -> ()
    %cst_58 = arith.constant dense<0.000000e+00> : vector<4x16x8xf32>
    %178 = tpu.matmul %176, %177, %cst_58 {dimension_numbers = #tpu.dot_dimension_numbers<[2], [1], [1], [2], [0, 0, 0, 1, 1, 2], [0], [0]>} : vector<4x16x16xbf16>, vector<4x16x8xbf16>, vector<4x16x8xf32> -> vector<4x16x8xf32>
    "tpu.trace_stop"() : () -> ()
    %179 = vector.broadcast %175 : vector<4x16x1xf32> to vector<4x16x8xf32>
    %180 = arith.mulf %178, %179 : vector<4x16x8xf32>
    %181 = vector.shape_cast %180 : vector<4x16x8xf32> to vector<64x8xf32>
    %182 = tpu.concatenate %52, %95, %138, %181 in 1 : vector<64x8xf32>, vector<64x8xf32>, vector<64x8xf32>, vector<64x8xf32> -> vector<64x32xf32>
    %183 = arith.truncf %182 : vector<64x32xf32> to vector<64x32xbf16>
    %c0_59 = arith.constant 0 : index
    %c0_60 = arith.constant 0 : index
    %184 = vector.load %arg4[%c0_59, %c0_60] : memref<32x32xbf16, #tpu.memory_space<vmem>>, vector<32x32xbf16>
    %cst_61 = arith.constant dense<0.000000e+00> : vector<64x32xf32>
    %185 = tpu.matmul %183, %184, %cst_61 {dimension_numbers = #tpu.dot_dimension_numbers<[1], [0], [0], [1], [0, 0, 1, 1], [], []>} : vector<64x32xbf16>, vector<32x32xbf16>, vector<64x32xf32> -> vector<64x32xf32>
    %c0_62 = arith.constant 0 : index
    %c0_63 = arith.constant 0 : index
    %186 = vector.load %arg5[%c0_62, %c0_63] : memref<1x32xf32, #tpu.memory_space<vmem>>, vector<1x32xf32>
    %187 = vector.broadcast %186 : vector<1x32xf32> to vector<64x32xf32>
    %188 = arith.addf %185, %187 : vector<64x32xf32>
    %cst_64 = arith.constant dense<0.000000e+00> : vector<64xf32>
    %189 = vector.multi_reduction <add>, %188, %cst_64 [1] : vector<64x32xf32> to vector<64xf32>
    %190 = vector.shape_cast %189 : vector<64xf32> to vector<64x1xf32>
    %cst_65 = arith.constant 3.200000e+01 : f32
    %191 = vector.broadcast %cst_65 : f32 to vector<64x1xf32>
    %192 = arith.divf %190, %191 : vector<64x1xf32>
    %193 = vector.broadcast %192 : vector<64x1xf32> to vector<64x32xf32>
    %194 = arith.subf %188, %193 : vector<64x32xf32>
    %195 = arith.mulf %194, %194 : vector<64x32xf32>
    %cst_66 = arith.constant dense<0.000000e+00> : vector<64xf32>
    %196 = vector.multi_reduction <add>, %195, %cst_66 [1] : vector<64x32xf32> to vector<64xf32>
    %197 = vector.shape_cast %196 : vector<64xf32> to vector<64x1xf32>
    %cst_67 = arith.constant 3.200000e+01 : f32
    %198 = vector.broadcast %cst_67 : f32 to vector<64x1xf32>
    %199 = arith.divf %197, %198 : vector<64x1xf32>
    %200 = vector.broadcast %192 : vector<64x1xf32> to vector<64x32xf32>
    %201 = arith.subf %188, %200 : vector<64x32xf32>
    %cst_68 = arith.constant 9.99999974E-6 : f32
    %202 = vector.broadcast %cst_68 : f32 to vector<64x1xf32>
    %203 = arith.addf %199, %202 : vector<64x1xf32>
    %204 = math.rsqrt %203 : vector<64x1xf32>
    %205 = vector.broadcast %204 : vector<64x1xf32> to vector<64x32xf32>
    %206 = arith.mulf %201, %205 : vector<64x32xf32>
    %207 = vector.broadcast %3 : vector<1x32xf32> to vector<64x32xf32>
    %208 = arith.mulf %206, %207 : vector<64x32xf32>
    %209 = vector.broadcast %4 : vector<1x32xf32> to vector<64x32xf32>
    %210 = arith.addf %208, %209 : vector<64x32xf32>
    %211 = arith.addf %1, %210 : vector<64x32xf32>
    %212 = arith.truncf %211 : vector<64x32xf32> to vector<64x32xbf16>
    %c0_69 = arith.constant 0 : index
    %c0_70 = arith.constant 0 : index
    %213 = vector.load %arg10[%c0_69, %c0_70] : memref<32x128xbf16, #tpu.memory_space<vmem>>, vector<32x128xbf16>
    %cst_71 = arith.constant dense<0.000000e+00> : vector<64x128xf32>
    %214 = tpu.matmul %212, %213, %cst_71 {dimension_numbers = #tpu.dot_dimension_numbers<[1], [0], [0], [1], [0, 0, 1, 1], [], []>} : vector<64x32xbf16>, vector<32x128xbf16>, vector<64x128xf32> -> vector<64x128xf32>
    %c0_72 = arith.constant 0 : index
    %c0_73 = arith.constant 0 : index
    %215 = vector.load %arg11[%c0_72, %c0_73] : memref<1x128xf32, #tpu.memory_space<vmem>>, vector<1x128xf32>
    %216 = vector.broadcast %215 : vector<1x128xf32> to vector<64x128xf32>
    %217 = arith.addf %214, %216 : vector<64x128xf32>
    %218 = arith.mulf %217, %217 : vector<64x128xf32>
    %219 = arith.mulf %217, %218 : vector<64x128xf32>
    %cst_74 = arith.constant 4.471500e-02 : f32
    %220 = vector.broadcast %cst_74 : f32 to vector<64x128xf32>
    %221 = arith.mulf %220, %219 : vector<64x128xf32>
    %222 = arith.addf %217, %221 : vector<64x128xf32>
    %cst_75 = arith.constant 0.797884583 : f32
    %223 = vector.broadcast %cst_75 : f32 to vector<64x128xf32>
    %224 = arith.mulf %223, %222 : vector<64x128xf32>
    %225 = math.tanh %224 : vector<64x128xf32>
    %cst_76 = arith.constant 1.000000e+00 : f32
    %226 = vector.broadcast %cst_76 : f32 to vector<64x128xf32>
    %227 = arith.addf %226, %225 : vector<64x128xf32>
    %cst_77 = arith.constant 5.000000e-01 : f32
    %228 = vector.broadcast %cst_77 : f32 to vector<64x128xf32>
    %229 = arith.mulf %228, %227 : vector<64x128xf32>
    %230 = arith.mulf %217, %229 : vector<64x128xf32>
    %231 = arith.truncf %230 : vector<64x128xf32> to vector<64x128xbf16>
    %c0_78 = arith.constant 0 : index
    %c0_79 = arith.constant 0 : index
    %232 = vector.load %arg12[%c0_78, %c0_79] : memref<128x32xbf16, #tpu.memory_space<vmem>>, vector<128x32xbf16>
    %cst_80 = arith.constant dense<0.000000e+00> : vector<64x32xf32>
    %233 = tpu.matmul %231, %232, %cst_80 {dimension_numbers = #tpu.dot_dimension_numbers<[1], [0], [0], [1], [0, 0, 1, 1], [], []>} : vector<64x128xbf16>, vector<128x32xbf16>, vector<64x32xf32> -> vector<64x32xf32>
    %c0_81 = arith.constant 0 : index
    %c0_82 = arith.constant 0 : index
    %234 = vector.load %arg13[%c0_81, %c0_82] : memref<1x32xf32, #tpu.memory_space<vmem>>, vector<1x32xf32>
    %235 = vector.broadcast %234 : vector<1x32xf32> to vector<64x32xf32>
    %236 = arith.addf %233, %235 : vector<64x32xf32>
    %cst_83 = arith.constant dense<0.000000e+00> : vector<64xf32>
    %237 = vector.multi_reduction <add>, %236, %cst_83 [1] : vector<64x32xf32> to vector<64xf32>
    %238 = vector.shape_cast %237 : vector<64xf32> to vector<64x1xf32>
    %cst_84 = arith.constant 3.200000e+01 : f32
    %239 = vector.broadcast %cst_84 : f32 to vector<64x1xf32>
    %240 = arith.divf %238, %239 : vector<64x1xf32>
    %241 = vector.broadcast %240 : vector<64x1xf32> to vector<64x32xf32>
    %242 = arith.subf %236, %241 : vector<64x32xf32>
    %243 = arith.mulf %242, %242 : vector<64x32xf32>
    %cst_85 = arith.constant dense<0.000000e+00> : vector<64xf32>
    %244 = vector.multi_reduction <add>, %243, %cst_85 [1] : vector<64x32xf32> to vector<64xf32>
    %245 = vector.shape_cast %244 : vector<64xf32> to vector<64x1xf32>
    %cst_86 = arith.constant 3.200000e+01 : f32
    %246 = vector.broadcast %cst_86 : f32 to vector<64x1xf32>
    %247 = arith.divf %245, %246 : vector<64x1xf32>
    %248 = vector.broadcast %240 : vector<64x1xf32> to vector<64x32xf32>
    %249 = arith.subf %236, %248 : vector<64x32xf32>
    %cst_87 = arith.constant 9.99999974E-6 : f32
    %250 = vector.broadcast %cst_87 : f32 to vector<64x1xf32>
    %251 = arith.addf %247, %250 : vector<64x1xf32>
    %252 = math.rsqrt %251 : vector<64x1xf32>
    %253 = vector.broadcast %252 : vector<64x1xf32> to vector<64x32xf32>
    %254 = arith.mulf %249, %253 : vector<64x32xf32>
    %255 = vector.broadcast %3 : vector<1x32xf32> to vector<64x32xf32>
    %256 = arith.mulf %254, %255 : vector<64x32xf32>
    %257 = vector.broadcast %4 : vector<1x32xf32> to vector<64x32xf32>
    %258 = arith.addf %256, %257 : vector<64x32xf32>
    %259 = arith.addf %211, %258 : vector<64x32xf32>
    %c0_88 = arith.constant 0 : index
    %c0_89 = arith.constant 0 : index
    %c0_90 = arith.constant 0 : index
    %260 = vector.load %arg14[%c0_88, %c0_89, %c0_90] : memref<1x64x32xf32, #tpu.memory_space<vmem>>, vector<1x64x32xf32>
    %261 = vector.shape_cast %260 : vector<1x64x32xf32> to vector<64x32xf32>
    %262 = vector.shape_cast %259 : vector<64x32xf32> to vector<1x64x32xf32>
    tpu.vector_store %arg14[%c0_88, %c0_89, %c0_90], %262 {strides = array<i32>} : memref<1x64x32xf32, #tpu.memory_space<vmem>>, vector<1x64x32xf32>,
    return
  }
  func.func @transform_0(%arg0: i32) -> (i32, i32, i32) {
    %c0_i32 = arith.constant 0 : i32
    %c0_i32_0 = arith.constant 0 : i32
    %c0_i32_1 = arith.constant 0 : i32
    return %arg0, %c0_i32, %c0_i32_0 : i32, i32, i32
  }
  func.func @transform_1(%arg0: i32) -> (i32, i32) {
    %c0_i32 = arith.constant 0 : i32
    %c0_i32_0 = arith.constant 0 : i32
    %c0_i32_1 = arith.constant 0 : i32
    return %c0_i32, %c0_i32_0 : i32, i32
  }
  func.func @transform_2(%arg0: i32) -> (i32, i32) {
    %c0_i32 = arith.constant 0 : i32
    %c0_i32_0 = arith.constant 0 : i32
    %c0_i32_1 = arith.constant 0 : i32
    return %c0_i32, %c0_i32_0 : i32, i32
  }
  func.func @transform_3(%arg0: i32) -> (i32, i32) {
    %c0_i32 = arith.constant 0 : i32
    %c0_i32_0 = arith.constant 0 : i32
    %c0_i32_1 = arith.constant 0 : i32
    return %c0_i32, %c0_i32_0 : i32, i32
  }
  func.func @transform_4(%arg0: i32) -> (i32, i32) {
    %c0_i32 = arith.constant 0 : i32
    %c0_i32_0 = arith.constant 0 : i32
    %c0_i32_1 = arith.constant 0 : i32
    return %c0_i32, %c0_i32_0 : i32, i32
  }
  func.func @transform_5(%arg0: i32) -> i32 {
    %c0_i32 = arith.constant 0 : i32
    %c0_i32_0 = arith.constant 0 : i32
    return %c0_i32 : i32
  }
  func.func @transform_6(%arg0: i32) -> (i32, i32, i32, i32) {
    %c0_i32 = arith.constant 0 : i32
    %c0_i32_0 = arith.constant 0 : i32
    %c0_i32_1 = arith.constant 0 : i32
    %c0_i32_2 = arith.constant 0 : i32
    %c0_i32_3 = arith.constant 0 : i32
    return %c0_i32, %c0_i32_0, %c0_i32_1, %c0_i32_2 : i32, i32, i32, i32
  }
  func.func @transform_7(%arg0: i32) -> (i32, i32) {
    %c0_i32 = arith.constant 0 : i32
    %c0_i32_0 = arith.constant 0 : i32
    %c0_i32_1 = arith.constant 0 : i32
    return %c0_i32, %c0_i32_0 : i32, i32
  }
  func.func @transform_8(%arg0: i32) -> (i32, i32) {
    %c0_i32 = arith.constant 0 : i32
    %c0_i32_0 = arith.constant 0 : i32
    %c0_i32_1 = arith.constant 0 : i32
    return %c0_i32, %c0_i32_0 : i32, i32
  }
  func.func @transform_9(%arg0: i32) -> (i32, i32) {
    %c0_i32 = arith.constant 0 : i32
    %c0_i32_0 = arith.constant 0 : i32
    %c0_i32_1 = arith.constant 0 : i32
    return %c0_i32, %c0_i32_0 : i32, i32
  }
  func.func @transform_10(%arg0: i32) -> (i32, i32) {
    %c0_i32 = arith.constant 0 : i32
    %c0_i32_0 = arith.constant 0 : i32
    %c0_i32_1 = arith.constant 0 : i32
    return %c0_i32, %c0_i32_0 : i32, i32
  }
  func.func @transform_11(%arg0: i32) -> (i32, i32) {
    %c0_i32 = arith.constant 0 : i32
    %c0_i32_0 = arith.constant 0 : i32
    %c0_i32_1 = arith.constant 0 : i32
    return %c0_i32, %c0_i32_0 : i32, i32
  }
  func.func @transform_12(%arg0: i32) -> (i32, i32) {
    %c0_i32 = arith.constant 0 : i32
    %c0_i32_0 = arith.constant 0 : i32
    %c0_i32_1 = arith.constant 0 : i32
    return %c0_i32, %c0_i32_0 : i32, i32
  }
  func.func @transform_13(%arg0: i32) -> (i32, i32, i32) {
    %c0_i32 = arith.constant 0 : i32
    %c0_i32_0 = arith.constant 0 : i32
    %c0_i32_1 = arith.constant 0 : i32
    return %arg0, %c0_i32, %c0_i32_0 : i32, i32, i32
  }
}

</mosaic_0001>

<llo_original>
// kernel: swin_connect_encoder_forward.2
$region0: #{swin_connect_encoder_forward.2}
  #allocation0 [shape = 'u32[]', space=smem, size = 0x4, offset = 0x4, fixed_abs, tag = 'smem constant byte address 0x4 - core index']
  #allocation1 [shape = 'u32[72,128]{1,0:T(1,128)}', space=vmem, size = 0x9000, scoped, tag = 'internal scratch']
  %s0 = inlined_call_operand.vmem [shape: f32[2,64,32], index: 0, kind: input, shape index: {}]
  %s1 = inlined_call_operand.vmem [shape: bf16[32,96], index: 1, kind: input, shape index: {}]
  %s2 = inlined_call_operand.vmem [shape: f32[1,96], index: 2, kind: input, shape index: {}]
  %s3 = inlined_call_operand.vmem [shape: bf16[32,32], index: 3, kind: input, shape index: {}]
  %s4 = inlined_call_operand.vmem [shape: f32[1,32], index: 4, kind: input, shape index: {}]
  %s5 = inlined_call_operand.vmem [shape: f32[4], index: 5, kind: input, shape index: {}]
  %s6 = inlined_call_operand.vmem [shape: f32[4,1,16,16], index: 6, kind: input, shape index: {}]
  %s7 = inlined_call_operand.vmem [shape: f32[1,32], index: 7, kind: input, shape index: {}]
  %s8 = inlined_call_operand.vmem [shape: f32[1,32], index: 8, kind: input, shape index: {}]
  %s9 = inlined_call_operand.vmem [shape: bf16[32,128], index: 9, kind: input, shape index: {}]
  %s10 = inlined_call_operand.vmem [shape: f32[1,128], index: 10, kind: input, shape index: {}]
  %s11 = inlined_call_operand.vmem [shape: bf16[128,32], index: 11, kind: input, shape index: {}]
  %s12 = inlined_call_operand.vmem [shape: f32[1,32], index: 12, kind: input, shape index: {}]
  %s13 = inlined_call_operand.vmem [shape: f32[2,64,32], index: 13, kind: output, shape index: {}]
  %s14 = sld [smem:[#allocation0]]
  $region89: #{swin_connect_encoder_forward.2} parent=0
    _
  %s16 = ssub.s32 1, %s14
  %s17 = scalar_select 0, %s16, %s14
  $region1: #{swin_connect_encoder_forward.2} parent=0
    #allocation2 [shape = 'u8[512]{0}', space=smem, size = 0x200, scoped, tag = 'input window, operand 5, single buffered']
    #allocation3 [shape = 's32[2]{0}', space=sflag, size = 0x8, scoped, tag = 'scoped memory for swin_connect_encoder_forward.2']
    %18 = vsyncpa [#allocation3], 0
    loop: start=0, step=1, limit=4
    $region2: #{swin_connect_encoder_forward.2} parent=1 // loop_pre_header
      _
    $region3: #{swin_connect_encoder_forward.2} parent=1 // loop_header
      %s20 = sphi 0, %s24
      %p21 = scmp.ge.s32.totalorder %s20, 4
      %s30 = sphi 0, %s32
      %s33 = sphi 0, %s30
      %s34 = sphi 0, %s33
      %s50 = sphi 0, %s34
      %s54 = sphi 0, %s54
      %s56 = sphi 0, %s54
      %s57 = sphi 0, %s56
      %s71 = sphi 0, %s57
      %s75 = sphi 0, %s75
      %s77 = sphi 0, %s75
      %s78 = sphi 0, %s77
      %s92 = sphi 0, %s78
      %s96 = sphi 0, %s96
      %s98 = sphi 0, %s96
      %s99 = sphi 0, %s98
      %s113 = sphi 0, %s99
      %s117 = sphi 0, %s117
      %s119 = sphi 0, %s117
      %s120 = sphi 0, %s119
      %s134 = sphi 0, %s120
      %s138 = sphi 0, %s138
      %s140 = sphi 0, %s138
      %s141 = sphi 0, %s140
      %s155 = sphi 0, %s141
      %s159 = sphi 0, %s159
      %s161 = sphi 0, %s159
      %s162 = sphi 0, %s161
      %s176 = sphi 0, %s162
      %s180 = sphi 0, %s180
      %s182 = sphi 0, %s180
      %s183 = sphi 0, %s182
      %s197 = sphi 0, %s183
      %s201 = sphi 0, %s201
      %s203 = sphi 0, %s201
      %s204 = sphi 0, %s203
      %s218 = sphi 0, %s204
      %s222 = sphi 0, %s222
      %s224 = sphi 0, %s222
      %s225 = sphi 0, %s224
      %s239 = sphi 0, %s225
      %s243 = sphi 0, %s243
      %s245 = sphi 0, %s243
      %s246 = sphi 0, %s245
      %s260 = sphi 0, %s246
      %s264 = sphi 0, %s264
      %s266 = sphi 0, %s264
      %s267 = sphi 0, %s266
      %s281 = sphi 0, %s267
      %s285 = sphi 0, %s285
      %s287 = sphi 0, %s285
      %s288 = sphi 0, %s287
      %s302 = sphi 0, %s288
      %s308 = sphi 0, %s310
      %s311 = sphi 0, %s308
      %s312 = sphi 0, %s311
      %s328 = sphi 0, %s312
    $region4: #{swin_connect_encoder_forward.2} parent=1 // loop_header_branch
      %23 = sbr.rel (%p21) target = $region8
    $region5: #{swin_connect_encoder_forward.2} parent=1 // loop_body
      %s25 = ssub.s32 %s20, 1
      %s26 = ssub.s32 %s20, 2
      %s27 = sadd.s32 %s20, 1
      %s28 = ssub.s32 %s20, %s27
      %p29 = scmp.eq.s32.totalorder %s28, 0
      %s31 = sadd.s32 %s30, 1
      %s32 = scalar_select %p29, %s30, %s31
      %p35 = pneg %p29
      %p36 = scmp.eq.s32.totalorder %s20, 1
      %p37 = por %p35, %p36
      %p38 = scmp.ne.s32.totalorder %s30, %s33
      %p39 = scmp.eq.s32.totalorder %s20, 0
      %p40 = por %p38, %p39
      %p41 = scmp.ne.s32.totalorder %s30, %s33
      %p42 = scmp.eq.s32.totalorder %s25, 1
      %p43 = por %p41, %p42
      %p44 = scmp.ne.s32.totalorder %s33, %s34
      %p45 = scmp.eq.s32.totalorder %s25, 0
      %p46 = por %p44, %p45
      %p47 = scmp.ne.s32.totalorder %s33, %s34
      %p48 = scmp.eq.s32.totalorder %s26, 1
      %p49 = por %p47, %p48
      %p51 = scmp.ne.s32.totalorder %s34, %s50
      %p52 = scmp.eq.s32.totalorder %s26, 0
      %p53 = por %p51, %p52
      %s55 = sadd.s32 %s54, 1
      %p58 = scmp.eq.s32.totalorder %s20, 1
      %p59 = scmp.ne.s32.totalorder %s54, %s56
      %p60 = scmp.eq.s32.totalorder %s20, 0
      %p61 = por %p59, %p60
      %p62 = scmp.ne.s32.totalorder %s54, %s56
      %p63 = scmp.eq.s32.totalorder %s25, 1
      %p64 = por %p62, %p63
      %p65 = scmp.ne.s32.totalorder %s56, %s57
      %p66 = scmp.eq.s32.totalorder %s25, 0
      %p67 = por %p65, %p66
      %p68 = scmp.ne.s32.totalorder %s56, %s57
      %p69 = scmp.eq.s32.totalorder %s26, 1
      %p70 = por %p68, %p69
      %p72 = scmp.ne.s32.totalorder %s57, %s71
      %p73 = scmp.eq.s32.totalorder %s26, 0
      %p74 = por %p72, %p73
      %s76 = sadd.s32 %s75, 1
      %p79 = scmp.eq.s32.totalorder %s20, 1
      %p80 = scmp.ne.s32.totalorder %s75, %s77
      %p81 = scmp.eq.s32.totalorder %s20, 0
      %p82 = por %p80, %p81
      %p83 = scmp.ne.s32.totalorder %s75, %s77
      %p84 = scmp.eq.s32.totalorder %s25, 1
      %p85 = por %p83, %p84
      %p86 = scmp.ne.s32.totalorder %s77, %s78
      %p87 = scmp.eq.s32.totalorder %s25, 0
      %p88 = por %p86, %p87
      %p89 = scmp.ne.s32.totalorder %s77, %s78
      %p90 = scmp.eq.s32.totalorder %s26, 1
      %p91 = por %p89, %p90
      %p93 = scmp.ne.s32.totalorder %s78, %s92
      %p94 = scmp.eq.s32.totalorder %s26, 0
      %p95 = por %p93, %p94
      %s97 = sadd.s32 %s96, 1
      %p100 = scmp.eq.s32.totalorder %s20, 1
      %p101 = scmp.ne.s32.totalorder %s96, %s98
      %p102 = scmp.eq.s32.totalorder %s20, 0
      %p103 = por %p101, %p102
      %p104 = scmp.ne.s32.totalorder %s96, %s98
      %p105 = scmp.eq.s32.totalorder %s25, 1
      %p106 = por %p104, %p105
      %p107 = scmp.ne.s32.totalorder %s98, %s99
      %p108 = scmp.eq.s32.totalorder %s25, 0
      %p109 = por %p107, %p108
      %p110 = scmp.ne.s32.totalorder %s98, %s99
      %p111 = scmp.eq.s32.totalorder %s26, 1
      %p112 = por %p110, %p111
      %p114 = scmp.ne.s32.totalorder %s99, %s113
      %p115 = scmp.eq.s32.totalorder %s26, 0
      %p116 = por %p114, %p115
      %s118 = sadd.s32 %s117, 1
      %p121 = scmp.eq.s32.totalorder %s20, 1
      %p122 = scmp.ne.s32.totalorder %s117, %s119
      %p123 = scmp.eq.s32.totalorder %s20, 0
      %p124 = por %p122, %p123
      %p125 = scmp.ne.s32.totalorder %s117, %s119
      %p126 = scmp.eq.s32.totalorder %s25, 1
      %p127 = por %p125, %p126
      %p128 = scmp.ne.s32.totalorder %s119, %s120
      %p129 = scmp.eq.s32.totalorder %s25, 0
      %p130 = por %p128, %p129
      %p131 = scmp.ne.s32.totalorder %s119, %s120
      %p132 = scmp.eq.s32.totalorder %s26, 1
      %p133 = por %p131, %p132
      %p135 = scmp.ne.s32.totalorder %s120, %s134
      %p136 = scmp.eq.s32.totalorder %s26, 0
      %p137 = por %p135, %p136
      %s139 = sadd.s32 %s138, 1
      %p142 = scmp.eq.s32.totalorder %s20, 1
      %p143 = scmp.ne.s32.totalorder %s138, %s140
      %p144 = scmp.eq.s32.totalorder %s20, 0
      %p145 = por %p143, %p144
      %p146 = scmp.ne.s32.totalorder %s138, %s140
      %p147 = scmp.eq.s32.totalorder %s25, 1
      %p148 = por %p146, %p147
      %p149 = scmp.ne.s32.totalorder %s140, %s141
      %p150 = scmp.eq.s32.totalorder %s25, 0
      %p151 = por %p149, %p150
      %p152 = scmp.ne.s32.totalorder %s140, %s141
      %p153 = scmp.eq.s32.totalorder %s26, 1
      %p154 = por %p152, %p153
      %p156 = scmp.ne.s32.totalorder %s141, %s155
      %p157 = scmp.eq.s32.totalorder %s26, 0
      %p158 = por %p156, %p157
      %s160 = sadd.s32 %s159, 1
      %p163 = scmp.eq.s32.totalorder %s20, 1
      %p164 = scmp.ne.s32.totalorder %s159, %s161
      %p165 = scmp.eq.s32.totalorder %s20, 0
      %p166 = por %p164, %p165
      %p167 = scmp.ne.s32.totalorder %s159, %s161
      %p168 = scmp.eq.s32.totalorder %s25, 1
      %p169 = por %p167, %p168
      %p170 = scmp.ne.s32.totalorder %s161, %s162
      %p171 = scmp.eq.s32.totalorder %s25, 0
      %p172 = por %p170, %p171
      %p173 = scmp.ne.s32.totalorder %s161, %s162
      %p174 = scmp.eq.s32.totalorder %s26, 1
      %p175 = por %p173, %p174
      %p177 = scmp.ne.s32.totalorder %s162, %s176
      %p178 = scmp.eq.s32.totalorder %s26, 0
      %p179 = por %p177, %p178
      %s181 = sadd.s32 %s180, 1
      %p184 = scmp.eq.s32.totalorder %s20, 1
      %p185 = scmp.ne.s32.totalorder %s180, %s182
      %p186 = scmp.eq.s32.totalorder %s20, 0
      %p187 = por %p185, %p186
      %p188 = scmp.ne.s32.totalorder %s180, %s182
      %p189 = scmp.eq.s32.totalorder %s25, 1
      %p190 = por %p188, %p189
      %p191 = scmp.ne.s32.totalorder %s182, %s183
      %p192 = scmp.eq.s32.totalorder %s25, 0
      %p193 = por %p191, %p192
      %p194 = scmp.ne.s32.totalorder %s182, %s183
      %p195 = scmp.eq.s32.totalorder %s26, 1
      %p196 = por %p194, %p195
      %p198 = scmp.ne.s32.totalorder %s183, %s197
      %p199 = scmp.eq.s32.totalorder %s26, 0
      %p200 = por %p198, %p199
      %s202 = sadd.s32 %s201, 1
      %p205 = scmp.eq.s32.totalorder %s20, 1
      %p206 = scmp.ne.s32.totalorder %s201, %s203
      %p207 = scmp.eq.s32.totalorder %s20, 0
      %p208 = por %p206, %p207
      %p209 = scmp.ne.s32.totalorder %s201, %s203
      %p210 = scmp.eq.s32.totalorder %s25, 1
      %p211 = por %p209, %p210
      %p212 = scmp.ne.s32.totalorder %s203, %s204
      %p213 = scmp.eq.s32.totalorder %s25, 0
      %p214 = por %p212, %p213
      %p215 = scmp.ne.s32.totalorder %s203, %s204
      %p216 = scmp.eq.s32.totalorder %s26, 1
      %p217 = por %p215, %p216
      %p219 = scmp.ne.s32.totalorder %s204, %s218
      %p220 = scmp.eq.s32.totalorder %s26, 0
      %p221 = por %p219, %p220
      %s223 = sadd.s32 %s222, 1
      %p226 = scmp.eq.s32.totalorder %s20, 1
      %p227 = scmp.ne.s32.totalorder %s222, %s224
      %p228 = scmp.eq.s32.totalorder %s20, 0
      %p229 = por %p227, %p228
      %p230 = scmp.ne.s32.totalorder %s222, %s224
      %p231 = scmp.eq.s32.totalorder %s25, 1
      %p232 = por %p230, %p231
      %p233 = scmp.ne.s32.totalorder %s224, %s225
      %p234 = scmp.eq.s32.totalorder %s25, 0
      %p235 = por %p233, %p234
      %p236 = scmp.ne.s32.totalorder %s224, %s225
      %p237 = scmp.eq.s32.totalorder %s26, 1
      %p238 = por %p236, %p237
      %p240 = scmp.ne.s32.totalorder %s225, %s239
      %p241 = scmp.eq.s32.totalorder %s26, 0
      %p242 = por %p240, %p241
      %s244 = sadd.s32 %s243, 1
      %p247 = scmp.eq.s32.totalorder %s20, 1
      %p248 = scmp.ne.s32.totalorder %s243, %s245
      %p249 = scmp.eq.s32.totalorder %s20, 0
      %p250 = por %p248, %p249
      %p251 = scmp.ne.s32.totalorder %s243, %s245
      %p252 = scmp.eq.s32.totalorder %s25, 1
      %p253 = por %p251, %p252
      %p254 = scmp.ne.s32.totalorder %s245, %s246
      %p255 = scmp.eq.s32.totalorder %s25, 0
      %p256 = por %p254, %p255
      %p257 = scmp.ne.s32.totalorder %s245, %s246
      %p258 = scmp.eq.s32.totalorder %s26, 1
      %p259 = por %p257, %p258
      %p261 = scmp.ne.s32.totalorder %s246, %s260
      %p262 = scmp.eq.s32.totalorder %s26, 0
      %p263 = por %p261, %p262
      %s265 = sadd.s32 %s264, 1
      %p268 = scmp.eq.s32.totalorder %s20, 1
      %p269 = scmp.ne.s32.totalorder %s264, %s266
      %p270 = scmp.eq.s32.totalorder %s20, 0
      %p271 = por %p269, %p270
      %p272 = scmp.ne.s32.totalorder %s264, %s266
      %p273 = scmp.eq.s32.totalorder %s25, 1
      %p274 = por %p272, %p273
      %p275 = scmp.ne.s32.totalorder %s266, %s267
      %p276 = scmp.eq.s32.totalorder %s25, 0
      %p277 = por %p275, %p276
      %p278 = scmp.ne.s32.totalorder %s266, %s267
      %p279 = scmp.eq.s32.totalorder %s26, 1
      %p280 = por %p278, %p279
      %p282 = scmp.ne.s32.totalorder %s267, %s281
      %p283 = scmp.eq.s32.totalorder %s26, 0
      %p284 = por %p282, %p283
      %s286 = sadd.s32 %s285, 1
      %p289 = scmp.eq.s32.totalorder %s20, 1
      %p290 = scmp.ne.s32.totalorder %s285, %s287
      %p291 = scmp.eq.s32.totalorder %s20, 0
      %p292 = por %p290, %p291
      %p293 = scmp.ne.s32.totalorder %s285, %s287
      %p294 = scmp.eq.s32.totalorder %s25, 1
      %p295 = por %p293, %p294
      %p296 = scmp.ne.s32.totalorder %s287, %s288
      %p297 = scmp.eq.s32.totalorder %s25, 0
      %p298 = por %p296, %p297
      %p299 = scmp.ne.s32.totalorder %s287, %s288
      %p300 = scmp.eq.s32.totalorder %s26, 1
      %p301 = por %p299, %p300
      %p303 = scmp.ne.s32.totalorder %s288, %s302
      %p304 = scmp.eq.s32.totalorder %s26, 0
      %p305 = por %p303, %p304
      %s306 = ssub.s32 %s20, %s27
      %p307 = scmp.eq.s32.totalorder %s306, 0
      %s309 = sadd.s32 %s308, 1
      %s310 = scalar_select %p307, %s308, %s309
      %p313 = pneg %p307
      %p314 = scmp.eq.s32.totalorder %s20, 1
      %p315 = por %p313, %p314
      %p316 = scmp.ne.s32.totalorder %s308, %s311
      %p317 = scmp.eq.s32.totalorder %s20, 0
      %p318 = por %p316, %p317
      %p319 = scmp.ne.s32.totalorder %s308, %s311
      %p320 = scmp.eq.s32.totalorder %s25, 1
      %p321 = por %p319, %p320
      %p322 = scmp.ne.s32.totalorder %s311, %s312
      %p323 = scmp.eq.s32.totalorder %s25, 0
      %p324 = por %p322, %p323
      %p325 = scmp.ne.s32.totalorder %s311, %s312
      %p326 = scmp.eq.s32.totalorder %s26, 1
      %p327 = por %p325, %p326
      %p329 = scmp.ne.s32.totalorder %s312, %s328
      %p330 = scmp.eq.s32.totalorder %s26, 0
      %p331 = por %p329, %p330
      %p332 = scmp.le.s32.totalorder 1, %s20
      %p333 = scmp.lt.s32.totalorder %s20, 3
      %p334 = pnand %p332, %p333
      %p335 = pneg %p334
      // Predicated region
      $region9: #{swin_connect_encoder_forward.2} parent=5 // pred_check
        _
      $region10: #{swin_connect_encoder_forward.2} parent=5 // pred_check_branch
        %337 = sbr.rel (%p334) target = $region12
      $region11: #{swin_connect_encoder_forward.2} parent=5 // pred_region
        %s338 = ssub.s32 %s20, 1
        // Predicated region
        $region13: #{swin_connect_encoder_forward.2} parent=11 // pred_check
          %p339 = pneg %p67
        $region14: #{swin_connect_encoder_forward.2} parent=11 // pred_check_branch
          %341 = sbr.rel (%p339) target = $region16
        $region15: #{swin_connect_encoder_forward.2} parent=11 // pred_region
          _
        $region16: #{swin_connect_encoder_forward.2} parent=11 // pred_fallthru
          _
        // Predicated region
        $region17: #{swin_connect_encoder_forward.2} parent=11 // pred_check
          %p342 = pneg %p88
        $region18: #{swin_connect_encoder_forward.2} parent=11 // pred_check_branch
          %344 = sbr.rel (%p342) target = $region20
        $region19: #{swin_connect_encoder_forward.2} parent=11 // pred_region
          _
        $region20: #{swin_connect_encoder_forward.2} parent=11 // pred_fallthru
          _
        // Predicated region
        $region21: #{swin_connect_encoder_forward.2} parent=11 // pred_check
          %p345 = pneg %p109
        $region22: #{swin_connect_encoder_forward.2} parent=11 // pred_check_branch
          %347 = sbr.rel (%p345) target = $region24
        $region23: #{swin_connect_encoder_forward.2} parent=11 // pred_region
          _
        $region24: #{swin_connect_encoder_forward.2} parent=11 // pred_fallthru
          _
        // Predicated region
        $region25: #{swin_connect_encoder_forward.2} parent=11 // pred_check
          %p348 = pneg %p130
        $region26: #{swin_connect_encoder_forward.2} parent=11 // pred_check_branch
          %350 = sbr.rel (%p348) target = $region28
        $region27: #{swin_connect_encoder_forward.2} parent=11 // pred_region
          _
        $region28: #{swin_connect_encoder_forward.2} parent=11 // pred_fallthru
          _
        // Predicated region
        $region29: #{swin_connect_encoder_forward.2} parent=11 // pred_check
          %p351 = pneg %p151
        $region30: #{swin_connect_encoder_forward.2} parent=11 // pred_check_branch
          %353 = sbr.rel (%p351) target = $region32
        $region31: #{swin_connect_encoder_forward.2} parent=11 // pred_region
          %355 = vsyncadd [#allocation3], 0
          %s357 = sshll.u32 %s5, 4
          %s358 = int_to_ptr.vmem [resolvable:$true] %s357
          %360 = dma.vmem_to_smem %s358, 16, [#allocation2], [#allocation3]
        $region32: #{swin_connect_encoder_forward.2} parent=11 // pred_fallthru
          _
        // Predicated region
        $region33: #{swin_connect_encoder_forward.2} parent=11 // pred_check
          %p361 = pneg %p172
        $region34: #{swin_connect_encoder_forward.2} parent=11 // pred_check_branch
          %363 = sbr.rel (%p361) target = $region36
        $region35: #{swin_connect_encoder_forward.2} parent=11 // pred_region
          _
        $region36: #{swin_connect_encoder_forward.2} parent=11 // pred_fallthru
          _
        // Predicated region
        $region37: #{swin_connect_encoder_forward.2} parent=11 // pred_check
          %p364 = pneg %p193
        $region38: #{swin_connect_encoder_forward.2} parent=11 // pred_check_branch
          %366 = sbr.rel (%p364) target = $region40
        $region39: #{swin_connect_encoder_forward.2} parent=11 // pred_region
          _
        $region40: #{swin_connect_encoder_forward.2} parent=11 // pred_fallthru
          _
        // Predicated region
        $region41: #{swin_connect_encoder_forward.2} parent=11 // pred_check
          %p367 = pneg %p214
        $region42: #{swin_connect_encoder_forward.2} parent=11 // pred_check_branch
          %369 = sbr.rel (%p367) target = $region44
        $region43: #{swin_connect_encoder_forward.2} parent=11 // pred_region
          _
        $region44: #{swin_connect_encoder_forward.2} parent=11 // pred_fallthru
          _
        // Predicated region
        $region45: #{swin_connect_encoder_forward.2} parent=11 // pred_check
          %p370 = pneg %p235
        $region46: #{swin_connect_encoder_forward.2} parent=11 // pred_check_branch
          %372 = sbr.rel (%p370) target = $region48
        $region47: #{swin_connect_encoder_forward.2} parent=11 // pred_region
          _
        $region48: #{swin_connect_encoder_forward.2} parent=11 // pred_fallthru
          _
        // Predicated region
        $region49: #{swin_connect_encoder_forward.2} parent=11 // pred_check
          %p373 = pneg %p256
        $region50: #{swin_connect_encoder_forward.2} parent=11 // pred_check_branch
          %375 = sbr.rel (%p373) target = $region52
        $region51: #{swin_connect_encoder_forward.2} parent=11 // pred_region
          _
        $region52: #{swin_connect_encoder_forward.2} parent=11 // pred_fallthru
          _
        // Predicated region
        $region53: #{swin_connect_encoder_forward.2} parent=11 // pred_check
          %p376 = pneg %p277
        $region54: #{swin_connect_encoder_forward.2} parent=11 // pred_check_branch
          %378 = sbr.rel (%p376) target = $region56
        $region55: #{swin_connect_encoder_forward.2} parent=11 // pred_region
          _
        $region56: #{swin_connect_encoder_forward.2} parent=11 // pred_fallthru
          _
        // Predicated region
        $region57: #{swin_connect_encoder_forward.2} parent=11 // pred_check
          %p379 = pneg %p298
        $region58: #{swin_connect_encoder_forward.2} parent=11 // pred_check_branch
          %381 = sbr.rel (%p379) target = $region60
        $region59: #{swin_connect_encoder_forward.2} parent=11 // pred_region
          _
        $region60: #{swin_connect_encoder_forward.2} parent=11 // pred_fallthru
          _
      $region12: #{swin_connect_encoder_forward.2} parent=5 // pred_fallthru
        _
      %p382 = scmp.lt.s32.totalorder %s20, 2
      // Predicated region
      $region61: #{swin_connect_encoder_forward.2} parent=5 // pred_check
        %p383 = pneg %p382
      $region62: #{swin_connect_encoder_forward.2} parent=5 // pred_check_branch
        %385 = sbr.rel (%p383) target = $region64
      $region63: #{swin_connect_encoder_forward.2} parent=5 // pred_region
        // Predicated region
        $region65: #{swin_connect_encoder_forward.2} parent=63 // pred_check
          %p386 = pneg %p40
        $region66: #{swin_connect_encoder_forward.2} parent=63 // pred_check_branch
          %388 = sbr.rel (%p386) target = $region68
        $region67: #{swin_connect_encoder_forward.2} parent=63 // pred_region
          %p389 = scmp.lt.s32.totalorder %s20, 1
          %s390 = scalar_select %p389, %s20, 1
          %s391 = smul.addr %s390, 8
          %s392 = smul.addr %s391, 8
          %s393 = scalar_lea.vmem %s0, %s392
        $region68: #{swin_connect_encoder_forward.2} parent=63 // pred_fallthru
          _
      $region64: #{swin_connect_encoder_forward.2} parent=5 // pred_fallthru
        _
      %p394 = scmp.le.s32.totalorder 1, %s20
      %p395 = scmp.lt.s32.totalorder %s20, 3
      %p396 = pnand %p394, %p395
      %p397 = pneg %p396
      // Predicated region
      $region69: #{swin_connect_encoder_forward.2} parent=5 // pred_check
        _
      $region70: #{swin_connect_encoder_forward.2} parent=5 // pred_check_branch
        %399 = sbr.rel (%p396) target = $region72
      $region71: #{swin_connect_encoder_forward.2} parent=5 // pred_region
        %s400 = ssub.s32 %s20, 1
        // Predicated region
        $region73: #{swin_connect_encoder_forward.2} parent=71 // pred_check
          %p401 = pneg %p151
        $region74: #{swin_connect_encoder_forward.2} parent=71 // pred_check_branch
          %403 = sbr.rel (%p401) target = $region76
        $region75: #{swin_connect_encoder_forward.2} parent=71 // pred_region
          %405 = dma.done [#allocation3], 16
        $region76: #{swin_connect_encoder_forward.2} parent=71 // pred_fallthru
          _
        %406 = sfence
        %p407 = scmp.lt.s32.totalorder %s25, 1
        %s408 = scalar_select %p407, %s25, 1
        %s409 = smul.addr %s408, 8
        %s410 = smul.addr %s409, 8
        %s411 = scalar_lea.vmem %s0, %s410
        %p412 = pneg %p46
        %p413 = pneg %p43
        %p414 = pneg %p67
        %p415 = pneg %p64
        %p416 = pneg %p88
        %p417 = pneg %p85
        %p418 = pneg %p109
        %p419 = pneg %p106
        %p420 = pneg %p130
        %p421 = pneg %p127
        %p422 = pneg %p151
        %p423 = pneg %p148
        %p424 = pneg %p172
        %p425 = pneg %p169
        %p426 = pneg %p193
        %p427 = pneg %p190
        %p428 = pneg %p214
        %p429 = pneg %p211
        %p430 = pneg %p235
        %p431 = pneg %p232
        %p432 = pneg %p256
        %p433 = pneg %p253
        %p434 = pneg %p277
        %p435 = pneg %p274
        %p436 = pneg %p298
        %p437 = pneg %p295
        %p438 = pneg %p324
        %p439 = pneg %p321
        %p440 = scmp.lt.s32.totalorder %s25, 1
        %s441 = scalar_select %p440, %s25, 1
        %s442 = smul.addr %s441, 8
        %s443 = smul.addr %s442, 8
        %s444 = scalar_lea.vmem %s13, %s443
        %p445 = scmp.lt.s32.totalorder %s25, 1
        %s446 = scalar_select %p445, %s25, 1
        %s447 = smul.addr %s446, 8
        %s448 = smul.addr %s447, 8
        %s449 = scalar_lea.vmem %s0, %s448
        %p450 = scmp.lt.s32.totalorder %s25, 1
        %s451 = scalar_select %p450, %s25, 1
        %s452 = smul.addr %s451, 8
        %s453 = smul.addr %s452, 8
        %s454 = scalar_lea.vmem %s13, %s453
        %v456 = vld [vmem:[%s449] sm:$0xff]
        %v457 = vld [vmem:[%s449 + $0x8] sm:$0xff]
        %v458 = vld [vmem:[%s449 + $0x10] sm:$0xff]
        %v459 = vld [vmem:[%s449 + $0x18] sm:$0xff]
        %v460 = vld [vmem:[%s449 + $0x20] sm:$0xff]
        %v461 = vld [vmem:[%s449 + $0x28] sm:$0xff]
        %v462 = vld [vmem:[%s449 + $0x30] sm:$0xff]
        %v463 = vld [vmem:[%s449 + $0x38] sm:$0xff]
        %v464 = vpack.c.bf16 %v457, %v456
        %v465 = vpack.c.bf16 %v459, %v458
        %v466 = vpack.c.bf16 %v461, %v460
        %v467 = vpack.c.bf16 %v463, %v462
        %v468 = vld [vmem:[%s7] sm:$0x1]
        %v469 = vld [vmem:[%s8] sm:$0x1]
        %v470 = vld [vmem:[%s1] sm:$0xf]
        %v471 = vld [vmem:[%s1 + $0x4] sm:$0xf]
        %v472 = vld [vmem:[%s1 + $0x8] sm:$0xf]
        %v473 = vld [vmem:[%s1 + $0xc] sm:$0xf]
        %v474 = vld [vmem:[%s2] sm:$0x1]
        %v476 = vperm.slane %v474, 0
        %v482 = vunpack.c.l.b16 %v470
        %v483 = vunpack.c.l.b16 %v471
        %v484 = vunpack.c.l.b16 %v472
        %v485 = vunpack.c.l.b16 %v473
        %v486 = vpack.c.b16 %v483, %v482
        %v487 = vpack.c.b16 %v485, %v484
        %vm490 = vcmask 261120
        %v492 = vsel %vm490, %v464, 0
        %v495 = vsel %vm490, %v465, 0
        %v498 = vsel %vm490, %v466, 0
        %v501 = vsel %vm490, %v467, 0
        %503 = vmatpush.bf16.msra.mxu0 0
        %504 = vmatpush.bf16.msra.mxu0 0
        %505 = vmatpush.bf16.msra.mxu0 0
        %506 = vmatpush.bf16.msra.mxu0 0
        %507 = vmatpush.bf16.msra.mxu0 0
        %508 = vmatpush.bf16.msra.mxu0 0
        %509 = vmatpush.bf16.msra.mxu0 %v487
        %510 = vmatpush.bf16.msra.mxu0 %v486
        %511 = vmatmul.bf16.gmra.mxu0 %v492
        %v512 = vpop.f32.mrf.mxu0
        %v513 = vadd.f32 %v476, %v512
        %v514 = vpop.f32.mrf.mxu0
        %v515 = vadd.f32 %v476, %v514
        %516 = vmatmul.bf16.gmra.mxu0 %v495
        %v517 = vpop.f32.mrf.mxu0
        %v518 = vadd.f32 %v476, %v517
        %v519 = vpop.f32.mrf.mxu0
        %v520 = vadd.f32 %v476, %v519
        %521 = vmatmul.bf16.gmra.mxu0 %v498
        %v522 = vpop.f32.mrf.mxu0
        %v523 = vadd.f32 %v476, %v522
        %v524 = vpop.f32.mrf.mxu0
        %v525 = vadd.f32 %v476, %v524
        %526 = vmatmul.bf16.gmra.mxu0 %v501
        %v527 = vpop.f32.mrf.mxu0
        %v528 = vadd.f32 %v476, %v527
        %v529 = vpop.f32.mrf.mxu0
        %v530 = vadd.f32 %v476, %v529
        %531 = vdwg.mxu0
        %v532 = vmul.f32 %v513, %v513
        %v533 = vmul.f32 %v515, %v515
        %v534 = vmul.f32 %v518, %v518
        %v535 = vmul.f32 %v520, %v520
        %v536 = vmul.f32 %v523, %v523
        %v537 = vmul.f32 %v525, %v525
        %v538 = vmul.f32 %v528, %v528
        %v539 = vmul.f32 %v530, %v530
        %vm540 = vcmask 64512
        %v541 = vsel %vm540, %v532, 0.0
        %542 = vadd.xlane.f32.xlu0 %v541
        %v543 = vpop.xlane.xlu0 %542
        %v544 = vsel %vm540, %v533, 0.0
        %545 = vadd.xlane.f32.xlu0 %v544
        %v546 = vpop.xlane.xlu0 %545
        %v547 = vsel %vm540, %v534, 0.0
        %548 = vadd.xlane.f32.xlu0 %v547
        %v549 = vpop.xlane.xlu0 %548
        %v550 = vsel %vm540, %v535, 0.0
        %551 = vadd.xlane.f32.xlu0 %v550
        %v552 = vpop.xlane.xlu0 %551
        %v553 = vsel %vm540, %v536, 0.0
        %554 = vadd.xlane.f32.xlu0 %v553
        %v555 = vpop.xlane.xlu0 %554
        %v556 = vsel %vm540, %v537, 0.0
        %557 = vadd.xlane.f32.xlu0 %v556
        %v558 = vpop.xlane.xlu0 %557
        %v559 = vsel %vm540, %v538, 0.0
        %560 = vadd.xlane.f32.xlu0 %v559
        %v561 = vpop.xlane.xlu0 %560
        %v562 = vsel %vm540, %v539, 0.0
        %563 = vadd.xlane.f32.xlu0 %v562
        %v564 = vpop.xlane.xlu0 %563
        %v565 = vadd.f32 %v543, 1e-12
        %v566 = vadd.f32 %v546, 1e-12
        %v567 = vadd.f32 %v549, 1e-12
        %v568 = vadd.f32 %v552, 1e-12
        %v569 = vadd.f32 %v555, 1e-12
        %v570 = vadd.f32 %v558, 1e-12
        %v571 = vadd.f32 %v561, 1e-12
        %v572 = vadd.f32 %v564, 1e-12
        %v573 = vrsqrt.pop %v565
        %v574 = vmul.f32 %v573, %v565
        %v575 = vmul.f32 %v574, %v573
        %v576 = vmul.f32 0.5, %v575
        %v577 = vsub.f32 1.5, %v576
        %v578 = vmul.f32 %v573, %v577
        %vm579 = vweird.f32 %v565
        %vm580 = vweird.f32 %v573
        %vm581 = vmor %vm579, %vm580
        %v582 = vsel %vm581, %v573, %v578
        %v583 = vrsqrt.pop %v566
        %v584 = vmul.f32 %v583, %v566
        %v585 = vmul.f32 %v584, %v583
        %v586 = vmul.f32 0.5, %v585
        %v587 = vsub.f32 1.5, %v586
        %v588 = vmul.f32 %v583, %v587
        %vm589 = vweird.f32 %v566
        %vm590 = vweird.f32 %v583
        %vm591 = vmor %vm589, %vm590
        %v592 = vsel %vm591, %v583, %v588
        %v593 = vrsqrt.pop %v567
        %v594 = vmul.f32 %v593, %v567
        %v595 = vmul.f32 %v594, %v593
        %v596 = vmul.f32 0.5, %v595
        %v597 = vsub.f32 1.5, %v596
        %v598 = vmul.f32 %v593, %v597
        %vm599 = vweird.f32 %v567
        %vm600 = vweird.f32 %v593
        %vm601 = vmor %vm599, %vm600
        %v602 = vsel %vm601, %v593, %v598
        %v603 = vrsqrt.pop %v568
        %v604 = vmul.f32 %v603, %v568
        %v605 = vmul.f32 %v604, %v603
        %v606 = vmul.f32 0.5, %v605
        %v607 = vsub.f32 1.5, %v606
        %v608 = vmul.f32 %v603, %v607
        %vm609 = vweird.f32 %v568
        %vm610 = vweird.f32 %v603
        %vm611 = vmor %vm609, %vm610
        %v612 = vsel %vm611, %v603, %v608
        %v613 = vrsqrt.pop %v569
        %v614 = vmul.f32 %v613, %v569
        %v615 = vmul.f32 %v614, %v613
        %v616 = vmul.f32 0.5, %v615
        %v617 = vsub.f32 1.5, %v616
        %v618 = vmul.f32 %v613, %v617
        %vm619 = vweird.f32 %v569
        %vm620 = vweird.f32 %v613
        %vm621 = vmor %vm619, %vm620
        %v622 = vsel %vm621, %v613, %v618
        %v623 = vrsqrt.pop %v570
        %v624 = vmul.f32 %v623, %v570
        %v625 = vmul.f32 %v624, %v623
        %v626 = vmul.f32 0.5, %v625
        %v627 = vsub.f32 1.5, %v626
        %v628 = vmul.f32 %v623, %v627
        %vm629 = vweird.f32 %v570
        %vm630 = vweird.f32 %v623
        %vm631 = vmor %vm629, %vm630
        %v632 = vsel %vm631, %v623, %v628
        %v633 = vrsqrt.pop %v571
        %v634 = vmul.f32 %v633, %v571
        %v635 = vmul.f32 %v634, %v633
        %v636 = vmul.f32 0.5, %v635
        %v637 = vsub.f32 1.5, %v636
        %v638 = vmul.f32 %v633, %v637
        %vm639 = vweird.f32 %v571
        %vm640 = vweird.f32 %v633
        %vm641 = vmor %vm639, %vm640
        %v642 = vsel %vm641, %v633, %v638
        %v643 = vrsqrt.pop %v572
        %v644 = vmul.f32 %v643, %v572
        %v645 = vmul.f32 %v644, %v643
        %v646 = vmul.f32 0.5, %v645
        %v647 = vsub.f32 1.5, %v646
        %v648 = vmul.f32 %v643, %v647
        %vm649 = vweird.f32 %v572
        %vm650 = vweird.f32 %v643
        %vm651 = vmor %vm649, %vm650
        %v652 = vsel %vm651, %v643, %v648
        %v653 = vmul.f32 %v513, %v582
        %v654 = vmul.f32 %v515, %v592
        %v655 = vmul.f32 %v518, %v602
        %v656 = vmul.f32 %v520, %v612
        %v657 = vmul.f32 %v523, %v622
        %v658 = vmul.f32 %v525, %v632
        %v659 = vmul.f32 %v528, %v642
        %v660 = vmul.f32 %v530, %v652
        %669 = vrot.lane.b32.xlu0 %v532, 96
        %v670 = vpop.permute.xlu0 %669
        %671 = vrot.lane.b32.xlu0 %v533, 96
        %v672 = vpop.permute.xlu0 %671
        %673 = vrot.lane.b32.xlu0 %v534, 96
        %v674 = vpop.permute.xlu0 %673
        %675 = vrot.lane.b32.xlu0 %v535, 96
        %v676 = vpop.permute.xlu0 %675
        %677 = vrot.lane.b32.xlu0 %v536, 96
        %v678 = vpop.permute.xlu0 %677
        %679 = vrot.lane.b32.xlu0 %v537, 96
        %v680 = vpop.permute.xlu0 %679
        %681 = vrot.lane.b32.xlu0 %v538, 96
        %v682 = vpop.permute.xlu0 %681
        %683 = vrot.lane.b32.xlu0 %v539, 96
        %v684 = vpop.permute.xlu0 %683
        %v693 = vsel %vm540, %v670, 0.0
        %694 = vadd.xlane.f32.xlu0 %v693
        %v695 = vpop.xlane.xlu0 %694
        %v696 = vsel %vm540, %v672, 0.0
        %697 = vadd.xlane.f32.xlu0 %v696
        %v698 = vpop.xlane.xlu0 %697
        %v699 = vsel %vm540, %v674, 0.0
        %700 = vadd.xlane.f32.xlu0 %v699
        %v701 = vpop.xlane.xlu0 %700
        %v702 = vsel %vm540, %v676, 0.0
        %703 = vadd.xlane.f32.xlu0 %v702
        %v704 = vpop.xlane.xlu0 %703
        %v705 = vsel %vm540, %v678, 0.0
        %706 = vadd.xlane.f32.xlu0 %v705
        %v707 = vpop.xlane.xlu0 %706
        %v708 = vsel %vm540, %v680, 0.0
        %709 = vadd.xlane.f32.xlu0 %v708
        %v710 = vpop.xlane.xlu0 %709
        %v711 = vsel %vm540, %v682, 0.0
        %712 = vadd.xlane.f32.xlu0 %v711
        %v713 = vpop.xlane.xlu0 %712
        %v714 = vsel %vm540, %v684, 0.0
        %715 = vadd.xlane.f32.xlu0 %v714
        %v716 = vpop.xlane.xlu0 %715
        %v717 = vadd.f32 %v695, 1e-12
        %v718 = vadd.f32 %v698, 1e-12
        %v719 = vadd.f32 %v701, 1e-12
        %v720 = vadd.f32 %v704, 1e-12
        %v721 = vadd.f32 %v707, 1e-12
        %v722 = vadd.f32 %v710, 1e-12
        %v723 = vadd.f32 %v713, 1e-12
        %v724 = vadd.f32 %v716, 1e-12
        %v725 = vrsqrt.pop %v717
        %v726 = vmul.f32 %v725, %v717
        %v727 = vmul.f32 %v726, %v725
        %v728 = vmul.f32 0.5, %v727
        %v729 = vsub.f32 1.5, %v728
        %v730 = vmul.f32 %v725, %v729
        %vm731 = vweird.f32 %v717
        %vm732 = vweird.f32 %v725
        %vm733 = vmor %vm731, %vm732
        %v734 = vsel %vm733, %v725, %v730
        %v735 = vrsqrt.pop %v718
        %v736 = vmul.f32 %v735, %v718
        %v737 = vmul.f32 %v736, %v735
        %v738 = vmul.f32 0.5, %v737
        %v739 = vsub.f32 1.5, %v738
        %v740 = vmul.f32 %v735, %v739
        %vm741 = vweird.f32 %v718
        %vm742 = vweird.f32 %v735
        %vm743 = vmor %vm741, %vm742
        %v744 = vsel %vm743, %v735, %v740
        %v745 = vrsqrt.pop %v719
        %v746 = vmul.f32 %v745, %v719
        %v747 = vmul.f32 %v746, %v745
        %v748 = vmul.f32 0.5, %v747
        %v749 = vsub.f32 1.5, %v748
        %v750 = vmul.f32 %v745, %v749
        %vm751 = vweird.f32 %v719
        %vm752 = vweird.f32 %v745
        %vm753 = vmor %vm751, %vm752
        %v754 = vsel %vm753, %v745, %v750
        %v755 = vrsqrt.pop %v720
        %v756 = vmul.f32 %v755, %v720
        %v757 = vmul.f32 %v756, %v755
        %v758 = vmul.f32 0.5, %v757
        %v759 = vsub.f32 1.5, %v758
        %v760 = vmul.f32 %v755, %v759
        %vm761 = vweird.f32 %v720
        %vm762 = vweird.f32 %v755
        %vm763 = vmor %vm761, %vm762
        %v764 = vsel %vm763, %v755, %v760
        %v765 = vrsqrt.pop %v721
        %v766 = vmul.f32 %v765, %v721
        %v767 = vmul.f32 %v766, %v765
        %v768 = vmul.f32 0.5, %v767
        %v769 = vsub.f32 1.5, %v768
        %v770 = vmul.f32 %v765, %v769
        %vm771 = vweird.f32 %v721
        %vm772 = vweird.f32 %v765
        %vm773 = vmor %vm771, %vm772
        %v774 = vsel %vm773, %v765, %v770
        %v775 = vrsqrt.pop %v722
        %v776 = vmul.f32 %v775, %v722
        %v777 = vmul.f32 %v776, %v775
        %v778 = vmul.f32 0.5, %v777
        %v779 = vsub.f32 1.5, %v778
        %v780 = vmul.f32 %v775, %v779
        %vm781 = vweird.f32 %v722
        %vm782 = vweird.f32 %v775
        %vm783 = vmor %vm781, %vm782
        %v784 = vsel %vm783, %v775, %v780
        %v785 = vrsqrt.pop %v723
        %v786 = vmul.f32 %v785, %v723
        %v787 = vmul.f32 %v786, %v785
        %v788 = vmul.f32 0.5, %v787
        %v789 = vsub.f32 1.5, %v788
        %v790 = vmul.f32 %v785, %v789
        %vm791 = vweird.f32 %v723
        %vm792 = vweird.f32 %v785
        %vm793 = vmor %vm791, %vm792
        %v794 = vsel %vm793, %v785, %v790
        %v795 = vrsqrt.pop %v724
        %v796 = vmul.f32 %v795, %v724
        %v797 = vmul.f32 %v796, %v795
        %v798 = vmul.f32 0.5, %v797
        %v799 = vsub.f32 1.5, %v798
        %v800 = vmul.f32 %v795, %v799
        %vm801 = vweird.f32 %v724
        %vm802 = vweird.f32 %v795
        %vm803 = vmor %vm801, %vm802
        %v804 = vsel %vm803, %v795, %v800
        %v805 = vmul.f32 %v513, %v734
        %v806 = vmul.f32 %v515, %v744
        %v807 = vmul.f32 %v518, %v754
        %v808 = vmul.f32 %v520, %v764
        %v809 = vmul.f32 %v523, %v774
        %v810 = vmul.f32 %v525, %v784
        %v811 = vmul.f32 %v528, %v794
        %v812 = vmul.f32 %v530, %v804
        %s813 = sld [smem:[#allocation2]]
        %v814 = vstv %s813
        %v815 = vmul.f32 %v653, %v814
        %v816 = vmul.f32 %v654, %v814
        %v817 = vmul.f32 %v655, %v814
        %v818 = vmul.f32 %v656, %v814
        %v819 = vmul.f32 %v657, %v814
        %v820 = vmul.f32 %v658, %v814
        %v821 = vmul.f32 %v659, %v814
        %v822 = vmul.f32 %v660, %v814
        %v823 = vld [vmem:[%s6] sm:$0xff]
        %v824 = vld [vmem:[%s6 + $0x8] sm:$0xff]
        %827 = vrot.lane.b32.xlu0 %v805, 96
        %v828 = vpop.permute.xlu0 %827
        %829 = vrot.lane.b32.xlu0 %v806, 96
        %v830 = vpop.permute.xlu0 %829
        %v832 = vsel %vm540, %v815, 0
        %v835 = vsel %vm540, %v816, 0
        %v837 = vsel %vm540, %v828, 0
        %v839 = vsel %vm540, %v830, 0
        %841 = vmatpush.xpose.msra.mxu0 0.0
        %842 = vmatpush.xpose.msra.mxu0 0.0
        %843 = vmatpush.xpose.msra.mxu0 0.0
        %844 = vmatpush.xpose.msra.mxu0 0.0
        %845 = vmatpush.xpose.msra.mxu0 0.0
        %846 = vmatpush.xpose.msra.mxu0 0.0
        %847 = vmatpush.xpose.msra.mxu0 0.0
        %848 = vmatpush.xpose.msra.mxu0 0.0
        %849 = vmatpush.xpose.msra.mxu0 0.0
        %850 = vmatpush.xpose.msra.mxu0 0.0
        %851 = vmatpush.xpose.msra.mxu0 0.0
        %852 = vmatpush.xpose.msra.mxu0 0.0
        %853 = vmatpush.xpose.msra.mxu0 0.0
        %854 = vmatpush.xpose.msra.mxu0 0.0
        %855 = vmatpush.xpose.msra.mxu0 %v839
        %856 = vmatpush.xpose.msra.mxu0 %v837
        %857 = vmatmul.f32.gmra.mxu0 %v832
        %v858 = vpop.f32.mrf.mxu0
        %v859 = vadd.f32 %v823, %v858
        %860 = vmatmul.f32.gmra.mxu0 %v835
        %v861 = vpop.f32.mrf.mxu0
        %v862 = vadd.f32 %v824, %v861
        %863 = vdwg.mxu0
        %866 = vrot.lane.b32.xlu0 %v807, 96
        %v867 = vpop.permute.xlu0 %866
        %868 = vrot.lane.b32.xlu0 %v808, 96
        %v869 = vpop.permute.xlu0 %868
        %v871 = vsel %vm540, %v817, 0
        %v874 = vsel %vm540, %v818, 0
        %v876 = vsel %vm540, %v867, 0
        %v878 = vsel %vm540, %v869, 0
        %880 = vmatpush.xpose.msra.mxu0 0.0
        %881 = vmatpush.xpose.msra.mxu0 0.0
        %882 = vmatpush.xpose.msra.mxu0 0.0
        %883 = vmatpush.xpose.msra.mxu0 0.0
        %884 = vmatpush.xpose.msra.mxu0 0.0
        %885 = vmatpush.xpose.msra.mxu0 0.0
        %886 = vmatpush.xpose.msra.mxu0 0.0
        %887 = vmatpush.xpose.msra.mxu0 0.0
        %888 = vmatpush.xpose.msra.mxu0 0.0
        %889 = vmatpush.xpose.msra.mxu0 0.0
        %890 = vmatpush.xpose.msra.mxu0 0.0
        %891 = vmatpush.xpose.msra.mxu0 0.0
        %892 = vmatpush.xpose.msra.mxu0 0.0
        %893 = vmatpush.xpose.msra.mxu0 0.0
        %894 = vmatpush.xpose.msra.mxu0 %v878
        %895 = vmatpush.xpose.msra.mxu0 %v876
        %896 = vmatmul.f32.gmra.mxu0 %v871
        %v897 = vpop.f32.mrf.mxu0
        %v898 = vadd.f32 %v823, %v897
        %899 = vmatmul.f32.gmra.mxu0 %v874
        %v900 = vpop.f32.mrf.mxu0
        %v901 = vadd.f32 %v824, %v900
        %902 = vdwg.mxu0
        %905 = vrot.lane.b32.xlu0 %v809, 96
        %v906 = vpop.permute.xlu0 %905
        %907 = vrot.lane.b32.xlu0 %v810, 96
        %v908 = vpop.permute.xlu0 %907
        %v910 = vsel %vm540, %v819, 0
        %v913 = vsel %vm540, %v820, 0
        %v915 = vsel %vm540, %v906, 0
        %v917 = vsel %vm540, %v908, 0
        %919 = vmatpush.xpose.msra.mxu0 0.0
        %920 = vmatpush.xpose.msra.mxu0 0.0
        %921 = vmatpush.xpose.msra.mxu0 0.0
        %922 = vmatpush.xpose.msra.mxu0 0.0
        %923 = vmatpush.xpose.msra.mxu0 0.0
        %924 = vmatpush.xpose.msra.mxu0 0.0
        %925 = vmatpush.xpose.msra.mxu0 0.0
        %926 = vmatpush.xpose.msra.mxu0 0.0
        %927 = vmatpush.xpose.msra.mxu0 0.0
        %928 = vmatpush.xpose.msra.mxu0 0.0
        %929 = vmatpush.xpose.msra.mxu0 0.0
        %930 = vmatpush.xpose.msra.mxu0 0.0
        %931 = vmatpush.xpose.msra.mxu0 0.0
        %932 = vmatpush.xpose.msra.mxu0 0.0
        %933 = vmatpush.xpose.msra.mxu0 %v917
        %934 = vmatpush.xpose.msra.mxu0 %v915
        %935 = vmatmul.f32.gmra.mxu0 %v910
        %v936 = vpop.f32.mrf.mxu0
        %v937 = vadd.f32 %v823, %v936
        %938 = vmatmul.f32.gmra.mxu0 %v913
        %v939 = vpop.f32.mrf.mxu0
        %v940 = vadd.f32 %v824, %v939
        %941 = vdwg.mxu0
        %944 = vrot.lane.b32.xlu0 %v811, 96
        %v945 = vpop.permute.xlu0 %944
        %946 = vrot.lane.b32.xlu0 %v812, 96
        %v947 = vpop.permute.xlu0 %946
        %v949 = vsel %vm540, %v821, 0
        %v952 = vsel %vm540, %v822, 0
        %v954 = vsel %vm540, %v945, 0
        %v956 = vsel %vm540, %v947, 0
        %958 = vmatpush.xpose.msra.mxu0 0.0
        %959 = vmatpush.xpose.msra.mxu0 0.0
        %960 = vmatpush.xpose.msra.mxu0 0.0
        %961 = vmatpush.xpose.msra.mxu0 0.0
        %962 = vmatpush.xpose.msra.mxu0 0.0
        %963 = vmatpush.xpose.msra.mxu0 0.0
        %964 = vmatpush.xpose.msra.mxu0 0.0
        %965 = vmatpush.xpose.msra.mxu0 0.0
        %966 = vmatpush.xpose.msra.mxu0 0.0
        %967 = vmatpush.xpose.msra.mxu0 0.0
        %968 = vmatpush.xpose.msra.mxu0 0.0
        %969 = vmatpush.xpose.msra.mxu0 0.0
        %970 = vmatpush.xpose.msra.mxu0 0.0
        %971 = vmatpush.xpose.msra.mxu0 0.0
        %972 = vmatpush.xpose.msra.mxu0 %v956
        %973 = vmatpush.xpose.msra.mxu0 %v954
        %974 = vmatmul.f32.gmra.mxu0 %v949
        %v975 = vpop.f32.mrf.mxu0
        %v976 = vadd.f32 %v823, %v975
        %977 = vmatmul.f32.gmra.mxu0 %v952
        %v978 = vpop.f32.mrf.mxu0
        %v979 = vadd.f32 %v824, %v978
        %980 = vdwg.mxu0
        %vm981 = vcmask 130048
        %v982 = vsel %vm981, %v859, -inf
        %983 = vmax.xlane.f32.xlu0 %v982
        %v984 = vpop.xlane.xlu0 %983
        %v985 = vsel %vm981, %v862, -inf
        %986 = vmax.xlane.f32.xlu0 %v985
        %v987 = vpop.xlane.xlu0 %986
        %v988 = vsel %vm981, %v898, -inf
        %989 = vmax.xlane.f32.xlu0 %v988
        %v990 = vpop.xlane.xlu0 %989
        %v991 = vsel %vm981, %v901, -inf
        %992 = vmax.xlane.f32.xlu0 %v991
        %v993 = vpop.xlane.xlu0 %992
        %v994 = vsel %vm981, %v937, -inf
        %995 = vmax.xlane.f32.xlu0 %v994
        %v996 = vpop.xlane.xlu0 %995
        %v997 = vsel %vm981, %v940, -inf
        %998 = vmax.xlane.f32.xlu0 %v997
        %v999 = vpop.xlane.xlu0 %998
        %v1000 = vsel %vm981, %v976, -inf
        %1001 = vmax.xlane.f32.xlu0 %v1000
        %v1002 = vpop.xlane.xlu0 %1001
        %v1003 = vsel %vm981, %v979, -inf
        %1004 = vmax.xlane.f32.xlu0 %v1003
        %v1005 = vpop.xlane.xlu0 %1004
        %v1006 = vsub.f32 %v859, %v984
        %v1007 = vsub.f32 %v862, %v987
        %v1008 = vsub.f32 %v898, %v990
        %v1009 = vsub.f32 %v901, %v993
        %v1010 = vsub.f32 %v937, %v996
        %v1011 = vsub.f32 %v940, %v999
        %v1012 = vsub.f32 %v976, %v1002
        %v1013 = vsub.f32 %v979, %v1005
        %v1014 = vmul.f32 %v1006, 1.442695
        %v1015 = vpow.pop %v1014
        %v1016 = vmul.f32 %v1007, 1.442695
        %v1017 = vpow.pop %v1016
        %v1018 = vmul.f32 %v1008, 1.442695
        %v1019 = vpow.pop %v1018
        %v1020 = vmul.f32 %v1009, 1.442695
        %v1021 = vpow.pop %v1020
        %v1022 = vmul.f32 %v1010, 1.442695
        %v1023 = vpow.pop %v1022
        %v1024 = vmul.f32 %v1011, 1.442695
        %v1025 = vpow.pop %v1024
        %v1026 = vmul.f32 %v1012, 1.442695
        %v1027 = vpow.pop %v1026
        %v1028 = vmul.f32 %v1013, 1.442695
        %v1029 = vpow.pop %v1028
        %v1030 = vsel %vm981, %v1015, 0.0
        %1031 = vadd.xlane.f32.xlu0 %v1030
        %v1032 = vpop.xlane.xlu0 %1031
        %v1033 = vsel %vm981, %v1017, 0.0
        %1034 = vadd.xlane.f32.xlu0 %v1033
        %v1035 = vpop.xlane.xlu0 %1034
        %v1036 = vsel %vm981, %v1019, 0.0
        %1037 = vadd.xlane.f32.xlu0 %v1036
        %v1038 = vpop.xlane.xlu0 %1037
        %v1039 = vsel %vm981, %v1021, 0.0
        %1040 = vadd.xlane.f32.xlu0 %v1039
        %v1041 = vpop.xlane.xlu0 %1040
        %v1042 = vsel %vm981, %v1023, 0.0
        %1043 = vadd.xlane.f32.xlu0 %v1042
        %v1044 = vpop.xlane.xlu0 %1043
        %v1045 = vsel %vm981, %v1025, 0.0
        %1046 = vadd.xlane.f32.xlu0 %v1045
        %v1047 = vpop.xlane.xlu0 %1046
        %v1048 = vsel %vm981, %v1027, 0.0
        %1049 = vadd.xlane.f32.xlu0 %v1048
        %v1050 = vpop.xlane.xlu0 %1049
        %v1051 = vsel %vm981, %v1029, 0.0
        %1052 = vadd.xlane.f32.xlu0 %v1051
        %v1053 = vpop.xlane.xlu0 %1052
        %v1054 = vrcp.pop %v1032
        %v1055 = vrcp.pop %v1035
        %v1056 = vrcp.pop %v1038
        %v1057 = vrcp.pop %v1041
        %v1058 = vrcp.pop %v1044
        %v1059 = vrcp.pop %v1047
        %v1060 = vrcp.pop %v1050
        %v1061 = vrcp.pop %v1053
        %v1062 = vpack.c.bf16 %v1015, %v1015
        %v1063 = vpack.c.bf16 %v1017, %v1017
        %v1064 = vpack.c.bf16 %v1019, %v1019
        %v1065 = vpack.c.bf16 %v1021, %v1021
        %v1066 = vpack.c.bf16 %v1023, %v1023
        %v1067 = vpack.c.bf16 %v1025, %v1025
        %v1068 = vpack.c.bf16 %v1027, %v1027
        %v1069 = vpack.c.bf16 %v1029, %v1029
        %v1070 = vpack.c.bf16 %v513, %v513
        %v1071 = vpack.c.bf16 %v515, %v515
        %v1072 = vpack.c.bf16 %v518, %v518
        %v1073 = vpack.c.bf16 %v520, %v520
        %v1074 = vpack.c.bf16 %v523, %v523
        %v1075 = vpack.c.bf16 %v525, %v525
        %v1076 = vpack.c.bf16 %v528, %v528
        %v1077 = vpack.c.bf16 %v530, %v530
        %v1080 = vunpack.c.l.b16 %v1062
        %v1081 = vunpack.c.l.b16 %v1063
        %v1082 = vpack.c.b16 %v1081, %v1080
        %v1085 = vunpack.c.l.b16 %v1070
        %v1086 = vunpack.c.l.b16 %v1071
        %v1087 = vpack.c.b16 %v1086, %v1085
        %1088 = vrot.lane.b32.xlu0 %v1087, 64
        %v1089 = vpop.permute.xlu0 %1088
        %v1092 = vsel %vm981, %v1082, 0
        %1094 = vmatpush.bf16.msra.mxu0 0
        %1095 = vmatpush.bf16.msra.mxu0 0
        %1096 = vmatpush.bf16.msra.mxu0 0
        %1097 = vmatpush.bf16.msra.mxu0 0
        %1098 = vmatpush.bf16.msra.mxu0 0
        %1099 = vmatpush.bf16.msra.mxu0 0
        %1100 = vmatpush.bf16.msra.mxu0 0
        %1101 = vmatpush.bf16.msra.mxu0 %v1089
        %1102 = vmatmul.bf16.gmra.mxu0 %v1092
        %v1103 = vpop.f32.mrf.mxu0
        %v1104 = vadd.f32 0.0, %v1103
        %v1105 = vpop.f32.mrf.mxu0
        %v1106 = vadd.f32 0.0, %v1105
        %1107 = vdwg.mxu0
        %v1110 = vunpack.c.l.b16 %v1064
        %v1111 = vunpack.c.l.b16 %v1065
        %v1112 = vpack.c.b16 %v1111, %v1110
        %v1115 = vunpack.c.l.b16 %v1072
        %v1116 = vunpack.c.l.b16 %v1073
        %v1117 = vpack.c.b16 %v1116, %v1115
        %1118 = vrot.lane.b32.xlu0 %v1117, 64
        %v1119 = vpop.permute.xlu0 %1118
        %v1122 = vsel %vm981, %v1112, 0
        %1124 = vmatpush.bf16.msra.mxu0 0
        %1125 = vmatpush.bf16.msra.mxu0 0
        %1126 = vmatpush.bf16.msra.mxu0 0
        %1127 = vmatpush.bf16.msra.mxu0 0
        %1128 = vmatpush.bf16.msra.mxu0 0
        %1129 = vmatpush.bf16.msra.mxu0 0
        %1130 = vmatpush.bf16.msra.mxu0 0
        %1131 = vmatpush.bf16.msra.mxu0 %v1119
        %1132 = vmatmul.bf16.gmra.mxu0 %v1122
        %v1133 = vpop.f32.mrf.mxu0
        %v1134 = vadd.f32 0.0, %v1133
        %v1135 = vpop.f32.mrf.mxu0
        %v1136 = vadd.f32 0.0, %v1135
        %1137 = vdwg.mxu0
        %v1140 = vunpack.c.l.b16 %v1066
        %v1141 = vunpack.c.l.b16 %v1067
        %v1142 = vpack.c.b16 %v1141, %v1140
        %v1145 = vunpack.c.l.b16 %v1074
        %v1146 = vunpack.c.l.b16 %v1075
        %v1147 = vpack.c.b16 %v1146, %v1145
        %1148 = vrot.lane.b32.xlu0 %v1147, 64
        %v1149 = vpop.permute.xlu0 %1148
        %v1152 = vsel %vm981, %v1142, 0
        %1154 = vmatpush.bf16.msra.mxu0 0
        %1155 = vmatpush.bf16.msra.mxu0 0
        %1156 = vmatpush.bf16.msra.mxu0 0
        %1157 = vmatpush.bf16.msra.mxu0 0
        %1158 = vmatpush.bf16.msra.mxu0 0
        %1159 = vmatpush.bf16.msra.mxu0 0
        %1160 = vmatpush.bf16.msra.mxu0 0
        %1161 = vmatpush.bf16.msra.mxu0 %v1149
        %1162 = vmatmul.bf16.gmra.mxu0 %v1152
        %v1163 = vpop.f32.mrf.mxu0
        %v1164 = vadd.f32 0.0, %v1163
        %v1165 = vpop.f32.mrf.mxu0
        %v1166 = vadd.f32 0.0, %v1165
        %1167 = vdwg.mxu0
        %v1170 = vunpack.c.l.b16 %v1068
        %v1171 = vunpack.c.l.b16 %v1069
        %v1172 = vpack.c.b16 %v1171, %v1170
        %v1175 = vunpack.c.l.b16 %v1076
        %v1176 = vunpack.c.l.b16 %v1077
        %v1177 = vpack.c.b16 %v1176, %v1175
        %1178 = vrot.lane.b32.xlu0 %v1177, 64
        %v1179 = vpop.permute.xlu0 %1178
        %v1182 = vsel %vm981, %v1172, 0
        %1184 = vmatpush.bf16.msra.mxu0 0
        %1185 = vmatpush.bf16.msra.mxu0 0
        %1186 = vmatpush.bf16.msra.mxu0 0
        %1187 = vmatpush.bf16.msra.mxu0 0
        %1188 = vmatpush.bf16.msra.mxu0 0
        %1189 = vmatpush.bf16.msra.mxu0 0
        %1190 = vmatpush.bf16.msra.mxu0 0
        %1191 = vmatpush.bf16.msra.mxu0 %v1179
        %1192 = vmatmul.bf16.gmra.mxu0 %v1182
        %v1193 = vpop.f32.mrf.mxu0
        %v1194 = vadd.f32 0.0, %v1193
        %v1195 = vpop.f32.mrf.mxu0
        %v1196 = vadd.f32 0.0, %v1195
        %1197 = vdwg.mxu0
        %v1198 = vmul.f32 %v1104, %v1054
        %v1199 = vmul.f32 %v1106, %v1055
        %v1200 = vmul.f32 %v1134, %v1056
        %v1201 = vmul.f32 %v1136, %v1057
        %v1202 = vmul.f32 %v1164, %v1058
        %v1203 = vmul.f32 %v1166, %v1059
        %v1204 = vmul.f32 %v1194, %v1060
        %v1205 = vmul.f32 %v1196, %v1061
        %1206 = vrot.lane.b32.xlu0 %v532, 120
        %v1207 = vpop.permute.xlu0 %1206
        %1208 = vrot.lane.b32.xlu0 %v533, 120
        %v1209 = vpop.permute.xlu0 %1208
        %1210 = vrot.lane.b32.xlu0 %v534, 120
        %v1211 = vpop.permute.xlu0 %1210
        %1212 = vrot.lane.b32.xlu0 %v535, 120
        %v1213 = vpop.permute.xlu0 %1212
        %1214 = vrot.lane.b32.xlu0 %v536, 120
        %v1215 = vpop.permute.xlu0 %1214
        %1216 = vrot.lane.b32.xlu0 %v537, 120
        %v1217 = vpop.permute.xlu0 %1216
        %1218 = vrot.lane.b32.xlu0 %v538, 120
        %v1219 = vpop.permute.xlu0 %1218
        %1220 = vrot.lane.b32.xlu0 %v539, 120
        %v1221 = vpop.permute.xlu0 %1220
        %v1230 = vsel %vm540, %v1207, 0.0
        %1231 = vadd.xlane.f32.xlu0 %v1230
        %v1232 = vpop.xlane.xlu0 %1231
        %v1233 = vsel %vm540, %v1209, 0.0
        %1234 = vadd.xlane.f32.xlu0 %v1233
        %v1235 = vpop.xlane.xlu0 %1234
        %v1236 = vsel %vm540, %v1211, 0.0
        %1237 = vadd.xlane.f32.xlu0 %v1236
        %v1238 = vpop.xlane.xlu0 %1237
        %v1239 = vsel %vm540, %v1213, 0.0
        %1240 = vadd.xlane.f32.xlu0 %v1239
        %v1241 = vpop.xlane.xlu0 %1240
        %v1242 = vsel %vm540, %v1215, 0.0
        %1243 = vadd.xlane.f32.xlu0 %v1242
        %v1244 = vpop.xlane.xlu0 %1243
        %v1245 = vsel %vm540, %v1217, 0.0
        %1246 = vadd.xlane.f32.xlu0 %v1245
        %v1247 = vpop.xlane.xlu0 %1246
        %v1248 = vsel %vm540, %v1219, 0.0
        %1249 = vadd.xlane.f32.xlu0 %v1248
        %v1250 = vpop.xlane.xlu0 %1249
        %v1251 = vsel %vm540, %v1221, 0.0
        %1252 = vadd.xlane.f32.xlu0 %v1251
        %v1253 = vpop.xlane.xlu0 %1252
        %v1254 = vadd.f32 %v1232, 1e-12
        %v1255 = vadd.f32 %v1235, 1e-12
        %v1256 = vadd.f32 %v1238, 1e-12
        %v1257 = vadd.f32 %v1241, 1e-12
        %v1258 = vadd.f32 %v1244, 1e-12
        %v1259 = vadd.f32 %v1247, 1e-12
        %v1260 = vadd.f32 %v1250, 1e-12
        %v1261 = vadd.f32 %v1253, 1e-12
        %v1262 = vrsqrt.pop %v1254
        %v1263 = vmul.f32 %v1262, %v1254
        %v1264 = vmul.f32 %v1263, %v1262
        %v1265 = vmul.f32 0.5, %v1264
        %v1266 = vsub.f32 1.5, %v1265
        %v1267 = vmul.f32 %v1262, %v1266
        %vm1268 = vweird.f32 %v1254
        %vm1269 = vweird.f32 %v1262
        %vm1270 = vmor %vm1268, %vm1269
        %v1271 = vsel %vm1270, %v1262, %v1267
        %v1272 = vrsqrt.pop %v1255
        %v1273 = vmul.f32 %v1272, %v1255
        %v1274 = vmul.f32 %v1273, %v1272
        %v1275 = vmul.f32 0.5, %v1274
        %v1276 = vsub.f32 1.5, %v1275
        %v1277 = vmul.f32 %v1272, %v1276
        %vm1278 = vweird.f32 %v1255
        %vm1279 = vweird.f32 %v1272
        %vm1280 = vmor %vm1278, %vm1279
        %v1281 = vsel %vm1280, %v1272, %v1277
        %v1282 = vrsqrt.pop %v1256
        %v1283 = vmul.f32 %v1282, %v1256
        %v1284 = vmul.f32 %v1283, %v1282
        %v1285 = vmul.f32 0.5, %v1284
        %v1286 = vsub.f32 1.5, %v1285
        %v1287 = vmul.f32 %v1282, %v1286
        %vm1288 = vweird.f32 %v1256
        %vm1289 = vweird.f32 %v1282
        %vm1290 = vmor %vm1288, %vm1289
        %v1291 = vsel %vm1290, %v1282, %v1287
        %v1292 = vrsqrt.pop %v1257
        %v1293 = vmul.f32 %v1292, %v1257
        %v1294 = vmul.f32 %v1293, %v1292
        %v1295 = vmul.f32 0.5, %v1294
        %v1296 = vsub.f32 1.5, %v1295
        %v1297 = vmul.f32 %v1292, %v1296
        %vm1298 = vweird.f32 %v1257
        %vm1299 = vweird.f32 %v1292
        %vm1300 = vmor %vm1298, %vm1299
        %v1301 = vsel %vm1300, %v1292, %v1297
        %v1302 = vrsqrt.pop %v1258
        %v1303 = vmul.f32 %v1302, %v1258
        %v1304 = vmul.f32 %v1303, %v1302
        %v1305 = vmul.f32 0.5, %v1304
        %v1306 = vsub.f32 1.5, %v1305
        %v1307 = vmul.f32 %v1302, %v1306
        %vm1308 = vweird.f32 %v1258
        %vm1309 = vweird.f32 %v1302
        %vm1310 = vmor %vm1308, %vm1309
        %v1311 = vsel %vm1310, %v1302, %v1307
        %v1312 = vrsqrt.pop %v1259
        %v1313 = vmul.f32 %v1312, %v1259
        %v1314 = vmul.f32 %v1313, %v1312
        %v1315 = vmul.f32 0.5, %v1314
        %v1316 = vsub.f32 1.5, %v1315
        %v1317 = vmul.f32 %v1312, %v1316
        %vm1318 = vweird.f32 %v1259
        %vm1319 = vweird.f32 %v1312
        %vm1320 = vmor %vm1318, %vm1319
        %v1321 = vsel %vm1320, %v1312, %v1317
        %v1322 = vrsqrt.pop %v1260
        %v1323 = vmul.f32 %v1322, %v1260
        %v1324 = vmul.f32 %v1323, %v1322
        %v1325 = vmul.f32 0.5, %v1324
        %v1326 = vsub.f32 1.5, %v1325
        %v1327 = vmul.f32 %v1322, %v1326
        %vm1328 = vweird.f32 %v1260
        %vm1329 = vweird.f32 %v1322
        %vm1330 = vmor %vm1328, %vm1329
        %v1331 = vsel %vm1330, %v1322, %v1327
        %v1332 = vrsqrt.pop %v1261
        %v1333 = vmul.f32 %v1332, %v1261
        %v1334 = vmul.f32 %v1333, %v1332
        %v1335 = vmul.f32 0.5, %v1334
        %v1336 = vsub.f32 1.5, %v1335
        %v1337 = vmul.f32 %v1332, %v1336
        %vm1338 = vweird.f32 %v1261
        %vm1339 = vweird.f32 %v1332
        %vm1340 = vmor %vm1338, %vm1339
        %v1341 = vsel %vm1340, %v1332, %v1337
        %v1342 = vmul.f32 %v513, %v1271
        %v1343 = vmul.f32 %v515, %v1281
        %v1344 = vmul.f32 %v518, %v1291
        %v1345 = vmul.f32 %v520, %v1301
        %v1346 = vmul.f32 %v523, %v1311
        %v1347 = vmul.f32 %v525, %v1321
        %v1348 = vmul.f32 %v528, %v1331
        %v1349 = vmul.f32 %v530, %v1341
        %1350 = vrot.lane.b32.xlu0 %v532, 88
        %v1351 = vpop.permute.xlu0 %1350
        %1352 = vrot.lane.b32.xlu0 %v533, 88
        %v1353 = vpop.permute.xlu0 %1352
        %1354 = vrot.lane.b32.xlu0 %v534, 88
        %v1355 = vpop.permute.xlu0 %1354
        %1356 = vrot.lane.b32.xlu0 %v535, 88
        %v1357 = vpop.permute.xlu0 %1356
        %1358 = vrot.lane.b32.xlu0 %v536, 88
        %v1359 = vpop.permute.xlu0 %1358
        %1360 = vrot.lane.b32.xlu0 %v537, 88
        %v1361 = vpop.permute.xlu0 %1360
        %1362 = vrot.lane.b32.xlu0 %v538, 88
        %v1363 = vpop.permute.xlu0 %1362
        %1364 = vrot.lane.b32.xlu0 %v539, 88
        %v1365 = vpop.permute.xlu0 %1364
        %v1374 = vsel %vm540, %v1351, 0.0
        %1375 = vadd.xlane.f32.xlu0 %v1374
        %v1376 = vpop.xlane.xlu0 %1375
        %v1377 = vsel %vm540, %v1353, 0.0
        %1378 = vadd.xlane.f32.xlu0 %v1377
        %v1379 = vpop.xlane.xlu0 %1378
        %v1380 = vsel %vm540, %v1355, 0.0
        %1381 = vadd.xlane.f32.xlu0 %v1380
        %v1382 = vpop.xlane.xlu0 %1381
        %v1383 = vsel %vm540, %v1357, 0.0
        %1384 = vadd.xlane.f32.xlu0 %v1383
        %v1385 = vpop.xlane.xlu0 %1384
        %v1386 = vsel %vm540, %v1359, 0.0
        %1387 = vadd.xlane.f32.xlu0 %v1386
        %v1388 = vpop.xlane.xlu0 %1387
        %v1389 = vsel %vm540, %v1361, 0.0
        %1390 = vadd.xlane.f32.xlu0 %v1389
        %v1391 = vpop.xlane.xlu0 %1390
        %v1392 = vsel %vm540, %v1363, 0.0
        %1393 = vadd.xlane.f32.xlu0 %v1392
        %v1394 = vpop.xlane.xlu0 %1393
        %v1395 = vsel %vm540, %v1365, 0.0
        %1396 = vadd.xlane.f32.xlu0 %v1395
        %v1397 = vpop.xlane.xlu0 %1396
        %v1398 = vadd.f32 %v1376, 1e-12
        %v1399 = vadd.f32 %v1379, 1e-12
        %v1400 = vadd.f32 %v1382, 1e-12
        %v1401 = vadd.f32 %v1385, 1e-12
        %v1402 = vadd.f32 %v1388, 1e-12
        %v1403 = vadd.f32 %v1391, 1e-12
        %v1404 = vadd.f32 %v1394, 1e-12
        %v1405 = vadd.f32 %v1397, 1e-12
        %v1406 = vrsqrt.pop %v1398
        %v1407 = vmul.f32 %v1406, %v1398
        %v1408 = vmul.f32 %v1407, %v1406
        %v1409 = vmul.f32 0.5, %v1408
        %v1410 = vsub.f32 1.5, %v1409
        %v1411 = vmul.f32 %v1406, %v1410
        %vm1412 = vweird.f32 %v1398
        %vm1413 = vweird.f32 %v1406
        %vm1414 = vmor %vm1412, %vm1413
        %v1415 = vsel %vm1414, %v1406, %v1411
        %v1416 = vrsqrt.pop %v1399
        %v1417 = vmul.f32 %v1416, %v1399
        %v1418 = vmul.f32 %v1417, %v1416
        %v1419 = vmul.f32 0.5, %v1418
        %v1420 = vsub.f32 1.5, %v1419
        %v1421 = vmul.f32 %v1416, %v1420
        %vm1422 = vweird.f32 %v1399
        %vm1423 = vweird.f32 %v1416
        %vm1424 = vmor %vm1422, %vm1423
        %v1425 = vsel %vm1424, %v1416, %v1421
        %v1426 = vrsqrt.pop %v1400
        %v1427 = vmul.f32 %v1426, %v1400
        %v1428 = vmul.f32 %v1427, %v1426
        %v1429 = vmul.f32 0.5, %v1428
        %v1430 = vsub.f32 1.5, %v1429
        %v1431 = vmul.f32 %v1426, %v1430
        %vm1432 = vweird.f32 %v1400
        %vm1433 = vweird.f32 %v1426
        %vm1434 = vmor %vm1432, %vm1433
        %v1435 = vsel %vm1434, %v1426, %v1431
        %v1436 = vrsqrt.pop %v1401
        %v1437 = vmul.f32 %v1436, %v1401
        %v1438 = vmul.f32 %v1437, %v1436
        %v1439 = vmul.f32 0.5, %v1438
        %v1440 = vsub.f32 1.5, %v1439
        %v1441 = vmul.f32 %v1436, %v1440
        %vm1442 = vweird.f32 %v1401
        %vm1443 = vweird.f32 %v1436
        %vm1444 = vmor %vm1442, %vm1443
        %v1445 = vsel %vm1444, %v1436, %v1441
        %v1446 = vrsqrt.pop %v1402
        %v1447 = vmul.f32 %v1446, %v1402
        %v1448 = vmul.f32 %v1447, %v1446
        %v1449 = vmul.f32 0.5, %v1448
        %v1450 = vsub.f32 1.5, %v1449
        %v1451 = vmul.f32 %v1446, %v1450
        %vm1452 = vweird.f32 %v1402
        %vm1453 = vweird.f32 %v1446
        %vm1454 = vmor %vm1452, %vm1453
        %v1455 = vsel %vm1454, %v1446, %v1451
        %v1456 = vrsqrt.pop %v1403
        %v1457 = vmul.f32 %v1456, %v1403
        %v1458 = vmul.f32 %v1457, %v1456
        %v1459 = vmul.f32 0.5, %v1458
        %v1460 = vsub.f32 1.5, %v1459
        %v1461 = vmul.f32 %v1456, %v1460
        %vm1462 = vweird.f32 %v1403
        %vm1463 = vweird.f32 %v1456
        %vm1464 = vmor %vm1462, %vm1463
        %v1465 = vsel %vm1464, %v1456, %v1461
        %v1466 = vrsqrt.pop %v1404
        %v1467 = vmul.f32 %v1466, %v1404
        %v1468 = vmul.f32 %v1467, %v1466
        %v1469 = vmul.f32 0.5, %v1468
        %v1470 = vsub.f32 1.5, %v1469
        %v1471 = vmul.f32 %v1466, %v1470
        %vm1472 = vweird.f32 %v1404
        %vm1473 = vweird.f32 %v1466
        %vm1474 = vmor %vm1472, %vm1473
        %v1475 = vsel %vm1474, %v1466, %v1471
        %v1476 = vrsqrt.pop %v1405
        %v1477 = vmul.f32 %v1476, %v1405
        %v1478 = vmul.f32 %v1477, %v1476
        %v1479 = vmul.f32 0.5, %v1478
        %v1480 = vsub.f32 1.5, %v1479
        %v1481 = vmul.f32 %v1476, %v1480
        %vm1482 = vweird.f32 %v1405
        %vm1483 = vweird.f32 %v1476
        %vm1484 = vmor %vm1482, %vm1483
        %v1485 = vsel %vm1484, %v1476, %v1481
        %v1486 = vmul.f32 %v513, %v1415
        %v1487 = vmul.f32 %v515, %v1425
        %v1488 = vmul.f32 %v518, %v1435
        %v1489 = vmul.f32 %v520, %v1445
        %v1490 = vmul.f32 %v523, %v1455
        %v1491 = vmul.f32 %v525, %v1465
        %v1492 = vmul.f32 %v528, %v1475
        %v1493 = vmul.f32 %v530, %v1485
        %s1494 = sld [smem:[#allocation2 + $0x1]]
        %v1495 = vstv %s1494
        %v1496 = vmul.f32 %v1342, %v1495
        %v1497 = vmul.f32 %v1343, %v1495
        %v1498 = vmul.f32 %v1344, %v1495
        %v1499 = vmul.f32 %v1345, %v1495
        %v1500 = vmul.f32 %v1346, %v1495
        %v1501 = vmul.f32 %v1347, %v1495
        %v1502 = vmul.f32 %v1348, %v1495
        %v1503 = vmul.f32 %v1349, %v1495
        %s1504 = scalar_lea.vmem %s6, 16
        %v1505 = vld [vmem:[%s1504] sm:$0xff]
        %v1506 = vld [vmem:[%s1504 + $0x8] sm:$0xff]
        %1509 = vrot.lane.b32.xlu0 %v1496, 120
        %v1510 = vpop.permute.xlu0 %1509
        %1511 = vrot.lane.b32.xlu0 %v1497, 120
        %v1512 = vpop.permute.xlu0 %1511
        %1515 = vrot.lane.b32.xlu0 %v1486, 88
        %v1516 = vpop.permute.xlu0 %1515
        %1517 = vrot.lane.b32.xlu0 %v1487, 88
        %v1518 = vpop.permute.xlu0 %1517
        %v1519 = vsel %vm540, %v1510, 0
        %v1521 = vsel %vm540, %v1512, 0
        %v1523 = vsel %vm540, %v1516, 0
        %v1525 = vsel %vm540, %v1518, 0
        %1527 = vmatpush.xpose.msra.mxu0 0.0
        %1528 = vmatpush.xpose.msra.mxu0 0.0
        %1529 = vmatpush.xpose.msra.mxu0 0.0
        %1530 = vmatpush.xpose.msra.mxu0 0.0
        %1531 = vmatpush.xpose.msra.mxu0 0.0
        %1532 = vmatpush.xpose.msra.mxu0 0.0
        %1533 = vmatpush.xpose.msra.mxu0 0.0
        %1534 = vmatpush.xpose.msra.mxu0 0.0
        %1535 = vmatpush.xpose.msra.mxu0 0.0
        %1536 = vmatpush.xpose.msra.mxu0 0.0
        %1537 = vmatpush.xpose.msra.mxu0 0.0
        %1538 = vmatpush.xpose.msra.mxu0 0.0
        %1539 = vmatpush.xpose.msra.mxu0 0.0
        %1540 = vmatpush.xpose.msra.mxu0 0.0
        %1541 = vmatpush.xpose.msra.mxu0 %v1525
        %1542 = vmatpush.xpose.msra.mxu0 %v1523
        %1543 = vmatmul.f32.gmra.mxu0 %v1519
        %v1544 = vpop.f32.mrf.mxu0
        %v1545 = vadd.f32 %v1505, %v1544
        %1546 = vmatmul.f32.gmra.mxu0 %v1521
        %v1547 = vpop.f32.mrf.mxu0
        %v1548 = vadd.f32 %v1506, %v1547
        %1549 = vdwg.mxu0
        %1552 = vrot.lane.b32.xlu0 %v1498, 120
        %v1553 = vpop.permute.xlu0 %1552
        %1554 = vrot.lane.b32.xlu0 %v1499, 120
        %v1555 = vpop.permute.xlu0 %1554
        %1558 = vrot.lane.b32.xlu0 %v1488, 88
        %v1559 = vpop.permute.xlu0 %1558
        %1560 = vrot.lane.b32.xlu0 %v1489, 88
        %v1561 = vpop.permute.xlu0 %1560
        %v1562 = vsel %vm540, %v1553, 0
        %v1564 = vsel %vm540, %v1555, 0
        %v1566 = vsel %vm540, %v1559, 0
        %v1568 = vsel %vm540, %v1561, 0
        %1570 = vmatpush.xpose.msra.mxu0 0.0
        %1571 = vmatpush.xpose.msra.mxu0 0.0
        %1572 = vmatpush.xpose.msra.mxu0 0.0
        %1573 = vmatpush.xpose.msra.mxu0 0.0
        %1574 = vmatpush.xpose.msra.mxu0 0.0
        %1575 = vmatpush.xpose.msra.mxu0 0.0
        %1576 = vmatpush.xpose.msra.mxu0 0.0
        %1577 = vmatpush.xpose.msra.mxu0 0.0
        %1578 = vmatpush.xpose.msra.mxu0 0.0
        %1579 = vmatpush.xpose.msra.mxu0 0.0
        %1580 = vmatpush.xpose.msra.mxu0 0.0
        %1581 = vmatpush.xpose.msra.mxu0 0.0
        %1582 = vmatpush.xpose.msra.mxu0 0.0
        %1583 = vmatpush.xpose.msra.mxu0 0.0
        %1584 = vmatpush.xpose.msra.mxu0 %v1568
        %1585 = vmatpush.xpose.msra.mxu0 %v1566
        %1586 = vmatmul.f32.gmra.mxu0 %v1562
        %v1587 = vpop.f32.mrf.mxu0
        %v1588 = vadd.f32 %v1505, %v1587
        %1589 = vmatmul.f32.gmra.mxu0 %v1564
        %v1590 = vpop.f32.mrf.mxu0
        %v1591 = vadd.f32 %v1506, %v1590
        %1592 = vdwg.mxu0
        %1595 = vrot.lane.b32.xlu0 %v1500, 120
        %v1596 = vpop.permute.xlu0 %1595
        %1597 = vrot.lane.b32.xlu0 %v1501, 120
        %v1598 = vpop.permute.xlu0 %1597
        %1601 = vrot.lane.b32.xlu0 %v1490, 88
        %v1602 = vpop.permute.xlu0 %1601
        %1603 = vrot.lane.b32.xlu0 %v1491, 88
        %v1604 = vpop.permute.xlu0 %1603
        %v1605 = vsel %vm540, %v1596, 0
        %v1607 = vsel %vm540, %v1598, 0
        %v1609 = vsel %vm540, %v1602, 0
        %v1611 = vsel %vm540, %v1604, 0
        %1613 = vmatpush.xpose.msra.mxu0 0.0
        %1614 = vmatpush.xpose.msra.mxu0 0.0
        %1615 = vmatpush.xpose.msra.mxu0 0.0
        %1616 = vmatpush.xpose.msra.mxu0 0.0
        %1617 = vmatpush.xpose.msra.mxu0 0.0
        %1618 = vmatpush.xpose.msra.mxu0 0.0
        %1619 = vmatpush.xpose.msra.mxu0 0.0
        %1620 = vmatpush.xpose.msra.mxu0 0.0
        %1621 = vmatpush.xpose.msra.mxu0 0.0
        %1622 = vmatpush.xpose.msra.mxu0 0.0
        %1623 = vmatpush.xpose.msra.mxu0 0.0
        %1624 = vmatpush.xpose.msra.mxu0 0.0
        %1625 = vmatpush.xpose.msra.mxu0 0.0
        %1626 = vmatpush.xpose.msra.mxu0 0.0
        %1627 = vmatpush.xpose.msra.mxu0 %v1611
        %1628 = vmatpush.xpose.msra.mxu0 %v1609
        %1629 = vmatmul.f32.gmra.mxu0 %v1605
        %v1630 = vpop.f32.mrf.mxu0
        %v1631 = vadd.f32 %v1505, %v1630
        %1632 = vmatmul.f32.gmra.mxu0 %v1607
        %v1633 = vpop.f32.mrf.mxu0
        %v1634 = vadd.f32 %v1506, %v1633
        %1635 = vdwg.mxu0
        %1638 = vrot.lane.b32.xlu0 %v1502, 120
        %v1639 = vpop.permute.xlu0 %1638
        %1640 = vrot.lane.b32.xlu0 %v1503, 120
        %v1641 = vpop.permute.xlu0 %1640
        %1644 = vrot.lane.b32.xlu0 %v1492, 88
        %v1645 = vpop.permute.xlu0 %1644
        %1646 = vrot.lane.b32.xlu0 %v1493, 88
        %v1647 = vpop.permute.xlu0 %1646
        %v1648 = vsel %vm540, %v1639, 0
        %v1650 = vsel %vm540, %v1641, 0
        %v1652 = vsel %vm540, %v1645, 0
        %v1654 = vsel %vm540, %v1647, 0
        %1656 = vmatpush.xpose.msra.mxu0 0.0
        %1657 = vmatpush.xpose.msra.mxu0 0.0
        %1658 = vmatpush.xpose.msra.mxu0 0.0
        %1659 = vmatpush.xpose.msra.mxu0 0.0
        %1660 = vmatpush.xpose.msra.mxu0 0.0
        %1661 = vmatpush.xpose.msra.mxu0 0.0
        %1662 = vmatpush.xpose.msra.mxu0 0.0
        %1663 = vmatpush.xpose.msra.mxu0 0.0
        %1664 = vmatpush.xpose.msra.mxu0 0.0
        %1665 = vmatpush.xpose.msra.mxu0 0.0
        %1666 = vmatpush.xpose.msra.mxu0 0.0
        %1667 = vmatpush.xpose.msra.mxu0 0.0
        %1668 = vmatpush.xpose.msra.mxu0 0.0
        %1669 = vmatpush.xpose.msra.mxu0 0.0
        %1670 = vmatpush.xpose.msra.mxu0 %v1654
        %1671 = vmatpush.xpose.msra.mxu0 %v1652
        %1672 = vmatmul.f32.gmra.mxu0 %v1648
        %v1673 = vpop.f32.mrf.mxu0
        %v1674 = vadd.f32 %v1505, %v1673
        %1675 = vmatmul.f32.gmra.mxu0 %v1650
        %v1676 = vpop.f32.mrf.mxu0
        %v1677 = vadd.f32 %v1506, %v1676
        %1678 = vdwg.mxu0
        %v1679 = vsel %vm981, %v1545, -inf
        %1680 = vmax.xlane.f32.xlu0 %v1679
        %v1681 = vpop.xlane.xlu0 %1680
        %v1682 = vsel %vm981, %v1548, -inf
        %1683 = vmax.xlane.f32.xlu0 %v1682
        %v1684 = vpop.xlane.xlu0 %1683
        %v1685 = vsel %vm981, %v1588, -inf
        %1686 = vmax.xlane.f32.xlu0 %v1685
        %v1687 = vpop.xlane.xlu0 %1686
        %v1688 = vsel %vm981, %v1591, -inf
        %1689 = vmax.xlane.f32.xlu0 %v1688
        %v1690 = vpop.xlane.xlu0 %1689
        %v1691 = vsel %vm981, %v1631, -inf
        %1692 = vmax.xlane.f32.xlu0 %v1691
        %v1693 = vpop.xlane.xlu0 %1692
        %v1694 = vsel %vm981, %v1634, -inf
        %1695 = vmax.xlane.f32.xlu0 %v1694
        %v1696 = vpop.xlane.xlu0 %1695
        %v1697 = vsel %vm981, %v1674, -inf
        %1698 = vmax.xlane.f32.xlu0 %v1697
        %v1699 = vpop.xlane.xlu0 %1698
        %v1700 = vsel %vm981, %v1677, -inf
        %1701 = vmax.xlane.f32.xlu0 %v1700
        %v1702 = vpop.xlane.xlu0 %1701
        %v1703 = vsub.f32 %v1545, %v1681
        %v1704 = vsub.f32 %v1548, %v1684
        %v1705 = vsub.f32 %v1588, %v1687
        %v1706 = vsub.f32 %v1591, %v1690
        %v1707 = vsub.f32 %v1631, %v1693
        %v1708 = vsub.f32 %v1634, %v1696
        %v1709 = vsub.f32 %v1674, %v1699
        %v1710 = vsub.f32 %v1677, %v1702
        %v1711 = vmul.f32 %v1703, 1.442695
        %v1712 = vpow.pop %v1711
        %v1713 = vmul.f32 %v1704, 1.442695
        %v1714 = vpow.pop %v1713
        %v1715 = vmul.f32 %v1705, 1.442695
        %v1716 = vpow.pop %v1715
        %v1717 = vmul.f32 %v1706, 1.442695
        %v1718 = vpow.pop %v1717
        %v1719 = vmul.f32 %v1707, 1.442695
        %v1720 = vpow.pop %v1719
        %v1721 = vmul.f32 %v1708, 1.442695
        %v1722 = vpow.pop %v1721
        %v1723 = vmul.f32 %v1709, 1.442695
        %v1724 = vpow.pop %v1723
        %v1725 = vmul.f32 %v1710, 1.442695
        %v1726 = vpow.pop %v1725
        %v1727 = vsel %vm981, %v1712, 0.0
        %1728 = vadd.xlane.f32.xlu0 %v1727
        %v1729 = vpop.xlane.xlu0 %1728
        %v1730 = vsel %vm981, %v1714, 0.0
        %1731 = vadd.xlane.f32.xlu0 %v1730
        %v1732 = vpop.xlane.xlu0 %1731
        %v1733 = vsel %vm981, %v1716, 0.0
        %1734 = vadd.xlane.f32.xlu0 %v1733
        %v1735 = vpop.xlane.xlu0 %1734
        %v1736 = vsel %vm981, %v1718, 0.0
        %1737 = vadd.xlane.f32.xlu0 %v1736
        %v1738 = vpop.xlane.xlu0 %1737
        %v1739 = vsel %vm981, %v1720, 0.0
        %1740 = vadd.xlane.f32.xlu0 %v1739
        %v1741 = vpop.xlane.xlu0 %1740
        %v1742 = vsel %vm981, %v1722, 0.0
        %1743 = vadd.xlane.f32.xlu0 %v1742
        %v1744 = vpop.xlane.xlu0 %1743
        %v1745 = vsel %vm981, %v1724, 0.0
        %1746 = vadd.xlane.f32.xlu0 %v1745
        %v1747 = vpop.xlane.xlu0 %1746
        %v1748 = vsel %vm981, %v1726, 0.0
        %1749 = vadd.xlane.f32.xlu0 %v1748
        %v1750 = vpop.xlane.xlu0 %1749
        %v1751 = vrcp.pop %v1729
        %v1752 = vrcp.pop %v1732
        %v1753 = vrcp.pop %v1735
        %v1754 = vrcp.pop %v1738
        %v1755 = vrcp.pop %v1741
        %v1756 = vrcp.pop %v1744
        %v1757 = vrcp.pop %v1747
        %v1758 = vrcp.pop %v1750
        %v1759 = vpack.c.bf16 %v1712, %v1712
        %v1760 = vpack.c.bf16 %v1714, %v1714
        %v1761 = vpack.c.bf16 %v1716, %v1716
        %v1762 = vpack.c.bf16 %v1718, %v1718
        %v1763 = vpack.c.bf16 %v1720, %v1720
        %v1764 = vpack.c.bf16 %v1722, %v1722
        %v1765 = vpack.c.bf16 %v1724, %v1724
        %v1766 = vpack.c.bf16 %v1726, %v1726
        %v1769 = vunpack.c.l.b16 %v1759
        %v1770 = vunpack.c.l.b16 %v1760
        %v1771 = vpack.c.b16 %v1770, %v1769
        %1772 = vrot.lane.b32.xlu0 %v1087, 56
        %v1773 = vpop.permute.xlu0 %1772
        %v1776 = vsel %vm981, %v1771, 0
        %1778 = vmatpush.bf16.msra.mxu0 0
        %1779 = vmatpush.bf16.msra.mxu0 0
        %1780 = vmatpush.bf16.msra.mxu0 0
        %1781 = vmatpush.bf16.msra.mxu0 0
        %1782 = vmatpush.bf16.msra.mxu0 0
        %1783 = vmatpush.bf16.msra.mxu0 0
        %1784 = vmatpush.bf16.msra.mxu0 0
        %1785 = vmatpush.bf16.msra.mxu0 %v1773
        %1786 = vmatmul.bf16.gmra.mxu0 %v1776
        %v1787 = vpop.f32.mrf.mxu0
        %v1788 = vadd.f32 0.0, %v1787
        %v1789 = vpop.f32.mrf.mxu0
        %v1790 = vadd.f32 0.0, %v1789
        %1791 = vdwg.mxu0
        %v1794 = vunpack.c.l.b16 %v1761
        %v1795 = vunpack.c.l.b16 %v1762
        %v1796 = vpack.c.b16 %v1795, %v1794
        %1797 = vrot.lane.b32.xlu0 %v1117, 56
        %v1798 = vpop.permute.xlu0 %1797
        %v1801 = vsel %vm981, %v1796, 0
        %1803 = vmatpush.bf16.msra.mxu0 0
        %1804 = vmatpush.bf16.msra.mxu0 0
        %1805 = vmatpush.bf16.msra.mxu0 0
        %1806 = vmatpush.bf16.msra.mxu0 0
        %1807 = vmatpush.bf16.msra.mxu0 0
        %1808 = vmatpush.bf16.msra.mxu0 0
        %1809 = vmatpush.bf16.msra.mxu0 0
        %1810 = vmatpush.bf16.msra.mxu0 %v1798
        %1811 = vmatmul.bf16.gmra.mxu0 %v1801
        %v1812 = vpop.f32.mrf.mxu0
        %v1813 = vadd.f32 0.0, %v1812
        %v1814 = vpop.f32.mrf.mxu0
        %v1815 = vadd.f32 0.0, %v1814
        %1816 = vdwg.mxu0
        %v1819 = vunpack.c.l.b16 %v1763
        %v1820 = vunpack.c.l.b16 %v1764
        %v1821 = vpack.c.b16 %v1820, %v1819
        %1822 = vrot.lane.b32.xlu0 %v1147, 56
        %v1823 = vpop.permute.xlu0 %1822
        %v1826 = vsel %vm981, %v1821, 0
        %1828 = vmatpush.bf16.msra.mxu0 0
        %1829 = vmatpush.bf16.msra.mxu0 0
        %1830 = vmatpush.bf16.msra.mxu0 0
        %1831 = vmatpush.bf16.msra.mxu0 0
        %1832 = vmatpush.bf16.msra.mxu0 0
        %1833 = vmatpush.bf16.msra.mxu0 0
        %1834 = vmatpush.bf16.msra.mxu0 0
        %1835 = vmatpush.bf16.msra.mxu0 %v1823
        %1836 = vmatmul.bf16.gmra.mxu0 %v1826
        %v1837 = vpop.f32.mrf.mxu0
        %v1838 = vadd.f32 0.0, %v1837
        %v1839 = vpop.f32.mrf.mxu0
        %v1840 = vadd.f32 0.0, %v1839
        %1841 = vdwg.mxu0
        %v1844 = vunpack.c.l.b16 %v1765
        %v1845 = vunpack.c.l.b16 %v1766
        %v1846 = vpack.c.b16 %v1845, %v1844
        %1847 = vrot.lane.b32.xlu0 %v1177, 56
        %v1848 = vpop.permute.xlu0 %1847
        %v1851 = vsel %vm981, %v1846, 0
        %1853 = vmatpush.bf16.msra.mxu0 0
        %1854 = vmatpush.bf16.msra.mxu0 0
        %1855 = vmatpush.bf16.msra.mxu0 0
        %1856 = vmatpush.bf16.msra.mxu0 0
        %1857 = vmatpush.bf16.msra.mxu0 0
        %1858 = vmatpush.bf16.msra.mxu0 0
        %1859 = vmatpush.bf16.msra.mxu0 0
        %1860 = vmatpush.bf16.msra.mxu0 %v1848
        %1861 = vmatmul.bf16.gmra.mxu0 %v1851
        %v1862 = vpop.f32.mrf.mxu0
        %v1863 = vadd.f32 0.0, %v1862
        %v1864 = vpop.f32.mrf.mxu0
        %v1865 = vadd.f32 0.0, %v1864
        %1866 = vdwg.mxu0
        %v1867 = vmul.f32 %v1788, %v1751
        %v1868 = vmul.f32 %v1790, %v1752
        %v1869 = vmul.f32 %v1813, %v1753
        %v1870 = vmul.f32 %v1815, %v1754
        %v1871 = vmul.f32 %v1838, %v1755
        %v1872 = vmul.f32 %v1840, %v1756
        %v1873 = vmul.f32 %v1863, %v1757
        %v1874 = vmul.f32 %v1865, %v1758
        %1875 = vrot.lane.b32.xlu0 %v532, 112
        %v1876 = vpop.permute.xlu0 %1875
        %1877 = vrot.lane.b32.xlu0 %v533, 112
        %v1878 = vpop.permute.xlu0 %1877
        %1879 = vrot.lane.b32.xlu0 %v534, 112
        %v1880 = vpop.permute.xlu0 %1879
        %1881 = vrot.lane.b32.xlu0 %v535, 112
        %v1882 = vpop.permute.xlu0 %1881
        %1883 = vrot.lane.b32.xlu0 %v536, 112
        %v1884 = vpop.permute.xlu0 %1883
        %1885 = vrot.lane.b32.xlu0 %v537, 112
        %v1886 = vpop.permute.xlu0 %1885
        %1887 = vrot.lane.b32.xlu0 %v538, 112
        %v1888 = vpop.permute.xlu0 %1887
        %1889 = vrot.lane.b32.xlu0 %v539, 112
        %v1890 = vpop.permute.xlu0 %1889
        %v1899 = vsel %vm540, %v1876, 0.0
        %1900 = vadd.xlane.f32.xlu0 %v1899
        %v1901 = vpop.xlane.xlu0 %1900
        %v1902 = vsel %vm540, %v1878, 0.0
        %1903 = vadd.xlane.f32.xlu0 %v1902
        %v1904 = vpop.xlane.xlu0 %1903
        %v1905 = vsel %vm540, %v1880, 0.0
        %1906 = vadd.xlane.f32.xlu0 %v1905
        %v1907 = vpop.xlane.xlu0 %1906
        %v1908 = vsel %vm540, %v1882, 0.0
        %1909 = vadd.xlane.f32.xlu0 %v1908
        %v1910 = vpop.xlane.xlu0 %1909
        %v1911 = vsel %vm540, %v1884, 0.0
        %1912 = vadd.xlane.f32.xlu0 %v1911
        %v1913 = vpop.xlane.xlu0 %1912
        %v1914 = vsel %vm540, %v1886, 0.0
        %1915 = vadd.xlane.f32.xlu0 %v1914
        %v1916 = vpop.xlane.xlu0 %1915
        %v1917 = vsel %vm540, %v1888, 0.0
        %1918 = vadd.xlane.f32.xlu0 %v1917
        %v1919 = vpop.xlane.xlu0 %1918
        %v1920 = vsel %vm540, %v1890, 0.0
        %1921 = vadd.xlane.f32.xlu0 %v1920
        %v1922 = vpop.xlane.xlu0 %1921
        %v1923 = vadd.f32 %v1901, 1e-12
        %v1924 = vadd.f32 %v1904, 1e-12
        %v1925 = vadd.f32 %v1907, 1e-12
        %v1926 = vadd.f32 %v1910, 1e-12
        %v1927 = vadd.f32 %v1913, 1e-12
        %v1928 = vadd.f32 %v1916, 1e-12
        %v1929 = vadd.f32 %v1919, 1e-12
        %v1930 = vadd.f32 %v1922, 1e-12
        %v1931 = vrsqrt.pop %v1923
        %v1932 = vmul.f32 %v1931, %v1923
        %v1933 = vmul.f32 %v1932, %v1931
        %v1934 = vmul.f32 0.5, %v1933
        %v1935 = vsub.f32 1.5, %v1934
        %v1936 = vmul.f32 %v1931, %v1935
        %vm1937 = vweird.f32 %v1923
        %vm1938 = vweird.f32 %v1931
        %vm1939 = vmor %vm1937, %vm1938
        %v1940 = vsel %vm1939, %v1931, %v1936
        %v1941 = vrsqrt.pop %v1924
        %v1942 = vmul.f32 %v1941, %v1924
        %v1943 = vmul.f32 %v1942, %v1941
        %v1944 = vmul.f32 0.5, %v1943
        %v1945 = vsub.f32 1.5, %v1944
        %v1946 = vmul.f32 %v1941, %v1945
        %vm1947 = vweird.f32 %v1924
        %vm1948 = vweird.f32 %v1941
        %vm1949 = vmor %vm1947, %vm1948
        %v1950 = vsel %vm1949, %v1941, %v1946
        %v1951 = vrsqrt.pop %v1925
        %v1952 = vmul.f32 %v1951, %v1925
        %v1953 = vmul.f32 %v1952, %v1951
        %v1954 = vmul.f32 0.5, %v1953
        %v1955 = vsub.f32 1.5, %v1954
        %v1956 = vmul.f32 %v1951, %v1955
        %vm1957 = vweird.f32 %v1925
        %vm1958 = vweird.f32 %v1951
        %vm1959 = vmor %vm1957, %vm1958
        %v1960 = vsel %vm1959, %v1951, %v1956
        %v1961 = vrsqrt.pop %v1926
        %v1962 = vmul.f32 %v1961, %v1926
        %v1963 = vmul.f32 %v1962, %v1961
        %v1964 = vmul.f32 0.5, %v1963
        %v1965 = vsub.f32 1.5, %v1964
        %v1966 = vmul.f32 %v1961, %v1965
        %vm1967 = vweird.f32 %v1926
        %vm1968 = vweird.f32 %v1961
        %vm1969 = vmor %vm1967, %vm1968
        %v1970 = vsel %vm1969, %v1961, %v1966
        %v1971 = vrsqrt.pop %v1927
        %v1972 = vmul.f32 %v1971, %v1927
        %v1973 = vmul.f32 %v1972, %v1971
        %v1974 = vmul.f32 0.5, %v1973
        %v1975 = vsub.f32 1.5, %v1974
        %v1976 = vmul.f32 %v1971, %v1975
        %vm1977 = vweird.f32 %v1927
        %vm1978 = vweird.f32 %v1971
        %vm1979 = vmor %vm1977, %vm1978
        %v1980 = vsel %vm1979, %v1971, %v1976
        %v1981 = vrsqrt.pop %v1928
        %v1982 = vmul.f32 %v1981, %v1928
        %v1983 = vmul.f32 %v1982, %v1981
        %v1984 = vmul.f32 0.5, %v1983
        %v1985 = vsub.f32 1.5, %v1984
        %v1986 = vmul.f32 %v1981, %v1985
        %vm1987 = vweird.f32 %v1928
        %vm1988 = vweird.f32 %v1981
        %vm1989 = vmor %vm1987, %vm1988
        %v1990 = vsel %vm1989, %v1981, %v1986
        %v1991 = vrsqrt.pop %v1929
        %v1992 = vmul.f32 %v1991, %v1929
        %v1993 = vmul.f32 %v1992, %v1991
        %v1994 = vmul.f32 0.5, %v1993
        %v1995 = vsub.f32 1.5, %v1994
        %v1996 = vmul.f32 %v1991, %v1995
        %vm1997 = vweird.f32 %v1929
        %vm1998 = vweird.f32 %v1991
        %vm1999 = vmor %vm1997, %vm1998
        %v2000 = vsel %vm1999, %v1991, %v1996
        %v2001 = vrsqrt.pop %v1930
        %v2002 = vmul.f32 %v2001, %v1930
        %v2003 = vmul.f32 %v2002, %v2001
        %v2004 = vmul.f32 0.5, %v2003
        %v2005 = vsub.f32 1.5, %v2004
        %v2006 = vmul.f32 %v2001, %v2005
        %vm2007 = vweird.f32 %v1930
        %vm2008 = vweird.f32 %v2001
        %vm2009 = vmor %vm2007, %vm2008
        %v2010 = vsel %vm2009, %v2001, %v2006
        %v2011 = vmul.f32 %v513, %v1940
        %v2012 = vmul.f32 %v515, %v1950
        %v2013 = vmul.f32 %v518, %v1960
        %v2014 = vmul.f32 %v520, %v1970
        %v2015 = vmul.f32 %v523, %v1980
        %v2016 = vmul.f32 %v525, %v1990
        %v2017 = vmul.f32 %v528, %v2000
        %v2018 = vmul.f32 %v530, %v2010
        %2019 = vrot.lane.b32.xlu0 %v532, 80
        %v2020 = vpop.permute.xlu0 %2019
        %2021 = vrot.lane.b32.xlu0 %v533, 80
        %v2022 = vpop.permute.xlu0 %2021
        %2023 = vrot.lane.b32.xlu0 %v534, 80
        %v2024 = vpop.permute.xlu0 %2023
        %2025 = vrot.lane.b32.xlu0 %v535, 80
        %v2026 = vpop.permute.xlu0 %2025
        %2027 = vrot.lane.b32.xlu0 %v536, 80
        %v2028 = vpop.permute.xlu0 %2027
        %2029 = vrot.lane.b32.xlu0 %v537, 80
        %v2030 = vpop.permute.xlu0 %2029
        %2031 = vrot.lane.b32.xlu0 %v538, 80
        %v2032 = vpop.permute.xlu0 %2031
        %2033 = vrot.lane.b32.xlu0 %v539, 80
        %v2034 = vpop.permute.xlu0 %2033
        %v2043 = vsel %vm540, %v2020, 0.0
        %2044 = vadd.xlane.f32.xlu0 %v2043
        %v2045 = vpop.xlane.xlu0 %2044
        %v2046 = vsel %vm540, %v2022, 0.0
        %2047 = vadd.xlane.f32.xlu0 %v2046
        %v2048 = vpop.xlane.xlu0 %2047
        %v2049 = vsel %vm540, %v2024, 0.0
        %2050 = vadd.xlane.f32.xlu0 %v2049
        %v2051 = vpop.xlane.xlu0 %2050
        %v2052 = vsel %vm540, %v2026, 0.0
        %2053 = vadd.xlane.f32.xlu0 %v2052
        %v2054 = vpop.xlane.xlu0 %2053
        %v2055 = vsel %vm540, %v2028, 0.0
        %2056 = vadd.xlane.f32.xlu0 %v2055
        %v2057 = vpop.xlane.xlu0 %2056
        %v2058 = vsel %vm540, %v2030, 0.0
        %2059 = vadd.xlane.f32.xlu0 %v2058
        %v2060 = vpop.xlane.xlu0 %2059
        %v2061 = vsel %vm540, %v2032, 0.0
        %2062 = vadd.xlane.f32.xlu0 %v2061
        %v2063 = vpop.xlane.xlu0 %2062
        %v2064 = vsel %vm540, %v2034, 0.0
        %2065 = vadd.xlane.f32.xlu0 %v2064
        %v2066 = vpop.xlane.xlu0 %2065
        %v2067 = vadd.f32 %v2045, 1e-12
        %v2068 = vadd.f32 %v2048, 1e-12
        %v2069 = vadd.f32 %v2051, 1e-12
        %v2070 = vadd.f32 %v2054, 1e-12
        %v2071 = vadd.f32 %v2057, 1e-12
        %v2072 = vadd.f32 %v2060, 1e-12
        %v2073 = vadd.f32 %v2063, 1e-12
        %v2074 = vadd.f32 %v2066, 1e-12
        %v2075 = vrsqrt.pop %v2067
        %v2076 = vmul.f32 %v2075, %v2067
        %v2077 = vmul.f32 %v2076, %v2075
        %v2078 = vmul.f32 0.5, %v2077
        %v2079 = vsub.f32 1.5, %v2078
        %v2080 = vmul.f32 %v2075, %v2079
        %vm2081 = vweird.f32 %v2067
        %vm2082 = vweird.f32 %v2075
        %vm2083 = vmor %vm2081, %vm2082
        %v2084 = vsel %vm2083, %v2075, %v2080
        %v2085 = vrsqrt.pop %v2068
        %v2086 = vmul.f32 %v2085, %v2068
        %v2087 = vmul.f32 %v2086, %v2085
        %v2088 = vmul.f32 0.5, %v2087
        %v2089 = vsub.f32 1.5, %v2088
        %v2090 = vmul.f32 %v2085, %v2089
        %vm2091 = vweird.f32 %v2068
        %vm2092 = vweird.f32 %v2085
        %vm2093 = vmor %vm2091, %vm2092
        %v2094 = vsel %vm2093, %v2085, %v2090
        %v2095 = vrsqrt.pop %v2069
        %v2096 = vmul.f32 %v2095, %v2069
        %v2097 = vmul.f32 %v2096, %v2095
        %v2098 = vmul.f32 0.5, %v2097
        %v2099 = vsub.f32 1.5, %v2098
        %v2100 = vmul.f32 %v2095, %v2099
        %vm2101 = vweird.f32 %v2069
        %vm2102 = vweird.f32 %v2095
        %vm2103 = vmor %vm2101, %vm2102
        %v2104 = vsel %vm2103, %v2095, %v2100
        %v2105 = vrsqrt.pop %v2070
        %v2106 = vmul.f32 %v2105, %v2070
        %v2107 = vmul.f32 %v2106, %v2105
        %v2108 = vmul.f32 0.5, %v2107
        %v2109 = vsub.f32 1.5, %v2108
        %v2110 = vmul.f32 %v2105, %v2109
        %vm2111 = vweird.f32 %v2070
        %vm2112 = vweird.f32 %v2105
        %vm2113 = vmor %vm2111, %vm2112
        %v2114 = vsel %vm2113, %v2105, %v2110
        %v2115 = vrsqrt.pop %v2071
        %v2116 = vmul.f32 %v2115, %v2071
        %v2117 = vmul.f32 %v2116, %v2115
        %v2118 = vmul.f32 0.5, %v2117
        %v2119 = vsub.f32 1.5, %v2118
        %v2120 = vmul.f32 %v2115, %v2119
        %vm2121 = vweird.f32 %v2071
        %vm2122 = vweird.f32 %v2115
        %vm2123 = vmor %vm2121, %vm2122
        %v2124 = vsel %vm2123, %v2115, %v2120
        %v2125 = vrsqrt.pop %v2072
        %v2126 = vmul.f32 %v2125, %v2072
        %v2127 = vmul.f32 %v2126, %v2125
        %v2128 = vmul.f32 0.5, %v2127
        %v2129 = vsub.f32 1.5, %v2128
        %v2130 = vmul.f32 %v2125, %v2129
        %vm2131 = vweird.f32 %v2072
        %vm2132 = vweird.f32 %v2125
        %vm2133 = vmor %vm2131, %vm2132
        %v2134 = vsel %vm2133, %v2125, %v2130
        %v2135 = vrsqrt.pop %v2073
        %v2136 = vmul.f32 %v2135, %v2073
        %v2137 = vmul.f32 %v2136, %v2135
        %v2138 = vmul.f32 0.5, %v2137
        %v2139 = vsub.f32 1.5, %v2138
        %v2140 = vmul.f32 %v2135, %v2139
        %vm2141 = vweird.f32 %v2073
        %vm2142 = vweird.f32 %v2135
        %vm2143 = vmor %vm2141, %vm2142
        %v2144 = vsel %vm2143, %v2135, %v2140
        %v2145 = vrsqrt.pop %v2074
        %v2146 = vmul.f32 %v2145, %v2074
        %v2147 = vmul.f32 %v2146, %v2145
        %v2148 = vmul.f32 0.5, %v2147
        %v2149 = vsub.f32 1.5, %v2148
        %v2150 = vmul.f32 %v2145, %v2149
        %vm2151 = vweird.f32 %v2074
        %vm2152 = vweird.f32 %v2145
        %vm2153 = vmor %vm2151, %vm2152
        %v2154 = vsel %vm2153, %v2145, %v2150
        %v2155 = vmul.f32 %v513, %v2084
        %v2156 = vmul.f32 %v515, %v2094
        %v2157 = vmul.f32 %v518, %v2104
        %v2158 = vmul.f32 %v520, %v2114
        %v2159 = vmul.f32 %v523, %v2124
        %v2160 = vmul.f32 %v525, %v2134
        %v2161 = vmul.f32 %v528, %v2144
        %v2162 = vmul.f32 %v530, %v2154
        %s2163 = sld [smem:[#allocation2 + $0x2]]
        %v2164 = vstv %s2163
        %v2165 = vmul.f32 %v2011, %v2164
        %v2166 = vmul.f32 %v2012, %v2164
        %v2167 = vmul.f32 %v2013, %v2164
        %v2168 = vmul.f32 %v2014, %v2164
        %v2169 = vmul.f32 %v2015, %v2164
        %v2170 = vmul.f32 %v2016, %v2164
        %v2171 = vmul.f32 %v2017, %v2164
        %v2172 = vmul.f32 %v2018, %v2164
        %s2173 = scalar_lea.vmem %s6, 32
        %v2174 = vld [vmem:[%s2173] sm:$0xff]
        %v2175 = vld [vmem:[%s2173 + $0x8] sm:$0xff]
        %2178 = vrot.lane.b32.xlu0 %v2165, 112
        %v2179 = vpop.permute.xlu0 %2178
        %2180 = vrot.lane.b32.xlu0 %v2166, 112
        %v2181 = vpop.permute.xlu0 %2180
        %2184 = vrot.lane.b32.xlu0 %v2155, 80
        %v2185 = vpop.permute.xlu0 %2184
        %2186 = vrot.lane.b32.xlu0 %v2156, 80
        %v2187 = vpop.permute.xlu0 %2186
        %v2188 = vsel %vm540, %v2179, 0
        %v2190 = vsel %vm540, %v2181, 0
        %v2192 = vsel %vm540, %v2185, 0
        %v2194 = vsel %vm540, %v2187, 0
        %2196 = vmatpush.xpose.msra.mxu0 0.0
        %2197 = vmatpush.xpose.msra.mxu0 0.0
        %2198 = vmatpush.xpose.msra.mxu0 0.0
        %2199 = vmatpush.xpose.msra.mxu0 0.0
        %2200 = vmatpush.xpose.msra.mxu0 0.0
        %2201 = vmatpush.xpose.msra.mxu0 0.0
        %2202 = vmatpush.xpose.msra.mxu0 0.0
        %2203 = vmatpush.xpose.msra.mxu0 0.0
        %2204 = vmatpush.xpose.msra.mxu0 0.0
        %2205 = vmatpush.xpose.msra.mxu0 0.0
        %2206 = vmatpush.xpose.msra.mxu0 0.0
        %2207 = vmatpush.xpose.msra.mxu0 0.0
        %2208 = vmatpush.xpose.msra.mxu0 0.0
        %2209 = vmatpush.xpose.msra.mxu0 0.0
        %2210 = vmatpush.xpose.msra.mxu0 %v2194
        %2211 = vmatpush.xpose.msra.mxu0 %v2192
        %2212 = vmatmul.f32.gmra.mxu0 %v2188
        %v2213 = vpop.f32.mrf.mxu0
        %v2214 = vadd.f32 %v2174, %v2213
        %2215 = vmatmul.f32.gmra.mxu0 %v2190
        %v2216 = vpop.f32.mrf.mxu0
        %v2217 = vadd.f32 %v2175, %v2216
        %2218 = vdwg.mxu0
        %2221 = vrot.lane.b32.xlu0 %v2167, 112
        %v2222 = vpop.permute.xlu0 %2221
        %2223 = vrot.lane.b32.xlu0 %v2168, 112
        %v2224 = vpop.permute.xlu0 %2223
        %2227 = vrot.lane.b32.xlu0 %v2157, 80
        %v2228 = vpop.permute.xlu0 %2227
        %2229 = vrot.lane.b32.xlu0 %v2158, 80
        %v2230 = vpop.permute.xlu0 %2229
        %v2231 = vsel %vm540, %v2222, 0
        %v2233 = vsel %vm540, %v2224, 0
        %v2235 = vsel %vm540, %v2228, 0
        %v2237 = vsel %vm540, %v2230, 0
        %2239 = vmatpush.xpose.msra.mxu0 0.0
        %2240 = vmatpush.xpose.msra.mxu0 0.0
        %2241 = vmatpush.xpose.msra.mxu0 0.0
        %2242 = vmatpush.xpose.msra.mxu0 0.0
        %2243 = vmatpush.xpose.msra.mxu0 0.0
        %2244 = vmatpush.xpose.msra.mxu0 0.0
        %2245 = vmatpush.xpose.msra.mxu0 0.0
        %2246 = vmatpush.xpose.msra.mxu0 0.0
        %2247 = vmatpush.xpose.msra.mxu0 0.0
        %2248 = vmatpush.xpose.msra.mxu0 0.0
        %2249 = vmatpush.xpose.msra.mxu0 0.0
        %2250 = vmatpush.xpose.msra.mxu0 0.0
        %2251 = vmatpush.xpose.msra.mxu0 0.0
        %2252 = vmatpush.xpose.msra.mxu0 0.0
        %2253 = vmatpush.xpose.msra.mxu0 %v2237
        %2254 = vmatpush.xpose.msra.mxu0 %v2235
        %2255 = vmatmul.f32.gmra.mxu0 %v2231
        %v2256 = vpop.f32.mrf.mxu0
        %v2257 = vadd.f32 %v2174, %v2256
        %2258 = vmatmul.f32.gmra.mxu0 %v2233
        %v2259 = vpop.f32.mrf.mxu0
        %v2260 = vadd.f32 %v2175, %v2259
        %2261 = vdwg.mxu0
        %2264 = vrot.lane.b32.xlu0 %v2169, 112
        %v2265 = vpop.permute.xlu0 %2264
        %2266 = vrot.lane.b32.xlu0 %v2170, 112
        %v2267 = vpop.permute.xlu0 %2266
        %2270 = vrot.lane.b32.xlu0 %v2159, 80
        %v2271 = vpop.permute.xlu0 %2270
        %2272 = vrot.lane.b32.xlu0 %v2160, 80
        %v2273 = vpop.permute.xlu0 %2272
        %v2274 = vsel %vm540, %v2265, 0
        %v2276 = vsel %vm540, %v2267, 0
        %v2278 = vsel %vm540, %v2271, 0
        %v2280 = vsel %vm540, %v2273, 0
        %2282 = vmatpush.xpose.msra.mxu0 0.0
        %2283 = vmatpush.xpose.msra.mxu0 0.0
        %2284 = vmatpush.xpose.msra.mxu0 0.0
        %2285 = vmatpush.xpose.msra.mxu0 0.0
        %2286 = vmatpush.xpose.msra.mxu0 0.0
        %2287 = vmatpush.xpose.msra.mxu0 0.0
        %2288 = vmatpush.xpose.msra.mxu0 0.0
        %2289 = vmatpush.xpose.msra.mxu0 0.0
        %2290 = vmatpush.xpose.msra.mxu0 0.0
        %2291 = vmatpush.xpose.msra.mxu0 0.0
        %2292 = vmatpush.xpose.msra.mxu0 0.0
        %2293 = vmatpush.xpose.msra.mxu0 0.0
        %2294 = vmatpush.xpose.msra.mxu0 0.0
        %2295 = vmatpush.xpose.msra.mxu0 0.0
        %2296 = vmatpush.xpose.msra.mxu0 %v2280
        %2297 = vmatpush.xpose.msra.mxu0 %v2278
        %2298 = vmatmul.f32.gmra.mxu0 %v2274
        %v2299 = vpop.f32.mrf.mxu0
        %v2300 = vadd.f32 %v2174, %v2299
        %2301 = vmatmul.f32.gmra.mxu0 %v2276
        %v2302 = vpop.f32.mrf.mxu0
        %v2303 = vadd.f32 %v2175, %v2302
        %2304 = vdwg.mxu0
        %2307 = vrot.lane.b32.xlu0 %v2171, 112
        %v2308 = vpop.permute.xlu0 %2307
        %2309 = vrot.lane.b32.xlu0 %v2172, 112
        %v2310 = vpop.permute.xlu0 %2309
        %2313 = vrot.lane.b32.xlu0 %v2161, 80
        %v2314 = vpop.permute.xlu0 %2313
        %2315 = vrot.lane.b32.xlu0 %v2162, 80
        %v2316 = vpop.permute.xlu0 %2315
        %v2317 = vsel %vm540, %v2308, 0
        %v2319 = vsel %vm540, %v2310, 0
        %v2321 = vsel %vm540, %v2314, 0
        %v2323 = vsel %vm540, %v2316, 0
        %2325 = vmatpush.xpose.msra.mxu0 0.0
        %2326 = vmatpush.xpose.msra.mxu0 0.0
        %2327 = vmatpush.xpose.msra.mxu0 0.0
        %2328 = vmatpush.xpose.msra.mxu0 0.0
        %2329 = vmatpush.xpose.msra.mxu0 0.0
        %2330 = vmatpush.xpose.msra.mxu0 0.0
        %2331 = vmatpush.xpose.msra.mxu0 0.0
        %2332 = vmatpush.xpose.msra.mxu0 0.0
        %2333 = vmatpush.xpose.msra.mxu0 0.0
        %2334 = vmatpush.xpose.msra.mxu0 0.0
        %2335 = vmatpush.xpose.msra.mxu0 0.0
        %2336 = vmatpush.xpose.msra.mxu0 0.0
        %2337 = vmatpush.xpose.msra.mxu0 0.0
        %2338 = vmatpush.xpose.msra.mxu0 0.0
        %2339 = vmatpush.xpose.msra.mxu0 %v2323
        %2340 = vmatpush.xpose.msra.mxu0 %v2321
        %2341 = vmatmul.f32.gmra.mxu0 %v2317
        %v2342 = vpop.f32.mrf.mxu0
        %v2343 = vadd.f32 %v2174, %v2342
        %2344 = vmatmul.f32.gmra.mxu0 %v2319
        %v2345 = vpop.f32.mrf.mxu0
        %v2346 = vadd.f32 %v2175, %v2345
        %2347 = vdwg.mxu0
        %v2348 = vsel %vm981, %v2214, -inf
        %2349 = vmax.xlane.f32.xlu0 %v2348
        %v2350 = vpop.xlane.xlu0 %2349
        %v2351 = vsel %vm981, %v2217, -inf
        %2352 = vmax.xlane.f32.xlu0 %v2351
        %v2353 = vpop.xlane.xlu0 %2352
        %v2354 = vsel %vm981, %v2257, -inf
        %2355 = vmax.xlane.f32.xlu0 %v2354
        %v2356 = vpop.xlane.xlu0 %2355
        %v2357 = vsel %vm981, %v2260, -inf
        %2358 = vmax.xlane.f32.xlu0 %v2357
        %v2359 = vpop.xlane.xlu0 %2358
        %v2360 = vsel %vm981, %v2300, -inf
        %2361 = vmax.xlane.f32.xlu0 %v2360
        %v2362 = vpop.xlane.xlu0 %2361
        %v2363 = vsel %vm981, %v2303, -inf
        %2364 = vmax.xlane.f32.xlu0 %v2363
        %v2365 = vpop.xlane.xlu0 %2364
        %v2366 = vsel %vm981, %v2343, -inf
        %2367 = vmax.xlane.f32.xlu0 %v2366
        %v2368 = vpop.xlane.xlu0 %2367
        %v2369 = vsel %vm981, %v2346, -inf
        %2370 = vmax.xlane.f32.xlu0 %v2369
        %v2371 = vpop.xlane.xlu0 %2370
        %v2372 = vsub.f32 %v2214, %v2350
        %v2373 = vsub.f32 %v2217, %v2353
        %v2374 = vsub.f32 %v2257, %v2356
        %v2375 = vsub.f32 %v2260, %v2359
        %v2376 = vsub.f32 %v2300, %v2362
        %v2377 = vsub.f32 %v2303, %v2365
        %v2378 = vsub.f32 %v2343, %v2368
        %v2379 = vsub.f32 %v2346, %v2371
        %v2380 = vmul.f32 %v2372, 1.442695
        %v2381 = vpow.pop %v2380
        %v2382 = vmul.f32 %v2373, 1.442695
        %v2383 = vpow.pop %v2382
        %v2384 = vmul.f32 %v2374, 1.442695
        %v2385 = vpow.pop %v2384
        %v2386 = vmul.f32 %v2375, 1.442695
        %v2387 = vpow.pop %v2386
        %v2388 = vmul.f32 %v2376, 1.442695
        %v2389 = vpow.pop %v2388
        %v2390 = vmul.f32 %v2377, 1.442695
        %v2391 = vpow.pop %v2390
        %v2392 = vmul.f32 %v2378, 1.442695
        %v2393 = vpow.pop %v2392
        %v2394 = vmul.f32 %v2379, 1.442695
        %v2395 = vpow.pop %v2394
        %v2396 = vsel %vm981, %v2381, 0.0
        %2397 = vadd.xlane.f32.xlu0 %v2396
        %v2398 = vpop.xlane.xlu0 %2397
        %v2399 = vsel %vm981, %v2383, 0.0
        %2400 = vadd.xlane.f32.xlu0 %v2399
        %v2401 = vpop.xlane.xlu0 %2400
        %v2402 = vsel %vm981, %v2385, 0.0
        %2403 = vadd.xlane.f32.xlu0 %v2402
        %v2404 = vpop.xlane.xlu0 %2403
        %v2405 = vsel %vm981, %v2387, 0.0
        %2406 = vadd.xlane.f32.xlu0 %v2405
        %v2407 = vpop.xlane.xlu0 %2406
        %v2408 = vsel %vm981, %v2389, 0.0
        %2409 = vadd.xlane.f32.xlu0 %v2408
        %v2410 = vpop.xlane.xlu0 %2409
        %v2411 = vsel %vm981, %v2391, 0.0
        %2412 = vadd.xlane.f32.xlu0 %v2411
        %v2413 = vpop.xlane.xlu0 %2412
        %v2414 = vsel %vm981, %v2393, 0.0
        %2415 = vadd.xlane.f32.xlu0 %v2414
        %v2416 = vpop.xlane.xlu0 %2415
        %v2417 = vsel %vm981, %v2395, 0.0
        %2418 = vadd.xlane.f32.xlu0 %v2417
        %v2419 = vpop.xlane.xlu0 %2418
        %v2420 = vrcp.pop %v2398
        %v2421 = vrcp.pop %v2401
        %v2422 = vrcp.pop %v2404
        %v2423 = vrcp.pop %v2407
        %v2424 = vrcp.pop %v2410
        %v2425 = vrcp.pop %v2413
        %v2426 = vrcp.pop %v2416
        %v2427 = vrcp.pop %v2419
        %v2428 = vpack.c.bf16 %v2381, %v2381
        %v2429 = vpack.c.bf16 %v2383, %v2383
        %v2430 = vpack.c.bf16 %v2385, %v2385
        %v2431 = vpack.c.bf16 %v2387, %v2387
        %v2432 = vpack.c.bf16 %v2389, %v2389
        %v2433 = vpack.c.bf16 %v2391, %v2391
        %v2434 = vpack.c.bf16 %v2393, %v2393
        %v2435 = vpack.c.bf16 %v2395, %v2395
        %v2438 = vunpack.c.l.b16 %v2428
        %v2439 = vunpack.c.l.b16 %v2429
        %v2440 = vpack.c.b16 %v2439, %v2438
        %2441 = vrot.lane.b32.xlu0 %v1087, 48
        %v2442 = vpop.permute.xlu0 %2441
        %v2445 = vsel %vm981, %v2440, 0
        %2447 = vmatpush.bf16.msra.mxu0 0
        %2448 = vmatpush.bf16.msra.mxu0 0
        %2449 = vmatpush.bf16.msra.mxu0 0
        %2450 = vmatpush.bf16.msra.mxu0 0
        %2451 = vmatpush.bf16.msra.mxu0 0
        %2452 = vmatpush.bf16.msra.mxu0 0
        %2453 = vmatpush.bf16.msra.mxu0 0
        %2454 = vmatpush.bf16.msra.mxu0 %v2442
        %2455 = vmatmul.bf16.gmra.mxu0 %v2445
        %v2456 = vpop.f32.mrf.mxu0
        %v2457 = vadd.f32 0.0, %v2456
        %v2458 = vpop.f32.mrf.mxu0
        %v2459 = vadd.f32 0.0, %v2458
        %2460 = vdwg.mxu0
        %v2463 = vunpack.c.l.b16 %v2430
        %v2464 = vunpack.c.l.b16 %v2431
        %v2465 = vpack.c.b16 %v2464, %v2463
        %2466 = vrot.lane.b32.xlu0 %v1117, 48
        %v2467 = vpop.permute.xlu0 %2466
        %v2470 = vsel %vm981, %v2465, 0
        %2472 = vmatpush.bf16.msra.mxu0 0
        %2473 = vmatpush.bf16.msra.mxu0 0
        %2474 = vmatpush.bf16.msra.mxu0 0
        %2475 = vmatpush.bf16.msra.mxu0 0
        %2476 = vmatpush.bf16.msra.mxu0 0
        %2477 = vmatpush.bf16.msra.mxu0 0
        %2478 = vmatpush.bf16.msra.mxu0 0
        %2479 = vmatpush.bf16.msra.mxu0 %v2467
        %2480 = vmatmul.bf16.gmra.mxu0 %v2470
        %v2481 = vpop.f32.mrf.mxu0
        %v2482 = vadd.f32 0.0, %v2481
        %v2483 = vpop.f32.mrf.mxu0
        %v2484 = vadd.f32 0.0, %v2483
        %2485 = vdwg.mxu0
        %v2488 = vunpack.c.l.b16 %v2432
        %v2489 = vunpack.c.l.b16 %v2433
        %v2490 = vpack.c.b16 %v2489, %v2488
        %2491 = vrot.lane.b32.xlu0 %v1147, 48
        %v2492 = vpop.permute.xlu0 %2491
        %v2495 = vsel %vm981, %v2490, 0
        %2497 = vmatpush.bf16.msra.mxu0 0
        %2498 = vmatpush.bf16.msra.mxu0 0
        %2499 = vmatpush.bf16.msra.mxu0 0
        %2500 = vmatpush.bf16.msra.mxu0 0
        %2501 = vmatpush.bf16.msra.mxu0 0
        %2502 = vmatpush.bf16.msra.mxu0 0
        %2503 = vmatpush.bf16.msra.mxu0 0
        %2504 = vmatpush.bf16.msra.mxu0 %v2492
        %2505 = vmatmul.bf16.gmra.mxu0 %v2495
        %v2506 = vpop.f32.mrf.mxu0
        %v2507 = vadd.f32 0.0, %v2506
        %v2508 = vpop.f32.mrf.mxu0
        %v2509 = vadd.f32 0.0, %v2508
        %2510 = vdwg.mxu0
        %v2513 = vunpack.c.l.b16 %v2434
        %v2514 = vunpack.c.l.b16 %v2435
        %v2515 = vpack.c.b16 %v2514, %v2513
        %2516 = vrot.lane.b32.xlu0 %v1177, 48
        %v2517 = vpop.permute.xlu0 %2516
        %v2520 = vsel %vm981, %v2515, 0
        %2522 = vmatpush.bf16.msra.mxu0 0
        %2523 = vmatpush.bf16.msra.mxu0 0
        %2524 = vmatpush.bf16.msra.mxu0 0
        %2525 = vmatpush.bf16.msra.mxu0 0
        %2526 = vmatpush.bf16.msra.mxu0 0
        %2527 = vmatpush.bf16.msra.mxu0 0
        %2528 = vmatpush.bf16.msra.mxu0 0
        %2529 = vmatpush.bf16.msra.mxu0 %v2517
        %2530 = vmatmul.bf16.gmra.mxu0 %v2520
        %v2531 = vpop.f32.mrf.mxu0
        %v2532 = vadd.f32 0.0, %v2531
        %v2533 = vpop.f32.mrf.mxu0
        %v2534 = vadd.f32 0.0, %v2533
        %2535 = vdwg.mxu0
        %v2536 = vmul.f32 %v2457, %v2420
        %v2537 = vmul.f32 %v2459, %v2421
        %v2538 = vmul.f32 %v2482, %v2422
        %v2539 = vmul.f32 %v2484, %v2423
        %v2540 = vmul.f32 %v2507, %v2424
        %v2541 = vmul.f32 %v2509, %v2425
        %v2542 = vmul.f32 %v2532, %v2426
        %v2543 = vmul.f32 %v2534, %v2427
        %2544 = vrot.lane.b32.xlu0 %v532, 104
        %v2545 = vpop.permute.xlu0 %2544
        %2546 = vrot.lane.b32.xlu0 %v533, 104
        %v2547 = vpop.permute.xlu0 %2546
        %2548 = vrot.lane.b32.xlu0 %v534, 104
        %v2549 = vpop.permute.xlu0 %2548
        %2550 = vrot.lane.b32.xlu0 %v535, 104
        %v2551 = vpop.permute.xlu0 %2550
        %2552 = vrot.lane.b32.xlu0 %v536, 104
        %v2553 = vpop.permute.xlu0 %2552
        %2554 = vrot.lane.b32.xlu0 %v537, 104
        %v2555 = vpop.permute.xlu0 %2554
        %2556 = vrot.lane.b32.xlu0 %v538, 104
        %v2557 = vpop.permute.xlu0 %2556
        %2558 = vrot.lane.b32.xlu0 %v539, 104
        %v2559 = vpop.permute.xlu0 %2558
        %v2568 = vsel %vm540, %v2545, 0.0
        %2569 = vadd.xlane.f32.xlu0 %v2568
        %v2570 = vpop.xlane.xlu0 %2569
        %v2571 = vsel %vm540, %v2547, 0.0
        %2572 = vadd.xlane.f32.xlu0 %v2571
        %v2573 = vpop.xlane.xlu0 %2572
        %v2574 = vsel %vm540, %v2549, 0.0
        %2575 = vadd.xlane.f32.xlu0 %v2574
        %v2576 = vpop.xlane.xlu0 %2575
        %v2577 = vsel %vm540, %v2551, 0.0
        %2578 = vadd.xlane.f32.xlu0 %v2577
        %v2579 = vpop.xlane.xlu0 %2578
        %v2580 = vsel %vm540, %v2553, 0.0
        %2581 = vadd.xlane.f32.xlu0 %v2580
        %v2582 = vpop.xlane.xlu0 %2581
        %v2583 = vsel %vm540, %v2555, 0.0
        %2584 = vadd.xlane.f32.xlu0 %v2583
        %v2585 = vpop.xlane.xlu0 %2584
        %v2586 = vsel %vm540, %v2557, 0.0
        %2587 = vadd.xlane.f32.xlu0 %v2586
        %v2588 = vpop.xlane.xlu0 %2587
        %v2589 = vsel %vm540, %v2559, 0.0
        %2590 = vadd.xlane.f32.xlu0 %v2589
        %v2591 = vpop.xlane.xlu0 %2590
        %v2592 = vadd.f32 %v2570, 1e-12
        %v2593 = vadd.f32 %v2573, 1e-12
        %v2594 = vadd.f32 %v2576, 1e-12
        %v2595 = vadd.f32 %v2579, 1e-12
        %v2596 = vadd.f32 %v2582, 1e-12
        %v2597 = vadd.f32 %v2585, 1e-12
        %v2598 = vadd.f32 %v2588, 1e-12
        %v2599 = vadd.f32 %v2591, 1e-12
        %v2600 = vrsqrt.pop %v2592
        %v2601 = vmul.f32 %v2600, %v2592
        %v2602 = vmul.f32 %v2601, %v2600
        %v2603 = vmul.f32 0.5, %v2602
        %v2604 = vsub.f32 1.5, %v2603
        %v2605 = vmul.f32 %v2600, %v2604
        %vm2606 = vweird.f32 %v2592
        %vm2607 = vweird.f32 %v2600
        %vm2608 = vmor %vm2606, %vm2607
        %v2609 = vsel %vm2608, %v2600, %v2605
        %v2610 = vrsqrt.pop %v2593
        %v2611 = vmul.f32 %v2610, %v2593
        %v2612 = vmul.f32 %v2611, %v2610
        %v2613 = vmul.f32 0.5, %v2612
        %v2614 = vsub.f32 1.5, %v2613
        %v2615 = vmul.f32 %v2610, %v2614
        %vm2616 = vweird.f32 %v2593
        %vm2617 = vweird.f32 %v2610
        %vm2618 = vmor %vm2616, %vm2617
        %v2619 = vsel %vm2618, %v2610, %v2615
        %v2620 = vrsqrt.pop %v2594
        %v2621 = vmul.f32 %v2620, %v2594
        %v2622 = vmul.f32 %v2621, %v2620
        %v2623 = vmul.f32 0.5, %v2622
        %v2624 = vsub.f32 1.5, %v2623
        %v2625 = vmul.f32 %v2620, %v2624
        %vm2626 = vweird.f32 %v2594
        %vm2627 = vweird.f32 %v2620
        %vm2628 = vmor %vm2626, %vm2627
        %v2629 = vsel %vm2628, %v2620, %v2625
        %v2630 = vrsqrt.pop %v2595
        %v2631 = vmul.f32 %v2630, %v2595
        %v2632 = vmul.f32 %v2631, %v2630
        %v2633 = vmul.f32 0.5, %v2632
        %v2634 = vsub.f32 1.5, %v2633
        %v2635 = vmul.f32 %v2630, %v2634
        %vm2636 = vweird.f32 %v2595
        %vm2637 = vweird.f32 %v2630
        %vm2638 = vmor %vm2636, %vm2637
        %v2639 = vsel %vm2638, %v2630, %v2635
        %v2640 = vrsqrt.pop %v2596
        %v2641 = vmul.f32 %v2640, %v2596
        %v2642 = vmul.f32 %v2641, %v2640
        %v2643 = vmul.f32 0.5, %v2642
        %v2644 = vsub.f32 1.5, %v2643
        %v2645 = vmul.f32 %v2640, %v2644
        %vm2646 = vweird.f32 %v2596
        %vm2647 = vweird.f32 %v2640
        %vm2648 = vmor %vm2646, %vm2647
        %v2649 = vsel %vm2648, %v2640, %v2645
        %v2650 = vrsqrt.pop %v2597
        %v2651 = vmul.f32 %v2650, %v2597
        %v2652 = vmul.f32 %v2651, %v2650
        %v2653 = vmul.f32 0.5, %v2652
        %v2654 = vsub.f32 1.5, %v2653
        %v2655 = vmul.f32 %v2650, %v2654
        %vm2656 = vweird.f32 %v2597
        %vm2657 = vweird.f32 %v2650
        %vm2658 = vmor %vm2656, %vm2657
        %v2659 = vsel %vm2658, %v2650, %v2655
        %v2660 = vrsqrt.pop %v2598
        %v2661 = vmul.f32 %v2660, %v2598
        %v2662 = vmul.f32 %v2661, %v2660
        %v2663 = vmul.f32 0.5, %v2662
        %v2664 = vsub.f32 1.5, %v2663
        %v2665 = vmul.f32 %v2660, %v2664
        %vm2666 = vweird.f32 %v2598
        %vm2667 = vweird.f32 %v2660
        %vm2668 = vmor %vm2666, %vm2667
        %v2669 = vsel %vm2668, %v2660, %v2665
        %v2670 = vrsqrt.pop %v2599
        %v2671 = vmul.f32 %v2670, %v2599
        %v2672 = vmul.f32 %v2671, %v2670
        %v2673 = vmul.f32 0.5, %v2672
        %v2674 = vsub.f32 1.5, %v2673
        %v2675 = vmul.f32 %v2670, %v2674
        %vm2676 = vweird.f32 %v2599
        %vm2677 = vweird.f32 %v2670
        %vm2678 = vmor %vm2676, %vm2677
        %v2679 = vsel %vm2678, %v2670, %v2675
        %v2680 = vmul.f32 %v513, %v2609
        %v2681 = vmul.f32 %v515, %v2619
        %v2682 = vmul.f32 %v518, %v2629
        %v2683 = vmul.f32 %v520, %v2639
        %v2684 = vmul.f32 %v523, %v2649
        %v2685 = vmul.f32 %v525, %v2659
        %v2686 = vmul.f32 %v528, %v2669
        %v2687 = vmul.f32 %v530, %v2679
        %2688 = vrot.lane.b32.xlu0 %v532, 72
        %v2689 = vpop.permute.xlu0 %2688
        %2690 = vrot.lane.b32.xlu0 %v533, 72
        %v2691 = vpop.permute.xlu0 %2690
        %2692 = vrot.lane.b32.xlu0 %v534, 72
        %v2693 = vpop.permute.xlu0 %2692
        %2694 = vrot.lane.b32.xlu0 %v535, 72
        %v2695 = vpop.permute.xlu0 %2694
        %2696 = vrot.lane.b32.xlu0 %v536, 72
        %v2697 = vpop.permute.xlu0 %2696
        %2698 = vrot.lane.b32.xlu0 %v537, 72
        %v2699 = vpop.permute.xlu0 %2698
        %2700 = vrot.lane.b32.xlu0 %v538, 72
        %v2701 = vpop.permute.xlu0 %2700
        %2702 = vrot.lane.b32.xlu0 %v539, 72
        %v2703 = vpop.permute.xlu0 %2702
        %v2712 = vsel %vm540, %v2689, 0.0
        %2713 = vadd.xlane.f32.xlu0 %v2712
        %v2714 = vpop.xlane.xlu0 %2713
        %v2715 = vsel %vm540, %v2691, 0.0
        %2716 = vadd.xlane.f32.xlu0 %v2715
        %v2717 = vpop.xlane.xlu0 %2716
        %v2718 = vsel %vm540, %v2693, 0.0
        %2719 = vadd.xlane.f32.xlu0 %v2718
        %v2720 = vpop.xlane.xlu0 %2719
        %v2721 = vsel %vm540, %v2695, 0.0
        %2722 = vadd.xlane.f32.xlu0 %v2721
        %v2723 = vpop.xlane.xlu0 %2722
        %v2724 = vsel %vm540, %v2697, 0.0
        %2725 = vadd.xlane.f32.xlu0 %v2724
        %v2726 = vpop.xlane.xlu0 %2725
        %v2727 = vsel %vm540, %v2699, 0.0
        %2728 = vadd.xlane.f32.xlu0 %v2727
        %v2729 = vpop.xlane.xlu0 %2728
        %v2730 = vsel %vm540, %v2701, 0.0
        %2731 = vadd.xlane.f32.xlu0 %v2730
        %v2732 = vpop.xlane.xlu0 %2731
        %v2733 = vsel %vm540, %v2703, 0.0
        %2734 = vadd.xlane.f32.xlu0 %v2733
        %v2735 = vpop.xlane.xlu0 %2734
        %v2736 = vadd.f32 %v2714, 1e-12
        %v2737 = vadd.f32 %v2717, 1e-12
        %v2738 = vadd.f32 %v2720, 1e-12
        %v2739 = vadd.f32 %v2723, 1e-12
        %v2740 = vadd.f32 %v2726, 1e-12
        %v2741 = vadd.f32 %v2729, 1e-12
        %v2742 = vadd.f32 %v2732, 1e-12
        %v2743 = vadd.f32 %v2735, 1e-12
        %v2744 = vrsqrt.pop %v2736
        %v2745 = vmul.f32 %v2744, %v2736
        %v2746 = vmul.f32 %v2745, %v2744
        %v2747 = vmul.f32 0.5, %v2746
        %v2748 = vsub.f32 1.5, %v2747
        %v2749 = vmul.f32 %v2744, %v2748
        %vm2750 = vweird.f32 %v2736
        %vm2751 = vweird.f32 %v2744
        %vm2752 = vmor %vm2750, %vm2751
        %v2753 = vsel %vm2752, %v2744, %v2749
        %v2754 = vrsqrt.pop %v2737
        %v2755 = vmul.f32 %v2754, %v2737
        %v2756 = vmul.f32 %v2755, %v2754
        %v2757 = vmul.f32 0.5, %v2756
        %v2758 = vsub.f32 1.5, %v2757
        %v2759 = vmul.f32 %v2754, %v2758
        %vm2760 = vweird.f32 %v2737
        %vm2761 = vweird.f32 %v2754
        %vm2762 = vmor %vm2760, %vm2761
        %v2763 = vsel %vm2762, %v2754, %v2759
        %v2764 = vrsqrt.pop %v2738
        %v2765 = vmul.f32 %v2764, %v2738
        %v2766 = vmul.f32 %v2765, %v2764
        %v2767 = vmul.f32 0.5, %v2766
        %v2768 = vsub.f32 1.5, %v2767
        %v2769 = vmul.f32 %v2764, %v2768
        %vm2770 = vweird.f32 %v2738
        %vm2771 = vweird.f32 %v2764
        %vm2772 = vmor %vm2770, %vm2771
        %v2773 = vsel %vm2772, %v2764, %v2769
        %v2774 = vrsqrt.pop %v2739
        %v2775 = vmul.f32 %v2774, %v2739
        %v2776 = vmul.f32 %v2775, %v2774
        %v2777 = vmul.f32 0.5, %v2776
        %v2778 = vsub.f32 1.5, %v2777
        %v2779 = vmul.f32 %v2774, %v2778
        %vm2780 = vweird.f32 %v2739
        %vm2781 = vweird.f32 %v2774
        %vm2782 = vmor %vm2780, %vm2781
        %v2783 = vsel %vm2782, %v2774, %v2779
        %v2784 = vrsqrt.pop %v2740
        %v2785 = vmul.f32 %v2784, %v2740
        %v2786 = vmul.f32 %v2785, %v2784
        %v2787 = vmul.f32 0.5, %v2786
        %v2788 = vsub.f32 1.5, %v2787
        %v2789 = vmul.f32 %v2784, %v2788
        %vm2790 = vweird.f32 %v2740
        %vm2791 = vweird.f32 %v2784
        %vm2792 = vmor %vm2790, %vm2791
        %v2793 = vsel %vm2792, %v2784, %v2789
        %v2794 = vrsqrt.pop %v2741
        %v2795 = vmul.f32 %v2794, %v2741
        %v2796 = vmul.f32 %v2795, %v2794
        %v2797 = vmul.f32 0.5, %v2796
        %v2798 = vsub.f32 1.5, %v2797
        %v2799 = vmul.f32 %v2794, %v2798
        %vm2800 = vweird.f32 %v2741
        %vm2801 = vweird.f32 %v2794
        %vm2802 = vmor %vm2800, %vm2801
        %v2803 = vsel %vm2802, %v2794, %v2799
        %v2804 = vrsqrt.pop %v2742
        %v2805 = vmul.f32 %v2804, %v2742
        %v2806 = vmul.f32 %v2805, %v2804
        %v2807 = vmul.f32 0.5, %v2806
        %v2808 = vsub.f32 1.5, %v2807
        %v2809 = vmul.f32 %v2804, %v2808
        %vm2810 = vweird.f32 %v2742
        %vm2811 = vweird.f32 %v2804
        %vm2812 = vmor %vm2810, %vm2811
        %v2813 = vsel %vm2812, %v2804, %v2809
        %v2814 = vrsqrt.pop %v2743
        %v2815 = vmul.f32 %v2814, %v2743
        %v2816 = vmul.f32 %v2815, %v2814
        %v2817 = vmul.f32 0.5, %v2816
        %v2818 = vsub.f32 1.5, %v2817
        %v2819 = vmul.f32 %v2814, %v2818
        %vm2820 = vweird.f32 %v2743
        %vm2821 = vweird.f32 %v2814
        %vm2822 = vmor %vm2820, %vm2821
        %v2823 = vsel %vm2822, %v2814, %v2819
        %v2824 = vmul.f32 %v513, %v2753
        %v2825 = vmul.f32 %v515, %v2763
        %v2826 = vmul.f32 %v518, %v2773
        %v2827 = vmul.f32 %v520, %v2783
        %v2828 = vmul.f32 %v523, %v2793
        %v2829 = vmul.f32 %v525, %v2803
        %v2830 = vmul.f32 %v528, %v2813
        %v2831 = vmul.f32 %v530, %v2823
        %s2832 = sld [smem:[#allocation2 + $0x3]]
        %v2833 = vstv %s2832
        %v2834 = vmul.f32 %v2680, %v2833
        %v2835 = vmul.f32 %v2681, %v2833
        %v2836 = vmul.f32 %v2682, %v2833
        %v2837 = vmul.f32 %v2683, %v2833
        %v2838 = vmul.f32 %v2684, %v2833
        %v2839 = vmul.f32 %v2685, %v2833
        %v2840 = vmul.f32 %v2686, %v2833
        %v2841 = vmul.f32 %v2687, %v2833
        %s2842 = scalar_lea.vmem %s6, 48
        %v2843 = vld [vmem:[%s2842] sm:$0xff]
        %v2844 = vld [vmem:[%s2842 + $0x8] sm:$0xff]
        %2847 = vrot.lane.b32.xlu0 %v2834, 104
        %v2848 = vpop.permute.xlu0 %2847
        %2849 = vrot.lane.b32.xlu0 %v2835, 104
        %v2850 = vpop.permute.xlu0 %2849
        %2853 = vrot.lane.b32.xlu0 %v2824, 72
        %v2854 = vpop.permute.xlu0 %2853
        %2855 = vrot.lane.b32.xlu0 %v2825, 72
        %v2856 = vpop.permute.xlu0 %2855
        %v2857 = vsel %vm540, %v2848, 0
        %v2859 = vsel %vm540, %v2850, 0
        %v2861 = vsel %vm540, %v2854, 0
        %v2863 = vsel %vm540, %v2856, 0
        %2865 = vmatpush.xpose.msra.mxu0 0.0
        %2866 = vmatpush.xpose.msra.mxu0 0.0
        %2867 = vmatpush.xpose.msra.mxu0 0.0
        %2868 = vmatpush.xpose.msra.mxu0 0.0
        %2869 = vmatpush.xpose.msra.mxu0 0.0
        %2870 = vmatpush.xpose.msra.mxu0 0.0
        %2871 = vmatpush.xpose.msra.mxu0 0.0
        %2872 = vmatpush.xpose.msra.mxu0 0.0
        %2873 = vmatpush.xpose.msra.mxu0 0.0
        %2874 = vmatpush.xpose.msra.mxu0 0.0
        %2875 = vmatpush.xpose.msra.mxu0 0.0
        %2876 = vmatpush.xpose.msra.mxu0 0.0
        %2877 = vmatpush.xpose.msra.mxu0 0.0
        %2878 = vmatpush.xpose.msra.mxu0 0.0
        %2879 = vmatpush.xpose.msra.mxu0 %v2863
        %2880 = vmatpush.xpose.msra.mxu0 %v2861
        %2881 = vmatmul.f32.gmra.mxu0 %v2857
        %v2882 = vpop.f32.mrf.mxu0
        %v2883 = vadd.f32 %v2843, %v2882
        %2884 = vmatmul.f32.gmra.mxu0 %v2859
        %v2885 = vpop.f32.mrf.mxu0
        %v2886 = vadd.f32 %v2844, %v2885
        %2887 = vdwg.mxu0
        %2890 = vrot.lane.b32.xlu0 %v2836, 104
        %v2891 = vpop.permute.xlu0 %2890
        %2892 = vrot.lane.b32.xlu0 %v2837, 104
        %v2893 = vpop.permute.xlu0 %2892
        %2896 = vrot.lane.b32.xlu0 %v2826, 72
        %v2897 = vpop.permute.xlu0 %2896
        %2898 = vrot.lane.b32.xlu0 %v2827, 72
        %v2899 = vpop.permute.xlu0 %2898
        %v2900 = vsel %vm540, %v2891, 0
        %v2902 = vsel %vm540, %v2893, 0
        %v2904 = vsel %vm540, %v2897, 0
        %v2906 = vsel %vm540, %v2899, 0
        %2908 = vmatpush.xpose.msra.mxu0 0.0
        %2909 = vmatpush.xpose.msra.mxu0 0.0
        %2910 = vmatpush.xpose.msra.mxu0 0.0
        %2911 = vmatpush.xpose.msra.mxu0 0.0
        %2912 = vmatpush.xpose.msra.mxu0 0.0
        %2913 = vmatpush.xpose.msra.mxu0 0.0
        %2914 = vmatpush.xpose.msra.mxu0 0.0
        %2915 = vmatpush.xpose.msra.mxu0 0.0
        %2916 = vmatpush.xpose.msra.mxu0 0.0
        %2917 = vmatpush.xpose.msra.mxu0 0.0
        %2918 = vmatpush.xpose.msra.mxu0 0.0
        %2919 = vmatpush.xpose.msra.mxu0 0.0
        %2920 = vmatpush.xpose.msra.mxu0 0.0
        %2921 = vmatpush.xpose.msra.mxu0 0.0
        %2922 = vmatpush.xpose.msra.mxu0 %v2906
        %2923 = vmatpush.xpose.msra.mxu0 %v2904
        %2924 = vmatmul.f32.gmra.mxu0 %v2900
        %v2925 = vpop.f32.mrf.mxu0
        %v2926 = vadd.f32 %v2843, %v2925
        %2927 = vmatmul.f32.gmra.mxu0 %v2902
        %v2928 = vpop.f32.mrf.mxu0
        %v2929 = vadd.f32 %v2844, %v2928
        %2930 = vdwg.mxu0
        %2933 = vrot.lane.b32.xlu0 %v2838, 104
        %v2934 = vpop.permute.xlu0 %2933
        %2935 = vrot.lane.b32.xlu0 %v2839, 104
        %v2936 = vpop.permute.xlu0 %2935
        %2939 = vrot.lane.b32.xlu0 %v2828, 72
        %v2940 = vpop.permute.xlu0 %2939
        %2941 = vrot.lane.b32.xlu0 %v2829, 72
        %v2942 = vpop.permute.xlu0 %2941
        %v2943 = vsel %vm540, %v2934, 0
        %v2945 = vsel %vm540, %v2936, 0
        %v2947 = vsel %vm540, %v2940, 0
        %v2949 = vsel %vm540, %v2942, 0
        %2951 = vmatpush.xpose.msra.mxu0 0.0
        %2952 = vmatpush.xpose.msra.mxu0 0.0
        %2953 = vmatpush.xpose.msra.mxu0 0.0
        %2954 = vmatpush.xpose.msra.mxu0 0.0
        %2955 = vmatpush.xpose.msra.mxu0 0.0
        %2956 = vmatpush.xpose.msra.mxu0 0.0
        %2957 = vmatpush.xpose.msra.mxu0 0.0
        %2958 = vmatpush.xpose.msra.mxu0 0.0
        %2959 = vmatpush.xpose.msra.mxu0 0.0
        %2960 = vmatpush.xpose.msra.mxu0 0.0
        %2961 = vmatpush.xpose.msra.mxu0 0.0
        %2962 = vmatpush.xpose.msra.mxu0 0.0
        %2963 = vmatpush.xpose.msra.mxu0 0.0
        %2964 = vmatpush.xpose.msra.mxu0 0.0
        %2965 = vmatpush.xpose.msra.mxu0 %v2949
        %2966 = vmatpush.xpose.msra.mxu0 %v2947
        %2967 = vmatmul.f32.gmra.mxu0 %v2943
        %v2968 = vpop.f32.mrf.mxu0
        %v2969 = vadd.f32 %v2843, %v2968
        %2970 = vmatmul.f32.gmra.mxu0 %v2945
        %v2971 = vpop.f32.mrf.mxu0
        %v2972 = vadd.f32 %v2844, %v2971
        %2973 = vdwg.mxu0
        %2976 = vrot.lane.b32.xlu0 %v2840, 104
        %v2977 = vpop.permute.xlu0 %2976
        %2978 = vrot.lane.b32.xlu0 %v2841, 104
        %v2979 = vpop.permute.xlu0 %2978
        %2982 = vrot.lane.b32.xlu0 %v2830, 72
        %v2983 = vpop.permute.xlu0 %2982
        %2984 = vrot.lane.b32.xlu0 %v2831, 72
        %v2985 = vpop.permute.xlu0 %2984
        %v2986 = vsel %vm540, %v2977, 0
        %v2988 = vsel %vm540, %v2979, 0
        %v2990 = vsel %vm540, %v2983, 0
        %v2992 = vsel %vm540, %v2985, 0
        %2994 = vmatpush.xpose.msra.mxu0 0.0
        %2995 = vmatpush.xpose.msra.mxu0 0.0
        %2996 = vmatpush.xpose.msra.mxu0 0.0
        %2997 = vmatpush.xpose.msra.mxu0 0.0
        %2998 = vmatpush.xpose.msra.mxu0 0.0
        %2999 = vmatpush.xpose.msra.mxu0 0.0
        %3000 = vmatpush.xpose.msra.mxu0 0.0
        %3001 = vmatpush.xpose.msra.mxu0 0.0
        %3002 = vmatpush.xpose.msra.mxu0 0.0
        %3003 = vmatpush.xpose.msra.mxu0 0.0
        %3004 = vmatpush.xpose.msra.mxu0 0.0
        %3005 = vmatpush.xpose.msra.mxu0 0.0
        %3006 = vmatpush.xpose.msra.mxu0 0.0
        %3007 = vmatpush.xpose.msra.mxu0 0.0
        %3008 = vmatpush.xpose.msra.mxu0 %v2992
        %3009 = vmatpush.xpose.msra.mxu0 %v2990
        %3010 = vmatmul.f32.gmra.mxu0 %v2986
        %v3011 = vpop.f32.mrf.mxu0
        %v3012 = vadd.f32 %v2843, %v3011
        %3013 = vmatmul.f32.gmra.mxu0 %v2988
        %v3014 = vpop.f32.mrf.mxu0
        %v3015 = vadd.f32 %v2844, %v3014
        %3016 = vdwg.mxu0
        %v3017 = vsel %vm981, %v2883, -inf
        %3018 = vmax.xlane.f32.xlu0 %v3017
        %v3019 = vpop.xlane.xlu0 %3018
        %v3020 = vsel %vm981, %v2886, -inf
        %3021 = vmax.xlane.f32.xlu0 %v3020
        %v3022 = vpop.xlane.xlu0 %3021
        %v3023 = vsel %vm981, %v2926, -inf
        %3024 = vmax.xlane.f32.xlu0 %v3023
        %v3025 = vpop.xlane.xlu0 %3024
        %v3026 = vsel %vm981, %v2929, -inf
        %3027 = vmax.xlane.f32.xlu0 %v3026
        %v3028 = vpop.xlane.xlu0 %3027
        %v3029 = vsel %vm981, %v2969, -inf
        %3030 = vmax.xlane.f32.xlu0 %v3029
        %v3031 = vpop.xlane.xlu0 %3030
        %v3032 = vsel %vm981, %v2972, -inf
        %3033 = vmax.xlane.f32.xlu0 %v3032
        %v3034 = vpop.xlane.xlu0 %3033
        %v3035 = vsel %vm981, %v3012, -inf
        %3036 = vmax.xlane.f32.xlu0 %v3035
        %v3037 = vpop.xlane.xlu0 %3036
        %v3038 = vsel %vm981, %v3015, -inf
        %3039 = vmax.xlane.f32.xlu0 %v3038
        %v3040 = vpop.xlane.xlu0 %3039
        %v3041 = vsub.f32 %v2883, %v3019
        %v3042 = vsub.f32 %v2886, %v3022
        %v3043 = vsub.f32 %v2926, %v3025
        %v3044 = vsub.f32 %v2929, %v3028
        %v3045 = vsub.f32 %v2969, %v3031
        %v3046 = vsub.f32 %v2972, %v3034
        %v3047 = vsub.f32 %v3012, %v3037
        %v3048 = vsub.f32 %v3015, %v3040
        %v3049 = vmul.f32 %v3041, 1.442695
        %v3050 = vpow.pop %v3049
        %v3051 = vmul.f32 %v3042, 1.442695
        %v3052 = vpow.pop %v3051
        %v3053 = vmul.f32 %v3043, 1.442695
        %v3054 = vpow.pop %v3053
        %v3055 = vmul.f32 %v3044, 1.442695
        %v3056 = vpow.pop %v3055
        %v3057 = vmul.f32 %v3045, 1.442695
        %v3058 = vpow.pop %v3057
        %v3059 = vmul.f32 %v3046, 1.442695
        %v3060 = vpow.pop %v3059
        %v3061 = vmul.f32 %v3047, 1.442695
        %v3062 = vpow.pop %v3061
        %v3063 = vmul.f32 %v3048, 1.442695
        %v3064 = vpow.pop %v3063
        %v3065 = vsel %vm981, %v3050, 0.0
        %3066 = vadd.xlane.f32.xlu0 %v3065
        %v3067 = vpop.xlane.xlu0 %3066
        %v3068 = vsel %vm981, %v3052, 0.0
        %3069 = vadd.xlane.f32.xlu0 %v3068
        %v3070 = vpop.xlane.xlu0 %3069
        %v3071 = vsel %vm981, %v3054, 0.0
        %3072 = vadd.xlane.f32.xlu0 %v3071
        %v3073 = vpop.xlane.xlu0 %3072
        %v3074 = vsel %vm981, %v3056, 0.0
        %3075 = vadd.xlane.f32.xlu0 %v3074
        %v3076 = vpop.xlane.xlu0 %3075
        %v3077 = vsel %vm981, %v3058, 0.0
        %3078 = vadd.xlane.f32.xlu0 %v3077
        %v3079 = vpop.xlane.xlu0 %3078
        %v3080 = vsel %vm981, %v3060, 0.0
        %3081 = vadd.xlane.f32.xlu0 %v3080
        %v3082 = vpop.xlane.xlu0 %3081
        %v3083 = vsel %vm981, %v3062, 0.0
        %3084 = vadd.xlane.f32.xlu0 %v3083
        %v3085 = vpop.xlane.xlu0 %3084
        %v3086 = vsel %vm981, %v3064, 0.0
        %3087 = vadd.xlane.f32.xlu0 %v3086
        %v3088 = vpop.xlane.xlu0 %3087
        %v3089 = vrcp.pop %v3067
        %v3090 = vrcp.pop %v3070
        %v3091 = vrcp.pop %v3073
        %v3092 = vrcp.pop %v3076
        %v3093 = vrcp.pop %v3079
        %v3094 = vrcp.pop %v3082
        %v3095 = vrcp.pop %v3085
        %v3096 = vrcp.pop %v3088
        %v3097 = vpack.c.bf16 %v3050, %v3050
        %v3098 = vpack.c.bf16 %v3052, %v3052
        %v3099 = vpack.c.bf16 %v3054, %v3054
        %v3100 = vpack.c.bf16 %v3056, %v3056
        %v3101 = vpack.c.bf16 %v3058, %v3058
        %v3102 = vpack.c.bf16 %v3060, %v3060
        %v3103 = vpack.c.bf16 %v3062, %v3062
        %v3104 = vpack.c.bf16 %v3064, %v3064
        %v3107 = vunpack.c.l.b16 %v3097
        %v3108 = vunpack.c.l.b16 %v3098
        %v3109 = vpack.c.b16 %v3108, %v3107
        %3110 = vrot.lane.b32.xlu0 %v1087, 40
        %v3111 = vpop.permute.xlu0 %3110
        %v3114 = vsel %vm981, %v3109, 0
        %3116 = vmatpush.bf16.msra.mxu0 0
        %3117 = vmatpush.bf16.msra.mxu0 0
        %3118 = vmatpush.bf16.msra.mxu0 0
        %3119 = vmatpush.bf16.msra.mxu0 0
        %3120 = vmatpush.bf16.msra.mxu0 0
        %3121 = vmatpush.bf16.msra.mxu0 0
        %3122 = vmatpush.bf16.msra.mxu0 0
        %3123 = vmatpush.bf16.msra.mxu0 %v3111
        %3124 = vmatmul.bf16.gmra.mxu0 %v3114
        %v3125 = vpop.f32.mrf.mxu0
        %v3126 = vadd.f32 0.0, %v3125
        %v3127 = vpop.f32.mrf.mxu0
        %v3128 = vadd.f32 0.0, %v3127
        %3129 = vdwg.mxu0
        %v3132 = vunpack.c.l.b16 %v3099
        %v3133 = vunpack.c.l.b16 %v3100
        %v3134 = vpack.c.b16 %v3133, %v3132
        %3135 = vrot.lane.b32.xlu0 %v1117, 40
        %v3136 = vpop.permute.xlu0 %3135
        %v3139 = vsel %vm981, %v3134, 0
        %3141 = vmatpush.bf16.msra.mxu0 0
        %3142 = vmatpush.bf16.msra.mxu0 0
        %3143 = vmatpush.bf16.msra.mxu0 0
        %3144 = vmatpush.bf16.msra.mxu0 0
        %3145 = vmatpush.bf16.msra.mxu0 0
        %3146 = vmatpush.bf16.msra.mxu0 0
        %3147 = vmatpush.bf16.msra.mxu0 0
        %3148 = vmatpush.bf16.msra.mxu0 %v3136
        %3149 = vmatmul.bf16.gmra.mxu0 %v3139
        %v3150 = vpop.f32.mrf.mxu0
        %v3151 = vadd.f32 0.0, %v3150
        %v3152 = vpop.f32.mrf.mxu0
        %v3153 = vadd.f32 0.0, %v3152
        %3154 = vdwg.mxu0
        %v3157 = vunpack.c.l.b16 %v3101
        %v3158 = vunpack.c.l.b16 %v3102
        %v3159 = vpack.c.b16 %v3158, %v3157
        %3160 = vrot.lane.b32.xlu0 %v1147, 40
        %v3161 = vpop.permute.xlu0 %3160
        %v3164 = vsel %vm981, %v3159, 0
        %3166 = vmatpush.bf16.msra.mxu0 0
        %3167 = vmatpush.bf16.msra.mxu0 0
        %3168 = vmatpush.bf16.msra.mxu0 0
        %3169 = vmatpush.bf16.msra.mxu0 0
        %3170 = vmatpush.bf16.msra.mxu0 0
        %3171 = vmatpush.bf16.msra.mxu0 0
        %3172 = vmatpush.bf16.msra.mxu0 0
        %3173 = vmatpush.bf16.msra.mxu0 %v3161
        %3174 = vmatmul.bf16.gmra.mxu0 %v3164
        %v3175 = vpop.f32.mrf.mxu0
        %v3176 = vadd.f32 0.0, %v3175
        %v3177 = vpop.f32.mrf.mxu0
        %v3178 = vadd.f32 0.0, %v3177
        %3179 = vdwg.mxu0
        %v3182 = vunpack.c.l.b16 %v3103
        %v3183 = vunpack.c.l.b16 %v3104
        %v3184 = vpack.c.b16 %v3183, %v3182
        %3185 = vrot.lane.b32.xlu0 %v1177, 40
        %v3186 = vpop.permute.xlu0 %3185
        %v3189 = vsel %vm981, %v3184, 0
        %3191 = vmatpush.bf16.msra.mxu0 0
        %3192 = vmatpush.bf16.msra.mxu0 0
        %3193 = vmatpush.bf16.msra.mxu0 0
        %3194 = vmatpush.bf16.msra.mxu0 0
        %3195 = vmatpush.bf16.msra.mxu0 0
        %3196 = vmatpush.bf16.msra.mxu0 0
        %3197 = vmatpush.bf16.msra.mxu0 0
        %3198 = vmatpush.bf16.msra.mxu0 %v3186
        %3199 = vmatmul.bf16.gmra.mxu0 %v3189
        %v3200 = vpop.f32.mrf.mxu0
        %v3201 = vadd.f32 0.0, %v3200
        %v3202 = vpop.f32.mrf.mxu0
        %v3203 = vadd.f32 0.0, %v3202
        %3204 = vdwg.mxu0
        %v3205 = vmul.f32 %v3126, %v3089
        %v3206 = vmul.f32 %v3128, %v3090
        %v3207 = vmul.f32 %v3151, %v3091
        %v3208 = vmul.f32 %v3153, %v3092
        %v3209 = vmul.f32 %v3176, %v3093
        %v3210 = vmul.f32 %v3178, %v3094
        %v3211 = vmul.f32 %v3201, %v3095
        %v3212 = vmul.f32 %v3203, %v3096
        %3221 = vrot.lane.b32.xlu0 %v1867, 8
        %v3222 = vpop.permute.xlu0 %3221
        %3223 = vrot.lane.b32.xlu0 %v1868, 8
        %v3224 = vpop.permute.xlu0 %3223
        %3225 = vrot.lane.b32.xlu0 %v1869, 8
        %v3226 = vpop.permute.xlu0 %3225
        %3227 = vrot.lane.b32.xlu0 %v1870, 8
        %v3228 = vpop.permute.xlu0 %3227
        %3229 = vrot.lane.b32.xlu0 %v1871, 8
        %v3230 = vpop.permute.xlu0 %3229
        %3231 = vrot.lane.b32.xlu0 %v1872, 8
        %v3232 = vpop.permute.xlu0 %3231
        %3233 = vrot.lane.b32.xlu0 %v1873, 8
        %v3234 = vpop.permute.xlu0 %3233
        %3235 = vrot.lane.b32.xlu0 %v1874, 8
        %v3236 = vpop.permute.xlu0 %3235
        %3253 = vrot.lane.b32.xlu0 %v2536, 16
        %v3254 = vpop.permute.xlu0 %3253
        %3255 = vrot.lane.b32.xlu0 %v2537, 16
        %v3256 = vpop.permute.xlu0 %3255
        %3257 = vrot.lane.b32.xlu0 %v2538, 16
        %v3258 = vpop.permute.xlu0 %3257
        %3259 = vrot.lane.b32.xlu0 %v2539, 16
        %v3260 = vpop.permute.xlu0 %3259
        %3261 = vrot.lane.b32.xlu0 %v2540, 16
        %v3262 = vpop.permute.xlu0 %3261
        %3263 = vrot.lane.b32.xlu0 %v2541, 16
        %v3264 = vpop.permute.xlu0 %3263
        %3265 = vrot.lane.b32.xlu0 %v2542, 16
        %v3266 = vpop.permute.xlu0 %3265
        %3267 = vrot.lane.b32.xlu0 %v2543, 16
        %v3268 = vpop.permute.xlu0 %3267
        %3285 = vrot.lane.b32.xlu0 %v3205, 24
        %v3286 = vpop.permute.xlu0 %3285
        %3287 = vrot.lane.b32.xlu0 %v3206, 24
        %v3288 = vpop.permute.xlu0 %3287
        %3289 = vrot.lane.b32.xlu0 %v3207, 24
        %v3290 = vpop.permute.xlu0 %3289
        %3291 = vrot.lane.b32.xlu0 %v3208, 24
        %v3292 = vpop.permute.xlu0 %3291
        %3293 = vrot.lane.b32.xlu0 %v3209, 24
        %v3294 = vpop.permute.xlu0 %3293
        %3295 = vrot.lane.b32.xlu0 %v3210, 24
        %v3296 = vpop.permute.xlu0 %3295
        %3297 = vrot.lane.b32.xlu0 %v3211, 24
        %v3298 = vpop.permute.xlu0 %3297
        %3299 = vrot.lane.b32.xlu0 %v3212, 24
        %v3300 = vpop.permute.xlu0 %3299
        %v3309 = vsel %vm540, %v1198, %v3222
        %v3310 = vsel %vm540, %v1199, %v3224
        %v3311 = vsel %vm540, %v1200, %v3226
        %v3312 = vsel %vm540, %v1201, %v3228
        %v3313 = vsel %vm540, %v1202, %v3230
        %v3314 = vsel %vm540, %v1203, %v3232
        %v3315 = vsel %vm540, %v1204, %v3234
        %v3316 = vsel %vm540, %v1205, %v3236
        %v3317 = vsel %vm981, %v3309, %v3254
        %v3318 = vsel %vm981, %v3310, %v3256
        %v3319 = vsel %vm981, %v3311, %v3258
        %v3320 = vsel %vm981, %v3312, %v3260
        %v3321 = vsel %vm981, %v3313, %v3262
        %v3322 = vsel %vm981, %v3314, %v3264
        %v3323 = vsel %vm981, %v3315, %v3266
        %v3324 = vsel %vm981, %v3316, %v3268
        %vm3325 = vcmask 195584
        %v3326 = vsel %vm3325, %v3317, %v3286
        %v3327 = vsel %vm3325, %v3318, %v3288
        %v3328 = vsel %vm3325, %v3319, %v3290
        %v3329 = vsel %vm3325, %v3320, %v3292
        %v3330 = vsel %vm3325, %v3321, %v3294
        %v3331 = vsel %vm3325, %v3322, %v3296
        %v3332 = vsel %vm3325, %v3323, %v3298
        %v3333 = vsel %vm3325, %v3324, %v3300
        %v3334 = vpack.c.bf16 %v3327, %v3326
        %v3335 = vpack.c.bf16 %v3329, %v3328
        %v3336 = vpack.c.bf16 %v3331, %v3330
        %v3337 = vpack.c.bf16 %v3333, %v3332
        %v3338 = vld [vmem:[%s3] sm:$0xf]
        %v3339 = vld [vmem:[%s3 + $0x4] sm:$0xf]
        %v3340 = vld [vmem:[%s3 + $0x8] sm:$0xf]
        %v3341 = vld [vmem:[%s3 + $0xc] sm:$0xf]
        %v3342 = vld [vmem:[%s4] sm:$0x1]
        %v3344 = vperm.slane %v3342, 0
        %v3350 = vunpack.c.l.b16 %v3338
        %v3351 = vunpack.c.l.b16 %v3339
        %v3352 = vunpack.c.l.b16 %v3340
        %v3353 = vunpack.c.l.b16 %v3341
        %v3354 = vpack.c.b16 %v3351, %v3350
        %v3355 = vpack.c.b16 %v3353, %v3352
        %v3359 = vsel %vm490, %v3334, 0
        %v3362 = vsel %vm490, %v3335, 0
        %v3365 = vsel %vm490, %v3336, 0
        %v3368 = vsel %vm490, %v3337, 0
        %3370 = vmatpush.bf16.msra.mxu0 0
        %3371 = vmatpush.bf16.msra.mxu0 0
        %3372 = vmatpush.bf16.msra.mxu0 0
        %3373 = vmatpush.bf16.msra.mxu0 0
        %3374 = vmatpush.bf16.msra.mxu0 0
        %3375 = vmatpush.bf16.msra.mxu0 0
        %3376 = vmatpush.bf16.msra.mxu0 %v3355
        %3377 = vmatpush.bf16.msra.mxu0 %v3354
        %3378 = vmatmul.bf16.gmra.mxu0 %v3359
        %v3379 = vpop.f32.mrf.mxu0
        %v3380 = vadd.f32 %v3344, %v3379
        %v3381 = vpop.f32.mrf.mxu0
        %v3382 = vadd.f32 %v3344, %v3381
        %3383 = vmatmul.bf16.gmra.mxu0 %v3362
        %v3384 = vpop.f32.mrf.mxu0
        %v3385 = vadd.f32 %v3344, %v3384
        %v3386 = vpop.f32.mrf.mxu0
        %v3387 = vadd.f32 %v3344, %v3386
        %3388 = vmatmul.bf16.gmra.mxu0 %v3365
        %v3389 = vpop.f32.mrf.mxu0
        %v3390 = vadd.f32 %v3344, %v3389
        %v3391 = vpop.f32.mrf.mxu0
        %v3392 = vadd.f32 %v3344, %v3391
        %3393 = vmatmul.bf16.gmra.mxu0 %v3368
        %v3394 = vpop.f32.mrf.mxu0
        %v3395 = vadd.f32 %v3344, %v3394
        %v3396 = vpop.f32.mrf.mxu0
        %v3397 = vadd.f32 %v3344, %v3396
        %3398 = vdwg.mxu0
        %v3399 = vsel %vm490, %v3380, 0.0
        %3400 = vadd.xlane.f32.xlu0 %v3399
        %v3401 = vpop.xlane.xlu0 %3400
        %v3402 = vsel %vm490, %v3382, 0.0
        %3403 = vadd.xlane.f32.xlu0 %v3402
        %v3404 = vpop.xlane.xlu0 %3403
        %v3405 = vsel %vm490, %v3385, 0.0
        %3406 = vadd.xlane.f32.xlu0 %v3405
        %v3407 = vpop.xlane.xlu0 %3406
        %v3408 = vsel %vm490, %v3387, 0.0
        %3409 = vadd.xlane.f32.xlu0 %v3408
        %v3410 = vpop.xlane.xlu0 %3409
        %v3411 = vsel %vm490, %v3390, 0.0
        %3412 = vadd.xlane.f32.xlu0 %v3411
        %v3413 = vpop.xlane.xlu0 %3412
        %v3414 = vsel %vm490, %v3392, 0.0
        %3415 = vadd.xlane.f32.xlu0 %v3414
        %v3416 = vpop.xlane.xlu0 %3415
        %v3417 = vsel %vm490, %v3395, 0.0
        %3418 = vadd.xlane.f32.xlu0 %v3417
        %v3419 = vpop.xlane.xlu0 %3418
        %v3420 = vsel %vm490, %v3397, 0.0
        %3421 = vadd.xlane.f32.xlu0 %v3420
        %v3422 = vpop.xlane.xlu0 %3421
        %v3423 = vrcp.pop 32.0
        %v3424 = vmul.f32 32.0, %v3423
        %v3425 = vsub.f32 1.0, %v3424
        %v3426 = vmul.f32 %v3423, %v3425
        %v3427 = vadd.f32 %v3423, %v3426
        %vm3428 = vweird.f32 %v3423
        %v3429 = vsel %vm3428, %v3423, %v3427
        %v3430 = vmul.f32 %v3401, %v3429
        %v3431 = vmul.f32 %v3404, %v3429
        %v3432 = vmul.f32 %v3407, %v3429
        %v3433 = vmul.f32 %v3410, %v3429
        %v3434 = vmul.f32 %v3413, %v3429
        %v3435 = vmul.f32 %v3416, %v3429
        %v3436 = vmul.f32 %v3419, %v3429
        %v3437 = vmul.f32 %v3422, %v3429
        %v3438 = vsub.f32 %v3380, %v3430
        %v3439 = vsub.f32 %v3382, %v3431
        %v3440 = vsub.f32 %v3385, %v3432
        %v3441 = vsub.f32 %v3387, %v3433
        %v3442 = vsub.f32 %v3390, %v3434
        %v3443 = vsub.f32 %v3392, %v3435
        %v3444 = vsub.f32 %v3395, %v3436
        %v3445 = vsub.f32 %v3397, %v3437
        %v3446 = vmul.f32 %v3438, %v3438
        %v3447 = vmul.f32 %v3439, %v3439
        %v3448 = vmul.f32 %v3440, %v3440
        %v3449 = vmul.f32 %v3441, %v3441
        %v3450 = vmul.f32 %v3442, %v3442
        %v3451 = vmul.f32 %v3443, %v3443
        %v3452 = vmul.f32 %v3444, %v3444
        %v3453 = vmul.f32 %v3445, %v3445
        %v3454 = vsel %vm490, %v3446, 0.0
        %3455 = vadd.xlane.f32.xlu0 %v3454
        %v3456 = vpop.xlane.xlu0 %3455
        %v3457 = vsel %vm490, %v3447, 0.0
        %3458 = vadd.xlane.f32.xlu0 %v3457
        %v3459 = vpop.xlane.xlu0 %3458
        %v3460 = vsel %vm490, %v3448, 0.0
        %3461 = vadd.xlane.f32.xlu0 %v3460
        %v3462 = vpop.xlane.xlu0 %3461
        %v3463 = vsel %vm490, %v3449, 0.0
        %3464 = vadd.xlane.f32.xlu0 %v3463
        %v3465 = vpop.xlane.xlu0 %3464
        %v3466 = vsel %vm490, %v3450, 0.0
        %3467 = vadd.xlane.f32.xlu0 %v3466
        %v3468 = vpop.xlane.xlu0 %3467
        %v3469 = vsel %vm490, %v3451, 0.0
        %3470 = vadd.xlane.f32.xlu0 %v3469
        %v3471 = vpop.xlane.xlu0 %3470
        %v3472 = vsel %vm490, %v3452, 0.0
        %3473 = vadd.xlane.f32.xlu0 %v3472
        %v3474 = vpop.xlane.xlu0 %3473
        %v3475 = vsel %vm490, %v3453, 0.0
        %3476 = vadd.xlane.f32.xlu0 %v3475
        %v3477 = vpop.xlane.xlu0 %3476
        %v3478 = vmul.f32 %v3456, %v3429
        %v3479 = vmul.f32 %v3459, %v3429
        %v3480 = vmul.f32 %v3462, %v3429
        %v3481 = vmul.f32 %v3465, %v3429
        %v3482 = vmul.f32 %v3468, %v3429
        %v3483 = vmul.f32 %v3471, %v3429
        %v3484 = vmul.f32 %v3474, %v3429
        %v3485 = vmul.f32 %v3477, %v3429
        %v3486 = vadd.f32 %v3478, 1e-05
        %v3487 = vadd.f32 %v3479, 1e-05
        %v3488 = vadd.f32 %v3480, 1e-05
        %v3489 = vadd.f32 %v3481, 1e-05
        %v3490 = vadd.f32 %v3482, 1e-05
        %v3491 = vadd.f32 %v3483, 1e-05
        %v3492 = vadd.f32 %v3484, 1e-05
        %v3493 = vadd.f32 %v3485, 1e-05
        %v3494 = vrsqrt.pop %v3486
        %v3495 = vmul.f32 %v3494, %v3486
        %v3496 = vmul.f32 %v3495, %v3494
        %v3497 = vmul.f32 0.5, %v3496
        %v3498 = vsub.f32 1.5, %v3497
        %v3499 = vmul.f32 %v3494, %v3498
        %vm3500 = vweird.f32 %v3486
        %vm3501 = vweird.f32 %v3494
        %vm3502 = vmor %vm3500, %vm3501
        %v3503 = vsel %vm3502, %v3494, %v3499
        %v3504 = vrsqrt.pop %v3487
        %v3505 = vmul.f32 %v3504, %v3487
        %v3506 = vmul.f32 %v3505, %v3504
        %v3507 = vmul.f32 0.5, %v3506
        %v3508 = vsub.f32 1.5, %v3507
        %v3509 = vmul.f32 %v3504, %v3508
        %vm3510 = vweird.f32 %v3487
        %vm3511 = vweird.f32 %v3504
        %vm3512 = vmor %vm3510, %vm3511
        %v3513 = vsel %vm3512, %v3504, %v3509
        %v3514 = vrsqrt.pop %v3488
        %v3515 = vmul.f32 %v3514, %v3488
        %v3516 = vmul.f32 %v3515, %v3514
        %v3517 = vmul.f32 0.5, %v3516
        %v3518 = vsub.f32 1.5, %v3517
        %v3519 = vmul.f32 %v3514, %v3518
        %vm3520 = vweird.f32 %v3488
        %vm3521 = vweird.f32 %v3514
        %vm3522 = vmor %vm3520, %vm3521
        %v3523 = vsel %vm3522, %v3514, %v3519
        %v3524 = vrsqrt.pop %v3489
        %v3525 = vmul.f32 %v3524, %v3489
        %v3526 = vmul.f32 %v3525, %v3524
        %v3527 = vmul.f32 0.5, %v3526
        %v3528 = vsub.f32 1.5, %v3527
        %v3529 = vmul.f32 %v3524, %v3528
        %vm3530 = vweird.f32 %v3489
        %vm3531 = vweird.f32 %v3524
        %vm3532 = vmor %vm3530, %vm3531
        %v3533 = vsel %vm3532, %v3524, %v3529
        %v3534 = vrsqrt.pop %v3490
        %v3535 = vmul.f32 %v3534, %v3490
        %v3536 = vmul.f32 %v3535, %v3534
        %v3537 = vmul.f32 0.5, %v3536
        %v3538 = vsub.f32 1.5, %v3537
        %v3539 = vmul.f32 %v3534, %v3538
        %vm3540 = vweird.f32 %v3490
        %vm3541 = vweird.f32 %v3534
        %vm3542 = vmor %vm3540, %vm3541
        %v3543 = vsel %vm3542, %v3534, %v3539
        %v3544 = vrsqrt.pop %v3491
        %v3545 = vmul.f32 %v3544, %v3491
        %v3546 = vmul.f32 %v3545, %v3544
        %v3547 = vmul.f32 0.5, %v3546
        %v3548 = vsub.f32 1.5, %v3547
        %v3549 = vmul.f32 %v3544, %v3548
        %vm3550 = vweird.f32 %v3491
        %vm3551 = vweird.f32 %v3544
        %vm3552 = vmor %vm3550, %vm3551
        %v3553 = vsel %vm3552, %v3544, %v3549
        %v3554 = vrsqrt.pop %v3492
        %v3555 = vmul.f32 %v3554, %v3492
        %v3556 = vmul.f32 %v3555, %v3554
        %v3557 = vmul.f32 0.5, %v3556
        %v3558 = vsub.f32 1.5, %v3557
        %v3559 = vmul.f32 %v3554, %v3558
        %vm3560 = vweird.f32 %v3492
        %vm3561 = vweird.f32 %v3554
        %vm3562 = vmor %vm3560, %vm3561
        %v3563 = vsel %vm3562, %v3554, %v3559
        %v3564 = vrsqrt.pop %v3493
        %v3565 = vmul.f32 %v3564, %v3493
        %v3566 = vmul.f32 %v3565, %v3564
        %v3567 = vmul.f32 0.5, %v3566
        %v3568 = vsub.f32 1.5, %v3567
        %v3569 = vmul.f32 %v3564, %v3568
        %vm3570 = vweird.f32 %v3493
        %vm3571 = vweird.f32 %v3564
        %vm3572 = vmor %vm3570, %vm3571
        %v3573 = vsel %vm3572, %v3564, %v3569
        %v3574 = vmul.f32 %v3438, %v3503
        %v3575 = vmul.f32 %v3439, %v3513
        %v3576 = vmul.f32 %v3440, %v3523
        %v3577 = vmul.f32 %v3441, %v3533
        %v3578 = vmul.f32 %v3442, %v3543
        %v3579 = vmul.f32 %v3443, %v3553
        %v3580 = vmul.f32 %v3444, %v3563
        %v3581 = vmul.f32 %v3445, %v3573
        %v3583 = vperm.slane %v468, 0
        %v3585 = vmul.f32 %v3574, %v3583
        %v3586 = vmul.f32 %v3575, %v3583
        %v3587 = vmul.f32 %v3576, %v3583
        %v3588 = vmul.f32 %v3577, %v3583
        %v3589 = vmul.f32 %v3578, %v3583
        %v3590 = vmul.f32 %v3579, %v3583
        %v3591 = vmul.f32 %v3580, %v3583
        %v3592 = vmul.f32 %v3581, %v3583
        %v3594 = vperm.slane %v469, 0
        %v3596 = vadd.f32 %v3585, %v3594
        %v3597 = vadd.f32 %v3586, %v3594
        %v3598 = vadd.f32 %v3587, %v3594
        %v3599 = vadd.f32 %v3588, %v3594
        %v3600 = vadd.f32 %v3589, %v3594
        %v3601 = vadd.f32 %v3590, %v3594
        %v3602 = vadd.f32 %v3591, %v3594
        %v3603 = vadd.f32 %v3592, %v3594
        %v3604 = vadd.f32 %v456, %v3596
        %v3605 = vadd.f32 %v457, %v3597
        %v3606 = vadd.f32 %v458, %v3598
        %v3607 = vadd.f32 %v459, %v3599
        %v3608 = vadd.f32 %v460, %v3600
        %v3609 = vadd.f32 %v461, %v3601
        %v3610 = vadd.f32 %v462, %v3602
        %v3611 = vadd.f32 %v463, %v3603
        %v3612 = vpack.c.bf16 %v3605, %v3604
        %v3613 = vpack.c.bf16 %v3607, %v3606
        %v3614 = vpack.c.bf16 %v3609, %v3608
        %v3615 = vpack.c.bf16 %v3611, %v3610
        %v3616 = vld [vmem:[%s9] sm:$0xf]
        %v3617 = vld [vmem:[%s9 + $0x4] sm:$0xf]
        %v3618 = vld [vmem:[%s9 + $0x8] sm:$0xf]
        %v3619 = vld [vmem:[%s9 + $0xc] sm:$0xf]
        %v3620 = vld [vmem:[%s10] sm:$0x1]
        %v3622 = vperm.slane %v3620, 0
        %v3628 = vunpack.c.l.b16 %v3616
        %v3629 = vunpack.c.l.b16 %v3617
        %v3630 = vunpack.c.l.b16 %v3618
        %v3631 = vunpack.c.l.b16 %v3619
        %v3632 = vpack.c.b16 %v3629, %v3628
        %v3633 = vpack.c.b16 %v3631, %v3630
        %v3637 = vsel %vm490, %v3612, 0
        %v3640 = vsel %vm490, %v3613, 0
        %v3643 = vsel %vm490, %v3614, 0
        %v3646 = vsel %vm490, %v3615, 0
        %3648 = vmatpush.bf16.msra.mxu0 0
        %3649 = vmatpush.bf16.msra.mxu0 0
        %3650 = vmatpush.bf16.msra.mxu0 0
        %3651 = vmatpush.bf16.msra.mxu0 0
        %3652 = vmatpush.bf16.msra.mxu0 0
        %3653 = vmatpush.bf16.msra.mxu0 0
        %3654 = vmatpush.bf16.msra.mxu0 %v3633
        %3655 = vmatpush.bf16.msra.mxu0 %v3632
        %3656 = vmatmul.bf16.gmra.mxu0 %v3637
        %v3657 = vpop.f32.mrf.mxu0
        %v3658 = vadd.f32 %v3622, %v3657
        %v3659 = vpop.f32.mrf.mxu0
        %v3660 = vadd.f32 %v3622, %v3659
        %3661 = vmatmul.bf16.gmra.mxu0 %v3640
        %v3662 = vpop.f32.mrf.mxu0
        %v3663 = vadd.f32 %v3622, %v3662
        %v3664 = vpop.f32.mrf.mxu0
        %v3665 = vadd.f32 %v3622, %v3664
        %3666 = vmatmul.bf16.gmra.mxu0 %v3643
        %v3667 = vpop.f32.mrf.mxu0
        %v3668 = vadd.f32 %v3622, %v3667
        %v3669 = vpop.f32.mrf.mxu0
        %v3670 = vadd.f32 %v3622, %v3669
        %3671 = vmatmul.bf16.gmra.mxu0 %v3646
        %v3672 = vpop.f32.mrf.mxu0
        %v3673 = vadd.f32 %v3622, %v3672
        %v3674 = vpop.f32.mrf.mxu0
        %v3675 = vadd.f32 %v3622, %v3674
        %3676 = vdwg.mxu0
        %v3677 = vmul.f32 %v3658, %v3658
        %v3678 = vmul.f32 %v3660, %v3660
        %v3679 = vmul.f32 %v3663, %v3663
        %v3680 = vmul.f32 %v3665, %v3665
        %v3681 = vmul.f32 %v3668, %v3668
        %v3682 = vmul.f32 %v3670, %v3670
        %v3683 = vmul.f32 %v3673, %v3673
        %v3684 = vmul.f32 %v3675, %v3675
        %v3685 = vmul.f32 %v3658, %v3677
        %v3686 = vmul.f32 %v3660, %v3678
        %v3687 = vmul.f32 %v3663, %v3679
        %v3688 = vmul.f32 %v3665, %v3680
        %v3689 = vmul.f32 %v3668, %v3681
        %v3690 = vmul.f32 %v3670, %v3682
        %v3691 = vmul.f32 %v3673, %v3683
        %v3692 = vmul.f32 %v3675, %v3684
        %v3693 = vmul.f32 %v3685, 0.044715
        %v3694 = vmul.f32 %v3686, 0.044715
        %v3695 = vmul.f32 %v3687, 0.044715
        %v3696 = vmul.f32 %v3688, 0.044715
        %v3697 = vmul.f32 %v3689, 0.044715
        %v3698 = vmul.f32 %v3690, 0.044715
        %v3699 = vmul.f32 %v3691, 0.044715
        %v3700 = vmul.f32 %v3692, 0.044715
        %v3701 = vadd.f32 %v3658, %v3693
        %v3702 = vadd.f32 %v3660, %v3694
        %v3703 = vadd.f32 %v3663, %v3695
        %v3704 = vadd.f32 %v3665, %v3696
        %v3705 = vadd.f32 %v3668, %v3697
        %v3706 = vadd.f32 %v3670, %v3698
        %v3707 = vadd.f32 %v3673, %v3699
        %v3708 = vadd.f32 %v3675, %v3700
        %v3709 = vmul.f32 %v3701, 0.7978846
        %v3710 = vmul.f32 %v3702, 0.7978846
        %v3711 = vmul.f32 %v3703, 0.7978846
        %v3712 = vmul.f32 %v3704, 0.7978846
        %v3713 = vmul.f32 %v3705, 0.7978846
        %v3714 = vmul.f32 %v3706, 0.7978846
        %v3715 = vmul.f32 %v3707, 0.7978846
        %v3716 = vmul.f32 %v3708, 0.7978846
        %v3717 = vtanh.pop %v3709
        %v3718 = vtanh.pop %v3710
        %v3719 = vtanh.pop %v3711
        %v3720 = vtanh.pop %v3712
        %v3721 = vtanh.pop %v3713
        %v3722 = vtanh.pop %v3714
        %v3723 = vtanh.pop %v3715
        %v3724 = vtanh.pop %v3716
        %v3725 = vadd.f32 %v3717, 1.0
        %v3726 = vadd.f32 %v3718, 1.0
        %v3727 = vadd.f32 %v3719, 1.0
        %v3728 = vadd.f32 %v3720, 1.0
        %v3729 = vadd.f32 %v3721, 1.0
        %v3730 = vadd.f32 %v3722, 1.0
        %v3731 = vadd.f32 %v3723, 1.0
        %v3732 = vadd.f32 %v3724, 1.0
        %v3733 = vmul.f32 %v3725, 0.5
        %v3734 = vmul.f32 %v3726, 0.5
        %v3735 = vmul.f32 %v3727, 0.5
        %v3736 = vmul.f32 %v3728, 0.5
        %v3737 = vmul.f32 %v3729, 0.5
        %v3738 = vmul.f32 %v3730, 0.5
        %v3739 = vmul.f32 %v3731, 0.5
        %v3740 = vmul.f32 %v3732, 0.5
        %v3741 = vmul.f32 %v3658, %v3733
        %v3742 = vmul.f32 %v3660, %v3734
        %v3743 = vmul.f32 %v3663, %v3735
        %v3744 = vmul.f32 %v3665, %v3736
        %v3745 = vmul.f32 %v3668, %v3737
        %v3746 = vmul.f32 %v3670, %v3738
        %v3747 = vmul.f32 %v3673, %v3739
        %v3748 = vmul.f32 %v3675, %v3740
        %v3749 = vpack.c.bf16 %v3742, %v3741
        %v3750 = vpack.c.bf16 %v3744, %v3743
        %v3751 = vpack.c.bf16 %v3746, %v3745
        %v3752 = vpack.c.bf16 %v3748, %v3747
        %v3753 = vld [vmem:[%s11] sm:$0xf]
        %v3754 = vld [vmem:[%s11 + $0x4] sm:$0xf]
        %v3755 = vld [vmem:[%s11 + $0x8] sm:$0xf]
        %v3756 = vld [vmem:[%s11 + $0xc] sm:$0xf]
        %v3757 = vld [vmem:[%s11 + $0x10] sm:$0xf]
        %v3758 = vld [vmem:[%s11 + $0x14] sm:$0xf]
        %v3759 = vld [vmem:[%s11 + $0x18] sm:$0xf]
        %v3760 = vld [vmem:[%s11 + $0x1c] sm:$0xf]
        %v3761 = vld [vmem:[%s11 + $0x20] sm:$0xf]
        %v3762 = vld [vmem:[%s11 + $0x24] sm:$0xf]
        %v3763 = vld [vmem:[%s11 + $0x28] sm:$0xf]
        %v3764 = vld [vmem:[%s11 + $0x2c] sm:$0xf]
        %v3765 = vld [vmem:[%s11 + $0x30] sm:$0xf]
        %v3766 = vld [vmem:[%s11 + $0x34] sm:$0xf]
        %v3767 = vld [vmem:[%s11 + $0x38] sm:$0xf]
        %v3768 = vld [vmem:[%s11 + $0x3c] sm:$0xf]
        %v3769 = vld [vmem:[%s12] sm:$0x1]
        %v3771 = vperm.slane %v3769, 0
        %v3789 = vunpack.c.l.b16 %v3753
        %v3790 = vunpack.c.l.b16 %v3754
        %v3791 = vunpack.c.l.b16 %v3755
        %v3792 = vunpack.c.l.b16 %v3756
        %v3793 = vunpack.c.l.b16 %v3757
        %v3794 = vunpack.c.l.b16 %v3758
        %v3795 = vunpack.c.l.b16 %v3759
        %v3796 = vunpack.c.l.b16 %v3760
        %v3797 = vunpack.c.l.b16 %v3761
        %v3798 = vunpack.c.l.b16 %v3762
        %v3799 = vunpack.c.l.b16 %v3763
        %v3800 = vunpack.c.l.b16 %v3764
        %v3801 = vunpack.c.l.b16 %v3765
        %v3802 = vunpack.c.l.b16 %v3766
        %v3803 = vunpack.c.l.b16 %v3767
        %v3804 = vunpack.c.l.b16 %v3768
        %v3805 = vpack.c.b16 %v3790, %v3789
        %v3806 = vpack.c.b16 %v3792, %v3791
        %v3807 = vpack.c.b16 %v3794, %v3793
        %v3808 = vpack.c.b16 %v3796, %v3795
        %v3809 = vpack.c.b16 %v3798, %v3797
        %v3810 = vpack.c.b16 %v3800, %v3799
        %v3811 = vpack.c.b16 %v3802, %v3801
        %v3812 = vpack.c.b16 %v3804, %v3803
        %3821 = vmatpush.bf16.msra.mxu0 %v3812
        %3822 = vmatpush.bf16.msra.mxu0 %v3811
        %3823 = vmatpush.bf16.msra.mxu0 %v3810
        %3824 = vmatpush.bf16.msra.mxu0 %v3809
        %3825 = vmatpush.bf16.msra.mxu0 %v3808
        %3826 = vmatpush.bf16.msra.mxu0 %v3807
        %3827 = vmatpush.bf16.msra.mxu0 %v3806
        %3828 = vmatpush.bf16.msra.mxu0 %v3805
        %3829 = vmatmul.bf16.gmra.mxu0 %v3749
        %v3830 = vpop.f32.mrf.mxu0
        %v3831 = vadd.f32 %v3771, %v3830
        %v3832 = vpop.f32.mrf.mxu0
        %v3833 = vadd.f32 %v3771, %v3832
        %3834 = vmatmul.bf16.gmra.mxu0 %v3750
        %v3835 = vpop.f32.mrf.mxu0
        %v3836 = vadd.f32 %v3771, %v3835
        %v3837 = vpop.f32.mrf.mxu0
        %v3838 = vadd.f32 %v3771, %v3837
        %3839 = vmatmul.bf16.gmra.mxu0 %v3751
        %v3840 = vpop.f32.mrf.mxu0
        %v3841 = vadd.f32 %v3771, %v3840
        %v3842 = vpop.f32.mrf.mxu0
        %v3843 = vadd.f32 %v3771, %v3842
        %3844 = vmatmul.bf16.gmra.mxu0 %v3752
        %v3845 = vpop.f32.mrf.mxu0
        %v3846 = vadd.f32 %v3771, %v3845
        %v3847 = vpop.f32.mrf.mxu0
        %v3848 = vadd.f32 %v3771, %v3847
        %3849 = vdwg.mxu0
        %v3850 = vsel %vm490, %v3831, 0.0
        %3851 = vadd.xlane.f32.xlu0 %v3850
        %v3852 = vpop.xlane.xlu0 %3851
        %v3853 = vsel %vm490, %v3833, 0.0
        %3854 = vadd.xlane.f32.xlu0 %v3853
        %v3855 = vpop.xlane.xlu0 %3854
        %v3856 = vsel %vm490, %v3836, 0.0
        %3857 = vadd.xlane.f32.xlu0 %v3856
        %v3858 = vpop.xlane.xlu0 %3857
        %v3859 = vsel %vm490, %v3838, 0.0
        %3860 = vadd.xlane.f32.xlu0 %v3859
        %v3861 = vpop.xlane.xlu0 %3860
        %v3862 = vsel %vm490, %v3841, 0.0
        %3863 = vadd.xlane.f32.xlu0 %v3862
        %v3864 = vpop.xlane.xlu0 %3863
        %v3865 = vsel %vm490, %v3843, 0.0
        %3866 = vadd.xlane.f32.xlu0 %v3865
        %v3867 = vpop.xlane.xlu0 %3866
        %v3868 = vsel %vm490, %v3846, 0.0
        %3869 = vadd.xlane.f32.xlu0 %v3868
        %v3870 = vpop.xlane.xlu0 %3869
        %v3871 = vsel %vm490, %v3848, 0.0
        %3872 = vadd.xlane.f32.xlu0 %v3871
        %v3873 = vpop.xlane.xlu0 %3872
        %v3874 = vmul.f32 %v3852, %v3429
        %v3875 = vmul.f32 %v3855, %v3429
        %v3876 = vmul.f32 %v3858, %v3429
        %v3877 = vmul.f32 %v3861, %v3429
        %v3878 = vmul.f32 %v3864, %v3429
        %v3879 = vmul.f32 %v3867, %v3429
        %v3880 = vmul.f32 %v3870, %v3429
        %v3881 = vmul.f32 %v3873, %v3429
        %v3882 = vsub.f32 %v3831, %v3874
        %v3883 = vsub.f32 %v3833, %v3875
        %v3884 = vsub.f32 %v3836, %v3876
        %v3885 = vsub.f32 %v3838, %v3877
        %v3886 = vsub.f32 %v3841, %v3878
        %v3887 = vsub.f32 %v3843, %v3879
        %v3888 = vsub.f32 %v3846, %v3880
        %v3889 = vsub.f32 %v3848, %v3881
        %v3890 = vmul.f32 %v3882, %v3882
        %v3891 = vmul.f32 %v3883, %v3883
        %v3892 = vmul.f32 %v3884, %v3884
        %v3893 = vmul.f32 %v3885, %v3885
        %v3894 = vmul.f32 %v3886, %v3886
        %v3895 = vmul.f32 %v3887, %v3887
        %v3896 = vmul.f32 %v3888, %v3888
        %v3897 = vmul.f32 %v3889, %v3889
        %v3898 = vsel %vm490, %v3890, 0.0
        %3899 = vadd.xlane.f32.xlu0 %v3898
        %v3900 = vpop.xlane.xlu0 %3899
        %v3901 = vsel %vm490, %v3891, 0.0
        %3902 = vadd.xlane.f32.xlu0 %v3901
        %v3903 = vpop.xlane.xlu0 %3902
        %v3904 = vsel %vm490, %v3892, 0.0
        %3905 = vadd.xlane.f32.xlu0 %v3904
        %v3906 = vpop.xlane.xlu0 %3905
        %v3907 = vsel %vm490, %v3893, 0.0
        %3908 = vadd.xlane.f32.xlu0 %v3907
        %v3909 = vpop.xlane.xlu0 %3908
        %v3910 = vsel %vm490, %v3894, 0.0
        %3911 = vadd.xlane.f32.xlu0 %v3910
        %v3912 = vpop.xlane.xlu0 %3911
        %v3913 = vsel %vm490, %v3895, 0.0
        %3914 = vadd.xlane.f32.xlu0 %v3913
        %v3915 = vpop.xlane.xlu0 %3914
        %v3916 = vsel %vm490, %v3896, 0.0
        %3917 = vadd.xlane.f32.xlu0 %v3916
        %v3918 = vpop.xlane.xlu0 %3917
        %v3919 = vsel %vm490, %v3897, 0.0
        %3920 = vadd.xlane.f32.xlu0 %v3919
        %v3921 = vpop.xlane.xlu0 %3920
        %v3922 = vmul.f32 %v3900, %v3429
        %v3923 = vmul.f32 %v3903, %v3429
        %v3924 = vmul.f32 %v3906, %v3429
        %v3925 = vmul.f32 %v3909, %v3429
        %v3926 = vmul.f32 %v3912, %v3429
        %v3927 = vmul.f32 %v3915, %v3429
        %v3928 = vmul.f32 %v3918, %v3429
        %v3929 = vmul.f32 %v3921, %v3429
        %v3930 = vadd.f32 %v3922, 1e-05
        %v3931 = vadd.f32 %v3923, 1e-05
        %v3932 = vadd.f32 %v3924, 1e-05
        %v3933 = vadd.f32 %v3925, 1e-05
        %v3934 = vadd.f32 %v3926, 1e-05
        %v3935 = vadd.f32 %v3927, 1e-05
        %v3936 = vadd.f32 %v3928, 1e-05
        %v3937 = vadd.f32 %v3929, 1e-05
        %v3938 = vrsqrt.pop %v3930
        %v3939 = vmul.f32 %v3938, %v3930
        %v3940 = vmul.f32 %v3939, %v3938
        %v3941 = vmul.f32 0.5, %v3940
        %v3942 = vsub.f32 1.5, %v3941
        %v3943 = vmul.f32 %v3938, %v3942
        %vm3944 = vweird.f32 %v3930
        %vm3945 = vweird.f32 %v3938
        %vm3946 = vmor %vm3944, %vm3945
        %v3947 = vsel %vm3946, %v3938, %v3943
        %v3948 = vrsqrt.pop %v3931
        %v3949 = vmul.f32 %v3948, %v3931
        %v3950 = vmul.f32 %v3949, %v3948
        %v3951 = vmul.f32 0.5, %v3950
        %v3952 = vsub.f32 1.5, %v3951
        %v3953 = vmul.f32 %v3948, %v3952
        %vm3954 = vweird.f32 %v3931
        %vm3955 = vweird.f32 %v3948
        %vm3956 = vmor %vm3954, %vm3955
        %v3957 = vsel %vm3956, %v3948, %v3953
        %v3958 = vrsqrt.pop %v3932
        %v3959 = vmul.f32 %v3958, %v3932
        %v3960 = vmul.f32 %v3959, %v3958
        %v3961 = vmul.f32 0.5, %v3960
        %v3962 = vsub.f32 1.5, %v3961
        %v3963 = vmul.f32 %v3958, %v3962
        %vm3964 = vweird.f32 %v3932
        %vm3965 = vweird.f32 %v3958
        %vm3966 = vmor %vm3964, %vm3965
        %v3967 = vsel %vm3966, %v3958, %v3963
        %v3968 = vrsqrt.pop %v3933
        %v3969 = vmul.f32 %v3968, %v3933
        %v3970 = vmul.f32 %v3969, %v3968
        %v3971 = vmul.f32 0.5, %v3970
        %v3972 = vsub.f32 1.5, %v3971
        %v3973 = vmul.f32 %v3968, %v3972
        %vm3974 = vweird.f32 %v3933
        %vm3975 = vweird.f32 %v3968
        %vm3976 = vmor %vm3974, %vm3975
        %v3977 = vsel %vm3976, %v3968, %v3973
        %v3978 = vrsqrt.pop %v3934
        %v3979 = vmul.f32 %v3978, %v3934
        %v3980 = vmul.f32 %v3979, %v3978
        %v3981 = vmul.f32 0.5, %v3980
        %v3982 = vsub.f32 1.5, %v3981
        %v3983 = vmul.f32 %v3978, %v3982
        %vm3984 = vweird.f32 %v3934
        %vm3985 = vweird.f32 %v3978
        %vm3986 = vmor %vm3984, %vm3985
        %v3987 = vsel %vm3986, %v3978, %v3983
        %v3988 = vrsqrt.pop %v3935
        %v3989 = vmul.f32 %v3988, %v3935
        %v3990 = vmul.f32 %v3989, %v3988
        %v3991 = vmul.f32 0.5, %v3990
        %v3992 = vsub.f32 1.5, %v3991
        %v3993 = vmul.f32 %v3988, %v3992
        %vm3994 = vweird.f32 %v3935
        %vm3995 = vweird.f32 %v3988
        %vm3996 = vmor %vm3994, %vm3995
        %v3997 = vsel %vm3996, %v3988, %v3993
        %v3998 = vrsqrt.pop %v3936
        %v3999 = vmul.f32 %v3998, %v3936
        %v4000 = vmul.f32 %v3999, %v3998
        %v4001 = vmul.f32 0.5, %v4000
        %v4002 = vsub.f32 1.5, %v4001
        %v4003 = vmul.f32 %v3998, %v4002
        %vm4004 = vweird.f32 %v3936
        %vm4005 = vweird.f32 %v3998
        %vm4006 = vmor %vm4004, %vm4005
        %v4007 = vsel %vm4006, %v3998, %v4003
        %v4008 = vrsqrt.pop %v3937
        %v4009 = vmul.f32 %v4008, %v3937
        %v4010 = vmul.f32 %v4009, %v4008
        %v4011 = vmul.f32 0.5, %v4010
        %v4012 = vsub.f32 1.5, %v4011
        %v4013 = vmul.f32 %v4008, %v4012
        %vm4014 = vweird.f32 %v3937
        %vm4015 = vweird.f32 %v4008
        %vm4016 = vmor %vm4014, %vm4015
        %v4017 = vsel %vm4016, %v4008, %v4013
        %v4018 = vmul.f32 %v3882, %v3947
        %v4019 = vmul.f32 %v3883, %v3957
        %v4020 = vmul.f32 %v3884, %v3967
        %v4021 = vmul.f32 %v3885, %v3977
        %v4022 = vmul.f32 %v3886, %v3987
        %v4023 = vmul.f32 %v3887, %v3997
        %v4024 = vmul.f32 %v3888, %v4007
        %v4025 = vmul.f32 %v3889, %v4017
        %v4026 = vmul.f32 %v4018, %v3583
        %v4027 = vmul.f32 %v4019, %v3583
        %v4028 = vmul.f32 %v4020, %v3583
        %v4029 = vmul.f32 %v4021, %v3583
        %v4030 = vmul.f32 %v4022, %v3583
        %v4031 = vmul.f32 %v4023, %v3583
        %v4032 = vmul.f32 %v4024, %v3583
        %v4033 = vmul.f32 %v4025, %v3583
        %v4034 = vadd.f32 %v4026, %v3594
        %v4035 = vadd.f32 %v4027, %v3594
        %v4036 = vadd.f32 %v4028, %v3594
        %v4037 = vadd.f32 %v4029, %v3594
        %v4038 = vadd.f32 %v4030, %v3594
        %v4039 = vadd.f32 %v4031, %v3594
        %v4040 = vadd.f32 %v4032, %v3594
        %v4041 = vadd.f32 %v4033, %v3594
        %v4042 = vadd.f32 %v3604, %v4034
        %v4043 = vadd.f32 %v3605, %v4035
        %v4044 = vadd.f32 %v3606, %v4036
        %v4045 = vadd.f32 %v3607, %v4037
        %v4046 = vadd.f32 %v3608, %v4038
        %v4047 = vadd.f32 %v3609, %v4039
        %v4048 = vadd.f32 %v3610, %v4040
        %v4049 = vadd.f32 %v3611, %v4041
        %4050 = vst.msk [vmem:[%s454] sm:$0xff] %vm490, %v4042
        %4051 = vst.msk [vmem:[%s454 + $0x8] sm:$0xff] %vm490, %v4043
        %4052 = vst.msk [vmem:[%s454 + $0x10] sm:$0xff] %vm490, %v4044
        %4053 = vst.msk [vmem:[%s454 + $0x18] sm:$0xff] %vm490, %v4045
        %4054 = vst.msk [vmem:[%s454 + $0x20] sm:$0xff] %vm490, %v4046
        %4055 = vst.msk [vmem:[%s454 + $0x28] sm:$0xff] %vm490, %v4047
        %4056 = vst.msk [vmem:[%s454 + $0x30] sm:$0xff] %vm490, %v4048
        %4057 = vst.msk [vmem:[%s454 + $0x38] sm:$0xff] %vm490, %v4049
        %p4058 = scmp.lt.s32.totalorder %s25, 1
        %s4059 = scalar_select %p4058, %s25, 1
        %s4060 = smul.addr %s4059, 8
        %s4061 = smul.addr %s4060, 8
        %s4062 = scalar_lea.vmem %s13, %s4061
        // Predicated region
        $region77: #{swin_connect_encoder_forward.2} parent=71 // pred_check
          %p4063 = pneg %p321
        $region78: #{swin_connect_encoder_forward.2} parent=71 // pred_check_branch
          %4065 = sbr.rel (%p4063) target = $region80
        $region79: #{swin_connect_encoder_forward.2} parent=71 // pred_region
          _
        $region80: #{swin_connect_encoder_forward.2} parent=71 // pred_fallthru
          _
      $region72: #{swin_connect_encoder_forward.2} parent=5 // pred_fallthru
        _
      %p4066 = scmp.le.s32.totalorder 2, %s20
      // Predicated region
      $region81: #{swin_connect_encoder_forward.2} parent=5 // pred_check
        %p4067 = pneg %p4066
      $region82: #{swin_connect_encoder_forward.2} parent=5 // pred_check_branch
        %4069 = sbr.rel (%p4067) target = $region84
      $region83: #{swin_connect_encoder_forward.2} parent=5 // pred_region
        %s4070 = ssub.s32 %s20, 2
        // Predicated region
        $region85: #{swin_connect_encoder_forward.2} parent=83 // pred_check
          %p4071 = pneg %p327
        $region86: #{swin_connect_encoder_forward.2} parent=83 // pred_check_branch
          %4073 = sbr.rel (%p4071) target = $region88
        $region87: #{swin_connect_encoder_forward.2} parent=83 // pred_region
          %p4074 = scmp.lt.s32.totalorder %s26, 1
          %s4075 = scalar_select %p4074, %s26, 1
          %s4076 = smul.addr %s4075, 8
          %s4077 = smul.addr %s4076, 8
          %s4078 = scalar_lea.vmem %s13, %s4077
        $region88: #{swin_connect_encoder_forward.2} parent=83 // pred_fallthru
          _
      $region84: #{swin_connect_encoder_forward.2} parent=5 // pred_fallthru
        _
    $region6: #{swin_connect_encoder_forward.2} parent=1 // loop_footer
      %s24 = sadd.s32 1, %s20
    $region7: #{swin_connect_encoder_forward.2} parent=1 // loop_footer_branch
      %19 = sbr.rel target = $region3
    $region8: #{swin_connect_encoder_forward.2} parent=1 // loop_exit
      _
    %4079 = vsyncpa [#allocation3], 1
    %s4080 = scalar_lea.sflag [#allocation3], 1
    %4081 = vsyncpa %s4080, 1

// kernel: swin_connect_encoder_forward.3
$region0: #{swin_connect_encoder_forward.3}
  #allocation0 [shape = 'u32[]', space=smem, size = 0x4, offset = 0x4, fixed_abs, tag = 'smem constant byte address 0x4 - core index']
  #allocation1 [shape = 'u32[72,128]{1,0:T(1,128)}', space=vmem, size = 0x9000, scoped, tag = 'internal scratch']
  %s0 = inlined_call_operand.vmem [shape: f32[2,64,32], index: 0, kind: input, shape index: {}]
  %s1 = inlined_call_operand.vmem [shape: bf16[32,96], index: 1, kind: input, shape index: {}]
  %s2 = inlined_call_operand.vmem [shape: f32[1,96], index: 2, kind: input, shape index: {}]
  %s3 = inlined_call_operand.vmem [shape: bf16[32,32], index: 3, kind: input, shape index: {}]
  %s4 = inlined_call_operand.vmem [shape: f32[1,32], index: 4, kind: input, shape index: {}]
  %s5 = inlined_call_operand.vmem [shape: f32[4], index: 5, kind: input, shape index: {}]
  %s6 = inlined_call_operand.vmem [shape: f32[4,4,16,16], index: 6, kind: input, shape index: {}]
  %s7 = inlined_call_operand.vmem [shape: f32[1,32], index: 7, kind: input, shape index: {}]
  %s8 = inlined_call_operand.vmem [shape: f32[1,32], index: 8, kind: input, shape index: {}]
  %s9 = inlined_call_operand.vmem [shape: bf16[32,128], index: 9, kind: input, shape index: {}]
  %s10 = inlined_call_operand.vmem [shape: f32[1,128], index: 10, kind: input, shape index: {}]
  %s11 = inlined_call_operand.vmem [shape: bf16[128,32], index: 11, kind: input, shape index: {}]
  %s12 = inlined_call_operand.vmem [shape: f32[1,32], index: 12, kind: input, shape index: {}]
  %s13 = inlined_call_operand.vmem [shape: f32[2,64,32], index: 13, kind: output, shape index: {}]
  %s14 = sld [smem:[#allocation0]]
  $region89: #{swin_connect_encoder_forward.3} parent=0
    _
  %s16 = ssub.s32 1, %s14
  %s17 = scalar_select 0, %s16, %s14
  $region1: #{swin_connect_encoder_forward.3} parent=0
    #allocation2 [shape = 'u8[512]{0}', space=smem, size = 0x200, scoped, tag = 'input window, operand 5, single buffered']
    #allocation3 [shape = 's32[2]{0}', space=sflag, size = 0x8, scoped, tag = 'scoped memory for swin_connect_encoder_forward.3']
    %18 = vsyncpa [#allocation3], 0
    loop: start=0, step=1, limit=4
    $region2: #{swin_connect_encoder_forward.3} parent=1 // loop_pre_header
      _
    $region3: #{swin_connect_encoder_forward.3} parent=1 // loop_header
      %s20 = sphi 0, %s24
      %p21 = scmp.ge.s32.totalorder %s20, 4
      %s30 = sphi 0, %s32
      %s33 = sphi 0, %s30
      %s34 = sphi 0, %s33
      %s50 = sphi 0, %s34
      %s54 = sphi 0, %s54
      %s56 = sphi 0, %s54
      %s57 = sphi 0, %s56
      %s71 = sphi 0, %s57
      %s75 = sphi 0, %s75
      %s77 = sphi 0, %s75
      %s78 = sphi 0, %s77
      %s92 = sphi 0, %s78
      %s96 = sphi 0, %s96
      %s98 = sphi 0, %s96
      %s99 = sphi 0, %s98
      %s113 = sphi 0, %s99
      %s117 = sphi 0, %s117
      %s119 = sphi 0, %s117
      %s120 = sphi 0, %s119
      %s134 = sphi 0, %s120
      %s138 = sphi 0, %s138
      %s140 = sphi 0, %s138
      %s141 = sphi 0, %s140
      %s155 = sphi 0, %s141
      %s159 = sphi 0, %s159
      %s161 = sphi 0, %s159
      %s162 = sphi 0, %s161
      %s176 = sphi 0, %s162
      %s180 = sphi 0, %s180
      %s182 = sphi 0, %s180
      %s183 = sphi 0, %s182
      %s197 = sphi 0, %s183
      %s201 = sphi 0, %s201
      %s203 = sphi 0, %s201
      %s204 = sphi 0, %s203
      %s218 = sphi 0, %s204
      %s222 = sphi 0, %s222
      %s224 = sphi 0, %s222
      %s225 = sphi 0, %s224
      %s239 = sphi 0, %s225
      %s243 = sphi 0, %s243
      %s245 = sphi 0, %s243
      %s246 = sphi 0, %s245
      %s260 = sphi 0, %s246
      %s264 = sphi 0, %s264
      %s266 = sphi 0, %s264
      %s267 = sphi 0, %s266
      %s281 = sphi 0, %s267
      %s285 = sphi 0, %s285
      %s287 = sphi 0, %s285
      %s288 = sphi 0, %s287
      %s302 = sphi 0, %s288
      %s308 = sphi 0, %s310
      %s311 = sphi 0, %s308
      %s312 = sphi 0, %s311
      %s328 = sphi 0, %s312
    $region4: #{swin_connect_encoder_forward.3} parent=1 // loop_header_branch
      %23 = sbr.rel (%p21) target = $region8
    $region5: #{swin_connect_encoder_forward.3} parent=1 // loop_body
      %s25 = ssub.s32 %s20, 1
      %s26 = ssub.s32 %s20, 2
      %s27 = sadd.s32 %s20, 1
      %s28 = ssub.s32 %s20, %s27
      %p29 = scmp.eq.s32.totalorder %s28, 0
      %s31 = sadd.s32 %s30, 1
      %s32 = scalar_select %p29, %s30, %s31
      %p35 = pneg %p29
      %p36 = scmp.eq.s32.totalorder %s20, 1
      %p37 = por %p35, %p36
      %p38 = scmp.ne.s32.totalorder %s30, %s33
      %p39 = scmp.eq.s32.totalorder %s20, 0
      %p40 = por %p38, %p39
      %p41 = scmp.ne.s32.totalorder %s30, %s33
      %p42 = scmp.eq.s32.totalorder %s25, 1
      %p43 = por %p41, %p42
      %p44 = scmp.ne.s32.totalorder %s33, %s34
      %p45 = scmp.eq.s32.totalorder %s25, 0
      %p46 = por %p44, %p45
      %p47 = scmp.ne.s32.totalorder %s33, %s34
      %p48 = scmp.eq.s32.totalorder %s26, 1
      %p49 = por %p47, %p48
      %p51 = scmp.ne.s32.totalorder %s34, %s50
      %p52 = scmp.eq.s32.totalorder %s26, 0
      %p53 = por %p51, %p52
      %s55 = sadd.s32 %s54, 1
      %p58 = scmp.eq.s32.totalorder %s20, 1
      %p59 = scmp.ne.s32.totalorder %s54, %s56
      %p60 = scmp.eq.s32.totalorder %s20, 0
      %p61 = por %p59, %p60
      %p62 = scmp.ne.s32.totalorder %s54, %s56
      %p63 = scmp.eq.s32.totalorder %s25, 1
      %p64 = por %p62, %p63
      %p65 = scmp.ne.s32.totalorder %s56, %s57
      %p66 = scmp.eq.s32.totalorder %s25, 0
      %p67 = por %p65, %p66
      %p68 = scmp.ne.s32.totalorder %s56, %s57
      %p69 = scmp.eq.s32.totalorder %s26, 1
      %p70 = por %p68, %p69
      %p72 = scmp.ne.s32.totalorder %s57, %s71
      %p73 = scmp.eq.s32.totalorder %s26, 0
      %p74 = por %p72, %p73
      %s76 = sadd.s32 %s75, 1
      %p79 = scmp.eq.s32.totalorder %s20, 1
      %p80 = scmp.ne.s32.totalorder %s75, %s77
      %p81 = scmp.eq.s32.totalorder %s20, 0
      %p82 = por %p80, %p81
      %p83 = scmp.ne.s32.totalorder %s75, %s77
      %p84 = scmp.eq.s32.totalorder %s25, 1
      %p85 = por %p83, %p84
      %p86 = scmp.ne.s32.totalorder %s77, %s78
      %p87 = scmp.eq.s32.totalorder %s25, 0
      %p88 = por %p86, %p87
      %p89 = scmp.ne.s32.totalorder %s77, %s78
      %p90 = scmp.eq.s32.totalorder %s26, 1
      %p91 = por %p89, %p90
      %p93 = scmp.ne.s32.totalorder %s78, %s92
      %p94 = scmp.eq.s32.totalorder %s26, 0
      %p95 = por %p93, %p94
      %s97 = sadd.s32 %s96, 1
      %p100 = scmp.eq.s32.totalorder %s20, 1
      %p101 = scmp.ne.s32.totalorder %s96, %s98
      %p102 = scmp.eq.s32.totalorder %s20, 0
      %p103 = por %p101, %p102
      %p104 = scmp.ne.s32.totalorder %s96, %s98
      %p105 = scmp.eq.s32.totalorder %s25, 1
      %p106 = por %p104, %p105
      %p107 = scmp.ne.s32.totalorder %s98, %s99
      %p108 = scmp.eq.s32.totalorder %s25, 0
      %p109 = por %p107, %p108
      %p110 = scmp.ne.s32.totalorder %s98, %s99
      %p111 = scmp.eq.s32.totalorder %s26, 1
      %p112 = por %p110, %p111
      %p114 = scmp.ne.s32.totalorder %s99, %s113
      %p115 = scmp.eq.s32.totalorder %s26, 0
      %p116 = por %p114, %p115
      %s118 = sadd.s32 %s117, 1
      %p121 = scmp.eq.s32.totalorder %s20, 1
      %p122 = scmp.ne.s32.totalorder %s117, %s119
      %p123 = scmp.eq.s32.totalorder %s20, 0
      %p124 = por %p122, %p123
      %p125 = scmp.ne.s32.totalorder %s117, %s119
      %p126 = scmp.eq.s32.totalorder %s25, 1
      %p127 = por %p125, %p126
      %p128 = scmp.ne.s32.totalorder %s119, %s120
      %p129 = scmp.eq.s32.totalorder %s25, 0
      %p130 = por %p128, %p129
      %p131 = scmp.ne.s32.totalorder %s119, %s120
      %p132 = scmp.eq.s32.totalorder %s26, 1
      %p133 = por %p131, %p132
      %p135 = scmp.ne.s32.totalorder %s120, %s134
      %p136 = scmp.eq.s32.totalorder %s26, 0
      %p137 = por %p135, %p136
      %s139 = sadd.s32 %s138, 1
      %p142 = scmp.eq.s32.totalorder %s20, 1
      %p143 = scmp.ne.s32.totalorder %s138, %s140
      %p144 = scmp.eq.s32.totalorder %s20, 0
      %p145 = por %p143, %p144
      %p146 = scmp.ne.s32.totalorder %s138, %s140
      %p147 = scmp.eq.s32.totalorder %s25, 1
      %p148 = por %p146, %p147
      %p149 = scmp.ne.s32.totalorder %s140, %s141
      %p150 = scmp.eq.s32.totalorder %s25, 0
      %p151 = por %p149, %p150
      %p152 = scmp.ne.s32.totalorder %s140, %s141
      %p153 = scmp.eq.s32.totalorder %s26, 1
      %p154 = por %p152, %p153
      %p156 = scmp.ne.s32.totalorder %s141, %s155
      %p157 = scmp.eq.s32.totalorder %s26, 0
      %p158 = por %p156, %p157
      %s160 = sadd.s32 %s159, 1
      %p163 = scmp.eq.s32.totalorder %s20, 1
      %p164 = scmp.ne.s32.totalorder %s159, %s161
      %p165 = scmp.eq.s32.totalorder %s20, 0
      %p166 = por %p164, %p165
      %p167 = scmp.ne.s32.totalorder %s159, %s161
      %p168 = scmp.eq.s32.totalorder %s25, 1
      %p169 = por %p167, %p168
      %p170 = scmp.ne.s32.totalorder %s161, %s162
      %p171 = scmp.eq.s32.totalorder %s25, 0
      %p172 = por %p170, %p171
      %p173 = scmp.ne.s32.totalorder %s161, %s162
      %p174 = scmp.eq.s32.totalorder %s26, 1
      %p175 = por %p173, %p174
      %p177 = scmp.ne.s32.totalorder %s162, %s176
      %p178 = scmp.eq.s32.totalorder %s26, 0
      %p179 = por %p177, %p178
      %s181 = sadd.s32 %s180, 1
      %p184 = scmp.eq.s32.totalorder %s20, 1
      %p185 = scmp.ne.s32.totalorder %s180, %s182
      %p186 = scmp.eq.s32.totalorder %s20, 0
      %p187 = por %p185, %p186
      %p188 = scmp.ne.s32.totalorder %s180, %s182
      %p189 = scmp.eq.s32.totalorder %s25, 1
      %p190 = por %p188, %p189
      %p191 = scmp.ne.s32.totalorder %s182, %s183
      %p192 = scmp.eq.s32.totalorder %s25, 0
      %p193 = por %p191, %p192
      %p194 = scmp.ne.s32.totalorder %s182, %s183
      %p195 = scmp.eq.s32.totalorder %s26, 1
      %p196 = por %p194, %p195
      %p198 = scmp.ne.s32.totalorder %s183, %s197
      %p199 = scmp.eq.s32.totalorder %s26, 0
      %p200 = por %p198, %p199
      %s202 = sadd.s32 %s201, 1
      %p205 = scmp.eq.s32.totalorder %s20, 1
      %p206 = scmp.ne.s32.totalorder %s201, %s203
      %p207 = scmp.eq.s32.totalorder %s20, 0
      %p208 = por %p206, %p207
      %p209 = scmp.ne.s32.totalorder %s201, %s203
      %p210 = scmp.eq.s32.totalorder %s25, 1
      %p211 = por %p209, %p210
      %p212 = scmp.ne.s32.totalorder %s203, %s204
      %p213 = scmp.eq.s32.totalorder %s25, 0
      %p214 = por %p212, %p213
      %p215 = scmp.ne.s32.totalorder %s203, %s204
      %p216 = scmp.eq.s32.totalorder %s26, 1
      %p217 = por %p215, %p216
      %p219 = scmp.ne.s32.totalorder %s204, %s218
      %p220 = scmp.eq.s32.totalorder %s26, 0
      %p221 = por %p219, %p220
      %s223 = sadd.s32 %s222, 1
      %p226 = scmp.eq.s32.totalorder %s20, 1
      %p227 = scmp.ne.s32.totalorder %s222, %s224
      %p228 = scmp.eq.s32.totalorder %s20, 0
      %p229 = por %p227, %p228
      %p230 = scmp.ne.s32.totalorder %s222, %s224
      %p231 = scmp.eq.s32.totalorder %s25, 1
      %p232 = por %p230, %p231
      %p233 = scmp.ne.s32.totalorder %s224, %s225
      %p234 = scmp.eq.s32.totalorder %s25, 0
      %p235 = por %p233, %p234
      %p236 = scmp.ne.s32.totalorder %s224, %s225
      %p237 = scmp.eq.s32.totalorder %s26, 1
      %p238 = por %p236, %p237
      %p240 = scmp.ne.s32.totalorder %s225, %s239
      %p241 = scmp.eq.s32.totalorder %s26, 0
      %p242 = por %p240, %p241
      %s244 = sadd.s32 %s243, 1
      %p247 = scmp.eq.s32.totalorder %s20, 1
      %p248 = scmp.ne.s32.totalorder %s243, %s245
      %p249 = scmp.eq.s32.totalorder %s20, 0
      %p250 = por %p248, %p249
      %p251 = scmp.ne.s32.totalorder %s243, %s245
      %p252 = scmp.eq.s32.totalorder %s25, 1
      %p253 = por %p251, %p252
      %p254 = scmp.ne.s32.totalorder %s245, %s246
      %p255 = scmp.eq.s32.totalorder %s25, 0
      %p256 = por %p254, %p255
      %p257 = scmp.ne.s32.totalorder %s245, %s246
      %p258 = scmp.eq.s32.totalorder %s26, 1
      %p259 = por %p257, %p258
      %p261 = scmp.ne.s32.totalorder %s246, %s260
      %p262 = scmp.eq.s32.totalorder %s26, 0
      %p263 = por %p261, %p262
      %s265 = sadd.s32 %s264, 1
      %p268 = scmp.eq.s32.totalorder %s20, 1
      %p269 = scmp.ne.s32.totalorder %s264, %s266
      %p270 = scmp.eq.s32.totalorder %s20, 0
      %p271 = por %p269, %p270
      %p272 = scmp.ne.s32.totalorder %s264, %s266
      %p273 = scmp.eq.s32.totalorder %s25, 1
      %p274 = por %p272, %p273
      %p275 = scmp.ne.s32.totalorder %s266, %s267
      %p276 = scmp.eq.s32.totalorder %s25, 0
      %p277 = por %p275, %p276
      %p278 = scmp.ne.s32.totalorder %s266, %s267
      %p279 = scmp.eq.s32.totalorder %s26, 1
      %p280 = por %p278, %p279
      %p282 = scmp.ne.s32.totalorder %s267, %s281
      %p283 = scmp.eq.s32.totalorder %s26, 0
      %p284 = por %p282, %p283
      %s286 = sadd.s32 %s285, 1
      %p289 = scmp.eq.s32.totalorder %s20, 1
      %p290 = scmp.ne.s32.totalorder %s285, %s287
      %p291 = scmp.eq.s32.totalorder %s20, 0
      %p292 = por %p290, %p291
      %p293 = scmp.ne.s32.totalorder %s285, %s287
      %p294 = scmp.eq.s32.totalorder %s25, 1
      %p295 = por %p293, %p294
      %p296 = scmp.ne.s32.totalorder %s287, %s288
      %p297 = scmp.eq.s32.totalorder %s25, 0
      %p298 = por %p296, %p297
      %p299 = scmp.ne.s32.totalorder %s287, %s288
      %p300 = scmp.eq.s32.totalorder %s26, 1
      %p301 = por %p299, %p300
      %p303 = scmp.ne.s32.totalorder %s288, %s302
      %p304 = scmp.eq.s32.totalorder %s26, 0
      %p305 = por %p303, %p304
      %s306 = ssub.s32 %s20, %s27
      %p307 = scmp.eq.s32.totalorder %s306, 0
      %s309 = sadd.s32 %s308, 1
      %s310 = scalar_select %p307, %s308, %s309
      %p313 = pneg %p307
      %p314 = scmp.eq.s32.totalorder %s20, 1
      %p315 = por %p313, %p314
      %p316 = scmp.ne.s32.totalorder %s308, %s311
      %p317 = scmp.eq.s32.totalorder %s20, 0
      %p318 = por %p316, %p317
      %p319 = scmp.ne.s32.totalorder %s308, %s311
      %p320 = scmp.eq.s32.totalorder %s25, 1
      %p321 = por %p319, %p320
      %p322 = scmp.ne.s32.totalorder %s311, %s312
      %p323 = scmp.eq.s32.totalorder %s25, 0
      %p324 = por %p322, %p323
      %p325 = scmp.ne.s32.totalorder %s311, %s312
      %p326 = scmp.eq.s32.totalorder %s26, 1
      %p327 = por %p325, %p326
      %p329 = scmp.ne.s32.totalorder %s312, %s328
      %p330 = scmp.eq.s32.totalorder %s26, 0
      %p331 = por %p329, %p330
      %p332 = scmp.le.s32.totalorder 1, %s20
      %p333 = scmp.lt.s32.totalorder %s20, 3
      %p334 = pnand %p332, %p333
      %p335 = pneg %p334
      // Predicated region
      $region9: #{swin_connect_encoder_forward.3} parent=5 // pred_check
        _
      $region10: #{swin_connect_encoder_forward.3} parent=5 // pred_check_branch
        %337 = sbr.rel (%p334) target = $region12
      $region11: #{swin_connect_encoder_forward.3} parent=5 // pred_region
        %s338 = ssub.s32 %s20, 1
        // Predicated region
        $region13: #{swin_connect_encoder_forward.3} parent=11 // pred_check
          %p339 = pneg %p67
        $region14: #{swin_connect_encoder_forward.3} parent=11 // pred_check_branch
          %341 = sbr.rel (%p339) target = $region16
        $region15: #{swin_connect_encoder_forward.3} parent=11 // pred_region
          _
        $region16: #{swin_connect_encoder_forward.3} parent=11 // pred_fallthru
          _
        // Predicated region
        $region17: #{swin_connect_encoder_forward.3} parent=11 // pred_check
          %p342 = pneg %p88
        $region18: #{swin_connect_encoder_forward.3} parent=11 // pred_check_branch
          %344 = sbr.rel (%p342) target = $region20
        $region19: #{swin_connect_encoder_forward.3} parent=11 // pred_region
          _
        $region20: #{swin_connect_encoder_forward.3} parent=11 // pred_fallthru
          _
        // Predicated region
        $region21: #{swin_connect_encoder_forward.3} parent=11 // pred_check
          %p345 = pneg %p109
        $region22: #{swin_connect_encoder_forward.3} parent=11 // pred_check_branch
          %347 = sbr.rel (%p345) target = $region24
        $region23: #{swin_connect_encoder_forward.3} parent=11 // pred_region
          _
        $region24: #{swin_connect_encoder_forward.3} parent=11 // pred_fallthru
          _
        // Predicated region
        $region25: #{swin_connect_encoder_forward.3} parent=11 // pred_check
          %p348 = pneg %p130
        $region26: #{swin_connect_encoder_forward.3} parent=11 // pred_check_branch
          %350 = sbr.rel (%p348) target = $region28
        $region27: #{swin_connect_encoder_forward.3} parent=11 // pred_region
          _
        $region28: #{swin_connect_encoder_forward.3} parent=11 // pred_fallthru
          _
        // Predicated region
        $region29: #{swin_connect_encoder_forward.3} parent=11 // pred_check
          %p351 = pneg %p151
        $region30: #{swin_connect_encoder_forward.3} parent=11 // pred_check_branch
          %353 = sbr.rel (%p351) target = $region32
        $region31: #{swin_connect_encoder_forward.3} parent=11 // pred_region
          %355 = vsyncadd [#allocation3], 0
          %s357 = sshll.u32 %s5, 4
          %s358 = int_to_ptr.vmem [resolvable:$true] %s357
          %360 = dma.vmem_to_smem %s358, 16, [#allocation2], [#allocation3]
        $region32: #{swin_connect_encoder_forward.3} parent=11 // pred_fallthru
          _
        // Predicated region
        $region33: #{swin_connect_encoder_forward.3} parent=11 // pred_check
          %p361 = pneg %p172
        $region34: #{swin_connect_encoder_forward.3} parent=11 // pred_check_branch
          %363 = sbr.rel (%p361) target = $region36
        $region35: #{swin_connect_encoder_forward.3} parent=11 // pred_region
          _
        $region36: #{swin_connect_encoder_forward.3} parent=11 // pred_fallthru
          _
        // Predicated region
        $region37: #{swin_connect_encoder_forward.3} parent=11 // pred_check
          %p364 = pneg %p193
        $region38: #{swin_connect_encoder_forward.3} parent=11 // pred_check_branch
          %366 = sbr.rel (%p364) target = $region40
        $region39: #{swin_connect_encoder_forward.3} parent=11 // pred_region
          _
        $region40: #{swin_connect_encoder_forward.3} parent=11 // pred_fallthru
          _
        // Predicated region
        $region41: #{swin_connect_encoder_forward.3} parent=11 // pred_check
          %p367 = pneg %p214
        $region42: #{swin_connect_encoder_forward.3} parent=11 // pred_check_branch
          %369 = sbr.rel (%p367) target = $region44
        $region43: #{swin_connect_encoder_forward.3} parent=11 // pred_region
          _
        $region44: #{swin_connect_encoder_forward.3} parent=11 // pred_fallthru
          _
        // Predicated region
        $region45: #{swin_connect_encoder_forward.3} parent=11 // pred_check
          %p370 = pneg %p235
        $region46: #{swin_connect_encoder_forward.3} parent=11 // pred_check_branch
          %372 = sbr.rel (%p370) target = $region48
        $region47: #{swin_connect_encoder_forward.3} parent=11 // pred_region
          _
        $region48: #{swin_connect_encoder_forward.3} parent=11 // pred_fallthru
          _
        // Predicated region
        $region49: #{swin_connect_encoder_forward.3} parent=11 // pred_check
          %p373 = pneg %p256
        $region50: #{swin_connect_encoder_forward.3} parent=11 // pred_check_branch
          %375 = sbr.rel (%p373) target = $region52
        $region51: #{swin_connect_encoder_forward.3} parent=11 // pred_region
          _
        $region52: #{swin_connect_encoder_forward.3} parent=11 // pred_fallthru
          _
        // Predicated region
        $region53: #{swin_connect_encoder_forward.3} parent=11 // pred_check
          %p376 = pneg %p277
        $region54: #{swin_connect_encoder_forward.3} parent=11 // pred_check_branch
          %378 = sbr.rel (%p376) target = $region56
        $region55: #{swin_connect_encoder_forward.3} parent=11 // pred_region
          _
        $region56: #{swin_connect_encoder_forward.3} parent=11 // pred_fallthru
          _
        // Predicated region
        $region57: #{swin_connect_encoder_forward.3} parent=11 // pred_check
          %p379 = pneg %p298
        $region58: #{swin_connect_encoder_forward.3} parent=11 // pred_check_branch
          %381 = sbr.rel (%p379) target = $region60
        $region59: #{swin_connect_encoder_forward.3} parent=11 // pred_region
          _
        $region60: #{swin_connect_encoder_forward.3} parent=11 // pred_fallthru
          _
      $region12: #{swin_connect_encoder_forward.3} parent=5 // pred_fallthru
        _
      %p382 = scmp.lt.s32.totalorder %s20, 2
      // Predicated region
      $region61: #{swin_connect_encoder_forward.3} parent=5 // pred_check
        %p383 = pneg %p382
      $region62: #{swin_connect_encoder_forward.3} parent=5 // pred_check_branch
        %385 = sbr.rel (%p383) target = $region64
      $region63: #{swin_connect_encoder_forward.3} parent=5 // pred_region
        // Predicated region
        $region65: #{swin_connect_encoder_forward.3} parent=63 // pred_check
          %p386 = pneg %p40
        $region66: #{swin_connect_encoder_forward.3} parent=63 // pred_check_branch
          %388 = sbr.rel (%p386) target = $region68
        $region67: #{swin_connect_encoder_forward.3} parent=63 // pred_region
          %p389 = scmp.lt.s32.totalorder %s20, 1
          %s390 = scalar_select %p389, %s20, 1
          %s391 = smul.addr %s390, 8
          %s392 = smul.addr %s391, 8
          %s393 = scalar_lea.vmem %s0, %s392
        $region68: #{swin_connect_encoder_forward.3} parent=63 // pred_fallthru
          _
      $region64: #{swin_connect_encoder_forward.3} parent=5 // pred_fallthru
        _
      %p394 = scmp.le.s32.totalorder 1, %s20
      %p395 = scmp.lt.s32.totalorder %s20, 3
      %p396 = pnand %p394, %p395
      %p397 = pneg %p396
      // Predicated region
      $region69: #{swin_connect_encoder_forward.3} parent=5 // pred_check
        _
      $region70: #{swin_connect_encoder_forward.3} parent=5 // pred_check_branch
        %399 = sbr.rel (%p396) target = $region72
      $region71: #{swin_connect_encoder_forward.3} parent=5 // pred_region
        %s400 = ssub.s32 %s20, 1
        // Predicated region
        $region73: #{swin_connect_encoder_forward.3} parent=71 // pred_check
          %p401 = pneg %p151
        $region74: #{swin_connect_encoder_forward.3} parent=71 // pred_check_branch
          %403 = sbr.rel (%p401) target = $region76
        $region75: #{swin_connect_encoder_forward.3} parent=71 // pred_region
          %405 = dma.done [#allocation3], 16
        $region76: #{swin_connect_encoder_forward.3} parent=71 // pred_fallthru
          _
        %406 = sfence
        %p407 = scmp.lt.s32.totalorder %s25, 1
        %s408 = scalar_select %p407, %s25, 1
        %s409 = smul.addr %s408, 8
        %s410 = smul.addr %s409, 8
        %s411 = scalar_lea.vmem %s0, %s410
        %p412 = pneg %p46
        %p413 = pneg %p43
        %p414 = pneg %p67
        %p415 = pneg %p64
        %p416 = pneg %p88
        %p417 = pneg %p85
        %p418 = pneg %p109
        %p419 = pneg %p106
        %p420 = pneg %p130
        %p421 = pneg %p127
        %p422 = pneg %p151
        %p423 = pneg %p148
        %p424 = pneg %p172
        %p425 = pneg %p169
        %p426 = pneg %p193
        %p427 = pneg %p190
        %p428 = pneg %p214
        %p429 = pneg %p211
        %p430 = pneg %p235
        %p431 = pneg %p232
        %p432 = pneg %p256
        %p433 = pneg %p253
        %p434 = pneg %p277
        %p435 = pneg %p274
        %p436 = pneg %p298
        %p437 = pneg %p295
        %p438 = pneg %p324
        %p439 = pneg %p321
        %p440 = scmp.lt.s32.totalorder %s25, 1
        %s441 = scalar_select %p440, %s25, 1
        %s442 = smul.addr %s441, 8
        %s443 = smul.addr %s442, 8
        %s444 = scalar_lea.vmem %s13, %s443
        %p445 = scmp.lt.s32.totalorder %s25, 1
        %s446 = scalar_select %p445, %s25, 1
        %s447 = smul.addr %s446, 8
        %s448 = smul.addr %s447, 8
        %s449 = scalar_lea.vmem %s0, %s448
        %p450 = scmp.lt.s32.totalorder %s25, 1
        %s451 = scalar_select %p450, %s25, 1
        %s452 = smul.addr %s451, 8
        %s453 = smul.addr %s452, 8
        %s454 = scalar_lea.vmem %s13, %s453
        %v456 = vld [vmem:[%s449] sm:$0xff]
        %v457 = vld [vmem:[%s449 + $0x8] sm:$0xff]
        %v458 = vld [vmem:[%s449 + $0x10] sm:$0xff]
        %v459 = vld [vmem:[%s449 + $0x18] sm:$0xff]
        %v460 = vld [vmem:[%s449 + $0x20] sm:$0xff]
        %v461 = vld [vmem:[%s449 + $0x28] sm:$0xff]
        %v462 = vld [vmem:[%s449 + $0x30] sm:$0xff]
        %v463 = vld [vmem:[%s449 + $0x38] sm:$0xff]
        %v464 = vpack.c.bf16 %v457, %v456
        %v465 = vpack.c.bf16 %v459, %v458
        %v466 = vpack.c.bf16 %v461, %v460
        %v467 = vpack.c.bf16 %v463, %v462
        %v468 = vld [vmem:[%s7] sm:$0x1]
        %v469 = vld [vmem:[%s8] sm:$0x1]
        %v470 = vld [vmem:[%s1] sm:$0xf]
        %v471 = vld [vmem:[%s1 + $0x4] sm:$0xf]
        %v472 = vld [vmem:[%s1 + $0x8] sm:$0xf]
        %v473 = vld [vmem:[%s1 + $0xc] sm:$0xf]
        %v474 = vld [vmem:[%s2] sm:$0x1]
        %v476 = vperm.slane %v474, 0
        %v482 = vunpack.c.l.b16 %v470
        %v483 = vunpack.c.l.b16 %v471
        %v484 = vunpack.c.l.b16 %v472
        %v485 = vunpack.c.l.b16 %v473
        %v486 = vpack.c.b16 %v483, %v482
        %v487 = vpack.c.b16 %v485, %v484
        %vm490 = vcmask 261120
        %v492 = vsel %vm490, %v464, 0
        %v495 = vsel %vm490, %v465, 0
        %v498 = vsel %vm490, %v466, 0
        %v501 = vsel %vm490, %v467, 0
        %503 = vmatpush.bf16.msra.mxu0 0
        %504 = vmatpush.bf16.msra.mxu0 0
        %505 = vmatpush.bf16.msra.mxu0 0
        %506 = vmatpush.bf16.msra.mxu0 0
        %507 = vmatpush.bf16.msra.mxu0 0
        %508 = vmatpush.bf16.msra.mxu0 0
        %509 = vmatpush.bf16.msra.mxu0 %v487
        %510 = vmatpush.bf16.msra.mxu0 %v486
        %511 = vmatmul.bf16.gmra.mxu0 %v492
        %v512 = vpop.f32.mrf.mxu0
        %v513 = vadd.f32 %v476, %v512
        %v514 = vpop.f32.mrf.mxu0
        %v515 = vadd.f32 %v476, %v514
        %516 = vmatmul.bf16.gmra.mxu0 %v495
        %v517 = vpop.f32.mrf.mxu0
        %v518 = vadd.f32 %v476, %v517
        %v519 = vpop.f32.mrf.mxu0
        %v520 = vadd.f32 %v476, %v519
        %521 = vmatmul.bf16.gmra.mxu0 %v498
        %v522 = vpop.f32.mrf.mxu0
        %v523 = vadd.f32 %v476, %v522
        %v524 = vpop.f32.mrf.mxu0
        %v525 = vadd.f32 %v476, %v524
        %526 = vmatmul.bf16.gmra.mxu0 %v501
        %v527 = vpop.f32.mrf.mxu0
        %v528 = vadd.f32 %v476, %v527
        %v529 = vpop.f32.mrf.mxu0
        %v530 = vadd.f32 %v476, %v529
        %531 = vdwg.mxu0
        %v532 = vmul.f32 %v513, %v513
        %v533 = vmul.f32 %v515, %v515
        %v534 = vmul.f32 %v518, %v518
        %v535 = vmul.f32 %v520, %v520
        %v536 = vmul.f32 %v523, %v523
        %v537 = vmul.f32 %v525, %v525
        %v538 = vmul.f32 %v528, %v528
        %v539 = vmul.f32 %v530, %v530
        %vm540 = vcmask 64512
        %v541 = vsel %vm540, %v532, 0.0
        %542 = vadd.xlane.f32.xlu0 %v541
        %v543 = vpop.xlane.xlu0 %542
        %v544 = vsel %vm540, %v533, 0.0
        %545 = vadd.xlane.f32.xlu0 %v544
        %v546 = vpop.xlane.xlu0 %545
        %v547 = vsel %vm540, %v534, 0.0
        %548 = vadd.xlane.f32.xlu0 %v547
        %v549 = vpop.xlane.xlu0 %548
        %v550 = vsel %vm540, %v535, 0.0
        %551 = vadd.xlane.f32.xlu0 %v550
        %v552 = vpop.xlane.xlu0 %551
        %v553 = vsel %vm540, %v536, 0.0
        %554 = vadd.xlane.f32.xlu0 %v553
        %v555 = vpop.xlane.xlu0 %554
        %v556 = vsel %vm540, %v537, 0.0
        %557 = vadd.xlane.f32.xlu0 %v556
        %v558 = vpop.xlane.xlu0 %557
        %v559 = vsel %vm540, %v538, 0.0
        %560 = vadd.xlane.f32.xlu0 %v559
        %v561 = vpop.xlane.xlu0 %560
        %v562 = vsel %vm540, %v539, 0.0
        %563 = vadd.xlane.f32.xlu0 %v562
        %v564 = vpop.xlane.xlu0 %563
        %v565 = vadd.f32 %v543, 1e-12
        %v566 = vadd.f32 %v546, 1e-12
        %v567 = vadd.f32 %v549, 1e-12
        %v568 = vadd.f32 %v552, 1e-12
        %v569 = vadd.f32 %v555, 1e-12
        %v570 = vadd.f32 %v558, 1e-12
        %v571 = vadd.f32 %v561, 1e-12
        %v572 = vadd.f32 %v564, 1e-12
        %v573 = vrsqrt.pop %v565
        %v574 = vmul.f32 %v573, %v565
        %v575 = vmul.f32 %v574, %v573
        %v576 = vmul.f32 0.5, %v575
        %v577 = vsub.f32 1.5, %v576
        %v578 = vmul.f32 %v573, %v577
        %vm579 = vweird.f32 %v565
        %vm580 = vweird.f32 %v573
        %vm581 = vmor %vm579, %vm580
        %v582 = vsel %vm581, %v573, %v578
        %v583 = vrsqrt.pop %v566
        %v584 = vmul.f32 %v583, %v566
        %v585 = vmul.f32 %v584, %v583
        %v586 = vmul.f32 0.5, %v585
        %v587 = vsub.f32 1.5, %v586
        %v588 = vmul.f32 %v583, %v587
        %vm589 = vweird.f32 %v566
        %vm590 = vweird.f32 %v583
        %vm591 = vmor %vm589, %vm590
        %v592 = vsel %vm591, %v583, %v588
        %v593 = vrsqrt.pop %v567
        %v594 = vmul.f32 %v593, %v567
        %v595 = vmul.f32 %v594, %v593
        %v596 = vmul.f32 0.5, %v595
        %v597 = vsub.f32 1.5, %v596
        %v598 = vmul.f32 %v593, %v597
        %vm599 = vweird.f32 %v567
        %vm600 = vweird.f32 %v593
        %vm601 = vmor %vm599, %vm600
        %v602 = vsel %vm601, %v593, %v598
        %v603 = vrsqrt.pop %v568
        %v604 = vmul.f32 %v603, %v568
        %v605 = vmul.f32 %v604, %v603
        %v606 = vmul.f32 0.5, %v605
        %v607 = vsub.f32 1.5, %v606
        %v608 = vmul.f32 %v603, %v607
        %vm609 = vweird.f32 %v568
        %vm610 = vweird.f32 %v603
        %vm611 = vmor %vm609, %vm610
        %v612 = vsel %vm611, %v603, %v608
        %v613 = vrsqrt.pop %v569
        %v614 = vmul.f32 %v613, %v569
        %v615 = vmul.f32 %v614, %v613
        %v616 = vmul.f32 0.5, %v615
        %v617 = vsub.f32 1.5, %v616
        %v618 = vmul.f32 %v613, %v617
        %vm619 = vweird.f32 %v569
        %vm620 = vweird.f32 %v613
        %vm621 = vmor %vm619, %vm620
        %v622 = vsel %vm621, %v613, %v618
        %v623 = vrsqrt.pop %v570
        %v624 = vmul.f32 %v623, %v570
        %v625 = vmul.f32 %v624, %v623
        %v626 = vmul.f32 0.5, %v625
        %v627 = vsub.f32 1.5, %v626
        %v628 = vmul.f32 %v623, %v627
        %vm629 = vweird.f32 %v570
        %vm630 = vweird.f32 %v623
        %vm631 = vmor %vm629, %vm630
        %v632 = vsel %vm631, %v623, %v628
        %v633 = vrsqrt.pop %v571
        %v634 = vmul.f32 %v633, %v571
        %v635 = vmul.f32 %v634, %v633
        %v636 = vmul.f32 0.5, %v635
        %v637 = vsub.f32 1.5, %v636
        %v638 = vmul.f32 %v633, %v637
        %vm639 = vweird.f32 %v571
        %vm640 = vweird.f32 %v633
        %vm641 = vmor %vm639, %vm640
        %v642 = vsel %vm641, %v633, %v638
        %v643 = vrsqrt.pop %v572
        %v644 = vmul.f32 %v643, %v572
        %v645 = vmul.f32 %v644, %v643
        %v646 = vmul.f32 0.5, %v645
        %v647 = vsub.f32 1.5, %v646
        %v648 = vmul.f32 %v643, %v647
        %vm649 = vweird.f32 %v572
        %vm650 = vweird.f32 %v643
        %vm651 = vmor %vm649, %vm650
        %v652 = vsel %vm651, %v643, %v648
        %v653 = vmul.f32 %v513, %v582
        %v654 = vmul.f32 %v515, %v592
        %v655 = vmul.f32 %v518, %v602
        %v656 = vmul.f32 %v520, %v612
        %v657 = vmul.f32 %v523, %v622
        %v658 = vmul.f32 %v525, %v632
        %v659 = vmul.f32 %v528, %v642
        %v660 = vmul.f32 %v530, %v652
        %669 = vrot.lane.b32.xlu0 %v532, 96
        %v670 = vpop.permute.xlu0 %669
        %671 = vrot.lane.b32.xlu0 %v533, 96
        %v672 = vpop.permute.xlu0 %671
        %673 = vrot.lane.b32.xlu0 %v534, 96
        %v674 = vpop.permute.xlu0 %673
        %675 = vrot.lane.b32.xlu0 %v535, 96
        %v676 = vpop.permute.xlu0 %675
        %677 = vrot.lane.b32.xlu0 %v536, 96
        %v678 = vpop.permute.xlu0 %677
        %679 = vrot.lane.b32.xlu0 %v537, 96
        %v680 = vpop.permute.xlu0 %679
        %681 = vrot.lane.b32.xlu0 %v538, 96
        %v682 = vpop.permute.xlu0 %681
        %683 = vrot.lane.b32.xlu0 %v539, 96
        %v684 = vpop.permute.xlu0 %683
        %v693 = vsel %vm540, %v670, 0.0
        %694 = vadd.xlane.f32.xlu0 %v693
        %v695 = vpop.xlane.xlu0 %694
        %v696 = vsel %vm540, %v672, 0.0
        %697 = vadd.xlane.f32.xlu0 %v696
        %v698 = vpop.xlane.xlu0 %697
        %v699 = vsel %vm540, %v674, 0.0
        %700 = vadd.xlane.f32.xlu0 %v699
        %v701 = vpop.xlane.xlu0 %700
        %v702 = vsel %vm540, %v676, 0.0
        %703 = vadd.xlane.f32.xlu0 %v702
        %v704 = vpop.xlane.xlu0 %703
        %v705 = vsel %vm540, %v678, 0.0
        %706 = vadd.xlane.f32.xlu0 %v705
        %v707 = vpop.xlane.xlu0 %706
        %v708 = vsel %vm540, %v680, 0.0
        %709 = vadd.xlane.f32.xlu0 %v708
        %v710 = vpop.xlane.xlu0 %709
        %v711 = vsel %vm540, %v682, 0.0
        %712 = vadd.xlane.f32.xlu0 %v711
        %v713 = vpop.xlane.xlu0 %712
        %v714 = vsel %vm540, %v684, 0.0
        %715 = vadd.xlane.f32.xlu0 %v714
        %v716 = vpop.xlane.xlu0 %715
        %v717 = vadd.f32 %v695, 1e-12
        %v718 = vadd.f32 %v698, 1e-12
        %v719 = vadd.f32 %v701, 1e-12
        %v720 = vadd.f32 %v704, 1e-12
        %v721 = vadd.f32 %v707, 1e-12
        %v722 = vadd.f32 %v710, 1e-12
        %v723 = vadd.f32 %v713, 1e-12
        %v724 = vadd.f32 %v716, 1e-12
        %v725 = vrsqrt.pop %v717
        %v726 = vmul.f32 %v725, %v717
        %v727 = vmul.f32 %v726, %v725
        %v728 = vmul.f32 0.5, %v727
        %v729 = vsub.f32 1.5, %v728
        %v730 = vmul.f32 %v725, %v729
        %vm731 = vweird.f32 %v717
        %vm732 = vweird.f32 %v725
        %vm733 = vmor %vm731, %vm732
        %v734 = vsel %vm733, %v725, %v730
        %v735 = vrsqrt.pop %v718
        %v736 = vmul.f32 %v735, %v718
        %v737 = vmul.f32 %v736, %v735
        %v738 = vmul.f32 0.5, %v737
        %v739 = vsub.f32 1.5, %v738
        %v740 = vmul.f32 %v735, %v739
        %vm741 = vweird.f32 %v718
        %vm742 = vweird.f32 %v735
        %vm743 = vmor %vm741, %vm742
        %v744 = vsel %vm743, %v735, %v740
        %v745 = vrsqrt.pop %v719
        %v746 = vmul.f32 %v745, %v719
        %v747 = vmul.f32 %v746, %v745
        %v748 = vmul.f32 0.5, %v747
        %v749 = vsub.f32 1.5, %v748
        %v750 = vmul.f32 %v745, %v749
        %vm751 = vweird.f32 %v719
        %vm752 = vweird.f32 %v745
        %vm753 = vmor %vm751, %vm752
        %v754 = vsel %vm753, %v745, %v750
        %v755 = vrsqrt.pop %v720
        %v756 = vmul.f32 %v755, %v720
        %v757 = vmul.f32 %v756, %v755
        %v758 = vmul.f32 0.5, %v757
        %v759 = vsub.f32 1.5, %v758
        %v760 = vmul.f32 %v755, %v759
        %vm761 = vweird.f32 %v720
        %vm762 = vweird.f32 %v755
        %vm763 = vmor %vm761, %vm762
        %v764 = vsel %vm763, %v755, %v760
        %v765 = vrsqrt.pop %v721
        %v766 = vmul.f32 %v765, %v721
        %v767 = vmul.f32 %v766, %v765
        %v768 = vmul.f32 0.5, %v767
        %v769 = vsub.f32 1.5, %v768
        %v770 = vmul.f32 %v765, %v769
        %vm771 = vweird.f32 %v721
        %vm772 = vweird.f32 %v765
        %vm773 = vmor %vm771, %vm772
        %v774 = vsel %vm773, %v765, %v770
        %v775 = vrsqrt.pop %v722
        %v776 = vmul.f32 %v775, %v722
        %v777 = vmul.f32 %v776, %v775
        %v778 = vmul.f32 0.5, %v777
        %v779 = vsub.f32 1.5, %v778
        %v780 = vmul.f32 %v775, %v779
        %vm781 = vweird.f32 %v722
        %vm782 = vweird.f32 %v775
        %vm783 = vmor %vm781, %vm782
        %v784 = vsel %vm783, %v775, %v780
        %v785 = vrsqrt.pop %v723
        %v786 = vmul.f32 %v785, %v723
        %v787 = vmul.f32 %v786, %v785
        %v788 = vmul.f32 0.5, %v787
        %v789 = vsub.f32 1.5, %v788
        %v790 = vmul.f32 %v785, %v789
        %vm791 = vweird.f32 %v723
        %vm792 = vweird.f32 %v785
        %vm793 = vmor %vm791, %vm792
        %v794 = vsel %vm793, %v785, %v790
        %v795 = vrsqrt.pop %v724
        %v796 = vmul.f32 %v795, %v724
        %v797 = vmul.f32 %v796, %v795
        %v798 = vmul.f32 0.5, %v797
        %v799 = vsub.f32 1.5, %v798
        %v800 = vmul.f32 %v795, %v799
        %vm801 = vweird.f32 %v724
        %vm802 = vweird.f32 %v795
        %vm803 = vmor %vm801, %vm802
        %v804 = vsel %vm803, %v795, %v800
        %v805 = vmul.f32 %v513, %v734
        %v806 = vmul.f32 %v515, %v744
        %v807 = vmul.f32 %v518, %v754
        %v808 = vmul.f32 %v520, %v764
        %v809 = vmul.f32 %v523, %v774
        %v810 = vmul.f32 %v525, %v784
        %v811 = vmul.f32 %v528, %v794
        %v812 = vmul.f32 %v530, %v804
        %s813 = sld [smem:[#allocation2]]
        %v814 = vstv %s813
        %v815 = vmul.f32 %v653, %v814
        %v816 = vmul.f32 %v654, %v814
        %v817 = vmul.f32 %v655, %v814
        %v818 = vmul.f32 %v656, %v814
        %v819 = vmul.f32 %v657, %v814
        %v820 = vmul.f32 %v658, %v814
        %v821 = vmul.f32 %v659, %v814
        %v822 = vmul.f32 %v660, %v814
        %v823 = vld [vmem:[%s6] sm:$0xff]
        %v824 = vld [vmem:[%s6 + $0x8] sm:$0xff]
        %v825 = vld [vmem:[%s6 + $0x10] sm:$0xff]
        %v826 = vld [vmem:[%s6 + $0x18] sm:$0xff]
        %v827 = vld [vmem:[%s6 + $0x20] sm:$0xff]
        %v828 = vld [vmem:[%s6 + $0x28] sm:$0xff]
        %v829 = vld [vmem:[%s6 + $0x30] sm:$0xff]
        %v830 = vld [vmem:[%s6 + $0x38] sm:$0xff]
        %833 = vrot.lane.b32.xlu0 %v805, 96
        %v834 = vpop.permute.xlu0 %833
        %835 = vrot.lane.b32.xlu0 %v806, 96
        %v836 = vpop.permute.xlu0 %835
        %v838 = vsel %vm540, %v815, 0
        %v841 = vsel %vm540, %v816, 0
        %v843 = vsel %vm540, %v834, 0
        %v845 = vsel %vm540, %v836, 0
        %847 = vmatpush.xpose.msra.mxu0 0.0
        %848 = vmatpush.xpose.msra.mxu0 0.0
        %849 = vmatpush.xpose.msra.mxu0 0.0
        %850 = vmatpush.xpose.msra.mxu0 0.0
        %851 = vmatpush.xpose.msra.mxu0 0.0
        %852 = vmatpush.xpose.msra.mxu0 0.0
        %853 = vmatpush.xpose.msra.mxu0 0.0
        %854 = vmatpush.xpose.msra.mxu0 0.0
        %855 = vmatpush.xpose.msra.mxu0 0.0
        %856 = vmatpush.xpose.msra.mxu0 0.0
        %857 = vmatpush.xpose.msra.mxu0 0.0
        %858 = vmatpush.xpose.msra.mxu0 0.0
        %859 = vmatpush.xpose.msra.mxu0 0.0
        %860 = vmatpush.xpose.msra.mxu0 0.0
        %861 = vmatpush.xpose.msra.mxu0 %v845
        %862 = vmatpush.xpose.msra.mxu0 %v843
        %863 = vmatmul.f32.gmra.mxu0 %v838
        %v864 = vpop.f32.mrf.mxu0
        %v865 = vadd.f32 %v823, %v864
        %866 = vmatmul.f32.gmra.mxu0 %v841
        %v867 = vpop.f32.mrf.mxu0
        %v868 = vadd.f32 %v824, %v867
        %869 = vdwg.mxu0
        %872 = vrot.lane.b32.xlu0 %v807, 96
        %v873 = vpop.permute.xlu0 %872
        %874 = vrot.lane.b32.xlu0 %v808, 96
        %v875 = vpop.permute.xlu0 %874
        %v877 = vsel %vm540, %v817, 0
        %v880 = vsel %vm540, %v818, 0
        %v882 = vsel %vm540, %v873, 0
        %v884 = vsel %vm540, %v875, 0
        %886 = vmatpush.xpose.msra.mxu0 0.0
        %887 = vmatpush.xpose.msra.mxu0 0.0
        %888 = vmatpush.xpose.msra.mxu0 0.0
        %889 = vmatpush.xpose.msra.mxu0 0.0
        %890 = vmatpush.xpose.msra.mxu0 0.0
        %891 = vmatpush.xpose.msra.mxu0 0.0
        %892 = vmatpush.xpose.msra.mxu0 0.0
        %893 = vmatpush.xpose.msra.mxu0 0.0
        %894 = vmatpush.xpose.msra.mxu0 0.0
        %895 = vmatpush.xpose.msra.mxu0 0.0
        %896 = vmatpush.xpose.msra.mxu0 0.0
        %897 = vmatpush.xpose.msra.mxu0 0.0
        %898 = vmatpush.xpose.msra.mxu0 0.0
        %899 = vmatpush.xpose.msra.mxu0 0.0
        %900 = vmatpush.xpose.msra.mxu0 %v884
        %901 = vmatpush.xpose.msra.mxu0 %v882
        %902 = vmatmul.f32.gmra.mxu0 %v877
        %v903 = vpop.f32.mrf.mxu0
        %v904 = vadd.f32 %v825, %v903
        %905 = vmatmul.f32.gmra.mxu0 %v880
        %v906 = vpop.f32.mrf.mxu0
        %v907 = vadd.f32 %v826, %v906
        %908 = vdwg.mxu0
        %911 = vrot.lane.b32.xlu0 %v809, 96
        %v912 = vpop.permute.xlu0 %911
        %913 = vrot.lane.b32.xlu0 %v810, 96
        %v914 = vpop.permute.xlu0 %913
        %v916 = vsel %vm540, %v819, 0
        %v919 = vsel %vm540, %v820, 0
        %v921 = vsel %vm540, %v912, 0
        %v923 = vsel %vm540, %v914, 0
        %925 = vmatpush.xpose.msra.mxu0 0.0
        %926 = vmatpush.xpose.msra.mxu0 0.0
        %927 = vmatpush.xpose.msra.mxu0 0.0
        %928 = vmatpush.xpose.msra.mxu0 0.0
        %929 = vmatpush.xpose.msra.mxu0 0.0
        %930 = vmatpush.xpose.msra.mxu0 0.0
        %931 = vmatpush.xpose.msra.mxu0 0.0
        %932 = vmatpush.xpose.msra.mxu0 0.0
        %933 = vmatpush.xpose.msra.mxu0 0.0
        %934 = vmatpush.xpose.msra.mxu0 0.0
        %935 = vmatpush.xpose.msra.mxu0 0.0
        %936 = vmatpush.xpose.msra.mxu0 0.0
        %937 = vmatpush.xpose.msra.mxu0 0.0
        %938 = vmatpush.xpose.msra.mxu0 0.0
        %939 = vmatpush.xpose.msra.mxu0 %v923
        %940 = vmatpush.xpose.msra.mxu0 %v921
        %941 = vmatmul.f32.gmra.mxu0 %v916
        %v942 = vpop.f32.mrf.mxu0
        %v943 = vadd.f32 %v827, %v942
        %944 = vmatmul.f32.gmra.mxu0 %v919
        %v945 = vpop.f32.mrf.mxu0
        %v946 = vadd.f32 %v828, %v945
        %947 = vdwg.mxu0
        %950 = vrot.lane.b32.xlu0 %v811, 96
        %v951 = vpop.permute.xlu0 %950
        %952 = vrot.lane.b32.xlu0 %v812, 96
        %v953 = vpop.permute.xlu0 %952
        %v955 = vsel %vm540, %v821, 0
        %v958 = vsel %vm540, %v822, 0
        %v960 = vsel %vm540, %v951, 0
        %v962 = vsel %vm540, %v953, 0
        %964 = vmatpush.xpose.msra.mxu0 0.0
        %965 = vmatpush.xpose.msra.mxu0 0.0
        %966 = vmatpush.xpose.msra.mxu0 0.0
        %967 = vmatpush.xpose.msra.mxu0 0.0
        %968 = vmatpush.xpose.msra.mxu0 0.0
        %969 = vmatpush.xpose.msra.mxu0 0.0
        %970 = vmatpush.xpose.msra.mxu0 0.0
        %971 = vmatpush.xpose.msra.mxu0 0.0
        %972 = vmatpush.xpose.msra.mxu0 0.0
        %973 = vmatpush.xpose.msra.mxu0 0.0
        %974 = vmatpush.xpose.msra.mxu0 0.0
        %975 = vmatpush.xpose.msra.mxu0 0.0
        %976 = vmatpush.xpose.msra.mxu0 0.0
        %977 = vmatpush.xpose.msra.mxu0 0.0
        %978 = vmatpush.xpose.msra.mxu0 %v962
        %979 = vmatpush.xpose.msra.mxu0 %v960
        %980 = vmatmul.f32.gmra.mxu0 %v955
        %v981 = vpop.f32.mrf.mxu0
        %v982 = vadd.f32 %v829, %v981
        %983 = vmatmul.f32.gmra.mxu0 %v958
        %v984 = vpop.f32.mrf.mxu0
        %v985 = vadd.f32 %v830, %v984
        %986 = vdwg.mxu0
        %vm987 = vcmask 130048
        %v988 = vsel %vm987, %v865, -inf
        %989 = vmax.xlane.f32.xlu0 %v988
        %v990 = vpop.xlane.xlu0 %989
        %v991 = vsel %vm987, %v868, -inf
        %992 = vmax.xlane.f32.xlu0 %v991
        %v993 = vpop.xlane.xlu0 %992
        %v994 = vsel %vm987, %v904, -inf
        %995 = vmax.xlane.f32.xlu0 %v994
        %v996 = vpop.xlane.xlu0 %995
        %v997 = vsel %vm987, %v907, -inf
        %998 = vmax.xlane.f32.xlu0 %v997
        %v999 = vpop.xlane.xlu0 %998
        %v1000 = vsel %vm987, %v943, -inf
        %1001 = vmax.xlane.f32.xlu0 %v1000
        %v1002 = vpop.xlane.xlu0 %1001
        %v1003 = vsel %vm987, %v946, -inf
        %1004 = vmax.xlane.f32.xlu0 %v1003
        %v1005 = vpop.xlane.xlu0 %1004
        %v1006 = vsel %vm987, %v982, -inf
        %1007 = vmax.xlane.f32.xlu0 %v1006
        %v1008 = vpop.xlane.xlu0 %1007
        %v1009 = vsel %vm987, %v985, -inf
        %1010 = vmax.xlane.f32.xlu0 %v1009
        %v1011 = vpop.xlane.xlu0 %1010
        %v1012 = vsub.f32 %v865, %v990
        %v1013 = vsub.f32 %v868, %v993
        %v1014 = vsub.f32 %v904, %v996
        %v1015 = vsub.f32 %v907, %v999
        %v1016 = vsub.f32 %v943, %v1002
        %v1017 = vsub.f32 %v946, %v1005
        %v1018 = vsub.f32 %v982, %v1008
        %v1019 = vsub.f32 %v985, %v1011
        %v1020 = vmul.f32 %v1012, 1.442695
        %v1021 = vpow.pop %v1020
        %v1022 = vmul.f32 %v1013, 1.442695
        %v1023 = vpow.pop %v1022
        %v1024 = vmul.f32 %v1014, 1.442695
        %v1025 = vpow.pop %v1024
        %v1026 = vmul.f32 %v1015, 1.442695
        %v1027 = vpow.pop %v1026
        %v1028 = vmul.f32 %v1016, 1.442695
        %v1029 = vpow.pop %v1028
        %v1030 = vmul.f32 %v1017, 1.442695
        %v1031 = vpow.pop %v1030
        %v1032 = vmul.f32 %v1018, 1.442695
        %v1033 = vpow.pop %v1032
        %v1034 = vmul.f32 %v1019, 1.442695
        %v1035 = vpow.pop %v1034
        %v1036 = vsel %vm987, %v1021, 0.0
        %1037 = vadd.xlane.f32.xlu0 %v1036
        %v1038 = vpop.xlane.xlu0 %1037
        %v1039 = vsel %vm987, %v1023, 0.0
        %1040 = vadd.xlane.f32.xlu0 %v1039
        %v1041 = vpop.xlane.xlu0 %1040
        %v1042 = vsel %vm987, %v1025, 0.0
        %1043 = vadd.xlane.f32.xlu0 %v1042
        %v1044 = vpop.xlane.xlu0 %1043
        %v1045 = vsel %vm987, %v1027, 0.0
        %1046 = vadd.xlane.f32.xlu0 %v1045
        %v1047 = vpop.xlane.xlu0 %1046
        %v1048 = vsel %vm987, %v1029, 0.0
        %1049 = vadd.xlane.f32.xlu0 %v1048
        %v1050 = vpop.xlane.xlu0 %1049
        %v1051 = vsel %vm987, %v1031, 0.0
        %1052 = vadd.xlane.f32.xlu0 %v1051
        %v1053 = vpop.xlane.xlu0 %1052
        %v1054 = vsel %vm987, %v1033, 0.0
        %1055 = vadd.xlane.f32.xlu0 %v1054
        %v1056 = vpop.xlane.xlu0 %1055
        %v1057 = vsel %vm987, %v1035, 0.0
        %1058 = vadd.xlane.f32.xlu0 %v1057
        %v1059 = vpop.xlane.xlu0 %1058
        %v1060 = vrcp.pop %v1038
        %v1061 = vrcp.pop %v1041
        %v1062 = vrcp.pop %v1044
        %v1063 = vrcp.pop %v1047
        %v1064 = vrcp.pop %v1050
        %v1065 = vrcp.pop %v1053
        %v1066 = vrcp.pop %v1056
        %v1067 = vrcp.pop %v1059
        %v1068 = vpack.c.bf16 %v1021, %v1021
        %v1069 = vpack.c.bf16 %v1023, %v1023
        %v1070 = vpack.c.bf16 %v1025, %v1025
        %v1071 = vpack.c.bf16 %v1027, %v1027
        %v1072 = vpack.c.bf16 %v1029, %v1029
        %v1073 = vpack.c.bf16 %v1031, %v1031
        %v1074 = vpack.c.bf16 %v1033, %v1033
        %v1075 = vpack.c.bf16 %v1035, %v1035
        %v1076 = vpack.c.bf16 %v513, %v513
        %v1077 = vpack.c.bf16 %v515, %v515
        %v1078 = vpack.c.bf16 %v518, %v518
        %v1079 = vpack.c.bf16 %v520, %v520
        %v1080 = vpack.c.bf16 %v523, %v523
        %v1081 = vpack.c.bf16 %v525, %v525
        %v1082 = vpack.c.bf16 %v528, %v528
        %v1083 = vpack.c.bf16 %v530, %v530
        %v1086 = vunpack.c.l.b16 %v1068
        %v1087 = vunpack.c.l.b16 %v1069
        %v1088 = vpack.c.b16 %v1087, %v1086
        %v1091 = vunpack.c.l.b16 %v1076
        %v1092 = vunpack.c.l.b16 %v1077
        %v1093 = vpack.c.b16 %v1092, %v1091
        %1094 = vrot.lane.b32.xlu0 %v1093, 64
        %v1095 = vpop.permute.xlu0 %1094
        %v1098 = vsel %vm987, %v1088, 0
        %1100 = vmatpush.bf16.msra.mxu0 0
        %1101 = vmatpush.bf16.msra.mxu0 0
        %1102 = vmatpush.bf16.msra.mxu0 0
        %1103 = vmatpush.bf16.msra.mxu0 0
        %1104 = vmatpush.bf16.msra.mxu0 0
        %1105 = vmatpush.bf16.msra.mxu0 0
        %1106 = vmatpush.bf16.msra.mxu0 0
        %1107 = vmatpush.bf16.msra.mxu0 %v1095
        %1108 = vmatmul.bf16.gmra.mxu0 %v1098
        %v1109 = vpop.f32.mrf.mxu0
        %v1110 = vadd.f32 0.0, %v1109
        %v1111 = vpop.f32.mrf.mxu0
        %v1112 = vadd.f32 0.0, %v1111
        %1113 = vdwg.mxu0
        %v1116 = vunpack.c.l.b16 %v1070
        %v1117 = vunpack.c.l.b16 %v1071
        %v1118 = vpack.c.b16 %v1117, %v1116
        %v1121 = vunpack.c.l.b16 %v1078
        %v1122 = vunpack.c.l.b16 %v1079
        %v1123 = vpack.c.b16 %v1122, %v1121
        %1124 = vrot.lane.b32.xlu0 %v1123, 64
        %v1125 = vpop.permute.xlu0 %1124
        %v1128 = vsel %vm987, %v1118, 0
        %1130 = vmatpush.bf16.msra.mxu0 0
        %1131 = vmatpush.bf16.msra.mxu0 0
        %1132 = vmatpush.bf16.msra.mxu0 0
        %1133 = vmatpush.bf16.msra.mxu0 0
        %1134 = vmatpush.bf16.msra.mxu0 0
        %1135 = vmatpush.bf16.msra.mxu0 0
        %1136 = vmatpush.bf16.msra.mxu0 0
        %1137 = vmatpush.bf16.msra.mxu0 %v1125
        %1138 = vmatmul.bf16.gmra.mxu0 %v1128
        %v1139 = vpop.f32.mrf.mxu0
        %v1140 = vadd.f32 0.0, %v1139
        %v1141 = vpop.f32.mrf.mxu0
        %v1142 = vadd.f32 0.0, %v1141
        %1143 = vdwg.mxu0
        %v1146 = vunpack.c.l.b16 %v1072
        %v1147 = vunpack.c.l.b16 %v1073
        %v1148 = vpack.c.b16 %v1147, %v1146
        %v1151 = vunpack.c.l.b16 %v1080
        %v1152 = vunpack.c.l.b16 %v1081
        %v1153 = vpack.c.b16 %v1152, %v1151
        %1154 = vrot.lane.b32.xlu0 %v1153, 64
        %v1155 = vpop.permute.xlu0 %1154
        %v1158 = vsel %vm987, %v1148, 0
        %1160 = vmatpush.bf16.msra.mxu0 0
        %1161 = vmatpush.bf16.msra.mxu0 0
        %1162 = vmatpush.bf16.msra.mxu0 0
        %1163 = vmatpush.bf16.msra.mxu0 0
        %1164 = vmatpush.bf16.msra.mxu0 0
        %1165 = vmatpush.bf16.msra.mxu0 0
        %1166 = vmatpush.bf16.msra.mxu0 0
        %1167 = vmatpush.bf16.msra.mxu0 %v1155
        %1168 = vmatmul.bf16.gmra.mxu0 %v1158
        %v1169 = vpop.f32.mrf.mxu0
        %v1170 = vadd.f32 0.0, %v1169
        %v1171 = vpop.f32.mrf.mxu0
        %v1172 = vadd.f32 0.0, %v1171
        %1173 = vdwg.mxu0
        %v1176 = vunpack.c.l.b16 %v1074
        %v1177 = vunpack.c.l.b16 %v1075
        %v1178 = vpack.c.b16 %v1177, %v1176
        %v1181 = vunpack.c.l.b16 %v1082
        %v1182 = vunpack.c.l.b16 %v1083
        %v1183 = vpack.c.b16 %v1182, %v1181
        %1184 = vrot.lane.b32.xlu0 %v1183, 64
        %v1185 = vpop.permute.xlu0 %1184
        %v1188 = vsel %vm987, %v1178, 0
        %1190 = vmatpush.bf16.msra.mxu0 0
        %1191 = vmatpush.bf16.msra.mxu0 0
        %1192 = vmatpush.bf16.msra.mxu0 0
        %1193 = vmatpush.bf16.msra.mxu0 0
        %1194 = vmatpush.bf16.msra.mxu0 0
        %1195 = vmatpush.bf16.msra.mxu0 0
        %1196 = vmatpush.bf16.msra.mxu0 0
        %1197 = vmatpush.bf16.msra.mxu0 %v1185
        %1198 = vmatmul.bf16.gmra.mxu0 %v1188
        %v1199 = vpop.f32.mrf.mxu0
        %v1200 = vadd.f32 0.0, %v1199
        %v1201 = vpop.f32.mrf.mxu0
        %v1202 = vadd.f32 0.0, %v1201
        %1203 = vdwg.mxu0
        %v1204 = vmul.f32 %v1110, %v1060
        %v1205 = vmul.f32 %v1112, %v1061
        %v1206 = vmul.f32 %v1140, %v1062
        %v1207 = vmul.f32 %v1142, %v1063
        %v1208 = vmul.f32 %v1170, %v1064
        %v1209 = vmul.f32 %v1172, %v1065
        %v1210 = vmul.f32 %v1200, %v1066
        %v1211 = vmul.f32 %v1202, %v1067
        %1212 = vrot.lane.b32.xlu0 %v532, 120
        %v1213 = vpop.permute.xlu0 %1212
        %1214 = vrot.lane.b32.xlu0 %v533, 120
        %v1215 = vpop.permute.xlu0 %1214
        %1216 = vrot.lane.b32.xlu0 %v534, 120
        %v1217 = vpop.permute.xlu0 %1216
        %1218 = vrot.lane.b32.xlu0 %v535, 120
        %v1219 = vpop.permute.xlu0 %1218
        %1220 = vrot.lane.b32.xlu0 %v536, 120
        %v1221 = vpop.permute.xlu0 %1220
        %1222 = vrot.lane.b32.xlu0 %v537, 120
        %v1223 = vpop.permute.xlu0 %1222
        %1224 = vrot.lane.b32.xlu0 %v538, 120
        %v1225 = vpop.permute.xlu0 %1224
        %1226 = vrot.lane.b32.xlu0 %v539, 120
        %v1227 = vpop.permute.xlu0 %1226
        %v1236 = vsel %vm540, %v1213, 0.0
        %1237 = vadd.xlane.f32.xlu0 %v1236
        %v1238 = vpop.xlane.xlu0 %1237
        %v1239 = vsel %vm540, %v1215, 0.0
        %1240 = vadd.xlane.f32.xlu0 %v1239
        %v1241 = vpop.xlane.xlu0 %1240
        %v1242 = vsel %vm540, %v1217, 0.0
        %1243 = vadd.xlane.f32.xlu0 %v1242
        %v1244 = vpop.xlane.xlu0 %1243
        %v1245 = vsel %vm540, %v1219, 0.0
        %1246 = vadd.xlane.f32.xlu0 %v1245
        %v1247 = vpop.xlane.xlu0 %1246
        %v1248 = vsel %vm540, %v1221, 0.0
        %1249 = vadd.xlane.f32.xlu0 %v1248
        %v1250 = vpop.xlane.xlu0 %1249
        %v1251 = vsel %vm540, %v1223, 0.0
        %1252 = vadd.xlane.f32.xlu0 %v1251
        %v1253 = vpop.xlane.xlu0 %1252
        %v1254 = vsel %vm540, %v1225, 0.0
        %1255 = vadd.xlane.f32.xlu0 %v1254
        %v1256 = vpop.xlane.xlu0 %1255
        %v1257 = vsel %vm540, %v1227, 0.0
        %1258 = vadd.xlane.f32.xlu0 %v1257
        %v1259 = vpop.xlane.xlu0 %1258
        %v1260 = vadd.f32 %v1238, 1e-12
        %v1261 = vadd.f32 %v1241, 1e-12
        %v1262 = vadd.f32 %v1244, 1e-12
        %v1263 = vadd.f32 %v1247, 1e-12
        %v1264 = vadd.f32 %v1250, 1e-12
        %v1265 = vadd.f32 %v1253, 1e-12
        %v1266 = vadd.f32 %v1256, 1e-12
        %v1267 = vadd.f32 %v1259, 1e-12
        %v1268 = vrsqrt.pop %v1260
        %v1269 = vmul.f32 %v1268, %v1260
        %v1270 = vmul.f32 %v1269, %v1268
        %v1271 = vmul.f32 0.5, %v1270
        %v1272 = vsub.f32 1.5, %v1271
        %v1273 = vmul.f32 %v1268, %v1272
        %vm1274 = vweird.f32 %v1260
        %vm1275 = vweird.f32 %v1268
        %vm1276 = vmor %vm1274, %vm1275
        %v1277 = vsel %vm1276, %v1268, %v1273
        %v1278 = vrsqrt.pop %v1261
        %v1279 = vmul.f32 %v1278, %v1261
        %v1280 = vmul.f32 %v1279, %v1278
        %v1281 = vmul.f32 0.5, %v1280
        %v1282 = vsub.f32 1.5, %v1281
        %v1283 = vmul.f32 %v1278, %v1282
        %vm1284 = vweird.f32 %v1261
        %vm1285 = vweird.f32 %v1278
        %vm1286 = vmor %vm1284, %vm1285
        %v1287 = vsel %vm1286, %v1278, %v1283
        %v1288 = vrsqrt.pop %v1262
        %v1289 = vmul.f32 %v1288, %v1262
        %v1290 = vmul.f32 %v1289, %v1288
        %v1291 = vmul.f32 0.5, %v1290
        %v1292 = vsub.f32 1.5, %v1291
        %v1293 = vmul.f32 %v1288, %v1292
        %vm1294 = vweird.f32 %v1262
        %vm1295 = vweird.f32 %v1288
        %vm1296 = vmor %vm1294, %vm1295
        %v1297 = vsel %vm1296, %v1288, %v1293
        %v1298 = vrsqrt.pop %v1263
        %v1299 = vmul.f32 %v1298, %v1263
        %v1300 = vmul.f32 %v1299, %v1298
        %v1301 = vmul.f32 0.5, %v1300
        %v1302 = vsub.f32 1.5, %v1301
        %v1303 = vmul.f32 %v1298, %v1302
        %vm1304 = vweird.f32 %v1263
        %vm1305 = vweird.f32 %v1298
        %vm1306 = vmor %vm1304, %vm1305
        %v1307 = vsel %vm1306, %v1298, %v1303
        %v1308 = vrsqrt.pop %v1264
        %v1309 = vmul.f32 %v1308, %v1264
        %v1310 = vmul.f32 %v1309, %v1308
        %v1311 = vmul.f32 0.5, %v1310
        %v1312 = vsub.f32 1.5, %v1311
        %v1313 = vmul.f32 %v1308, %v1312
        %vm1314 = vweird.f32 %v1264
        %vm1315 = vweird.f32 %v1308
        %vm1316 = vmor %vm1314, %vm1315
        %v1317 = vsel %vm1316, %v1308, %v1313
        %v1318 = vrsqrt.pop %v1265
        %v1319 = vmul.f32 %v1318, %v1265
        %v1320 = vmul.f32 %v1319, %v1318
        %v1321 = vmul.f32 0.5, %v1320
        %v1322 = vsub.f32 1.5, %v1321
        %v1323 = vmul.f32 %v1318, %v1322
        %vm1324 = vweird.f32 %v1265
        %vm1325 = vweird.f32 %v1318
        %vm1326 = vmor %vm1324, %vm1325
        %v1327 = vsel %vm1326, %v1318, %v1323
        %v1328 = vrsqrt.pop %v1266
        %v1329 = vmul.f32 %v1328, %v1266
        %v1330 = vmul.f32 %v1329, %v1328
        %v1331 = vmul.f32 0.5, %v1330
        %v1332 = vsub.f32 1.5, %v1331
        %v1333 = vmul.f32 %v1328, %v1332
        %vm1334 = vweird.f32 %v1266
        %vm1335 = vweird.f32 %v1328
        %vm1336 = vmor %vm1334, %vm1335
        %v1337 = vsel %vm1336, %v1328, %v1333
        %v1338 = vrsqrt.pop %v1267
        %v1339 = vmul.f32 %v1338, %v1267
        %v1340 = vmul.f32 %v1339, %v1338
        %v1341 = vmul.f32 0.5, %v1340
        %v1342 = vsub.f32 1.5, %v1341
        %v1343 = vmul.f32 %v1338, %v1342
        %vm1344 = vweird.f32 %v1267
        %vm1345 = vweird.f32 %v1338
        %vm1346 = vmor %vm1344, %vm1345
        %v1347 = vsel %vm1346, %v1338, %v1343
        %v1348 = vmul.f32 %v513, %v1277
        %v1349 = vmul.f32 %v515, %v1287
        %v1350 = vmul.f32 %v518, %v1297
        %v1351 = vmul.f32 %v520, %v1307
        %v1352 = vmul.f32 %v523, %v1317
        %v1353 = vmul.f32 %v525, %v1327
        %v1354 = vmul.f32 %v528, %v1337
        %v1355 = vmul.f32 %v530, %v1347
        %1356 = vrot.lane.b32.xlu0 %v532, 88
        %v1357 = vpop.permute.xlu0 %1356
        %1358 = vrot.lane.b32.xlu0 %v533, 88
        %v1359 = vpop.permute.xlu0 %1358
        %1360 = vrot.lane.b32.xlu0 %v534, 88
        %v1361 = vpop.permute.xlu0 %1360
        %1362 = vrot.lane.b32.xlu0 %v535, 88
        %v1363 = vpop.permute.xlu0 %1362
        %1364 = vrot.lane.b32.xlu0 %v536, 88
        %v1365 = vpop.permute.xlu0 %1364
        %1366 = vrot.lane.b32.xlu0 %v537, 88
        %v1367 = vpop.permute.xlu0 %1366
        %1368 = vrot.lane.b32.xlu0 %v538, 88
        %v1369 = vpop.permute.xlu0 %1368
        %1370 = vrot.lane.b32.xlu0 %v539, 88
        %v1371 = vpop.permute.xlu0 %1370
        %v1380 = vsel %vm540, %v1357, 0.0
        %1381 = vadd.xlane.f32.xlu0 %v1380
        %v1382 = vpop.xlane.xlu0 %1381
        %v1383 = vsel %vm540, %v1359, 0.0
        %1384 = vadd.xlane.f32.xlu0 %v1383
        %v1385 = vpop.xlane.xlu0 %1384
        %v1386 = vsel %vm540, %v1361, 0.0
        %1387 = vadd.xlane.f32.xlu0 %v1386
        %v1388 = vpop.xlane.xlu0 %1387
        %v1389 = vsel %vm540, %v1363, 0.0
        %1390 = vadd.xlane.f32.xlu0 %v1389
        %v1391 = vpop.xlane.xlu0 %1390
        %v1392 = vsel %vm540, %v1365, 0.0
        %1393 = vadd.xlane.f32.xlu0 %v1392
        %v1394 = vpop.xlane.xlu0 %1393
        %v1395 = vsel %vm540, %v1367, 0.0
        %1396 = vadd.xlane.f32.xlu0 %v1395
        %v1397 = vpop.xlane.xlu0 %1396
        %v1398 = vsel %vm540, %v1369, 0.0
        %1399 = vadd.xlane.f32.xlu0 %v1398
        %v1400 = vpop.xlane.xlu0 %1399
        %v1401 = vsel %vm540, %v1371, 0.0
        %1402 = vadd.xlane.f32.xlu0 %v1401
        %v1403 = vpop.xlane.xlu0 %1402
        %v1404 = vadd.f32 %v1382, 1e-12
        %v1405 = vadd.f32 %v1385, 1e-12
        %v1406 = vadd.f32 %v1388, 1e-12
        %v1407 = vadd.f32 %v1391, 1e-12
        %v1408 = vadd.f32 %v1394, 1e-12
        %v1409 = vadd.f32 %v1397, 1e-12
        %v1410 = vadd.f32 %v1400, 1e-12
        %v1411 = vadd.f32 %v1403, 1e-12
        %v1412 = vrsqrt.pop %v1404
        %v1413 = vmul.f32 %v1412, %v1404
        %v1414 = vmul.f32 %v1413, %v1412
        %v1415 = vmul.f32 0.5, %v1414
        %v1416 = vsub.f32 1.5, %v1415
        %v1417 = vmul.f32 %v1412, %v1416
        %vm1418 = vweird.f32 %v1404
        %vm1419 = vweird.f32 %v1412
        %vm1420 = vmor %vm1418, %vm1419
        %v1421 = vsel %vm1420, %v1412, %v1417
        %v1422 = vrsqrt.pop %v1405
        %v1423 = vmul.f32 %v1422, %v1405
        %v1424 = vmul.f32 %v1423, %v1422
        %v1425 = vmul.f32 0.5, %v1424
        %v1426 = vsub.f32 1.5, %v1425
        %v1427 = vmul.f32 %v1422, %v1426
        %vm1428 = vweird.f32 %v1405
        %vm1429 = vweird.f32 %v1422
        %vm1430 = vmor %vm1428, %vm1429
        %v1431 = vsel %vm1430, %v1422, %v1427
        %v1432 = vrsqrt.pop %v1406
        %v1433 = vmul.f32 %v1432, %v1406
        %v1434 = vmul.f32 %v1433, %v1432
        %v1435 = vmul.f32 0.5, %v1434
        %v1436 = vsub.f32 1.5, %v1435
        %v1437 = vmul.f32 %v1432, %v1436
        %vm1438 = vweird.f32 %v1406
        %vm1439 = vweird.f32 %v1432
        %vm1440 = vmor %vm1438, %vm1439
        %v1441 = vsel %vm1440, %v1432, %v1437
        %v1442 = vrsqrt.pop %v1407
        %v1443 = vmul.f32 %v1442, %v1407
        %v1444 = vmul.f32 %v1443, %v1442
        %v1445 = vmul.f32 0.5, %v1444
        %v1446 = vsub.f32 1.5, %v1445
        %v1447 = vmul.f32 %v1442, %v1446
        %vm1448 = vweird.f32 %v1407
        %vm1449 = vweird.f32 %v1442
        %vm1450 = vmor %vm1448, %vm1449
        %v1451 = vsel %vm1450, %v1442, %v1447
        %v1452 = vrsqrt.pop %v1408
        %v1453 = vmul.f32 %v1452, %v1408
        %v1454 = vmul.f32 %v1453, %v1452
        %v1455 = vmul.f32 0.5, %v1454
        %v1456 = vsub.f32 1.5, %v1455
        %v1457 = vmul.f32 %v1452, %v1456
        %vm1458 = vweird.f32 %v1408
        %vm1459 = vweird.f32 %v1452
        %vm1460 = vmor %vm1458, %vm1459
        %v1461 = vsel %vm1460, %v1452, %v1457
        %v1462 = vrsqrt.pop %v1409
        %v1463 = vmul.f32 %v1462, %v1409
        %v1464 = vmul.f32 %v1463, %v1462
        %v1465 = vmul.f32 0.5, %v1464
        %v1466 = vsub.f32 1.5, %v1465
        %v1467 = vmul.f32 %v1462, %v1466
        %vm1468 = vweird.f32 %v1409
        %vm1469 = vweird.f32 %v1462
        %vm1470 = vmor %vm1468, %vm1469
        %v1471 = vsel %vm1470, %v1462, %v1467
        %v1472 = vrsqrt.pop %v1410
        %v1473 = vmul.f32 %v1472, %v1410
        %v1474 = vmul.f32 %v1473, %v1472
        %v1475 = vmul.f32 0.5, %v1474
        %v1476 = vsub.f32 1.5, %v1475
        %v1477 = vmul.f32 %v1472, %v1476
        %vm1478 = vweird.f32 %v1410
        %vm1479 = vweird.f32 %v1472
        %vm1480 = vmor %vm1478, %vm1479
        %v1481 = vsel %vm1480, %v1472, %v1477
        %v1482 = vrsqrt.pop %v1411
        %v1483 = vmul.f32 %v1482, %v1411
        %v1484 = vmul.f32 %v1483, %v1482
        %v1485 = vmul.f32 0.5, %v1484
        %v1486 = vsub.f32 1.5, %v1485
        %v1487 = vmul.f32 %v1482, %v1486
        %vm1488 = vweird.f32 %v1411
        %vm1489 = vweird.f32 %v1482
        %vm1490 = vmor %vm1488, %vm1489
        %v1491 = vsel %vm1490, %v1482, %v1487
        %v1492 = vmul.f32 %v513, %v1421
        %v1493 = vmul.f32 %v515, %v1431
        %v1494 = vmul.f32 %v518, %v1441
        %v1495 = vmul.f32 %v520, %v1451
        %v1496 = vmul.f32 %v523, %v1461
        %v1497 = vmul.f32 %v525, %v1471
        %v1498 = vmul.f32 %v528, %v1481
        %v1499 = vmul.f32 %v530, %v1491
        %s1500 = sld [smem:[#allocation2 + $0x1]]
        %v1501 = vstv %s1500
        %v1502 = vmul.f32 %v1348, %v1501
        %v1503 = vmul.f32 %v1349, %v1501
        %v1504 = vmul.f32 %v1350, %v1501
        %v1505 = vmul.f32 %v1351, %v1501
        %v1506 = vmul.f32 %v1352, %v1501
        %v1507 = vmul.f32 %v1353, %v1501
        %v1508 = vmul.f32 %v1354, %v1501
        %v1509 = vmul.f32 %v1355, %v1501
        %s1510 = scalar_lea.vmem %s6, 64
        %v1511 = vld [vmem:[%s1510] sm:$0xff]
        %v1512 = vld [vmem:[%s1510 + $0x8] sm:$0xff]
        %v1513 = vld [vmem:[%s1510 + $0x10] sm:$0xff]
        %v1514 = vld [vmem:[%s1510 + $0x18] sm:$0xff]
        %v1515 = vld [vmem:[%s1510 + $0x20] sm:$0xff]
        %v1516 = vld [vmem:[%s1510 + $0x28] sm:$0xff]
        %v1517 = vld [vmem:[%s1510 + $0x30] sm:$0xff]
        %v1518 = vld [vmem:[%s1510 + $0x38] sm:$0xff]
        %1521 = vrot.lane.b32.xlu0 %v1502, 120
        %v1522 = vpop.permute.xlu0 %1521
        %1523 = vrot.lane.b32.xlu0 %v1503, 120
        %v1524 = vpop.permute.xlu0 %1523
        %1527 = vrot.lane.b32.xlu0 %v1492, 88
        %v1528 = vpop.permute.xlu0 %1527
        %1529 = vrot.lane.b32.xlu0 %v1493, 88
        %v1530 = vpop.permute.xlu0 %1529
        %v1531 = vsel %vm540, %v1522, 0
        %v1533 = vsel %vm540, %v1524, 0
        %v1535 = vsel %vm540, %v1528, 0
        %v1537 = vsel %vm540, %v1530, 0
        %1539 = vmatpush.xpose.msra.mxu0 0.0
        %1540 = vmatpush.xpose.msra.mxu0 0.0
        %1541 = vmatpush.xpose.msra.mxu0 0.0
        %1542 = vmatpush.xpose.msra.mxu0 0.0
        %1543 = vmatpush.xpose.msra.mxu0 0.0
        %1544 = vmatpush.xpose.msra.mxu0 0.0
        %1545 = vmatpush.xpose.msra.mxu0 0.0
        %1546 = vmatpush.xpose.msra.mxu0 0.0
        %1547 = vmatpush.xpose.msra.mxu0 0.0
        %1548 = vmatpush.xpose.msra.mxu0 0.0
        %1549 = vmatpush.xpose.msra.mxu0 0.0
        %1550 = vmatpush.xpose.msra.mxu0 0.0
        %1551 = vmatpush.xpose.msra.mxu0 0.0
        %1552 = vmatpush.xpose.msra.mxu0 0.0
        %1553 = vmatpush.xpose.msra.mxu0 %v1537
        %1554 = vmatpush.xpose.msra.mxu0 %v1535
        %1555 = vmatmul.f32.gmra.mxu0 %v1531
        %v1556 = vpop.f32.mrf.mxu0
        %v1557 = vadd.f32 %v1511, %v1556
        %1558 = vmatmul.f32.gmra.mxu0 %v1533
        %v1559 = vpop.f32.mrf.mxu0
        %v1560 = vadd.f32 %v1512, %v1559
        %1561 = vdwg.mxu0
        %1564 = vrot.lane.b32.xlu0 %v1504, 120
        %v1565 = vpop.permute.xlu0 %1564
        %1566 = vrot.lane.b32.xlu0 %v1505, 120
        %v1567 = vpop.permute.xlu0 %1566
        %1570 = vrot.lane.b32.xlu0 %v1494, 88
        %v1571 = vpop.permute.xlu0 %1570
        %1572 = vrot.lane.b32.xlu0 %v1495, 88
        %v1573 = vpop.permute.xlu0 %1572
        %v1574 = vsel %vm540, %v1565, 0
        %v1576 = vsel %vm540, %v1567, 0
        %v1578 = vsel %vm540, %v1571, 0
        %v1580 = vsel %vm540, %v1573, 0
        %1582 = vmatpush.xpose.msra.mxu0 0.0
        %1583 = vmatpush.xpose.msra.mxu0 0.0
        %1584 = vmatpush.xpose.msra.mxu0 0.0
        %1585 = vmatpush.xpose.msra.mxu0 0.0
        %1586 = vmatpush.xpose.msra.mxu0 0.0
        %1587 = vmatpush.xpose.msra.mxu0 0.0
        %1588 = vmatpush.xpose.msra.mxu0 0.0
        %1589 = vmatpush.xpose.msra.mxu0 0.0
        %1590 = vmatpush.xpose.msra.mxu0 0.0
        %1591 = vmatpush.xpose.msra.mxu0 0.0
        %1592 = vmatpush.xpose.msra.mxu0 0.0
        %1593 = vmatpush.xpose.msra.mxu0 0.0
        %1594 = vmatpush.xpose.msra.mxu0 0.0
        %1595 = vmatpush.xpose.msra.mxu0 0.0
        %1596 = vmatpush.xpose.msra.mxu0 %v1580
        %1597 = vmatpush.xpose.msra.mxu0 %v1578
        %1598 = vmatmul.f32.gmra.mxu0 %v1574
        %v1599 = vpop.f32.mrf.mxu0
        %v1600 = vadd.f32 %v1513, %v1599
        %1601 = vmatmul.f32.gmra.mxu0 %v1576
        %v1602 = vpop.f32.mrf.mxu0
        %v1603 = vadd.f32 %v1514, %v1602
        %1604 = vdwg.mxu0
        %1607 = vrot.lane.b32.xlu0 %v1506, 120
        %v1608 = vpop.permute.xlu0 %1607
        %1609 = vrot.lane.b32.xlu0 %v1507, 120
        %v1610 = vpop.permute.xlu0 %1609
        %1613 = vrot.lane.b32.xlu0 %v1496, 88
        %v1614 = vpop.permute.xlu0 %1613
        %1615 = vrot.lane.b32.xlu0 %v1497, 88
        %v1616 = vpop.permute.xlu0 %1615
        %v1617 = vsel %vm540, %v1608, 0
        %v1619 = vsel %vm540, %v1610, 0
        %v1621 = vsel %vm540, %v1614, 0
        %v1623 = vsel %vm540, %v1616, 0
        %1625 = vmatpush.xpose.msra.mxu0 0.0
        %1626 = vmatpush.xpose.msra.mxu0 0.0
        %1627 = vmatpush.xpose.msra.mxu0 0.0
        %1628 = vmatpush.xpose.msra.mxu0 0.0
        %1629 = vmatpush.xpose.msra.mxu0 0.0
        %1630 = vmatpush.xpose.msra.mxu0 0.0
        %1631 = vmatpush.xpose.msra.mxu0 0.0
        %1632 = vmatpush.xpose.msra.mxu0 0.0
        %1633 = vmatpush.xpose.msra.mxu0 0.0
        %1634 = vmatpush.xpose.msra.mxu0 0.0
        %1635 = vmatpush.xpose.msra.mxu0 0.0
        %1636 = vmatpush.xpose.msra.mxu0 0.0
        %1637 = vmatpush.xpose.msra.mxu0 0.0
        %1638 = vmatpush.xpose.msra.mxu0 0.0
        %1639 = vmatpush.xpose.msra.mxu0 %v1623
        %1640 = vmatpush.xpose.msra.mxu0 %v1621
        %1641 = vmatmul.f32.gmra.mxu0 %v1617
        %v1642 = vpop.f32.mrf.mxu0
        %v1643 = vadd.f32 %v1515, %v1642
        %1644 = vmatmul.f32.gmra.mxu0 %v1619
        %v1645 = vpop.f32.mrf.mxu0
        %v1646 = vadd.f32 %v1516, %v1645
        %1647 = vdwg.mxu0
        %1650 = vrot.lane.b32.xlu0 %v1508, 120
        %v1651 = vpop.permute.xlu0 %1650
        %1652 = vrot.lane.b32.xlu0 %v1509, 120
        %v1653 = vpop.permute.xlu0 %1652
        %1656 = vrot.lane.b32.xlu0 %v1498, 88
        %v1657 = vpop.permute.xlu0 %1656
        %1658 = vrot.lane.b32.xlu0 %v1499, 88
        %v1659 = vpop.permute.xlu0 %1658
        %v1660 = vsel %vm540, %v1651, 0
        %v1662 = vsel %vm540, %v1653, 0
        %v1664 = vsel %vm540, %v1657, 0
        %v1666 = vsel %vm540, %v1659, 0
        %1668 = vmatpush.xpose.msra.mxu0 0.0
        %1669 = vmatpush.xpose.msra.mxu0 0.0
        %1670 = vmatpush.xpose.msra.mxu0 0.0
        %1671 = vmatpush.xpose.msra.mxu0 0.0
        %1672 = vmatpush.xpose.msra.mxu0 0.0
        %1673 = vmatpush.xpose.msra.mxu0 0.0
        %1674 = vmatpush.xpose.msra.mxu0 0.0
        %1675 = vmatpush.xpose.msra.mxu0 0.0
        %1676 = vmatpush.xpose.msra.mxu0 0.0
        %1677 = vmatpush.xpose.msra.mxu0 0.0
        %1678 = vmatpush.xpose.msra.mxu0 0.0
        %1679 = vmatpush.xpose.msra.mxu0 0.0
        %1680 = vmatpush.xpose.msra.mxu0 0.0
        %1681 = vmatpush.xpose.msra.mxu0 0.0
        %1682 = vmatpush.xpose.msra.mxu0 %v1666
        %1683 = vmatpush.xpose.msra.mxu0 %v1664
        %1684 = vmatmul.f32.gmra.mxu0 %v1660
        %v1685 = vpop.f32.mrf.mxu0
        %v1686 = vadd.f32 %v1517, %v1685
        %1687 = vmatmul.f32.gmra.mxu0 %v1662
        %v1688 = vpop.f32.mrf.mxu0
        %v1689 = vadd.f32 %v1518, %v1688
        %1690 = vdwg.mxu0
        %v1691 = vsel %vm987, %v1557, -inf
        %1692 = vmax.xlane.f32.xlu0 %v1691
        %v1693 = vpop.xlane.xlu0 %1692
        %v1694 = vsel %vm987, %v1560, -inf
        %1695 = vmax.xlane.f32.xlu0 %v1694
        %v1696 = vpop.xlane.xlu0 %1695
        %v1697 = vsel %vm987, %v1600, -inf
        %1698 = vmax.xlane.f32.xlu0 %v1697
        %v1699 = vpop.xlane.xlu0 %1698
        %v1700 = vsel %vm987, %v1603, -inf
        %1701 = vmax.xlane.f32.xlu0 %v1700
        %v1702 = vpop.xlane.xlu0 %1701
        %v1703 = vsel %vm987, %v1643, -inf
        %1704 = vmax.xlane.f32.xlu0 %v1703
        %v1705 = vpop.xlane.xlu0 %1704
        %v1706 = vsel %vm987, %v1646, -inf
        %1707 = vmax.xlane.f32.xlu0 %v1706
        %v1708 = vpop.xlane.xlu0 %1707
        %v1709 = vsel %vm987, %v1686, -inf
        %1710 = vmax.xlane.f32.xlu0 %v1709
        %v1711 = vpop.xlane.xlu0 %1710
        %v1712 = vsel %vm987, %v1689, -inf
        %1713 = vmax.xlane.f32.xlu0 %v1712
        %v1714 = vpop.xlane.xlu0 %1713
        %v1715 = vsub.f32 %v1557, %v1693
        %v1716 = vsub.f32 %v1560, %v1696
        %v1717 = vsub.f32 %v1600, %v1699
        %v1718 = vsub.f32 %v1603, %v1702
        %v1719 = vsub.f32 %v1643, %v1705
        %v1720 = vsub.f32 %v1646, %v1708
        %v1721 = vsub.f32 %v1686, %v1711
        %v1722 = vsub.f32 %v1689, %v1714
        %v1723 = vmul.f32 %v1715, 1.442695
        %v1724 = vpow.pop %v1723
        %v1725 = vmul.f32 %v1716, 1.442695
        %v1726 = vpow.pop %v1725
        %v1727 = vmul.f32 %v1717, 1.442695
        %v1728 = vpow.pop %v1727
        %v1729 = vmul.f32 %v1718, 1.442695
        %v1730 = vpow.pop %v1729
        %v1731 = vmul.f32 %v1719, 1.442695
        %v1732 = vpow.pop %v1731
        %v1733 = vmul.f32 %v1720, 1.442695
        %v1734 = vpow.pop %v1733
        %v1735 = vmul.f32 %v1721, 1.442695
        %v1736 = vpow.pop %v1735
        %v1737 = vmul.f32 %v1722, 1.442695
        %v1738 = vpow.pop %v1737
        %v1739 = vsel %vm987, %v1724, 0.0
        %1740 = vadd.xlane.f32.xlu0 %v1739
        %v1741 = vpop.xlane.xlu0 %1740
        %v1742 = vsel %vm987, %v1726, 0.0
        %1743 = vadd.xlane.f32.xlu0 %v1742
        %v1744 = vpop.xlane.xlu0 %1743
        %v1745 = vsel %vm987, %v1728, 0.0
        %1746 = vadd.xlane.f32.xlu0 %v1745
        %v1747 = vpop.xlane.xlu0 %1746
        %v1748 = vsel %vm987, %v1730, 0.0
        %1749 = vadd.xlane.f32.xlu0 %v1748
        %v1750 = vpop.xlane.xlu0 %1749
        %v1751 = vsel %vm987, %v1732, 0.0
        %1752 = vadd.xlane.f32.xlu0 %v1751
        %v1753 = vpop.xlane.xlu0 %1752
        %v1754 = vsel %vm987, %v1734, 0.0
        %1755 = vadd.xlane.f32.xlu0 %v1754
        %v1756 = vpop.xlane.xlu0 %1755
        %v1757 = vsel %vm987, %v1736, 0.0
        %1758 = vadd.xlane.f32.xlu0 %v1757
        %v1759 = vpop.xlane.xlu0 %1758
        %v1760 = vsel %vm987, %v1738, 0.0
        %1761 = vadd.xlane.f32.xlu0 %v1760
        %v1762 = vpop.xlane.xlu0 %1761
        %v1763 = vrcp.pop %v1741
        %v1764 = vrcp.pop %v1744
        %v1765 = vrcp.pop %v1747
        %v1766 = vrcp.pop %v1750
        %v1767 = vrcp.pop %v1753
        %v1768 = vrcp.pop %v1756
        %v1769 = vrcp.pop %v1759
        %v1770 = vrcp.pop %v1762
        %v1771 = vpack.c.bf16 %v1724, %v1724
        %v1772 = vpack.c.bf16 %v1726, %v1726
        %v1773 = vpack.c.bf16 %v1728, %v1728
        %v1774 = vpack.c.bf16 %v1730, %v1730
        %v1775 = vpack.c.bf16 %v1732, %v1732
        %v1776 = vpack.c.bf16 %v1734, %v1734
        %v1777 = vpack.c.bf16 %v1736, %v1736
        %v1778 = vpack.c.bf16 %v1738, %v1738
        %v1781 = vunpack.c.l.b16 %v1771
        %v1782 = vunpack.c.l.b16 %v1772
        %v1783 = vpack.c.b16 %v1782, %v1781
        %1784 = vrot.lane.b32.xlu0 %v1093, 56
        %v1785 = vpop.permute.xlu0 %1784
        %v1788 = vsel %vm987, %v1783, 0
        %1790 = vmatpush.bf16.msra.mxu0 0
        %1791 = vmatpush.bf16.msra.mxu0 0
        %1792 = vmatpush.bf16.msra.mxu0 0
        %1793 = vmatpush.bf16.msra.mxu0 0
        %1794 = vmatpush.bf16.msra.mxu0 0
        %1795 = vmatpush.bf16.msra.mxu0 0
        %1796 = vmatpush.bf16.msra.mxu0 0
        %1797 = vmatpush.bf16.msra.mxu0 %v1785
        %1798 = vmatmul.bf16.gmra.mxu0 %v1788
        %v1799 = vpop.f32.mrf.mxu0
        %v1800 = vadd.f32 0.0, %v1799
        %v1801 = vpop.f32.mrf.mxu0
        %v1802 = vadd.f32 0.0, %v1801
        %1803 = vdwg.mxu0
        %v1806 = vunpack.c.l.b16 %v1773
        %v1807 = vunpack.c.l.b16 %v1774
        %v1808 = vpack.c.b16 %v1807, %v1806
        %1809 = vrot.lane.b32.xlu0 %v1123, 56
        %v1810 = vpop.permute.xlu0 %1809
        %v1813 = vsel %vm987, %v1808, 0
        %1815 = vmatpush.bf16.msra.mxu0 0
        %1816 = vmatpush.bf16.msra.mxu0 0
        %1817 = vmatpush.bf16.msra.mxu0 0
        %1818 = vmatpush.bf16.msra.mxu0 0
        %1819 = vmatpush.bf16.msra.mxu0 0
        %1820 = vmatpush.bf16.msra.mxu0 0
        %1821 = vmatpush.bf16.msra.mxu0 0
        %1822 = vmatpush.bf16.msra.mxu0 %v1810
        %1823 = vmatmul.bf16.gmra.mxu0 %v1813
        %v1824 = vpop.f32.mrf.mxu0
        %v1825 = vadd.f32 0.0, %v1824
        %v1826 = vpop.f32.mrf.mxu0
        %v1827 = vadd.f32 0.0, %v1826
        %1828 = vdwg.mxu0
        %v1831 = vunpack.c.l.b16 %v1775
        %v1832 = vunpack.c.l.b16 %v1776
        %v1833 = vpack.c.b16 %v1832, %v1831
        %1834 = vrot.lane.b32.xlu0 %v1153, 56
        %v1835 = vpop.permute.xlu0 %1834
        %v1838 = vsel %vm987, %v1833, 0
        %1840 = vmatpush.bf16.msra.mxu0 0
        %1841 = vmatpush.bf16.msra.mxu0 0
        %1842 = vmatpush.bf16.msra.mxu0 0
        %1843 = vmatpush.bf16.msra.mxu0 0
        %1844 = vmatpush.bf16.msra.mxu0 0
        %1845 = vmatpush.bf16.msra.mxu0 0
        %1846 = vmatpush.bf16.msra.mxu0 0
        %1847 = vmatpush.bf16.msra.mxu0 %v1835
        %1848 = vmatmul.bf16.gmra.mxu0 %v1838
        %v1849 = vpop.f32.mrf.mxu0
        %v1850 = vadd.f32 0.0, %v1849
        %v1851 = vpop.f32.mrf.mxu0
        %v1852 = vadd.f32 0.0, %v1851
        %1853 = vdwg.mxu0
        %v1856 = vunpack.c.l.b16 %v1777
        %v1857 = vunpack.c.l.b16 %v1778
        %v1858 = vpack.c.b16 %v1857, %v1856
        %1859 = vrot.lane.b32.xlu0 %v1183, 56
        %v1860 = vpop.permute.xlu0 %1859
        %v1863 = vsel %vm987, %v1858, 0
        %1865 = vmatpush.bf16.msra.mxu0 0
        %1866 = vmatpush.bf16.msra.mxu0 0
        %1867 = vmatpush.bf16.msra.mxu0 0
        %1868 = vmatpush.bf16.msra.mxu0 0
        %1869 = vmatpush.bf16.msra.mxu0 0
        %1870 = vmatpush.bf16.msra.mxu0 0
        %1871 = vmatpush.bf16.msra.mxu0 0
        %1872 = vmatpush.bf16.msra.mxu0 %v1860
        %1873 = vmatmul.bf16.gmra.mxu0 %v1863
        %v1874 = vpop.f32.mrf.mxu0
        %v1875 = vadd.f32 0.0, %v1874
        %v1876 = vpop.f32.mrf.mxu0
        %v1877 = vadd.f32 0.0, %v1876
        %1878 = vdwg.mxu0
        %v1879 = vmul.f32 %v1800, %v1763
        %v1880 = vmul.f32 %v1802, %v1764
        %v1881 = vmul.f32 %v1825, %v1765
        %v1882 = vmul.f32 %v1827, %v1766
        %v1883 = vmul.f32 %v1850, %v1767
        %v1884 = vmul.f32 %v1852, %v1768
        %v1885 = vmul.f32 %v1875, %v1769
        %v1886 = vmul.f32 %v1877, %v1770
        %1887 = vrot.lane.b32.xlu0 %v532, 112
        %v1888 = vpop.permute.xlu0 %1887
        %1889 = vrot.lane.b32.xlu0 %v533, 112
        %v1890 = vpop.permute.xlu0 %1889
        %1891 = vrot.lane.b32.xlu0 %v534, 112
        %v1892 = vpop.permute.xlu0 %1891
        %1893 = vrot.lane.b32.xlu0 %v535, 112
        %v1894 = vpop.permute.xlu0 %1893
        %1895 = vrot.lane.b32.xlu0 %v536, 112
        %v1896 = vpop.permute.xlu0 %1895
        %1897 = vrot.lane.b32.xlu0 %v537, 112
        %v1898 = vpop.permute.xlu0 %1897
        %1899 = vrot.lane.b32.xlu0 %v538, 112
        %v1900 = vpop.permute.xlu0 %1899
        %1901 = vrot.lane.b32.xlu0 %v539, 112
        %v1902 = vpop.permute.xlu0 %1901
        %v1911 = vsel %vm540, %v1888, 0.0
        %1912 = vadd.xlane.f32.xlu0 %v1911
        %v1913 = vpop.xlane.xlu0 %1912
        %v1914 = vsel %vm540, %v1890, 0.0
        %1915 = vadd.xlane.f32.xlu0 %v1914
        %v1916 = vpop.xlane.xlu0 %1915
        %v1917 = vsel %vm540, %v1892, 0.0
        %1918 = vadd.xlane.f32.xlu0 %v1917
        %v1919 = vpop.xlane.xlu0 %1918
        %v1920 = vsel %vm540, %v1894, 0.0
        %1921 = vadd.xlane.f32.xlu0 %v1920
        %v1922 = vpop.xlane.xlu0 %1921
        %v1923 = vsel %vm540, %v1896, 0.0
        %1924 = vadd.xlane.f32.xlu0 %v1923
        %v1925 = vpop.xlane.xlu0 %1924
        %v1926 = vsel %vm540, %v1898, 0.0
        %1927 = vadd.xlane.f32.xlu0 %v1926
        %v1928 = vpop.xlane.xlu0 %1927
        %v1929 = vsel %vm540, %v1900, 0.0
        %1930 = vadd.xlane.f32.xlu0 %v1929
        %v1931 = vpop.xlane.xlu0 %1930
        %v1932 = vsel %vm540, %v1902, 0.0
        %1933 = vadd.xlane.f32.xlu0 %v1932
        %v1934 = vpop.xlane.xlu0 %1933
        %v1935 = vadd.f32 %v1913, 1e-12
        %v1936 = vadd.f32 %v1916, 1e-12
        %v1937 = vadd.f32 %v1919, 1e-12
        %v1938 = vadd.f32 %v1922, 1e-12
        %v1939 = vadd.f32 %v1925, 1e-12
        %v1940 = vadd.f32 %v1928, 1e-12
        %v1941 = vadd.f32 %v1931, 1e-12
        %v1942 = vadd.f32 %v1934, 1e-12
        %v1943 = vrsqrt.pop %v1935
        %v1944 = vmul.f32 %v1943, %v1935
        %v1945 = vmul.f32 %v1944, %v1943
        %v1946 = vmul.f32 0.5, %v1945
        %v1947 = vsub.f32 1.5, %v1946
        %v1948 = vmul.f32 %v1943, %v1947
        %vm1949 = vweird.f32 %v1935
        %vm1950 = vweird.f32 %v1943
        %vm1951 = vmor %vm1949, %vm1950
        %v1952 = vsel %vm1951, %v1943, %v1948
        %v1953 = vrsqrt.pop %v1936
        %v1954 = vmul.f32 %v1953, %v1936
        %v1955 = vmul.f32 %v1954, %v1953
        %v1956 = vmul.f32 0.5, %v1955
        %v1957 = vsub.f32 1.5, %v1956
        %v1958 = vmul.f32 %v1953, %v1957
        %vm1959 = vweird.f32 %v1936
        %vm1960 = vweird.f32 %v1953
        %vm1961 = vmor %vm1959, %vm1960
        %v1962 = vsel %vm1961, %v1953, %v1958
        %v1963 = vrsqrt.pop %v1937
        %v1964 = vmul.f32 %v1963, %v1937
        %v1965 = vmul.f32 %v1964, %v1963
        %v1966 = vmul.f32 0.5, %v1965
        %v1967 = vsub.f32 1.5, %v1966
        %v1968 = vmul.f32 %v1963, %v1967
        %vm1969 = vweird.f32 %v1937
        %vm1970 = vweird.f32 %v1963
        %vm1971 = vmor %vm1969, %vm1970
        %v1972 = vsel %vm1971, %v1963, %v1968
        %v1973 = vrsqrt.pop %v1938
        %v1974 = vmul.f32 %v1973, %v1938
        %v1975 = vmul.f32 %v1974, %v1973
        %v1976 = vmul.f32 0.5, %v1975
        %v1977 = vsub.f32 1.5, %v1976
        %v1978 = vmul.f32 %v1973, %v1977
        %vm1979 = vweird.f32 %v1938
        %vm1980 = vweird.f32 %v1973
        %vm1981 = vmor %vm1979, %vm1980
        %v1982 = vsel %vm1981, %v1973, %v1978
        %v1983 = vrsqrt.pop %v1939
        %v1984 = vmul.f32 %v1983, %v1939
        %v1985 = vmul.f32 %v1984, %v1983
        %v1986 = vmul.f32 0.5, %v1985
        %v1987 = vsub.f32 1.5, %v1986
        %v1988 = vmul.f32 %v1983, %v1987
        %vm1989 = vweird.f32 %v1939
        %vm1990 = vweird.f32 %v1983
        %vm1991 = vmor %vm1989, %vm1990
        %v1992 = vsel %vm1991, %v1983, %v1988
        %v1993 = vrsqrt.pop %v1940
        %v1994 = vmul.f32 %v1993, %v1940
        %v1995 = vmul.f32 %v1994, %v1993
        %v1996 = vmul.f32 0.5, %v1995
        %v1997 = vsub.f32 1.5, %v1996
        %v1998 = vmul.f32 %v1993, %v1997
        %vm1999 = vweird.f32 %v1940
        %vm2000 = vweird.f32 %v1993
        %vm2001 = vmor %vm1999, %vm2000
        %v2002 = vsel %vm2001, %v1993, %v1998
        %v2003 = vrsqrt.pop %v1941
        %v2004 = vmul.f32 %v2003, %v1941
        %v2005 = vmul.f32 %v2004, %v2003
        %v2006 = vmul.f32 0.5, %v2005
        %v2007 = vsub.f32 1.5, %v2006
        %v2008 = vmul.f32 %v2003, %v2007
        %vm2009 = vweird.f32 %v1941
        %vm2010 = vweird.f32 %v2003
        %vm2011 = vmor %vm2009, %vm2010
        %v2012 = vsel %vm2011, %v2003, %v2008
        %v2013 = vrsqrt.pop %v1942
        %v2014 = vmul.f32 %v2013, %v1942
        %v2015 = vmul.f32 %v2014, %v2013
        %v2016 = vmul.f32 0.5, %v2015
        %v2017 = vsub.f32 1.5, %v2016
        %v2018 = vmul.f32 %v2013, %v2017
        %vm2019 = vweird.f32 %v1942
        %vm2020 = vweird.f32 %v2013
        %vm2021 = vmor %vm2019, %vm2020
        %v2022 = vsel %vm2021, %v2013, %v2018
        %v2023 = vmul.f32 %v513, %v1952
        %v2024 = vmul.f32 %v515, %v1962
        %v2025 = vmul.f32 %v518, %v1972
        %v2026 = vmul.f32 %v520, %v1982
        %v2027 = vmul.f32 %v523, %v1992
        %v2028 = vmul.f32 %v525, %v2002
        %v2029 = vmul.f32 %v528, %v2012
        %v2030 = vmul.f32 %v530, %v2022
        %2031 = vrot.lane.b32.xlu0 %v532, 80
        %v2032 = vpop.permute.xlu0 %2031
        %2033 = vrot.lane.b32.xlu0 %v533, 80
        %v2034 = vpop.permute.xlu0 %2033
        %2035 = vrot.lane.b32.xlu0 %v534, 80
        %v2036 = vpop.permute.xlu0 %2035
        %2037 = vrot.lane.b32.xlu0 %v535, 80
        %v2038 = vpop.permute.xlu0 %2037
        %2039 = vrot.lane.b32.xlu0 %v536, 80
        %v2040 = vpop.permute.xlu0 %2039
        %2041 = vrot.lane.b32.xlu0 %v537, 80
        %v2042 = vpop.permute.xlu0 %2041
        %2043 = vrot.lane.b32.xlu0 %v538, 80
        %v2044 = vpop.permute.xlu0 %2043
        %2045 = vrot.lane.b32.xlu0 %v539, 80
        %v2046 = vpop.permute.xlu0 %2045
        %v2055 = vsel %vm540, %v2032, 0.0
        %2056 = vadd.xlane.f32.xlu0 %v2055
        %v2057 = vpop.xlane.xlu0 %2056
        %v2058 = vsel %vm540, %v2034, 0.0
        %2059 = vadd.xlane.f32.xlu0 %v2058
        %v2060 = vpop.xlane.xlu0 %2059
        %v2061 = vsel %vm540, %v2036, 0.0
        %2062 = vadd.xlane.f32.xlu0 %v2061
        %v2063 = vpop.xlane.xlu0 %2062
        %v2064 = vsel %vm540, %v2038, 0.0
        %2065 = vadd.xlane.f32.xlu0 %v2064
        %v2066 = vpop.xlane.xlu0 %2065
        %v2067 = vsel %vm540, %v2040, 0.0
        %2068 = vadd.xlane.f32.xlu0 %v2067
        %v2069 = vpop.xlane.xlu0 %2068
        %v2070 = vsel %vm540, %v2042, 0.0
        %2071 = vadd.xlane.f32.xlu0 %v2070
        %v2072 = vpop.xlane.xlu0 %2071
        %v2073 = vsel %vm540, %v2044, 0.0
        %2074 = vadd.xlane.f32.xlu0 %v2073
        %v2075 = vpop.xlane.xlu0 %2074
        %v2076 = vsel %vm540, %v2046, 0.0
        %2077 = vadd.xlane.f32.xlu0 %v2076
        %v2078 = vpop.xlane.xlu0 %2077
        %v2079 = vadd.f32 %v2057, 1e-12
        %v2080 = vadd.f32 %v2060, 1e-12
        %v2081 = vadd.f32 %v2063, 1e-12
        %v2082 = vadd.f32 %v2066, 1e-12
        %v2083 = vadd.f32 %v2069, 1e-12
        %v2084 = vadd.f32 %v2072, 1e-12
        %v2085 = vadd.f32 %v2075, 1e-12
        %v2086 = vadd.f32 %v2078, 1e-12
        %v2087 = vrsqrt.pop %v2079
        %v2088 = vmul.f32 %v2087, %v2079
        %v2089 = vmul.f32 %v2088, %v2087
        %v2090 = vmul.f32 0.5, %v2089
        %v2091 = vsub.f32 1.5, %v2090
        %v2092 = vmul.f32 %v2087, %v2091
        %vm2093 = vweird.f32 %v2079
        %vm2094 = vweird.f32 %v2087
        %vm2095 = vmor %vm2093, %vm2094
        %v2096 = vsel %vm2095, %v2087, %v2092
        %v2097 = vrsqrt.pop %v2080
        %v2098 = vmul.f32 %v2097, %v2080
        %v2099 = vmul.f32 %v2098, %v2097
        %v2100 = vmul.f32 0.5, %v2099
        %v2101 = vsub.f32 1.5, %v2100
        %v2102 = vmul.f32 %v2097, %v2101
        %vm2103 = vweird.f32 %v2080
        %vm2104 = vweird.f32 %v2097
        %vm2105 = vmor %vm2103, %vm2104
        %v2106 = vsel %vm2105, %v2097, %v2102
        %v2107 = vrsqrt.pop %v2081
        %v2108 = vmul.f32 %v2107, %v2081
        %v2109 = vmul.f32 %v2108, %v2107
        %v2110 = vmul.f32 0.5, %v2109
        %v2111 = vsub.f32 1.5, %v2110
        %v2112 = vmul.f32 %v2107, %v2111
        %vm2113 = vweird.f32 %v2081
        %vm2114 = vweird.f32 %v2107
        %vm2115 = vmor %vm2113, %vm2114
        %v2116 = vsel %vm2115, %v2107, %v2112
        %v2117 = vrsqrt.pop %v2082
        %v2118 = vmul.f32 %v2117, %v2082
        %v2119 = vmul.f32 %v2118, %v2117
        %v2120 = vmul.f32 0.5, %v2119
        %v2121 = vsub.f32 1.5, %v2120
        %v2122 = vmul.f32 %v2117, %v2121
        %vm2123 = vweird.f32 %v2082
        %vm2124 = vweird.f32 %v2117
        %vm2125 = vmor %vm2123, %vm2124
        %v2126 = vsel %vm2125, %v2117, %v2122
        %v2127 = vrsqrt.pop %v2083
        %v2128 = vmul.f32 %v2127, %v2083
        %v2129 = vmul.f32 %v2128, %v2127
        %v2130 = vmul.f32 0.5, %v2129
        %v2131 = vsub.f32 1.5, %v2130
        %v2132 = vmul.f32 %v2127, %v2131
        %vm2133 = vweird.f32 %v2083
        %vm2134 = vweird.f32 %v2127
        %vm2135 = vmor %vm2133, %vm2134
        %v2136 = vsel %vm2135, %v2127, %v2132
        %v2137 = vrsqrt.pop %v2084
        %v2138 = vmul.f32 %v2137, %v2084
        %v2139 = vmul.f32 %v2138, %v2137
        %v2140 = vmul.f32 0.5, %v2139
        %v2141 = vsub.f32 1.5, %v2140
        %v2142 = vmul.f32 %v2137, %v2141
        %vm2143 = vweird.f32 %v2084
        %vm2144 = vweird.f32 %v2137
        %vm2145 = vmor %vm2143, %vm2144
        %v2146 = vsel %vm2145, %v2137, %v2142
        %v2147 = vrsqrt.pop %v2085
        %v2148 = vmul.f32 %v2147, %v2085
        %v2149 = vmul.f32 %v2148, %v2147
        %v2150 = vmul.f32 0.5, %v2149
        %v2151 = vsub.f32 1.5, %v2150
        %v2152 = vmul.f32 %v2147, %v2151
        %vm2153 = vweird.f32 %v2085
        %vm2154 = vweird.f32 %v2147
        %vm2155 = vmor %vm2153, %vm2154
        %v2156 = vsel %vm2155, %v2147, %v2152
        %v2157 = vrsqrt.pop %v2086
        %v2158 = vmul.f32 %v2157, %v2086
        %v2159 = vmul.f32 %v2158, %v2157
        %v2160 = vmul.f32 0.5, %v2159
        %v2161 = vsub.f32 1.5, %v2160
        %v2162 = vmul.f32 %v2157, %v2161
        %vm2163 = vweird.f32 %v2086
        %vm2164 = vweird.f32 %v2157
        %vm2165 = vmor %vm2163, %vm2164
        %v2166 = vsel %vm2165, %v2157, %v2162
        %v2167 = vmul.f32 %v513, %v2096
        %v2168 = vmul.f32 %v515, %v2106
        %v2169 = vmul.f32 %v518, %v2116
        %v2170 = vmul.f32 %v520, %v2126
        %v2171 = vmul.f32 %v523, %v2136
        %v2172 = vmul.f32 %v525, %v2146
        %v2173 = vmul.f32 %v528, %v2156
        %v2174 = vmul.f32 %v530, %v2166
        %s2175 = sld [smem:[#allocation2 + $0x2]]
        %v2176 = vstv %s2175
        %v2177 = vmul.f32 %v2023, %v2176
        %v2178 = vmul.f32 %v2024, %v2176
        %v2179 = vmul.f32 %v2025, %v2176
        %v2180 = vmul.f32 %v2026, %v2176
        %v2181 = vmul.f32 %v2027, %v2176
        %v2182 = vmul.f32 %v2028, %v2176
        %v2183 = vmul.f32 %v2029, %v2176
        %v2184 = vmul.f32 %v2030, %v2176
        %s2185 = scalar_lea.vmem %s6, 128
        %v2186 = vld [vmem:[%s2185] sm:$0xff]
        %v2187 = vld [vmem:[%s2185 + $0x8] sm:$0xff]
        %v2188 = vld [vmem:[%s2185 + $0x10] sm:$0xff]
        %v2189 = vld [vmem:[%s2185 + $0x18] sm:$0xff]
        %v2190 = vld [vmem:[%s2185 + $0x20] sm:$0xff]
        %v2191 = vld [vmem:[%s2185 + $0x28] sm:$0xff]
        %v2192 = vld [vmem:[%s2185 + $0x30] sm:$0xff]
        %v2193 = vld [vmem:[%s2185 + $0x38] sm:$0xff]
        %2196 = vrot.lane.b32.xlu0 %v2177, 112
        %v2197 = vpop.permute.xlu0 %2196
        %2198 = vrot.lane.b32.xlu0 %v2178, 112
        %v2199 = vpop.permute.xlu0 %2198
        %2202 = vrot.lane.b32.xlu0 %v2167, 80
        %v2203 = vpop.permute.xlu0 %2202
        %2204 = vrot.lane.b32.xlu0 %v2168, 80
        %v2205 = vpop.permute.xlu0 %2204
        %v2206 = vsel %vm540, %v2197, 0
        %v2208 = vsel %vm540, %v2199, 0
        %v2210 = vsel %vm540, %v2203, 0
        %v2212 = vsel %vm540, %v2205, 0
        %2214 = vmatpush.xpose.msra.mxu0 0.0
        %2215 = vmatpush.xpose.msra.mxu0 0.0
        %2216 = vmatpush.xpose.msra.mxu0 0.0
        %2217 = vmatpush.xpose.msra.mxu0 0.0
        %2218 = vmatpush.xpose.msra.mxu0 0.0
        %2219 = vmatpush.xpose.msra.mxu0 0.0
        %2220 = vmatpush.xpose.msra.mxu0 0.0
        %2221 = vmatpush.xpose.msra.mxu0 0.0
        %2222 = vmatpush.xpose.msra.mxu0 0.0
        %2223 = vmatpush.xpose.msra.mxu0 0.0
        %2224 = vmatpush.xpose.msra.mxu0 0.0
        %2225 = vmatpush.xpose.msra.mxu0 0.0
        %2226 = vmatpush.xpose.msra.mxu0 0.0
        %2227 = vmatpush.xpose.msra.mxu0 0.0
        %2228 = vmatpush.xpose.msra.mxu0 %v2212
        %2229 = vmatpush.xpose.msra.mxu0 %v2210
        %2230 = vmatmul.f32.gmra.mxu0 %v2206
        %v2231 = vpop.f32.mrf.mxu0
        %v2232 = vadd.f32 %v2186, %v2231
        %2233 = vmatmul.f32.gmra.mxu0 %v2208
        %v2234 = vpop.f32.mrf.mxu0
        %v2235 = vadd.f32 %v2187, %v2234
        %2236 = vdwg.mxu0
        %2239 = vrot.lane.b32.xlu0 %v2179, 112
        %v2240 = vpop.permute.xlu0 %2239
        %2241 = vrot.lane.b32.xlu0 %v2180, 112
        %v2242 = vpop.permute.xlu0 %2241
        %2245 = vrot.lane.b32.xlu0 %v2169, 80
        %v2246 = vpop.permute.xlu0 %2245
        %2247 = vrot.lane.b32.xlu0 %v2170, 80
        %v2248 = vpop.permute.xlu0 %2247
        %v2249 = vsel %vm540, %v2240, 0
        %v2251 = vsel %vm540, %v2242, 0
        %v2253 = vsel %vm540, %v2246, 0
        %v2255 = vsel %vm540, %v2248, 0
        %2257 = vmatpush.xpose.msra.mxu0 0.0
        %2258 = vmatpush.xpose.msra.mxu0 0.0
        %2259 = vmatpush.xpose.msra.mxu0 0.0
        %2260 = vmatpush.xpose.msra.mxu0 0.0
        %2261 = vmatpush.xpose.msra.mxu0 0.0
        %2262 = vmatpush.xpose.msra.mxu0 0.0
        %2263 = vmatpush.xpose.msra.mxu0 0.0
        %2264 = vmatpush.xpose.msra.mxu0 0.0
        %2265 = vmatpush.xpose.msra.mxu0 0.0
        %2266 = vmatpush.xpose.msra.mxu0 0.0
        %2267 = vmatpush.xpose.msra.mxu0 0.0
        %2268 = vmatpush.xpose.msra.mxu0 0.0
        %2269 = vmatpush.xpose.msra.mxu0 0.0
        %2270 = vmatpush.xpose.msra.mxu0 0.0
        %2271 = vmatpush.xpose.msra.mxu0 %v2255
        %2272 = vmatpush.xpose.msra.mxu0 %v2253
        %2273 = vmatmul.f32.gmra.mxu0 %v2249
        %v2274 = vpop.f32.mrf.mxu0
        %v2275 = vadd.f32 %v2188, %v2274
        %2276 = vmatmul.f32.gmra.mxu0 %v2251
        %v2277 = vpop.f32.mrf.mxu0
        %v2278 = vadd.f32 %v2189, %v2277
        %2279 = vdwg.mxu0
        %2282 = vrot.lane.b32.xlu0 %v2181, 112
        %v2283 = vpop.permute.xlu0 %2282
        %2284 = vrot.lane.b32.xlu0 %v2182, 112
        %v2285 = vpop.permute.xlu0 %2284
        %2288 = vrot.lane.b32.xlu0 %v2171, 80
        %v2289 = vpop.permute.xlu0 %2288
        %2290 = vrot.lane.b32.xlu0 %v2172, 80
        %v2291 = vpop.permute.xlu0 %2290
        %v2292 = vsel %vm540, %v2283, 0
        %v2294 = vsel %vm540, %v2285, 0
        %v2296 = vsel %vm540, %v2289, 0
        %v2298 = vsel %vm540, %v2291, 0
        %2300 = vmatpush.xpose.msra.mxu0 0.0
        %2301 = vmatpush.xpose.msra.mxu0 0.0
        %2302 = vmatpush.xpose.msra.mxu0 0.0
        %2303 = vmatpush.xpose.msra.mxu0 0.0
        %2304 = vmatpush.xpose.msra.mxu0 0.0
        %2305 = vmatpush.xpose.msra.mxu0 0.0
        %2306 = vmatpush.xpose.msra.mxu0 0.0
        %2307 = vmatpush.xpose.msra.mxu0 0.0
        %2308 = vmatpush.xpose.msra.mxu0 0.0
        %2309 = vmatpush.xpose.msra.mxu0 0.0
        %2310 = vmatpush.xpose.msra.mxu0 0.0
        %2311 = vmatpush.xpose.msra.mxu0 0.0
        %2312 = vmatpush.xpose.msra.mxu0 0.0
        %2313 = vmatpush.xpose.msra.mxu0 0.0
        %2314 = vmatpush.xpose.msra.mxu0 %v2298
        %2315 = vmatpush.xpose.msra.mxu0 %v2296
        %2316 = vmatmul.f32.gmra.mxu0 %v2292
        %v2317 = vpop.f32.mrf.mxu0
        %v2318 = vadd.f32 %v2190, %v2317
        %2319 = vmatmul.f32.gmra.mxu0 %v2294
        %v2320 = vpop.f32.mrf.mxu0
        %v2321 = vadd.f32 %v2191, %v2320
        %2322 = vdwg.mxu0
        %2325 = vrot.lane.b32.xlu0 %v2183, 112
        %v2326 = vpop.permute.xlu0 %2325
        %2327 = vrot.lane.b32.xlu0 %v2184, 112
        %v2328 = vpop.permute.xlu0 %2327
        %2331 = vrot.lane.b32.xlu0 %v2173, 80
        %v2332 = vpop.permute.xlu0 %2331
        %2333 = vrot.lane.b32.xlu0 %v2174, 80
        %v2334 = vpop.permute.xlu0 %2333
        %v2335 = vsel %vm540, %v2326, 0
        %v2337 = vsel %vm540, %v2328, 0
        %v2339 = vsel %vm540, %v2332, 0
        %v2341 = vsel %vm540, %v2334, 0
        %2343 = vmatpush.xpose.msra.mxu0 0.0
        %2344 = vmatpush.xpose.msra.mxu0 0.0
        %2345 = vmatpush.xpose.msra.mxu0 0.0
        %2346 = vmatpush.xpose.msra.mxu0 0.0
        %2347 = vmatpush.xpose.msra.mxu0 0.0
        %2348 = vmatpush.xpose.msra.mxu0 0.0
        %2349 = vmatpush.xpose.msra.mxu0 0.0
        %2350 = vmatpush.xpose.msra.mxu0 0.0
        %2351 = vmatpush.xpose.msra.mxu0 0.0
        %2352 = vmatpush.xpose.msra.mxu0 0.0
        %2353 = vmatpush.xpose.msra.mxu0 0.0
        %2354 = vmatpush.xpose.msra.mxu0 0.0
        %2355 = vmatpush.xpose.msra.mxu0 0.0
        %2356 = vmatpush.xpose.msra.mxu0 0.0
        %2357 = vmatpush.xpose.msra.mxu0 %v2341
        %2358 = vmatpush.xpose.msra.mxu0 %v2339
        %2359 = vmatmul.f32.gmra.mxu0 %v2335
        %v2360 = vpop.f32.mrf.mxu0
        %v2361 = vadd.f32 %v2192, %v2360
        %2362 = vmatmul.f32.gmra.mxu0 %v2337
        %v2363 = vpop.f32.mrf.mxu0
        %v2364 = vadd.f32 %v2193, %v2363
        %2365 = vdwg.mxu0
        %v2366 = vsel %vm987, %v2232, -inf
        %2367 = vmax.xlane.f32.xlu0 %v2366
        %v2368 = vpop.xlane.xlu0 %2367
        %v2369 = vsel %vm987, %v2235, -inf
        %2370 = vmax.xlane.f32.xlu0 %v2369
        %v2371 = vpop.xlane.xlu0 %2370
        %v2372 = vsel %vm987, %v2275, -inf
        %2373 = vmax.xlane.f32.xlu0 %v2372
        %v2374 = vpop.xlane.xlu0 %2373
        %v2375 = vsel %vm987, %v2278, -inf
        %2376 = vmax.xlane.f32.xlu0 %v2375
        %v2377 = vpop.xlane.xlu0 %2376
        %v2378 = vsel %vm987, %v2318, -inf
        %2379 = vmax.xlane.f32.xlu0 %v2378
        %v2380 = vpop.xlane.xlu0 %2379
        %v2381 = vsel %vm987, %v2321, -inf
        %2382 = vmax.xlane.f32.xlu0 %v2381
        %v2383 = vpop.xlane.xlu0 %2382
        %v2384 = vsel %vm987, %v2361, -inf
        %2385 = vmax.xlane.f32.xlu0 %v2384
        %v2386 = vpop.xlane.xlu0 %2385
        %v2387 = vsel %vm987, %v2364, -inf
        %2388 = vmax.xlane.f32.xlu0 %v2387
        %v2389 = vpop.xlane.xlu0 %2388
        %v2390 = vsub.f32 %v2232, %v2368
        %v2391 = vsub.f32 %v2235, %v2371
        %v2392 = vsub.f32 %v2275, %v2374
        %v2393 = vsub.f32 %v2278, %v2377
        %v2394 = vsub.f32 %v2318, %v2380
        %v2395 = vsub.f32 %v2321, %v2383
        %v2396 = vsub.f32 %v2361, %v2386
        %v2397 = vsub.f32 %v2364, %v2389
        %v2398 = vmul.f32 %v2390, 1.442695
        %v2399 = vpow.pop %v2398
        %v2400 = vmul.f32 %v2391, 1.442695
        %v2401 = vpow.pop %v2400
        %v2402 = vmul.f32 %v2392, 1.442695
        %v2403 = vpow.pop %v2402
        %v2404 = vmul.f32 %v2393, 1.442695
        %v2405 = vpow.pop %v2404
        %v2406 = vmul.f32 %v2394, 1.442695
        %v2407 = vpow.pop %v2406
        %v2408 = vmul.f32 %v2395, 1.442695
        %v2409 = vpow.pop %v2408
        %v2410 = vmul.f32 %v2396, 1.442695
        %v2411 = vpow.pop %v2410
        %v2412 = vmul.f32 %v2397, 1.442695
        %v2413 = vpow.pop %v2412
        %v2414 = vsel %vm987, %v2399, 0.0
        %2415 = vadd.xlane.f32.xlu0 %v2414
        %v2416 = vpop.xlane.xlu0 %2415
        %v2417 = vsel %vm987, %v2401, 0.0
        %2418 = vadd.xlane.f32.xlu0 %v2417
        %v2419 = vpop.xlane.xlu0 %2418
        %v2420 = vsel %vm987, %v2403, 0.0
        %2421 = vadd.xlane.f32.xlu0 %v2420
        %v2422 = vpop.xlane.xlu0 %2421
        %v2423 = vsel %vm987, %v2405, 0.0
        %2424 = vadd.xlane.f32.xlu0 %v2423
        %v2425 = vpop.xlane.xlu0 %2424
        %v2426 = vsel %vm987, %v2407, 0.0
        %2427 = vadd.xlane.f32.xlu0 %v2426
        %v2428 = vpop.xlane.xlu0 %2427
        %v2429 = vsel %vm987, %v2409, 0.0
        %2430 = vadd.xlane.f32.xlu0 %v2429
        %v2431 = vpop.xlane.xlu0 %2430
        %v2432 = vsel %vm987, %v2411, 0.0
        %2433 = vadd.xlane.f32.xlu0 %v2432
        %v2434 = vpop.xlane.xlu0 %2433
        %v2435 = vsel %vm987, %v2413, 0.0
        %2436 = vadd.xlane.f32.xlu0 %v2435
        %v2437 = vpop.xlane.xlu0 %2436
        %v2438 = vrcp.pop %v2416
        %v2439 = vrcp.pop %v2419
        %v2440 = vrcp.pop %v2422
        %v2441 = vrcp.pop %v2425
        %v2442 = vrcp.pop %v2428
        %v2443 = vrcp.pop %v2431
        %v2444 = vrcp.pop %v2434
        %v2445 = vrcp.pop %v2437
        %v2446 = vpack.c.bf16 %v2399, %v2399
        %v2447 = vpack.c.bf16 %v2401, %v2401
        %v2448 = vpack.c.bf16 %v2403, %v2403
        %v2449 = vpack.c.bf16 %v2405, %v2405
        %v2450 = vpack.c.bf16 %v2407, %v2407
        %v2451 = vpack.c.bf16 %v2409, %v2409
        %v2452 = vpack.c.bf16 %v2411, %v2411
        %v2453 = vpack.c.bf16 %v2413, %v2413
        %v2456 = vunpack.c.l.b16 %v2446
        %v2457 = vunpack.c.l.b16 %v2447
        %v2458 = vpack.c.b16 %v2457, %v2456
        %2459 = vrot.lane.b32.xlu0 %v1093, 48
        %v2460 = vpop.permute.xlu0 %2459
        %v2463 = vsel %vm987, %v2458, 0
        %2465 = vmatpush.bf16.msra.mxu0 0
        %2466 = vmatpush.bf16.msra.mxu0 0
        %2467 = vmatpush.bf16.msra.mxu0 0
        %2468 = vmatpush.bf16.msra.mxu0 0
        %2469 = vmatpush.bf16.msra.mxu0 0
        %2470 = vmatpush.bf16.msra.mxu0 0
        %2471 = vmatpush.bf16.msra.mxu0 0
        %2472 = vmatpush.bf16.msra.mxu0 %v2460
        %2473 = vmatmul.bf16.gmra.mxu0 %v2463
        %v2474 = vpop.f32.mrf.mxu0
        %v2475 = vadd.f32 0.0, %v2474
        %v2476 = vpop.f32.mrf.mxu0
        %v2477 = vadd.f32 0.0, %v2476
        %2478 = vdwg.mxu0
        %v2481 = vunpack.c.l.b16 %v2448
        %v2482 = vunpack.c.l.b16 %v2449
        %v2483 = vpack.c.b16 %v2482, %v2481
        %2484 = vrot.lane.b32.xlu0 %v1123, 48
        %v2485 = vpop.permute.xlu0 %2484
        %v2488 = vsel %vm987, %v2483, 0
        %2490 = vmatpush.bf16.msra.mxu0 0
        %2491 = vmatpush.bf16.msra.mxu0 0
        %2492 = vmatpush.bf16.msra.mxu0 0
        %2493 = vmatpush.bf16.msra.mxu0 0
        %2494 = vmatpush.bf16.msra.mxu0 0
        %2495 = vmatpush.bf16.msra.mxu0 0
        %2496 = vmatpush.bf16.msra.mxu0 0
        %2497 = vmatpush.bf16.msra.mxu0 %v2485
        %2498 = vmatmul.bf16.gmra.mxu0 %v2488
        %v2499 = vpop.f32.mrf.mxu0
        %v2500 = vadd.f32 0.0, %v2499
        %v2501 = vpop.f32.mrf.mxu0
        %v2502 = vadd.f32 0.0, %v2501
        %2503 = vdwg.mxu0
        %v2506 = vunpack.c.l.b16 %v2450
        %v2507 = vunpack.c.l.b16 %v2451
        %v2508 = vpack.c.b16 %v2507, %v2506
        %2509 = vrot.lane.b32.xlu0 %v1153, 48
        %v2510 = vpop.permute.xlu0 %2509
        %v2513 = vsel %vm987, %v2508, 0
        %2515 = vmatpush.bf16.msra.mxu0 0
        %2516 = vmatpush.bf16.msra.mxu0 0
        %2517 = vmatpush.bf16.msra.mxu0 0
        %2518 = vmatpush.bf16.msra.mxu0 0
        %2519 = vmatpush.bf16.msra.mxu0 0
        %2520 = vmatpush.bf16.msra.mxu0 0
        %2521 = vmatpush.bf16.msra.mxu0 0
        %2522 = vmatpush.bf16.msra.mxu0 %v2510
        %2523 = vmatmul.bf16.gmra.mxu0 %v2513
        %v2524 = vpop.f32.mrf.mxu0
        %v2525 = vadd.f32 0.0, %v2524
        %v2526 = vpop.f32.mrf.mxu0
        %v2527 = vadd.f32 0.0, %v2526
        %2528 = vdwg.mxu0
        %v2531 = vunpack.c.l.b16 %v2452
        %v2532 = vunpack.c.l.b16 %v2453
        %v2533 = vpack.c.b16 %v2532, %v2531
        %2534 = vrot.lane.b32.xlu0 %v1183, 48
        %v2535 = vpop.permute.xlu0 %2534
        %v2538 = vsel %vm987, %v2533, 0
        %2540 = vmatpush.bf16.msra.mxu0 0
        %2541 = vmatpush.bf16.msra.mxu0 0
        %2542 = vmatpush.bf16.msra.mxu0 0
        %2543 = vmatpush.bf16.msra.mxu0 0
        %2544 = vmatpush.bf16.msra.mxu0 0
        %2545 = vmatpush.bf16.msra.mxu0 0
        %2546 = vmatpush.bf16.msra.mxu0 0
        %2547 = vmatpush.bf16.msra.mxu0 %v2535
        %2548 = vmatmul.bf16.gmra.mxu0 %v2538
        %v2549 = vpop.f32.mrf.mxu0
        %v2550 = vadd.f32 0.0, %v2549
        %v2551 = vpop.f32.mrf.mxu0
        %v2552 = vadd.f32 0.0, %v2551
        %2553 = vdwg.mxu0
        %v2554 = vmul.f32 %v2475, %v2438
        %v2555 = vmul.f32 %v2477, %v2439
        %v2556 = vmul.f32 %v2500, %v2440
        %v2557 = vmul.f32 %v2502, %v2441
        %v2558 = vmul.f32 %v2525, %v2442
        %v2559 = vmul.f32 %v2527, %v2443
        %v2560 = vmul.f32 %v2550, %v2444
        %v2561 = vmul.f32 %v2552, %v2445
        %2562 = vrot.lane.b32.xlu0 %v532, 104
        %v2563 = vpop.permute.xlu0 %2562
        %2564 = vrot.lane.b32.xlu0 %v533, 104
        %v2565 = vpop.permute.xlu0 %2564
        %2566 = vrot.lane.b32.xlu0 %v534, 104
        %v2567 = vpop.permute.xlu0 %2566
        %2568 = vrot.lane.b32.xlu0 %v535, 104
        %v2569 = vpop.permute.xlu0 %2568
        %2570 = vrot.lane.b32.xlu0 %v536, 104
        %v2571 = vpop.permute.xlu0 %2570
        %2572 = vrot.lane.b32.xlu0 %v537, 104
        %v2573 = vpop.permute.xlu0 %2572
        %2574 = vrot.lane.b32.xlu0 %v538, 104
        %v2575 = vpop.permute.xlu0 %2574
        %2576 = vrot.lane.b32.xlu0 %v539, 104
        %v2577 = vpop.permute.xlu0 %2576
        %v2586 = vsel %vm540, %v2563, 0.0
        %2587 = vadd.xlane.f32.xlu0 %v2586
        %v2588 = vpop.xlane.xlu0 %2587
        %v2589 = vsel %vm540, %v2565, 0.0
        %2590 = vadd.xlane.f32.xlu0 %v2589
        %v2591 = vpop.xlane.xlu0 %2590
        %v2592 = vsel %vm540, %v2567, 0.0
        %2593 = vadd.xlane.f32.xlu0 %v2592
        %v2594 = vpop.xlane.xlu0 %2593
        %v2595 = vsel %vm540, %v2569, 0.0
        %2596 = vadd.xlane.f32.xlu0 %v2595
        %v2597 = vpop.xlane.xlu0 %2596
        %v2598 = vsel %vm540, %v2571, 0.0
        %2599 = vadd.xlane.f32.xlu0 %v2598
        %v2600 = vpop.xlane.xlu0 %2599
        %v2601 = vsel %vm540, %v2573, 0.0
        %2602 = vadd.xlane.f32.xlu0 %v2601
        %v2603 = vpop.xlane.xlu0 %2602
        %v2604 = vsel %vm540, %v2575, 0.0
        %2605 = vadd.xlane.f32.xlu0 %v2604
        %v2606 = vpop.xlane.xlu0 %2605
        %v2607 = vsel %vm540, %v2577, 0.0
        %2608 = vadd.xlane.f32.xlu0 %v2607
        %v2609 = vpop.xlane.xlu0 %2608
        %v2610 = vadd.f32 %v2588, 1e-12
        %v2611 = vadd.f32 %v2591, 1e-12
        %v2612 = vadd.f32 %v2594, 1e-12
        %v2613 = vadd.f32 %v2597, 1e-12
        %v2614 = vadd.f32 %v2600, 1e-12
        %v2615 = vadd.f32 %v2603, 1e-12
        %v2616 = vadd.f32 %v2606, 1e-12
        %v2617 = vadd.f32 %v2609, 1e-12
        %v2618 = vrsqrt.pop %v2610
        %v2619 = vmul.f32 %v2618, %v2610
        %v2620 = vmul.f32 %v2619, %v2618
        %v2621 = vmul.f32 0.5, %v2620
        %v2622 = vsub.f32 1.5, %v2621
        %v2623 = vmul.f32 %v2618, %v2622
        %vm2624 = vweird.f32 %v2610
        %vm2625 = vweird.f32 %v2618
        %vm2626 = vmor %vm2624, %vm2625
        %v2627 = vsel %vm2626, %v2618, %v2623
        %v2628 = vrsqrt.pop %v2611
        %v2629 = vmul.f32 %v2628, %v2611
        %v2630 = vmul.f32 %v2629, %v2628
        %v2631 = vmul.f32 0.5, %v2630
        %v2632 = vsub.f32 1.5, %v2631
        %v2633 = vmul.f32 %v2628, %v2632
        %vm2634 = vweird.f32 %v2611
        %vm2635 = vweird.f32 %v2628
        %vm2636 = vmor %vm2634, %vm2635
        %v2637 = vsel %vm2636, %v2628, %v2633
        %v2638 = vrsqrt.pop %v2612
        %v2639 = vmul.f32 %v2638, %v2612
        %v2640 = vmul.f32 %v2639, %v2638
        %v2641 = vmul.f32 0.5, %v2640
        %v2642 = vsub.f32 1.5, %v2641
        %v2643 = vmul.f32 %v2638, %v2642
        %vm2644 = vweird.f32 %v2612
        %vm2645 = vweird.f32 %v2638
        %vm2646 = vmor %vm2644, %vm2645
        %v2647 = vsel %vm2646, %v2638, %v2643
        %v2648 = vrsqrt.pop %v2613
        %v2649 = vmul.f32 %v2648, %v2613
        %v2650 = vmul.f32 %v2649, %v2648
        %v2651 = vmul.f32 0.5, %v2650
        %v2652 = vsub.f32 1.5, %v2651
        %v2653 = vmul.f32 %v2648, %v2652
        %vm2654 = vweird.f32 %v2613
        %vm2655 = vweird.f32 %v2648
        %vm2656 = vmor %vm2654, %vm2655
        %v2657 = vsel %vm2656, %v2648, %v2653
        %v2658 = vrsqrt.pop %v2614
        %v2659 = vmul.f32 %v2658, %v2614
        %v2660 = vmul.f32 %v2659, %v2658
        %v2661 = vmul.f32 0.5, %v2660
        %v2662 = vsub.f32 1.5, %v2661
        %v2663 = vmul.f32 %v2658, %v2662
        %vm2664 = vweird.f32 %v2614
        %vm2665 = vweird.f32 %v2658
        %vm2666 = vmor %vm2664, %vm2665
        %v2667 = vsel %vm2666, %v2658, %v2663
        %v2668 = vrsqrt.pop %v2615
        %v2669 = vmul.f32 %v2668, %v2615
        %v2670 = vmul.f32 %v2669, %v2668
        %v2671 = vmul.f32 0.5, %v2670
        %v2672 = vsub.f32 1.5, %v2671
        %v2673 = vmul.f32 %v2668, %v2672
        %vm2674 = vweird.f32 %v2615
        %vm2675 = vweird.f32 %v2668
        %vm2676 = vmor %vm2674, %vm2675
        %v2677 = vsel %vm2676, %v2668, %v2673
        %v2678 = vrsqrt.pop %v2616
        %v2679 = vmul.f32 %v2678, %v2616
        %v2680 = vmul.f32 %v2679, %v2678
        %v2681 = vmul.f32 0.5, %v2680
        %v2682 = vsub.f32 1.5, %v2681
        %v2683 = vmul.f32 %v2678, %v2682
        %vm2684 = vweird.f32 %v2616
        %vm2685 = vweird.f32 %v2678
        %vm2686 = vmor %vm2684, %vm2685
        %v2687 = vsel %vm2686, %v2678, %v2683
        %v2688 = vrsqrt.pop %v2617
        %v2689 = vmul.f32 %v2688, %v2617
        %v2690 = vmul.f32 %v2689, %v2688
        %v2691 = vmul.f32 0.5, %v2690
        %v2692 = vsub.f32 1.5, %v2691
        %v2693 = vmul.f32 %v2688, %v2692
        %vm2694 = vweird.f32 %v2617
        %vm2695 = vweird.f32 %v2688
        %vm2696 = vmor %vm2694, %vm2695
        %v2697 = vsel %vm2696, %v2688, %v2693
        %v2698 = vmul.f32 %v513, %v2627
        %v2699 = vmul.f32 %v515, %v2637
        %v2700 = vmul.f32 %v518, %v2647
        %v2701 = vmul.f32 %v520, %v2657
        %v2702 = vmul.f32 %v523, %v2667
        %v2703 = vmul.f32 %v525, %v2677
        %v2704 = vmul.f32 %v528, %v2687
        %v2705 = vmul.f32 %v530, %v2697
        %2706 = vrot.lane.b32.xlu0 %v532, 72
        %v2707 = vpop.permute.xlu0 %2706
        %2708 = vrot.lane.b32.xlu0 %v533, 72
        %v2709 = vpop.permute.xlu0 %2708
        %2710 = vrot.lane.b32.xlu0 %v534, 72
        %v2711 = vpop.permute.xlu0 %2710
        %2712 = vrot.lane.b32.xlu0 %v535, 72
        %v2713 = vpop.permute.xlu0 %2712
        %2714 = vrot.lane.b32.xlu0 %v536, 72
        %v2715 = vpop.permute.xlu0 %2714
        %2716 = vrot.lane.b32.xlu0 %v537, 72
        %v2717 = vpop.permute.xlu0 %2716
        %2718 = vrot.lane.b32.xlu0 %v538, 72
        %v2719 = vpop.permute.xlu0 %2718
        %2720 = vrot.lane.b32.xlu0 %v539, 72
        %v2721 = vpop.permute.xlu0 %2720
        %v2730 = vsel %vm540, %v2707, 0.0
        %2731 = vadd.xlane.f32.xlu0 %v2730
        %v2732 = vpop.xlane.xlu0 %2731
        %v2733 = vsel %vm540, %v2709, 0.0
        %2734 = vadd.xlane.f32.xlu0 %v2733
        %v2735 = vpop.xlane.xlu0 %2734
        %v2736 = vsel %vm540, %v2711, 0.0
        %2737 = vadd.xlane.f32.xlu0 %v2736
        %v2738 = vpop.xlane.xlu0 %2737
        %v2739 = vsel %vm540, %v2713, 0.0
        %2740 = vadd.xlane.f32.xlu0 %v2739
        %v2741 = vpop.xlane.xlu0 %2740
        %v2742 = vsel %vm540, %v2715, 0.0
        %2743 = vadd.xlane.f32.xlu0 %v2742
        %v2744 = vpop.xlane.xlu0 %2743
        %v2745 = vsel %vm540, %v2717, 0.0
        %2746 = vadd.xlane.f32.xlu0 %v2745
        %v2747 = vpop.xlane.xlu0 %2746
        %v2748 = vsel %vm540, %v2719, 0.0
        %2749 = vadd.xlane.f32.xlu0 %v2748
        %v2750 = vpop.xlane.xlu0 %2749
        %v2751 = vsel %vm540, %v2721, 0.0
        %2752 = vadd.xlane.f32.xlu0 %v2751
        %v2753 = vpop.xlane.xlu0 %2752
        %v2754 = vadd.f32 %v2732, 1e-12
        %v2755 = vadd.f32 %v2735, 1e-12
        %v2756 = vadd.f32 %v2738, 1e-12
        %v2757 = vadd.f32 %v2741, 1e-12
        %v2758 = vadd.f32 %v2744, 1e-12
        %v2759 = vadd.f32 %v2747, 1e-12
        %v2760 = vadd.f32 %v2750, 1e-12
        %v2761 = vadd.f32 %v2753, 1e-12
        %v2762 = vrsqrt.pop %v2754
        %v2763 = vmul.f32 %v2762, %v2754
        %v2764 = vmul.f32 %v2763, %v2762
        %v2765 = vmul.f32 0.5, %v2764
        %v2766 = vsub.f32 1.5, %v2765
        %v2767 = vmul.f32 %v2762, %v2766
        %vm2768 = vweird.f32 %v2754
        %vm2769 = vweird.f32 %v2762
        %vm2770 = vmor %vm2768, %vm2769
        %v2771 = vsel %vm2770, %v2762, %v2767
        %v2772 = vrsqrt.pop %v2755
        %v2773 = vmul.f32 %v2772, %v2755
        %v2774 = vmul.f32 %v2773, %v2772
        %v2775 = vmul.f32 0.5, %v2774
        %v2776 = vsub.f32 1.5, %v2775
        %v2777 = vmul.f32 %v2772, %v2776
        %vm2778 = vweird.f32 %v2755
        %vm2779 = vweird.f32 %v2772
        %vm2780 = vmor %vm2778, %vm2779
        %v2781 = vsel %vm2780, %v2772, %v2777
        %v2782 = vrsqrt.pop %v2756
        %v2783 = vmul.f32 %v2782, %v2756
        %v2784 = vmul.f32 %v2783, %v2782
        %v2785 = vmul.f32 0.5, %v2784
        %v2786 = vsub.f32 1.5, %v2785
        %v2787 = vmul.f32 %v2782, %v2786
        %vm2788 = vweird.f32 %v2756
        %vm2789 = vweird.f32 %v2782
        %vm2790 = vmor %vm2788, %vm2789
        %v2791 = vsel %vm2790, %v2782, %v2787
        %v2792 = vrsqrt.pop %v2757
        %v2793 = vmul.f32 %v2792, %v2757
        %v2794 = vmul.f32 %v2793, %v2792
        %v2795 = vmul.f32 0.5, %v2794
        %v2796 = vsub.f32 1.5, %v2795
        %v2797 = vmul.f32 %v2792, %v2796
        %vm2798 = vweird.f32 %v2757
        %vm2799 = vweird.f32 %v2792
        %vm2800 = vmor %vm2798, %vm2799
        %v2801 = vsel %vm2800, %v2792, %v2797
        %v2802 = vrsqrt.pop %v2758
        %v2803 = vmul.f32 %v2802, %v2758
        %v2804 = vmul.f32 %v2803, %v2802
        %v2805 = vmul.f32 0.5, %v2804
        %v2806 = vsub.f32 1.5, %v2805
        %v2807 = vmul.f32 %v2802, %v2806
        %vm2808 = vweird.f32 %v2758
        %vm2809 = vweird.f32 %v2802
        %vm2810 = vmor %vm2808, %vm2809
        %v2811 = vsel %vm2810, %v2802, %v2807
        %v2812 = vrsqrt.pop %v2759
        %v2813 = vmul.f32 %v2812, %v2759
        %v2814 = vmul.f32 %v2813, %v2812
        %v2815 = vmul.f32 0.5, %v2814
        %v2816 = vsub.f32 1.5, %v2815
        %v2817 = vmul.f32 %v2812, %v2816
        %vm2818 = vweird.f32 %v2759
        %vm2819 = vweird.f32 %v2812
        %vm2820 = vmor %vm2818, %vm2819
        %v2821 = vsel %vm2820, %v2812, %v2817
        %v2822 = vrsqrt.pop %v2760
        %v2823 = vmul.f32 %v2822, %v2760
        %v2824 = vmul.f32 %v2823, %v2822
        %v2825 = vmul.f32 0.5, %v2824
        %v2826 = vsub.f32 1.5, %v2825
        %v2827 = vmul.f32 %v2822, %v2826
        %vm2828 = vweird.f32 %v2760
        %vm2829 = vweird.f32 %v2822
        %vm2830 = vmor %vm2828, %vm2829
        %v2831 = vsel %vm2830, %v2822, %v2827
        %v2832 = vrsqrt.pop %v2761
        %v2833 = vmul.f32 %v2832, %v2761
        %v2834 = vmul.f32 %v2833, %v2832
        %v2835 = vmul.f32 0.5, %v2834
        %v2836 = vsub.f32 1.5, %v2835
        %v2837 = vmul.f32 %v2832, %v2836
        %vm2838 = vweird.f32 %v2761
        %vm2839 = vweird.f32 %v2832
        %vm2840 = vmor %vm2838, %vm2839
        %v2841 = vsel %vm2840, %v2832, %v2837
        %v2842 = vmul.f32 %v513, %v2771
        %v2843 = vmul.f32 %v515, %v2781
        %v2844 = vmul.f32 %v518, %v2791
        %v2845 = vmul.f32 %v520, %v2801
        %v2846 = vmul.f32 %v523, %v2811
        %v2847 = vmul.f32 %v525, %v2821
        %v2848 = vmul.f32 %v528, %v2831
        %v2849 = vmul.f32 %v530, %v2841
        %s2850 = sld [smem:[#allocation2 + $0x3]]
        %v2851 = vstv %s2850
        %v2852 = vmul.f32 %v2698, %v2851
        %v2853 = vmul.f32 %v2699, %v2851
        %v2854 = vmul.f32 %v2700, %v2851
        %v2855 = vmul.f32 %v2701, %v2851
        %v2856 = vmul.f32 %v2702, %v2851
        %v2857 = vmul.f32 %v2703, %v2851
        %v2858 = vmul.f32 %v2704, %v2851
        %v2859 = vmul.f32 %v2705, %v2851
        %s2860 = scalar_lea.vmem %s6, 192
        %v2861 = vld [vmem:[%s2860] sm:$0xff]
        %v2862 = vld [vmem:[%s2860 + $0x8] sm:$0xff]
        %v2863 = vld [vmem:[%s2860 + $0x10] sm:$0xff]
        %v2864 = vld [vmem:[%s2860 + $0x18] sm:$0xff]
        %v2865 = vld [vmem:[%s2860 + $0x20] sm:$0xff]
        %v2866 = vld [vmem:[%s2860 + $0x28] sm:$0xff]
        %v2867 = vld [vmem:[%s2860 + $0x30] sm:$0xff]
        %v2868 = vld [vmem:[%s2860 + $0x38] sm:$0xff]
        %2871 = vrot.lane.b32.xlu0 %v2852, 104
        %v2872 = vpop.permute.xlu0 %2871
        %2873 = vrot.lane.b32.xlu0 %v2853, 104
        %v2874 = vpop.permute.xlu0 %2873
        %2877 = vrot.lane.b32.xlu0 %v2842, 72
        %v2878 = vpop.permute.xlu0 %2877
        %2879 = vrot.lane.b32.xlu0 %v2843, 72
        %v2880 = vpop.permute.xlu0 %2879
        %v2881 = vsel %vm540, %v2872, 0
        %v2883 = vsel %vm540, %v2874, 0
        %v2885 = vsel %vm540, %v2878, 0
        %v2887 = vsel %vm540, %v2880, 0
        %2889 = vmatpush.xpose.msra.mxu0 0.0
        %2890 = vmatpush.xpose.msra.mxu0 0.0
        %2891 = vmatpush.xpose.msra.mxu0 0.0
        %2892 = vmatpush.xpose.msra.mxu0 0.0
        %2893 = vmatpush.xpose.msra.mxu0 0.0
        %2894 = vmatpush.xpose.msra.mxu0 0.0
        %2895 = vmatpush.xpose.msra.mxu0 0.0
        %2896 = vmatpush.xpose.msra.mxu0 0.0
        %2897 = vmatpush.xpose.msra.mxu0 0.0
        %2898 = vmatpush.xpose.msra.mxu0 0.0
        %2899 = vmatpush.xpose.msra.mxu0 0.0
        %2900 = vmatpush.xpose.msra.mxu0 0.0
        %2901 = vmatpush.xpose.msra.mxu0 0.0
        %2902 = vmatpush.xpose.msra.mxu0 0.0
        %2903 = vmatpush.xpose.msra.mxu0 %v2887
        %2904 = vmatpush.xpose.msra.mxu0 %v2885
        %2905 = vmatmul.f32.gmra.mxu0 %v2881
        %v2906 = vpop.f32.mrf.mxu0
        %v2907 = vadd.f32 %v2861, %v2906
        %2908 = vmatmul.f32.gmra.mxu0 %v2883
        %v2909 = vpop.f32.mrf.mxu0
        %v2910 = vadd.f32 %v2862, %v2909
        %2911 = vdwg.mxu0
        %2914 = vrot.lane.b32.xlu0 %v2854, 104
        %v2915 = vpop.permute.xlu0 %2914
        %2916 = vrot.lane.b32.xlu0 %v2855, 104
        %v2917 = vpop.permute.xlu0 %2916
        %2920 = vrot.lane.b32.xlu0 %v2844, 72
        %v2921 = vpop.permute.xlu0 %2920
        %2922 = vrot.lane.b32.xlu0 %v2845, 72
        %v2923 = vpop.permute.xlu0 %2922
        %v2924 = vsel %vm540, %v2915, 0
        %v2926 = vsel %vm540, %v2917, 0
        %v2928 = vsel %vm540, %v2921, 0
        %v2930 = vsel %vm540, %v2923, 0
        %2932 = vmatpush.xpose.msra.mxu0 0.0
        %2933 = vmatpush.xpose.msra.mxu0 0.0
        %2934 = vmatpush.xpose.msra.mxu0 0.0
        %2935 = vmatpush.xpose.msra.mxu0 0.0
        %2936 = vmatpush.xpose.msra.mxu0 0.0
        %2937 = vmatpush.xpose.msra.mxu0 0.0
        %2938 = vmatpush.xpose.msra.mxu0 0.0
        %2939 = vmatpush.xpose.msra.mxu0 0.0
        %2940 = vmatpush.xpose.msra.mxu0 0.0
        %2941 = vmatpush.xpose.msra.mxu0 0.0
        %2942 = vmatpush.xpose.msra.mxu0 0.0
        %2943 = vmatpush.xpose.msra.mxu0 0.0
        %2944 = vmatpush.xpose.msra.mxu0 0.0
        %2945 = vmatpush.xpose.msra.mxu0 0.0
        %2946 = vmatpush.xpose.msra.mxu0 %v2930
        %2947 = vmatpush.xpose.msra.mxu0 %v2928
        %2948 = vmatmul.f32.gmra.mxu0 %v2924
        %v2949 = vpop.f32.mrf.mxu0
        %v2950 = vadd.f32 %v2863, %v2949
        %2951 = vmatmul.f32.gmra.mxu0 %v2926
        %v2952 = vpop.f32.mrf.mxu0
        %v2953 = vadd.f32 %v2864, %v2952
        %2954 = vdwg.mxu0
        %2957 = vrot.lane.b32.xlu0 %v2856, 104
        %v2958 = vpop.permute.xlu0 %2957
        %2959 = vrot.lane.b32.xlu0 %v2857, 104
        %v2960 = vpop.permute.xlu0 %2959
        %2963 = vrot.lane.b32.xlu0 %v2846, 72
        %v2964 = vpop.permute.xlu0 %2963
        %2965 = vrot.lane.b32.xlu0 %v2847, 72
        %v2966 = vpop.permute.xlu0 %2965
        %v2967 = vsel %vm540, %v2958, 0
        %v2969 = vsel %vm540, %v2960, 0
        %v2971 = vsel %vm540, %v2964, 0
        %v2973 = vsel %vm540, %v2966, 0
        %2975 = vmatpush.xpose.msra.mxu0 0.0
        %2976 = vmatpush.xpose.msra.mxu0 0.0
        %2977 = vmatpush.xpose.msra.mxu0 0.0
        %2978 = vmatpush.xpose.msra.mxu0 0.0
        %2979 = vmatpush.xpose.msra.mxu0 0.0
        %2980 = vmatpush.xpose.msra.mxu0 0.0
        %2981 = vmatpush.xpose.msra.mxu0 0.0
        %2982 = vmatpush.xpose.msra.mxu0 0.0
        %2983 = vmatpush.xpose.msra.mxu0 0.0
        %2984 = vmatpush.xpose.msra.mxu0 0.0
        %2985 = vmatpush.xpose.msra.mxu0 0.0
        %2986 = vmatpush.xpose.msra.mxu0 0.0
        %2987 = vmatpush.xpose.msra.mxu0 0.0
        %2988 = vmatpush.xpose.msra.mxu0 0.0
        %2989 = vmatpush.xpose.msra.mxu0 %v2973
        %2990 = vmatpush.xpose.msra.mxu0 %v2971
        %2991 = vmatmul.f32.gmra.mxu0 %v2967
        %v2992 = vpop.f32.mrf.mxu0
        %v2993 = vadd.f32 %v2865, %v2992
        %2994 = vmatmul.f32.gmra.mxu0 %v2969
        %v2995 = vpop.f32.mrf.mxu0
        %v2996 = vadd.f32 %v2866, %v2995
        %2997 = vdwg.mxu0
        %3000 = vrot.lane.b32.xlu0 %v2858, 104
        %v3001 = vpop.permute.xlu0 %3000
        %3002 = vrot.lane.b32.xlu0 %v2859, 104
        %v3003 = vpop.permute.xlu0 %3002
        %3006 = vrot.lane.b32.xlu0 %v2848, 72
        %v3007 = vpop.permute.xlu0 %3006
        %3008 = vrot.lane.b32.xlu0 %v2849, 72
        %v3009 = vpop.permute.xlu0 %3008
        %v3010 = vsel %vm540, %v3001, 0
        %v3012 = vsel %vm540, %v3003, 0
        %v3014 = vsel %vm540, %v3007, 0
        %v3016 = vsel %vm540, %v3009, 0
        %3018 = vmatpush.xpose.msra.mxu0 0.0
        %3019 = vmatpush.xpose.msra.mxu0 0.0
        %3020 = vmatpush.xpose.msra.mxu0 0.0
        %3021 = vmatpush.xpose.msra.mxu0 0.0
        %3022 = vmatpush.xpose.msra.mxu0 0.0
        %3023 = vmatpush.xpose.msra.mxu0 0.0
        %3024 = vmatpush.xpose.msra.mxu0 0.0
        %3025 = vmatpush.xpose.msra.mxu0 0.0
        %3026 = vmatpush.xpose.msra.mxu0 0.0
        %3027 = vmatpush.xpose.msra.mxu0 0.0
        %3028 = vmatpush.xpose.msra.mxu0 0.0
        %3029 = vmatpush.xpose.msra.mxu0 0.0
        %3030 = vmatpush.xpose.msra.mxu0 0.0
        %3031 = vmatpush.xpose.msra.mxu0 0.0
        %3032 = vmatpush.xpose.msra.mxu0 %v3016
        %3033 = vmatpush.xpose.msra.mxu0 %v3014
        %3034 = vmatmul.f32.gmra.mxu0 %v3010
        %v3035 = vpop.f32.mrf.mxu0
        %v3036 = vadd.f32 %v2867, %v3035
        %3037 = vmatmul.f32.gmra.mxu0 %v3012
        %v3038 = vpop.f32.mrf.mxu0
        %v3039 = vadd.f32 %v2868, %v3038
        %3040 = vdwg.mxu0
        %v3041 = vsel %vm987, %v2907, -inf
        %3042 = vmax.xlane.f32.xlu0 %v3041
        %v3043 = vpop.xlane.xlu0 %3042
        %v3044 = vsel %vm987, %v2910, -inf
        %3045 = vmax.xlane.f32.xlu0 %v3044
        %v3046 = vpop.xlane.xlu0 %3045
        %v3047 = vsel %vm987, %v2950, -inf
        %3048 = vmax.xlane.f32.xlu0 %v3047
        %v3049 = vpop.xlane.xlu0 %3048
        %v3050 = vsel %vm987, %v2953, -inf
        %3051 = vmax.xlane.f32.xlu0 %v3050
        %v3052 = vpop.xlane.xlu0 %3051
        %v3053 = vsel %vm987, %v2993, -inf
        %3054 = vmax.xlane.f32.xlu0 %v3053
        %v3055 = vpop.xlane.xlu0 %3054
        %v3056 = vsel %vm987, %v2996, -inf
        %3057 = vmax.xlane.f32.xlu0 %v3056
        %v3058 = vpop.xlane.xlu0 %3057
        %v3059 = vsel %vm987, %v3036, -inf
        %3060 = vmax.xlane.f32.xlu0 %v3059
        %v3061 = vpop.xlane.xlu0 %3060
        %v3062 = vsel %vm987, %v3039, -inf
        %3063 = vmax.xlane.f32.xlu0 %v3062
        %v3064 = vpop.xlane.xlu0 %3063
        %v3065 = vsub.f32 %v2907, %v3043
        %v3066 = vsub.f32 %v2910, %v3046
        %v3067 = vsub.f32 %v2950, %v3049
        %v3068 = vsub.f32 %v2953, %v3052
        %v3069 = vsub.f32 %v2993, %v3055
        %v3070 = vsub.f32 %v2996, %v3058
        %v3071 = vsub.f32 %v3036, %v3061
        %v3072 = vsub.f32 %v3039, %v3064
        %v3073 = vmul.f32 %v3065, 1.442695
        %v3074 = vpow.pop %v3073
        %v3075 = vmul.f32 %v3066, 1.442695
        %v3076 = vpow.pop %v3075
        %v3077 = vmul.f32 %v3067, 1.442695
        %v3078 = vpow.pop %v3077
        %v3079 = vmul.f32 %v3068, 1.442695
        %v3080 = vpow.pop %v3079
        %v3081 = vmul.f32 %v3069, 1.442695
        %v3082 = vpow.pop %v3081
        %v3083 = vmul.f32 %v3070, 1.442695
        %v3084 = vpow.pop %v3083
        %v3085 = vmul.f32 %v3071, 1.442695
        %v3086 = vpow.pop %v3085
        %v3087 = vmul.f32 %v3072, 1.442695
        %v3088 = vpow.pop %v3087
        %v3089 = vsel %vm987, %v3074, 0.0
        %3090 = vadd.xlane.f32.xlu0 %v3089
        %v3091 = vpop.xlane.xlu0 %3090
        %v3092 = vsel %vm987, %v3076, 0.0
        %3093 = vadd.xlane.f32.xlu0 %v3092
        %v3094 = vpop.xlane.xlu0 %3093
        %v3095 = vsel %vm987, %v3078, 0.0
        %3096 = vadd.xlane.f32.xlu0 %v3095
        %v3097 = vpop.xlane.xlu0 %3096
        %v3098 = vsel %vm987, %v3080, 0.0
        %3099 = vadd.xlane.f32.xlu0 %v3098
        %v3100 = vpop.xlane.xlu0 %3099
        %v3101 = vsel %vm987, %v3082, 0.0
        %3102 = vadd.xlane.f32.xlu0 %v3101
        %v3103 = vpop.xlane.xlu0 %3102
        %v3104 = vsel %vm987, %v3084, 0.0
        %3105 = vadd.xlane.f32.xlu0 %v3104
        %v3106 = vpop.xlane.xlu0 %3105
        %v3107 = vsel %vm987, %v3086, 0.0
        %3108 = vadd.xlane.f32.xlu0 %v3107
        %v3109 = vpop.xlane.xlu0 %3108
        %v3110 = vsel %vm987, %v3088, 0.0
        %3111 = vadd.xlane.f32.xlu0 %v3110
        %v3112 = vpop.xlane.xlu0 %3111
        %v3113 = vrcp.pop %v3091
        %v3114 = vrcp.pop %v3094
        %v3115 = vrcp.pop %v3097
        %v3116 = vrcp.pop %v3100
        %v3117 = vrcp.pop %v3103
        %v3118 = vrcp.pop %v3106
        %v3119 = vrcp.pop %v3109
        %v3120 = vrcp.pop %v3112
        %v3121 = vpack.c.bf16 %v3074, %v3074
        %v3122 = vpack.c.bf16 %v3076, %v3076
        %v3123 = vpack.c.bf16 %v3078, %v3078
        %v3124 = vpack.c.bf16 %v3080, %v3080
        %v3125 = vpack.c.bf16 %v3082, %v3082
        %v3126 = vpack.c.bf16 %v3084, %v3084
        %v3127 = vpack.c.bf16 %v3086, %v3086
        %v3128 = vpack.c.bf16 %v3088, %v3088
        %v3131 = vunpack.c.l.b16 %v3121
        %v3132 = vunpack.c.l.b16 %v3122
        %v3133 = vpack.c.b16 %v3132, %v3131
        %3134 = vrot.lane.b32.xlu0 %v1093, 40
        %v3135 = vpop.permute.xlu0 %3134
        %v3138 = vsel %vm987, %v3133, 0
        %3140 = vmatpush.bf16.msra.mxu0 0
        %3141 = vmatpush.bf16.msra.mxu0 0
        %3142 = vmatpush.bf16.msra.mxu0 0
        %3143 = vmatpush.bf16.msra.mxu0 0
        %3144 = vmatpush.bf16.msra.mxu0 0
        %3145 = vmatpush.bf16.msra.mxu0 0
        %3146 = vmatpush.bf16.msra.mxu0 0
        %3147 = vmatpush.bf16.msra.mxu0 %v3135
        %3148 = vmatmul.bf16.gmra.mxu0 %v3138
        %v3149 = vpop.f32.mrf.mxu0
        %v3150 = vadd.f32 0.0, %v3149
        %v3151 = vpop.f32.mrf.mxu0
        %v3152 = vadd.f32 0.0, %v3151
        %3153 = vdwg.mxu0
        %v3156 = vunpack.c.l.b16 %v3123
        %v3157 = vunpack.c.l.b16 %v3124
        %v3158 = vpack.c.b16 %v3157, %v3156
        %3159 = vrot.lane.b32.xlu0 %v1123, 40
        %v3160 = vpop.permute.xlu0 %3159
        %v3163 = vsel %vm987, %v3158, 0
        %3165 = vmatpush.bf16.msra.mxu0 0
        %3166 = vmatpush.bf16.msra.mxu0 0
        %3167 = vmatpush.bf16.msra.mxu0 0
        %3168 = vmatpush.bf16.msra.mxu0 0
        %3169 = vmatpush.bf16.msra.mxu0 0
        %3170 = vmatpush.bf16.msra.mxu0 0
        %3171 = vmatpush.bf16.msra.mxu0 0
        %3172 = vmatpush.bf16.msra.mxu0 %v3160
        %3173 = vmatmul.bf16.gmra.mxu0 %v3163
        %v3174 = vpop.f32.mrf.mxu0
        %v3175 = vadd.f32 0.0, %v3174
        %v3176 = vpop.f32.mrf.mxu0
        %v3177 = vadd.f32 0.0, %v3176
        %3178 = vdwg.mxu0
        %v3181 = vunpack.c.l.b16 %v3125
        %v3182 = vunpack.c.l.b16 %v3126
        %v3183 = vpack.c.b16 %v3182, %v3181
        %3184 = vrot.lane.b32.xlu0 %v1153, 40
        %v3185 = vpop.permute.xlu0 %3184
        %v3188 = vsel %vm987, %v3183, 0
        %3190 = vmatpush.bf16.msra.mxu0 0
        %3191 = vmatpush.bf16.msra.mxu0 0
        %3192 = vmatpush.bf16.msra.mxu0 0
        %3193 = vmatpush.bf16.msra.mxu0 0
        %3194 = vmatpush.bf16.msra.mxu0 0
        %3195 = vmatpush.bf16.msra.mxu0 0
        %3196 = vmatpush.bf16.msra.mxu0 0
        %3197 = vmatpush.bf16.msra.mxu0 %v3185
        %3198 = vmatmul.bf16.gmra.mxu0 %v3188
        %v3199 = vpop.f32.mrf.mxu0
        %v3200 = vadd.f32 0.0, %v3199
        %v3201 = vpop.f32.mrf.mxu0
        %v3202 = vadd.f32 0.0, %v3201
        %3203 = vdwg.mxu0
        %v3206 = vunpack.c.l.b16 %v3127
        %v3207 = vunpack.c.l.b16 %v3128
        %v3208 = vpack.c.b16 %v3207, %v3206
        %3209 = vrot.lane.b32.xlu0 %v1183, 40
        %v3210 = vpop.permute.xlu0 %3209
        %v3213 = vsel %vm987, %v3208, 0
        %3215 = vmatpush.bf16.msra.mxu0 0
        %3216 = vmatpush.bf16.msra.mxu0 0
        %3217 = vmatpush.bf16.msra.mxu0 0
        %3218 = vmatpush.bf16.msra.mxu0 0
        %3219 = vmatpush.bf16.msra.mxu0 0
        %3220 = vmatpush.bf16.msra.mxu0 0
        %3221 = vmatpush.bf16.msra.mxu0 0
        %3222 = vmatpush.bf16.msra.mxu0 %v3210
        %3223 = vmatmul.bf16.gmra.mxu0 %v3213
        %v3224 = vpop.f32.mrf.mxu0
        %v3225 = vadd.f32 0.0, %v3224
        %v3226 = vpop.f32.mrf.mxu0
        %v3227 = vadd.f32 0.0, %v3226
        %3228 = vdwg.mxu0
        %v3229 = vmul.f32 %v3150, %v3113
        %v3230 = vmul.f32 %v3152, %v3114
        %v3231 = vmul.f32 %v3175, %v3115
        %v3232 = vmul.f32 %v3177, %v3116
        %v3233 = vmul.f32 %v3200, %v3117
        %v3234 = vmul.f32 %v3202, %v3118
        %v3235 = vmul.f32 %v3225, %v3119
        %v3236 = vmul.f32 %v3227, %v3120
        %3245 = vrot.lane.b32.xlu0 %v1879, 8
        %v3246 = vpop.permute.xlu0 %3245
        %3247 = vrot.lane.b32.xlu0 %v1880, 8
        %v3248 = vpop.permute.xlu0 %3247
        %3249 = vrot.lane.b32.xlu0 %v1881, 8
        %v3250 = vpop.permute.xlu0 %3249
        %3251 = vrot.lane.b32.xlu0 %v1882, 8
        %v3252 = vpop.permute.xlu0 %3251
        %3253 = vrot.lane.b32.xlu0 %v1883, 8
        %v3254 = vpop.permute.xlu0 %3253
        %3255 = vrot.lane.b32.xlu0 %v1884, 8
        %v3256 = vpop.permute.xlu0 %3255
        %3257 = vrot.lane.b32.xlu0 %v1885, 8
        %v3258 = vpop.permute.xlu0 %3257
        %3259 = vrot.lane.b32.xlu0 %v1886, 8
        %v3260 = vpop.permute.xlu0 %3259
        %3277 = vrot.lane.b32.xlu0 %v2554, 16
        %v3278 = vpop.permute.xlu0 %3277
        %3279 = vrot.lane.b32.xlu0 %v2555, 16
        %v3280 = vpop.permute.xlu0 %3279
        %3281 = vrot.lane.b32.xlu0 %v2556, 16
        %v3282 = vpop.permute.xlu0 %3281
        %3283 = vrot.lane.b32.xlu0 %v2557, 16
        %v3284 = vpop.permute.xlu0 %3283
        %3285 = vrot.lane.b32.xlu0 %v2558, 16
        %v3286 = vpop.permute.xlu0 %3285
        %3287 = vrot.lane.b32.xlu0 %v2559, 16
        %v3288 = vpop.permute.xlu0 %3287
        %3289 = vrot.lane.b32.xlu0 %v2560, 16
        %v3290 = vpop.permute.xlu0 %3289
        %3291 = vrot.lane.b32.xlu0 %v2561, 16
        %v3292 = vpop.permute.xlu0 %3291
        %3309 = vrot.lane.b32.xlu0 %v3229, 24
        %v3310 = vpop.permute.xlu0 %3309
        %3311 = vrot.lane.b32.xlu0 %v3230, 24
        %v3312 = vpop.permute.xlu0 %3311
        %3313 = vrot.lane.b32.xlu0 %v3231, 24
        %v3314 = vpop.permute.xlu0 %3313
        %3315 = vrot.lane.b32.xlu0 %v3232, 24
        %v3316 = vpop.permute.xlu0 %3315
        %3317 = vrot.lane.b32.xlu0 %v3233, 24
        %v3318 = vpop.permute.xlu0 %3317
        %3319 = vrot.lane.b32.xlu0 %v3234, 24
        %v3320 = vpop.permute.xlu0 %3319
        %3321 = vrot.lane.b32.xlu0 %v3235, 24
        %v3322 = vpop.permute.xlu0 %3321
        %3323 = vrot.lane.b32.xlu0 %v3236, 24
        %v3324 = vpop.permute.xlu0 %3323
        %v3333 = vsel %vm540, %v1204, %v3246
        %v3334 = vsel %vm540, %v1205, %v3248
        %v3335 = vsel %vm540, %v1206, %v3250
        %v3336 = vsel %vm540, %v1207, %v3252
        %v3337 = vsel %vm540, %v1208, %v3254
        %v3338 = vsel %vm540, %v1209, %v3256
        %v3339 = vsel %vm540, %v1210, %v3258
        %v3340 = vsel %vm540, %v1211, %v3260
        %v3341 = vsel %vm987, %v3333, %v3278
        %v3342 = vsel %vm987, %v3334, %v3280
        %v3343 = vsel %vm987, %v3335, %v3282
        %v3344 = vsel %vm987, %v3336, %v3284
        %v3345 = vsel %vm987, %v3337, %v3286
        %v3346 = vsel %vm987, %v3338, %v3288
        %v3347 = vsel %vm987, %v3339, %v3290
        %v3348 = vsel %vm987, %v3340, %v3292
        %vm3349 = vcmask 195584
        %v3350 = vsel %vm3349, %v3341, %v3310
        %v3351 = vsel %vm3349, %v3342, %v3312
        %v3352 = vsel %vm3349, %v3343, %v3314
        %v3353 = vsel %vm3349, %v3344, %v3316
        %v3354 = vsel %vm3349, %v3345, %v3318
        %v3355 = vsel %vm3349, %v3346, %v3320
        %v3356 = vsel %vm3349, %v3347, %v3322
        %v3357 = vsel %vm3349, %v3348, %v3324
        %v3358 = vpack.c.bf16 %v3351, %v3350
        %v3359 = vpack.c.bf16 %v3353, %v3352
        %v3360 = vpack.c.bf16 %v3355, %v3354
        %v3361 = vpack.c.bf16 %v3357, %v3356
        %v3362 = vld [vmem:[%s3] sm:$0xf]
        %v3363 = vld [vmem:[%s3 + $0x4] sm:$0xf]
        %v3364 = vld [vmem:[%s3 + $0x8] sm:$0xf]
        %v3365 = vld [vmem:[%s3 + $0xc] sm:$0xf]
        %v3366 = vld [vmem:[%s4] sm:$0x1]
        %v3368 = vperm.slane %v3366, 0
        %v3374 = vunpack.c.l.b16 %v3362
        %v3375 = vunpack.c.l.b16 %v3363
        %v3376 = vunpack.c.l.b16 %v3364
        %v3377 = vunpack.c.l.b16 %v3365
        %v3378 = vpack.c.b16 %v3375, %v3374
        %v3379 = vpack.c.b16 %v3377, %v3376
        %v3383 = vsel %vm490, %v3358, 0
        %v3386 = vsel %vm490, %v3359, 0
        %v3389 = vsel %vm490, %v3360, 0
        %v3392 = vsel %vm490, %v3361, 0
        %3394 = vmatpush.bf16.msra.mxu0 0
        %3395 = vmatpush.bf16.msra.mxu0 0
        %3396 = vmatpush.bf16.msra.mxu0 0
        %3397 = vmatpush.bf16.msra.mxu0 0
        %3398 = vmatpush.bf16.msra.mxu0 0
        %3399 = vmatpush.bf16.msra.mxu0 0
        %3400 = vmatpush.bf16.msra.mxu0 %v3379
        %3401 = vmatpush.bf16.msra.mxu0 %v3378
        %3402 = vmatmul.bf16.gmra.mxu0 %v3383
        %v3403 = vpop.f32.mrf.mxu0
        %v3404 = vadd.f32 %v3368, %v3403
        %v3405 = vpop.f32.mrf.mxu0
        %v3406 = vadd.f32 %v3368, %v3405
        %3407 = vmatmul.bf16.gmra.mxu0 %v3386
        %v3408 = vpop.f32.mrf.mxu0
        %v3409 = vadd.f32 %v3368, %v3408
        %v3410 = vpop.f32.mrf.mxu0
        %v3411 = vadd.f32 %v3368, %v3410
        %3412 = vmatmul.bf16.gmra.mxu0 %v3389
        %v3413 = vpop.f32.mrf.mxu0
        %v3414 = vadd.f32 %v3368, %v3413
        %v3415 = vpop.f32.mrf.mxu0
        %v3416 = vadd.f32 %v3368, %v3415
        %3417 = vmatmul.bf16.gmra.mxu0 %v3392
        %v3418 = vpop.f32.mrf.mxu0
        %v3419 = vadd.f32 %v3368, %v3418
        %v3420 = vpop.f32.mrf.mxu0
        %v3421 = vadd.f32 %v3368, %v3420
        %3422 = vdwg.mxu0
        %v3423 = vsel %vm490, %v3404, 0.0
        %3424 = vadd.xlane.f32.xlu0 %v3423
        %v3425 = vpop.xlane.xlu0 %3424
        %v3426 = vsel %vm490, %v3406, 0.0
        %3427 = vadd.xlane.f32.xlu0 %v3426
        %v3428 = vpop.xlane.xlu0 %3427
        %v3429 = vsel %vm490, %v3409, 0.0
        %3430 = vadd.xlane.f32.xlu0 %v3429
        %v3431 = vpop.xlane.xlu0 %3430
        %v3432 = vsel %vm490, %v3411, 0.0
        %3433 = vadd.xlane.f32.xlu0 %v3432
        %v3434 = vpop.xlane.xlu0 %3433
        %v3435 = vsel %vm490, %v3414, 0.0
        %3436 = vadd.xlane.f32.xlu0 %v3435
        %v3437 = vpop.xlane.xlu0 %3436
        %v3438 = vsel %vm490, %v3416, 0.0
        %3439 = vadd.xlane.f32.xlu0 %v3438
        %v3440 = vpop.xlane.xlu0 %3439
        %v3441 = vsel %vm490, %v3419, 0.0
        %3442 = vadd.xlane.f32.xlu0 %v3441
        %v3443 = vpop.xlane.xlu0 %3442
        %v3444 = vsel %vm490, %v3421, 0.0
        %3445 = vadd.xlane.f32.xlu0 %v3444
        %v3446 = vpop.xlane.xlu0 %3445
        %v3447 = vrcp.pop 32.0
        %v3448 = vmul.f32 32.0, %v3447
        %v3449 = vsub.f32 1.0, %v3448
        %v3450 = vmul.f32 %v3447, %v3449
        %v3451 = vadd.f32 %v3447, %v3450
        %vm3452 = vweird.f32 %v3447
        %v3453 = vsel %vm3452, %v3447, %v3451
        %v3454 = vmul.f32 %v3425, %v3453
        %v3455 = vmul.f32 %v3428, %v3453
        %v3456 = vmul.f32 %v3431, %v3453
        %v3457 = vmul.f32 %v3434, %v3453
        %v3458 = vmul.f32 %v3437, %v3453
        %v3459 = vmul.f32 %v3440, %v3453
        %v3460 = vmul.f32 %v3443, %v3453
        %v3461 = vmul.f32 %v3446, %v3453
        %v3462 = vsub.f32 %v3404, %v3454
        %v3463 = vsub.f32 %v3406, %v3455
        %v3464 = vsub.f32 %v3409, %v3456
        %v3465 = vsub.f32 %v3411, %v3457
        %v3466 = vsub.f32 %v3414, %v3458
        %v3467 = vsub.f32 %v3416, %v3459
        %v3468 = vsub.f32 %v3419, %v3460
        %v3469 = vsub.f32 %v3421, %v3461
        %v3470 = vmul.f32 %v3462, %v3462
        %v3471 = vmul.f32 %v3463, %v3463
        %v3472 = vmul.f32 %v3464, %v3464
        %v3473 = vmul.f32 %v3465, %v3465
        %v3474 = vmul.f32 %v3466, %v3466
        %v3475 = vmul.f32 %v3467, %v3467
        %v3476 = vmul.f32 %v3468, %v3468
        %v3477 = vmul.f32 %v3469, %v3469
        %v3478 = vsel %vm490, %v3470, 0.0
        %3479 = vadd.xlane.f32.xlu0 %v3478
        %v3480 = vpop.xlane.xlu0 %3479
        %v3481 = vsel %vm490, %v3471, 0.0
        %3482 = vadd.xlane.f32.xlu0 %v3481
        %v3483 = vpop.xlane.xlu0 %3482
        %v3484 = vsel %vm490, %v3472, 0.0
        %3485 = vadd.xlane.f32.xlu0 %v3484
        %v3486 = vpop.xlane.xlu0 %3485
        %v3487 = vsel %vm490, %v3473, 0.0
        %3488 = vadd.xlane.f32.xlu0 %v3487
        %v3489 = vpop.xlane.xlu0 %3488
        %v3490 = vsel %vm490, %v3474, 0.0
        %3491 = vadd.xlane.f32.xlu0 %v3490
        %v3492 = vpop.xlane.xlu0 %3491
        %v3493 = vsel %vm490, %v3475, 0.0
        %3494 = vadd.xlane.f32.xlu0 %v3493
        %v3495 = vpop.xlane.xlu0 %3494
        %v3496 = vsel %vm490, %v3476, 0.0
        %3497 = vadd.xlane.f32.xlu0 %v3496
        %v3498 = vpop.xlane.xlu0 %3497
        %v3499 = vsel %vm490, %v3477, 0.0
        %3500 = vadd.xlane.f32.xlu0 %v3499
        %v3501 = vpop.xlane.xlu0 %3500
        %v3502 = vmul.f32 %v3480, %v3453
        %v3503 = vmul.f32 %v3483, %v3453
        %v3504 = vmul.f32 %v3486, %v3453
        %v3505 = vmul.f32 %v3489, %v3453
        %v3506 = vmul.f32 %v3492, %v3453
        %v3507 = vmul.f32 %v3495, %v3453
        %v3508 = vmul.f32 %v3498, %v3453
        %v3509 = vmul.f32 %v3501, %v3453
        %v3510 = vadd.f32 %v3502, 1e-05
        %v3511 = vadd.f32 %v3503, 1e-05
        %v3512 = vadd.f32 %v3504, 1e-05
        %v3513 = vadd.f32 %v3505, 1e-05
        %v3514 = vadd.f32 %v3506, 1e-05
        %v3515 = vadd.f32 %v3507, 1e-05
        %v3516 = vadd.f32 %v3508, 1e-05
        %v3517 = vadd.f32 %v3509, 1e-05
        %v3518 = vrsqrt.pop %v3510
        %v3519 = vmul.f32 %v3518, %v3510
        %v3520 = vmul.f32 %v3519, %v3518
        %v3521 = vmul.f32 0.5, %v3520
        %v3522 = vsub.f32 1.5, %v3521
        %v3523 = vmul.f32 %v3518, %v3522
        %vm3524 = vweird.f32 %v3510
        %vm3525 = vweird.f32 %v3518
        %vm3526 = vmor %vm3524, %vm3525
        %v3527 = vsel %vm3526, %v3518, %v3523
        %v3528 = vrsqrt.pop %v3511
        %v3529 = vmul.f32 %v3528, %v3511
        %v3530 = vmul.f32 %v3529, %v3528
        %v3531 = vmul.f32 0.5, %v3530
        %v3532 = vsub.f32 1.5, %v3531
        %v3533 = vmul.f32 %v3528, %v3532
        %vm3534 = vweird.f32 %v3511
        %vm3535 = vweird.f32 %v3528
        %vm3536 = vmor %vm3534, %vm3535
        %v3537 = vsel %vm3536, %v3528, %v3533
        %v3538 = vrsqrt.pop %v3512
        %v3539 = vmul.f32 %v3538, %v3512
        %v3540 = vmul.f32 %v3539, %v3538
        %v3541 = vmul.f32 0.5, %v3540
        %v3542 = vsub.f32 1.5, %v3541
        %v3543 = vmul.f32 %v3538, %v3542
        %vm3544 = vweird.f32 %v3512
        %vm3545 = vweird.f32 %v3538
        %vm3546 = vmor %vm3544, %vm3545
        %v3547 = vsel %vm3546, %v3538, %v3543
        %v3548 = vrsqrt.pop %v3513
        %v3549 = vmul.f32 %v3548, %v3513
        %v3550 = vmul.f32 %v3549, %v3548
        %v3551 = vmul.f32 0.5, %v3550
        %v3552 = vsub.f32 1.5, %v3551
        %v3553 = vmul.f32 %v3548, %v3552
        %vm3554 = vweird.f32 %v3513
        %vm3555 = vweird.f32 %v3548
        %vm3556 = vmor %vm3554, %vm3555
        %v3557 = vsel %vm3556, %v3548, %v3553
        %v3558 = vrsqrt.pop %v3514
        %v3559 = vmul.f32 %v3558, %v3514
        %v3560 = vmul.f32 %v3559, %v3558
        %v3561 = vmul.f32 0.5, %v3560
        %v3562 = vsub.f32 1.5, %v3561
        %v3563 = vmul.f32 %v3558, %v3562
        %vm3564 = vweird.f32 %v3514
        %vm3565 = vweird.f32 %v3558
        %vm3566 = vmor %vm3564, %vm3565
        %v3567 = vsel %vm3566, %v3558, %v3563
        %v3568 = vrsqrt.pop %v3515
        %v3569 = vmul.f32 %v3568, %v3515
        %v3570 = vmul.f32 %v3569, %v3568
        %v3571 = vmul.f32 0.5, %v3570
        %v3572 = vsub.f32 1.5, %v3571
        %v3573 = vmul.f32 %v3568, %v3572
        %vm3574 = vweird.f32 %v3515
        %vm3575 = vweird.f32 %v3568
        %vm3576 = vmor %vm3574, %vm3575
        %v3577 = vsel %vm3576, %v3568, %v3573
        %v3578 = vrsqrt.pop %v3516
        %v3579 = vmul.f32 %v3578, %v3516
        %v3580 = vmul.f32 %v3579, %v3578
        %v3581 = vmul.f32 0.5, %v3580
        %v3582 = vsub.f32 1.5, %v3581
        %v3583 = vmul.f32 %v3578, %v3582
        %vm3584 = vweird.f32 %v3516
        %vm3585 = vweird.f32 %v3578
        %vm3586 = vmor %vm3584, %vm3585
        %v3587 = vsel %vm3586, %v3578, %v3583
        %v3588 = vrsqrt.pop %v3517
        %v3589 = vmul.f32 %v3588, %v3517
        %v3590 = vmul.f32 %v3589, %v3588
        %v3591 = vmul.f32 0.5, %v3590
        %v3592 = vsub.f32 1.5, %v3591
        %v3593 = vmul.f32 %v3588, %v3592
        %vm3594 = vweird.f32 %v3517
        %vm3595 = vweird.f32 %v3588
        %vm3596 = vmor %vm3594, %vm3595
        %v3597 = vsel %vm3596, %v3588, %v3593
        %v3598 = vmul.f32 %v3462, %v3527
        %v3599 = vmul.f32 %v3463, %v3537
        %v3600 = vmul.f32 %v3464, %v3547
        %v3601 = vmul.f32 %v3465, %v3557
        %v3602 = vmul.f32 %v3466, %v3567
        %v3603 = vmul.f32 %v3467, %v3577
        %v3604 = vmul.f32 %v3468, %v3587
        %v3605 = vmul.f32 %v3469, %v3597
        %v3607 = vperm.slane %v468, 0
        %v3609 = vmul.f32 %v3598, %v3607
        %v3610 = vmul.f32 %v3599, %v3607
        %v3611 = vmul.f32 %v3600, %v3607
        %v3612 = vmul.f32 %v3601, %v3607
        %v3613 = vmul.f32 %v3602, %v3607
        %v3614 = vmul.f32 %v3603, %v3607
        %v3615 = vmul.f32 %v3604, %v3607
        %v3616 = vmul.f32 %v3605, %v3607
        %v3618 = vperm.slane %v469, 0
        %v3620 = vadd.f32 %v3609, %v3618
        %v3621 = vadd.f32 %v3610, %v3618
        %v3622 = vadd.f32 %v3611, %v3618
        %v3623 = vadd.f32 %v3612, %v3618
        %v3624 = vadd.f32 %v3613, %v3618
        %v3625 = vadd.f32 %v3614, %v3618
        %v3626 = vadd.f32 %v3615, %v3618
        %v3627 = vadd.f32 %v3616, %v3618
        %v3628 = vadd.f32 %v456, %v3620
        %v3629 = vadd.f32 %v457, %v3621
        %v3630 = vadd.f32 %v458, %v3622
        %v3631 = vadd.f32 %v459, %v3623
        %v3632 = vadd.f32 %v460, %v3624
        %v3633 = vadd.f32 %v461, %v3625
        %v3634 = vadd.f32 %v462, %v3626
        %v3635 = vadd.f32 %v463, %v3627
        %v3636 = vpack.c.bf16 %v3629, %v3628
        %v3637 = vpack.c.bf16 %v3631, %v3630
        %v3638 = vpack.c.bf16 %v3633, %v3632
        %v3639 = vpack.c.bf16 %v3635, %v3634
        %v3640 = vld [vmem:[%s9] sm:$0xf]
        %v3641 = vld [vmem:[%s9 + $0x4] sm:$0xf]
        %v3642 = vld [vmem:[%s9 + $0x8] sm:$0xf]
        %v3643 = vld [vmem:[%s9 + $0xc] sm:$0xf]
        %v3644 = vld [vmem:[%s10] sm:$0x1]
        %v3646 = vperm.slane %v3644, 0
        %v3652 = vunpack.c.l.b16 %v3640
        %v3653 = vunpack.c.l.b16 %v3641
        %v3654 = vunpack.c.l.b16 %v3642
        %v3655 = vunpack.c.l.b16 %v3643
        %v3656 = vpack.c.b16 %v3653, %v3652
        %v3657 = vpack.c.b16 %v3655, %v3654
        %v3661 = vsel %vm490, %v3636, 0
        %v3664 = vsel %vm490, %v3637, 0
        %v3667 = vsel %vm490, %v3638, 0
        %v3670 = vsel %vm490, %v3639, 0
        %3672 = vmatpush.bf16.msra.mxu0 0
        %3673 = vmatpush.bf16.msra.mxu0 0
        %3674 = vmatpush.bf16.msra.mxu0 0
        %3675 = vmatpush.bf16.msra.mxu0 0
        %3676 = vmatpush.bf16.msra.mxu0 0
        %3677 = vmatpush.bf16.msra.mxu0 0
        %3678 = vmatpush.bf16.msra.mxu0 %v3657
        %3679 = vmatpush.bf16.msra.mxu0 %v3656
        %3680 = vmatmul.bf16.gmra.mxu0 %v3661
        %v3681 = vpop.f32.mrf.mxu0
        %v3682 = vadd.f32 %v3646, %v3681
        %v3683 = vpop.f32.mrf.mxu0
        %v3684 = vadd.f32 %v3646, %v3683
        %3685 = vmatmul.bf16.gmra.mxu0 %v3664
        %v3686 = vpop.f32.mrf.mxu0
        %v3687 = vadd.f32 %v3646, %v3686
        %v3688 = vpop.f32.mrf.mxu0
        %v3689 = vadd.f32 %v3646, %v3688
        %3690 = vmatmul.bf16.gmra.mxu0 %v3667
        %v3691 = vpop.f32.mrf.mxu0
        %v3692 = vadd.f32 %v3646, %v3691
        %v3693 = vpop.f32.mrf.mxu0
        %v3694 = vadd.f32 %v3646, %v3693
        %3695 = vmatmul.bf16.gmra.mxu0 %v3670
        %v3696 = vpop.f32.mrf.mxu0
        %v3697 = vadd.f32 %v3646, %v3696
        %v3698 = vpop.f32.mrf.mxu0
        %v3699 = vadd.f32 %v3646, %v3698
        %3700 = vdwg.mxu0
        %v3701 = vmul.f32 %v3682, %v3682
        %v3702 = vmul.f32 %v3684, %v3684
        %v3703 = vmul.f32 %v3687, %v3687
        %v3704 = vmul.f32 %v3689, %v3689
        %v3705 = vmul.f32 %v3692, %v3692
        %v3706 = vmul.f32 %v3694, %v3694
        %v3707 = vmul.f32 %v3697, %v3697
        %v3708 = vmul.f32 %v3699, %v3699
        %v3709 = vmul.f32 %v3682, %v3701
        %v3710 = vmul.f32 %v3684, %v3702
        %v3711 = vmul.f32 %v3687, %v3703
        %v3712 = vmul.f32 %v3689, %v3704
        %v3713 = vmul.f32 %v3692, %v3705
        %v3714 = vmul.f32 %v3694, %v3706
        %v3715 = vmul.f32 %v3697, %v3707
        %v3716 = vmul.f32 %v3699, %v3708
        %v3717 = vmul.f32 %v3709, 0.044715
        %v3718 = vmul.f32 %v3710, 0.044715
        %v3719 = vmul.f32 %v3711, 0.044715
        %v3720 = vmul.f32 %v3712, 0.044715
        %v3721 = vmul.f32 %v3713, 0.044715
        %v3722 = vmul.f32 %v3714, 0.044715
        %v3723 = vmul.f32 %v3715, 0.044715
        %v3724 = vmul.f32 %v3716, 0.044715
        %v3725 = vadd.f32 %v3682, %v3717
        %v3726 = vadd.f32 %v3684, %v3718
        %v3727 = vadd.f32 %v3687, %v3719
        %v3728 = vadd.f32 %v3689, %v3720
        %v3729 = vadd.f32 %v3692, %v3721
        %v3730 = vadd.f32 %v3694, %v3722
        %v3731 = vadd.f32 %v3697, %v3723
        %v3732 = vadd.f32 %v3699, %v3724
        %v3733 = vmul.f32 %v3725, 0.7978846
        %v3734 = vmul.f32 %v3726, 0.7978846
        %v3735 = vmul.f32 %v3727, 0.7978846
        %v3736 = vmul.f32 %v3728, 0.7978846
        %v3737 = vmul.f32 %v3729, 0.7978846
        %v3738 = vmul.f32 %v3730, 0.7978846
        %v3739 = vmul.f32 %v3731, 0.7978846
        %v3740 = vmul.f32 %v3732, 0.7978846
        %v3741 = vtanh.pop %v3733
        %v3742 = vtanh.pop %v3734
        %v3743 = vtanh.pop %v3735
        %v3744 = vtanh.pop %v3736
        %v3745 = vtanh.pop %v3737
        %v3746 = vtanh.pop %v3738
        %v3747 = vtanh.pop %v3739
        %v3748 = vtanh.pop %v3740
        %v3749 = vadd.f32 %v3741, 1.0
        %v3750 = vadd.f32 %v3742, 1.0
        %v3751 = vadd.f32 %v3743, 1.0
        %v3752 = vadd.f32 %v3744, 1.0
        %v3753 = vadd.f32 %v3745, 1.0
        %v3754 = vadd.f32 %v3746, 1.0
        %v3755 = vadd.f32 %v3747, 1.0
        %v3756 = vadd.f32 %v3748, 1.0
        %v3757 = vmul.f32 %v3749, 0.5
        %v3758 = vmul.f32 %v3750, 0.5
        %v3759 = vmul.f32 %v3751, 0.5
        %v3760 = vmul.f32 %v3752, 0.5
        %v3761 = vmul.f32 %v3753, 0.5
        %v3762 = vmul.f32 %v3754, 0.5
        %v3763 = vmul.f32 %v3755, 0.5
        %v3764 = vmul.f32 %v3756, 0.5
        %v3765 = vmul.f32 %v3682, %v3757
        %v3766 = vmul.f32 %v3684, %v3758
        %v3767 = vmul.f32 %v3687, %v3759
        %v3768 = vmul.f32 %v3689, %v3760
        %v3769 = vmul.f32 %v3692, %v3761
        %v3770 = vmul.f32 %v3694, %v3762
        %v3771 = vmul.f32 %v3697, %v3763
        %v3772 = vmul.f32 %v3699, %v3764
        %v3773 = vpack.c.bf16 %v3766, %v3765
        %v3774 = vpack.c.bf16 %v3768, %v3767
        %v3775 = vpack.c.bf16 %v3770, %v3769
        %v3776 = vpack.c.bf16 %v3772, %v3771
        %v3777 = vld [vmem:[%s11] sm:$0xf]
        %v3778 = vld [vmem:[%s11 + $0x4] sm:$0xf]
        %v3779 = vld [vmem:[%s11 + $0x8] sm:$0xf]
        %v3780 = vld [vmem:[%s11 + $0xc] sm:$0xf]
        %v3781 = vld [vmem:[%s11 + $0x10] sm:$0xf]
        %v3782 = vld [vmem:[%s11 + $0x14] sm:$0xf]
        %v3783 = vld [vmem:[%s11 + $0x18] sm:$0xf]
        %v3784 = vld [vmem:[%s11 + $0x1c] sm:$0xf]
        %v3785 = vld [vmem:[%s11 + $0x20] sm:$0xf]
        %v3786 = vld [vmem:[%s11 + $0x24] sm:$0xf]
        %v3787 = vld [vmem:[%s11 + $0x28] sm:$0xf]
        %v3788 = vld [vmem:[%s11 + $0x2c] sm:$0xf]
        %v3789 = vld [vmem:[%s11 + $0x30] sm:$0xf]
        %v3790 = vld [vmem:[%s11 + $0x34] sm:$0xf]
        %v3791 = vld [vmem:[%s11 + $0x38] sm:$0xf]
        %v3792 = vld [vmem:[%s11 + $0x3c] sm:$0xf]
        %v3793 = vld [vmem:[%s12] sm:$0x1]
        %v3795 = vperm.slane %v3793, 0
        %v3813 = vunpack.c.l.b16 %v3777
        %v3814 = vunpack.c.l.b16 %v3778
        %v3815 = vunpack.c.l.b16 %v3779
        %v3816 = vunpack.c.l.b16 %v3780
        %v3817 = vunpack.c.l.b16 %v3781
        %v3818 = vunpack.c.l.b16 %v3782
        %v3819 = vunpack.c.l.b16 %v3783
        %v3820 = vunpack.c.l.b16 %v3784
        %v3821 = vunpack.c.l.b16 %v3785
        %v3822 = vunpack.c.l.b16 %v3786
        %v3823 = vunpack.c.l.b16 %v3787
        %v3824 = vunpack.c.l.b16 %v3788
        %v3825 = vunpack.c.l.b16 %v3789
        %v3826 = vunpack.c.l.b16 %v3790
        %v3827 = vunpack.c.l.b16 %v3791
        %v3828 = vunpack.c.l.b16 %v3792
        %v3829 = vpack.c.b16 %v3814, %v3813
        %v3830 = vpack.c.b16 %v3816, %v3815
        %v3831 = vpack.c.b16 %v3818, %v3817
        %v3832 = vpack.c.b16 %v3820, %v3819
        %v3833 = vpack.c.b16 %v3822, %v3821
        %v3834 = vpack.c.b16 %v3824, %v3823
        %v3835 = vpack.c.b16 %v3826, %v3825
        %v3836 = vpack.c.b16 %v3828, %v3827
        %3845 = vmatpush.bf16.msra.mxu0 %v3836
        %3846 = vmatpush.bf16.msra.mxu0 %v3835
        %3847 = vmatpush.bf16.msra.mxu0 %v3834
        %3848 = vmatpush.bf16.msra.mxu0 %v3833
        %3849 = vmatpush.bf16.msra.mxu0 %v3832
        %3850 = vmatpush.bf16.msra.mxu0 %v3831
        %3851 = vmatpush.bf16.msra.mxu0 %v3830
        %3852 = vmatpush.bf16.msra.mxu0 %v3829
        %3853 = vmatmul.bf16.gmra.mxu0 %v3773
        %v3854 = vpop.f32.mrf.mxu0
        %v3855 = vadd.f32 %v3795, %v3854
        %v3856 = vpop.f32.mrf.mxu0
        %v3857 = vadd.f32 %v3795, %v3856
        %3858 = vmatmul.bf16.gmra.mxu0 %v3774
        %v3859 = vpop.f32.mrf.mxu0
        %v3860 = vadd.f32 %v3795, %v3859
        %v3861 = vpop.f32.mrf.mxu0
        %v3862 = vadd.f32 %v3795, %v3861
        %3863 = vmatmul.bf16.gmra.mxu0 %v3775
        %v3864 = vpop.f32.mrf.mxu0
        %v3865 = vadd.f32 %v3795, %v3864
        %v3866 = vpop.f32.mrf.mxu0
        %v3867 = vadd.f32 %v3795, %v3866
        %3868 = vmatmul.bf16.gmra.mxu0 %v3776
        %v3869 = vpop.f32.mrf.mxu0
        %v3870 = vadd.f32 %v3795, %v3869
        %v3871 = vpop.f32.mrf.mxu0
        %v3872 = vadd.f32 %v3795, %v3871
        %3873 = vdwg.mxu0
        %v3874 = vsel %vm490, %v3855, 0.0
        %3875 = vadd.xlane.f32.xlu0 %v3874
        %v3876 = vpop.xlane.xlu0 %3875
        %v3877 = vsel %vm490, %v3857, 0.0
        %3878 = vadd.xlane.f32.xlu0 %v3877
        %v3879 = vpop.xlane.xlu0 %3878
        %v3880 = vsel %vm490, %v3860, 0.0
        %3881 = vadd.xlane.f32.xlu0 %v3880
        %v3882 = vpop.xlane.xlu0 %3881
        %v3883 = vsel %vm490, %v3862, 0.0
        %3884 = vadd.xlane.f32.xlu0 %v3883
        %v3885 = vpop.xlane.xlu0 %3884
        %v3886 = vsel %vm490, %v3865, 0.0
        %3887 = vadd.xlane.f32.xlu0 %v3886
        %v3888 = vpop.xlane.xlu0 %3887
        %v3889 = vsel %vm490, %v3867, 0.0
        %3890 = vadd.xlane.f32.xlu0 %v3889
        %v3891 = vpop.xlane.xlu0 %3890
        %v3892 = vsel %vm490, %v3870, 0.0
        %3893 = vadd.xlane.f32.xlu0 %v3892
        %v3894 = vpop.xlane.xlu0 %3893
        %v3895 = vsel %vm490, %v3872, 0.0
        %3896 = vadd.xlane.f32.xlu0 %v3895
        %v3897 = vpop.xlane.xlu0 %3896
        %v3898 = vmul.f32 %v3876, %v3453
        %v3899 = vmul.f32 %v3879, %v3453
        %v3900 = vmul.f32 %v3882, %v3453
        %v3901 = vmul.f32 %v3885, %v3453
        %v3902 = vmul.f32 %v3888, %v3453
        %v3903 = vmul.f32 %v3891, %v3453
        %v3904 = vmul.f32 %v3894, %v3453
        %v3905 = vmul.f32 %v3897, %v3453
        %v3906 = vsub.f32 %v3855, %v3898
        %v3907 = vsub.f32 %v3857, %v3899
        %v3908 = vsub.f32 %v3860, %v3900
        %v3909 = vsub.f32 %v3862, %v3901
        %v3910 = vsub.f32 %v3865, %v3902
        %v3911 = vsub.f32 %v3867, %v3903
        %v3912 = vsub.f32 %v3870, %v3904
        %v3913 = vsub.f32 %v3872, %v3905
        %v3914 = vmul.f32 %v3906, %v3906
        %v3915 = vmul.f32 %v3907, %v3907
        %v3916 = vmul.f32 %v3908, %v3908
        %v3917 = vmul.f32 %v3909, %v3909
        %v3918 = vmul.f32 %v3910, %v3910
        %v3919 = vmul.f32 %v3911, %v3911
        %v3920 = vmul.f32 %v3912, %v3912
        %v3921 = vmul.f32 %v3913, %v3913
        %v3922 = vsel %vm490, %v3914, 0.0
        %3923 = vadd.xlane.f32.xlu0 %v3922
        %v3924 = vpop.xlane.xlu0 %3923
        %v3925 = vsel %vm490, %v3915, 0.0
        %3926 = vadd.xlane.f32.xlu0 %v3925
        %v3927 = vpop.xlane.xlu0 %3926
        %v3928 = vsel %vm490, %v3916, 0.0
        %3929 = vadd.xlane.f32.xlu0 %v3928
        %v3930 = vpop.xlane.xlu0 %3929
        %v3931 = vsel %vm490, %v3917, 0.0
        %3932 = vadd.xlane.f32.xlu0 %v3931
        %v3933 = vpop.xlane.xlu0 %3932
        %v3934 = vsel %vm490, %v3918, 0.0
        %3935 = vadd.xlane.f32.xlu0 %v3934
        %v3936 = vpop.xlane.xlu0 %3935
        %v3937 = vsel %vm490, %v3919, 0.0
        %3938 = vadd.xlane.f32.xlu0 %v3937
        %v3939 = vpop.xlane.xlu0 %3938
        %v3940 = vsel %vm490, %v3920, 0.0
        %3941 = vadd.xlane.f32.xlu0 %v3940
        %v3942 = vpop.xlane.xlu0 %3941
        %v3943 = vsel %vm490, %v3921, 0.0
        %3944 = vadd.xlane.f32.xlu0 %v3943
        %v3945 = vpop.xlane.xlu0 %3944
        %v3946 = vmul.f32 %v3924, %v3453
        %v3947 = vmul.f32 %v3927, %v3453
        %v3948 = vmul.f32 %v3930, %v3453
        %v3949 = vmul.f32 %v3933, %v3453
        %v3950 = vmul.f32 %v3936, %v3453
        %v3951 = vmul.f32 %v3939, %v3453
        %v3952 = vmul.f32 %v3942, %v3453
        %v3953 = vmul.f32 %v3945, %v3453
        %v3954 = vadd.f32 %v3946, 1e-05
        %v3955 = vadd.f32 %v3947, 1e-05
        %v3956 = vadd.f32 %v3948, 1e-05
        %v3957 = vadd.f32 %v3949, 1e-05
        %v3958 = vadd.f32 %v3950, 1e-05
        %v3959 = vadd.f32 %v3951, 1e-05
        %v3960 = vadd.f32 %v3952, 1e-05
        %v3961 = vadd.f32 %v3953, 1e-05
        %v3962 = vrsqrt.pop %v3954
        %v3963 = vmul.f32 %v3962, %v3954
        %v3964 = vmul.f32 %v3963, %v3962
        %v3965 = vmul.f32 0.5, %v3964
        %v3966 = vsub.f32 1.5, %v3965
        %v3967 = vmul.f32 %v3962, %v3966
        %vm3968 = vweird.f32 %v3954
        %vm3969 = vweird.f32 %v3962
        %vm3970 = vmor %vm3968, %vm3969
        %v3971 = vsel %vm3970, %v3962, %v3967
        %v3972 = vrsqrt.pop %v3955
        %v3973 = vmul.f32 %v3972, %v3955
        %v3974 = vmul.f32 %v3973, %v3972
        %v3975 = vmul.f32 0.5, %v3974
        %v3976 = vsub.f32 1.5, %v3975
        %v3977 = vmul.f32 %v3972, %v3976
        %vm3978 = vweird.f32 %v3955
        %vm3979 = vweird.f32 %v3972
        %vm3980 = vmor %vm3978, %vm3979
        %v3981 = vsel %vm3980, %v3972, %v3977
        %v3982 = vrsqrt.pop %v3956
        %v3983 = vmul.f32 %v3982, %v3956
        %v3984 = vmul.f32 %v3983, %v3982
        %v3985 = vmul.f32 0.5, %v3984
        %v3986 = vsub.f32 1.5, %v3985
        %v3987 = vmul.f32 %v3982, %v3986
        %vm3988 = vweird.f32 %v3956
        %vm3989 = vweird.f32 %v3982
        %vm3990 = vmor %vm3988, %vm3989
        %v3991 = vsel %vm3990, %v3982, %v3987
        %v3992 = vrsqrt.pop %v3957
        %v3993 = vmul.f32 %v3992, %v3957
        %v3994 = vmul.f32 %v3993, %v3992
        %v3995 = vmul.f32 0.5, %v3994
        %v3996 = vsub.f32 1.5, %v3995
        %v3997 = vmul.f32 %v3992, %v3996
        %vm3998 = vweird.f32 %v3957
        %vm3999 = vweird.f32 %v3992
        %vm4000 = vmor %vm3998, %vm3999
        %v4001 = vsel %vm4000, %v3992, %v3997
        %v4002 = vrsqrt.pop %v3958
        %v4003 = vmul.f32 %v4002, %v3958
        %v4004 = vmul.f32 %v4003, %v4002
        %v4005 = vmul.f32 0.5, %v4004
        %v4006 = vsub.f32 1.5, %v4005
        %v4007 = vmul.f32 %v4002, %v4006
        %vm4008 = vweird.f32 %v3958
        %vm4009 = vweird.f32 %v4002
        %vm4010 = vmor %vm4008, %vm4009
        %v4011 = vsel %vm4010, %v4002, %v4007
        %v4012 = vrsqrt.pop %v3959
        %v4013 = vmul.f32 %v4012, %v3959
        %v4014 = vmul.f32 %v4013, %v4012
        %v4015 = vmul.f32 0.5, %v4014
        %v4016 = vsub.f32 1.5, %v4015
        %v4017 = vmul.f32 %v4012, %v4016
        %vm4018 = vweird.f32 %v3959
        %vm4019 = vweird.f32 %v4012
        %vm4020 = vmor %vm4018, %vm4019
        %v4021 = vsel %vm4020, %v4012, %v4017
        %v4022 = vrsqrt.pop %v3960
        %v4023 = vmul.f32 %v4022, %v3960
        %v4024 = vmul.f32 %v4023, %v4022
        %v4025 = vmul.f32 0.5, %v4024
        %v4026 = vsub.f32 1.5, %v4025
        %v4027 = vmul.f32 %v4022, %v4026
        %vm4028 = vweird.f32 %v3960
        %vm4029 = vweird.f32 %v4022
        %vm4030 = vmor %vm4028, %vm4029
        %v4031 = vsel %vm4030, %v4022, %v4027
        %v4032 = vrsqrt.pop %v3961
        %v4033 = vmul.f32 %v4032, %v3961
        %v4034 = vmul.f32 %v4033, %v4032
        %v4035 = vmul.f32 0.5, %v4034
        %v4036 = vsub.f32 1.5, %v4035
        %v4037 = vmul.f32 %v4032, %v4036
        %vm4038 = vweird.f32 %v3961
        %vm4039 = vweird.f32 %v4032
        %vm4040 = vmor %vm4038, %vm4039
        %v4041 = vsel %vm4040, %v4032, %v4037
        %v4042 = vmul.f32 %v3906, %v3971
        %v4043 = vmul.f32 %v3907, %v3981
        %v4044 = vmul.f32 %v3908, %v3991
        %v4045 = vmul.f32 %v3909, %v4001
        %v4046 = vmul.f32 %v3910, %v4011
        %v4047 = vmul.f32 %v3911, %v4021
        %v4048 = vmul.f32 %v3912, %v4031
        %v4049 = vmul.f32 %v3913, %v4041
        %v4050 = vmul.f32 %v4042, %v3607
        %v4051 = vmul.f32 %v4043, %v3607
        %v4052 = vmul.f32 %v4044, %v3607
        %v4053 = vmul.f32 %v4045, %v3607
        %v4054 = vmul.f32 %v4046, %v3607
        %v4055 = vmul.f32 %v4047, %v3607
        %v4056 = vmul.f32 %v4048, %v3607
        %v4057 = vmul.f32 %v4049, %v3607
        %v4058 = vadd.f32 %v4050, %v3618
        %v4059 = vadd.f32 %v4051, %v3618
        %v4060 = vadd.f32 %v4052, %v3618
        %v4061 = vadd.f32 %v4053, %v3618
        %v4062 = vadd.f32 %v4054, %v3618
        %v4063 = vadd.f32 %v4055, %v3618
        %v4064 = vadd.f32 %v4056, %v3618
        %v4065 = vadd.f32 %v4057, %v3618
        %v4066 = vadd.f32 %v3628, %v4058
        %v4067 = vadd.f32 %v3629, %v4059
        %v4068 = vadd.f32 %v3630, %v4060
        %v4069 = vadd.f32 %v3631, %v4061
        %v4070 = vadd.f32 %v3632, %v4062
        %v4071 = vadd.f32 %v3633, %v4063
        %v4072 = vadd.f32 %v3634, %v4064
        %v4073 = vadd.f32 %v3635, %v4065
        %4074 = vst.msk [vmem:[%s454] sm:$0xff] %vm490, %v4066
        %4075 = vst.msk [vmem:[%s454 + $0x8] sm:$0xff] %vm490, %v4067
        %4076 = vst.msk [vmem:[%s454 + $0x10] sm:$0xff] %vm490, %v4068
        %4077 = vst.msk [vmem:[%s454 + $0x18] sm:$0xff] %vm490, %v4069
        %4078 = vst.msk [vmem:[%s454 + $0x20] sm:$0xff] %vm490, %v4070
        %4079 = vst.msk [vmem:[%s454 + $0x28] sm:$0xff] %vm490, %v4071
        %4080 = vst.msk [vmem:[%s454 + $0x30] sm:$0xff] %vm490, %v4072
        %4081 = vst.msk [vmem:[%s454 + $0x38] sm:$0xff] %vm490, %v4073
        %p4082 = scmp.lt.s32.totalorder %s25, 1
        %s4083 = scalar_select %p4082, %s25, 1
        %s4084 = smul.addr %s4083, 8
        %s4085 = smul.addr %s4084, 8
        %s4086 = scalar_lea.vmem %s13, %s4085
        // Predicated region
        $region77: #{swin_connect_encoder_forward.3} parent=71 // pred_check
          %p4087 = pneg %p321
        $region78: #{swin_connect_encoder_forward.3} parent=71 // pred_check_branch
          %4089 = sbr.rel (%p4087) target = $region80
        $region79: #{swin_connect_encoder_forward.3} parent=71 // pred_region
          _
        $region80: #{swin_connect_encoder_forward.3} parent=71 // pred_fallthru
          _
      $region72: #{swin_connect_encoder_forward.3} parent=5 // pred_fallthru
        _
      %p4090 = scmp.le.s32.totalorder 2, %s20
      // Predicated region
      $region81: #{swin_connect_encoder_forward.3} parent=5 // pred_check
        %p4091 = pneg %p4090
      $region82: #{swin_connect_encoder_forward.3} parent=5 // pred_check_branch
        %4093 = sbr.rel (%p4091) target = $region84
      $region83: #{swin_connect_encoder_forward.3} parent=5 // pred_region
        %s4094 = ssub.s32 %s20, 2
        // Predicated region
        $region85: #{swin_connect_encoder_forward.3} parent=83 // pred_check
          %p4095 = pneg %p327
        $region86: #{swin_connect_encoder_forward.3} parent=83 // pred_check_branch
          %4097 = sbr.rel (%p4095) target = $region88
        $region87: #{swin_connect_encoder_forward.3} parent=83 // pred_region
          %p4098 = scmp.lt.s32.totalorder %s26, 1
          %s4099 = scalar_select %p4098, %s26, 1
          %s4100 = smul.addr %s4099, 8
          %s4101 = smul.addr %s4100, 8
          %s4102 = scalar_lea.vmem %s13, %s4101
        $region88: #{swin_connect_encoder_forward.3} parent=83 // pred_fallthru
          _
      $region84: #{swin_connect_encoder_forward.3} parent=5 // pred_fallthru
        _
    $region6: #{swin_connect_encoder_forward.3} parent=1 // loop_footer
      %s24 = sadd.s32 1, %s20
    $region7: #{swin_connect_encoder_forward.3} parent=1 // loop_footer_branch
      %19 = sbr.rel target = $region3
    $region8: #{swin_connect_encoder_forward.3} parent=1 // loop_exit
      _
    %4103 = vsyncpa [#allocation3], 1
    %s4104 = scalar_lea.sflag [#allocation3], 1
    %4105 = vsyncpa %s4104, 1

</llo_original>
